<compile_context>
chip_gen: v6e
topology: v6e:2x2x1
jax: 0.10.0
libtpu: 0.0.40
codegen_flags: <defaults>
</compile_context>

<pallas_src>
import functools
import math

import jax
import jax.numpy as jnp
from jax.experimental import pallas as pl
from jax.experimental.pallas import tpu as pltpu

# Full-precision f32 matmuls everywhere (kernel + pure-JAX reference).
jax.config.update("jax_default_matmul_precision", "highest")

N_EMBD = 32
N_HEAD = 4
BLOCK_SIZE = 8   # == T in the example


def _self_attention_kernel(x_ref, wb_ref, o_ref, *, n_head, block_size):
    """x_ref : (B*T, C) activations.
    wb_ref : (C+1, 4C) fused parameter slab:
               rows 0:C = [Wq^T * 1/sqrt(hd) | Wk^T | Wv^T | Wp^T]  (all (in, out))
               row  C   = [bq  * 1/sqrt(hd)  | bk   | bv   | bp ]
    o_ref  : (B*T, C) output."""
    BT, C = x_ref.shape
    T = block_size
    B = BT // T
    nh = n_head
    hd = C // nh
    f32 = jnp.float32
    hi = jax.lax.Precision.HIGHEST

    x = x_ref[...]                       # (BT, C)
    wb = wb_ref[...]                     # (C+1, 4C)
    w = wb[0:C, :]                       # (C, 4C)  weights
    b = wb[C:C + 1, :]                   # (1, 4C)  biases

    # --- fused QKV projection (attention scale already folded into q) --------
    qkv = jnp.dot(x, w[:, 0:3 * C], preferred_element_type=f32,
                  precision=hi) + b[:, 0:3 * C]                  # (BT, 3C)

    # --- gather heads into the leading batch dim: (nh*B, T, hd) ---------------
    def to_heads(z2d):
        z = z2d.reshape(B, T, C)
        return jnp.concatenate(
            [z[:, :, h * hd:(h + 1) * hd] for h in range(nh)], axis=0)

    q = to_heads(qkv[:, 0 * C:1 * C])    # already * 1/sqrt(hd)
    k = to_heads(qkv[:, 1 * C:2 * C])
    v = to_heads(qkv[:, 2 * C:3 * C])

    # --- single batched attention over all (head, batch) pairs ---------------
    row = jax.lax.broadcasted_iota(jnp.int32, (T, T), 0)
    col = jax.lax.broadcasted_iota(jnp.int32, (T, T), 1)
    causal = (col <= row)[None]          # (1, T, T), torch.tril semantics

    att = jnp.einsum("btd,bsd->bts", q, k,
                     preferred_element_type=f32, precision=hi)   # (nh*B, T, T)
    att = jnp.where(causal, att, f32(-10000.0))                  # masked_fill
    att = jnp.exp(att - jnp.max(att, axis=-1, keepdims=True))
    att = att / jnp.sum(att, axis=-1, keepdims=True)             # exact softmax

    y = jnp.einsum("bts,bsd->btd", att, v,
                   preferred_element_type=f32, precision=hi)     # (nh*B, T, hd)

    # --- output projection, accumulated per head (no VMEM scratch) -----------
    wp = w[:, 3 * C:4 * C]               # (C, C)
    out = b[:, 3 * C:4 * C]              # (1, C) bias; broadcasts on first add
    for h in range(nh):
        y_h = y[h * B:(h + 1) * B].reshape(BT, hd)               # (BT, hd)
        out = out + jnp.dot(y_h, wp[h * hd:(h + 1) * hd, :],
                            preferred_element_type=f32, precision=hi)

    o_ref[...] = out.astype(o_ref.dtype)                         # one slab store


def self_attention_pallas(x, params, *, n_head=N_HEAD):
    """x: (B, T, C) float32. params: PyTorch-convention (out,in) weights, (out,) biases."""
    B, T, C = x.shape
    hd = C // n_head
    scale = 1.0 / math.sqrt(hd)

    # Host-side, one-time prep (grid-invariant):
    #  - transpose weights to (in, out) so the kernel computes x @ W,
    #  - fold the attention scale into the q weight/bias,
    #  - fuse [Wq|Wk|Wv|Wp] and all biases into a single (C+1, 4C) slab.
    w_all = jnp.concatenate([params["wq"].T * scale, params["wk"].T,
                             params["wv"].T, params["wp"].T], axis=1)      # (C, 4C)
    b_all = jnp.concatenate([params["bq"] * scale, params["bk"],
                             params["bv"], params["bp"]]).reshape(1, 4 * C)
    wb = jnp.concatenate([w_all, b_all], axis=0)                           # (C+1, 4C)

    x2d = x.reshape(B * T, C)
    vmem = pl.BlockSpec(memory_space=pltpu.MemorySpace.VMEM)
    kernel = functools.partial(_self_attention_kernel,
                               n_head=n_head, block_size=T)

    out2d = pl.pallas_call(
        kernel,
        out_shape=jax.ShapeDtypeStruct((B * T, C), x.dtype),
        in_specs=[vmem, vmem],
        out_specs=vmem,
    )(x2d, wb)
    return out2d.reshape(B, T, C)


def self_attention_ref(x, params):
    """Pure-JAX reference matching the PyTorch forward exactly."""
    B, T, C = x.shape
    nh = N_HEAD
    hd = C // nh

    def lin(z, w, b):
        return z @ w.T + b

    q = lin(x, params["wq"], params["bq"]).reshape(B, T, nh, hd).transpose(0, 2, 1, 3)
    k = lin(x, params["wk"], params["bk"]).reshape(B, T, nh, hd).transpose(0, 2, 1, 3)
    v = lin(x, params["wv"], params["bv"]).reshape(B, T, nh, hd).transpose(0, 2, 1, 3)

    att = jnp.einsum("bhtd,bhsd->bhts", q, k) / math.sqrt(hd)
    mask = jnp.tril(jnp.ones((T, T), dtype=bool))
    att = jnp.where(mask[None, None], att, -10000.0)
    att = jax.nn.softmax(att, axis=-1)
    y = jnp.einsum("bhts,bhsd->bhtd", att, v)
    y = y.transpose(0, 2, 1, 3).reshape(B, T, C)
    return lin(y, params["wp"], params["bp"])


def make_params(key, n_embd):
    """Deterministic init mimicking nn.Linear default (uniform +-1/sqrt(fan_in))."""
    keys = jax.random.split(key, 8)
    bound = 1.0 / math.sqrt(n_embd)

    def u(k, shape):
        return jax.random.uniform(k, shape, jnp.float32, -bound, bound)

    return {
        "wk": u(keys[0], (n_embd, n_embd)), "bk": u(keys[1], (n_embd,)),
        "wq": u(keys[2], (n_embd, n_embd)), "bq": u(keys[3], (n_embd,)),
        "wv": u(keys[4], (n_embd, n_embd)), "bv": u(keys[5], (n_embd,)),
        "wp": u(keys[6], (n_embd, n_embd)), "bp": u(keys[7], (n_embd,)),
    }


if __name__ == "__main__":
    B, T, C = 2, BLOCK_SIZE, N_EMBD   # batch=2, seq=8, hidden=32, heads=4

    key = jax.random.PRNGKey(0)
    kx, kp = jax.random.split(key)
    x = jax.random.normal(kx, (B, T, C), dtype=jnp.float32)
    params = make_params(kp, C)

    out = jax.block_until_ready(self_attention_pallas(x, params))
    ref = self_attention_ref(x, params)

    assert out.shape == (B, T, C)
    # Exact softmax + HIGHEST-precision f32 matmuls -> tight tolerance again.
    assert jnp.allclose(out, ref, atol=1e-3, rtol=1e-3), \
        f"max abs err = {jnp.max(jnp.abs(out - ref))}"

    print("KERNEL_OK")
</pallas_src>

<mosaic_0001>
module attributes {stable_mosaic.version = 11 : i64} {
  func.func @_self_attention_kernel(%arg0: memref<16x32xf32, #tpu.memory_space<vmem>>, %arg1: memref<33x128xf32, #tpu.memory_space<vmem>>, %arg2: memref<16x32xf32, #tpu.memory_space<vmem>>) attributes {dimension_semantics = [], scalar_prefetch = 0 : i64, scratch_operands = 0 : i64, tpu.core_type = #tpu.core_type<tc>} {
    %c0 = arith.constant 0 : index
    %c0_0 = arith.constant 0 : index
    %0 = vector.load %arg0[%c0, %c0_0] : memref<16x32xf32, #tpu.memory_space<vmem>>, vector<16x32xf32>
    %c0_1 = arith.constant 0 : index
    %c0_2 = arith.constant 0 : index
    %1 = vector.load %arg1[%c0_1, %c0_2] : memref<33x128xf32, #tpu.memory_space<vmem>>, vector<33x128xf32>
    %2 = vector.extract_strided_slice %1 {offsets = [0, 0], sizes = [32, 128], strides = [1, 1]} : vector<33x128xf32> to vector<32x128xf32>
    %3 = vector.extract_strided_slice %1 {offsets = [32, 0], sizes = [1, 128], strides = [1, 1]} : vector<33x128xf32> to vector<1x128xf32>
    %4 = vector.extract_strided_slice %2 {offsets = [0, 0], sizes = [32, 96], strides = [1, 1]} : vector<32x128xf32> to vector<32x96xf32>
    %cst = arith.constant dense<0.000000e+00> : vector<16x96xf32>
    %5 = tpu.matmul %0, %4, %cst {dimension_numbers = #tpu.dot_dimension_numbers<[1], [0], [0], [1], [0, 0, 1, 1], [], []>, precision = #tpu.contract_precision<fp32>} : vector<16x32xf32>, vector<32x96xf32>, vector<16x96xf32> -> vector<16x96xf32>
    %6 = vector.extract_strided_slice %3 {offsets = [0, 0], sizes = [1, 96], strides = [1, 1]} : vector<1x128xf32> to vector<1x96xf32>
    %7 = vector.broadcast %6 : vector<1x96xf32> to vector<16x96xf32>
    %8 = arith.addf %5, %7 : vector<16x96xf32>
    %9 = vector.extract_strided_slice %8 {offsets = [0, 0], sizes = [16, 32], strides = [1, 1]} : vector<16x96xf32> to vector<16x32xf32>
    %10 = vector.shape_cast %9 : vector<16x32xf32> to vector<2x8x32xf32>
    %11 = vector.extract_strided_slice %10 {offsets = [0, 0, 0], sizes = [2, 8, 8], strides = [1, 1, 1]} : vector<2x8x32xf32> to vector<2x8x8xf32>
    %12 = vector.extract_strided_slice %10 {offsets = [0, 0, 8], sizes = [2, 8, 8], strides = [1, 1, 1]} : vector<2x8x32xf32> to vector<2x8x8xf32>
    %13 = vector.extract_strided_slice %10 {offsets = [0, 0, 16], sizes = [2, 8, 8], strides = [1, 1, 1]} : vector<2x8x32xf32> to vector<2x8x8xf32>
    %14 = vector.extract_strided_slice %10 {offsets = [0, 0, 24], sizes = [2, 8, 8], strides = [1, 1, 1]} : vector<2x8x32xf32> to vector<2x8x8xf32>
    %15 = tpu.concatenate %11, %12, %13, %14 in 0 : vector<2x8x8xf32>, vector<2x8x8xf32>, vector<2x8x8xf32>, vector<2x8x8xf32> -> vector<8x8x8xf32>
    %16 = vector.extract_strided_slice %8 {offsets = [0, 32], sizes = [16, 32], strides = [1, 1]} : vector<16x96xf32> to vector<16x32xf32>
    %17 = vector.shape_cast %16 : vector<16x32xf32> to vector<2x8x32xf32>
    %18 = vector.extract_strided_slice %17 {offsets = [0, 0, 0], sizes = [2, 8, 8], strides = [1, 1, 1]} : vector<2x8x32xf32> to vector<2x8x8xf32>
    %19 = vector.extract_strided_slice %17 {offsets = [0, 0, 8], sizes = [2, 8, 8], strides = [1, 1, 1]} : vector<2x8x32xf32> to vector<2x8x8xf32>
    %20 = vector.extract_strided_slice %17 {offsets = [0, 0, 16], sizes = [2, 8, 8], strides = [1, 1, 1]} : vector<2x8x32xf32> to vector<2x8x8xf32>
    %21 = vector.extract_strided_slice %17 {offsets = [0, 0, 24], sizes = [2, 8, 8], strides = [1, 1, 1]} : vector<2x8x32xf32> to vector<2x8x8xf32>
    %22 = tpu.concatenate %18, %19, %20, %21 in 0 : vector<2x8x8xf32>, vector<2x8x8xf32>, vector<2x8x8xf32>, vector<2x8x8xf32> -> vector<8x8x8xf32>
    %23 = vector.extract_strided_slice %8 {offsets = [0, 64], sizes = [16, 32], strides = [1, 1]} : vector<16x96xf32> to vector<16x32xf32>
    %24 = vector.shape_cast %23 : vector<16x32xf32> to vector<2x8x32xf32>
    %25 = vector.extract_strided_slice %24 {offsets = [0, 0, 0], sizes = [2, 8, 8], strides = [1, 1, 1]} : vector<2x8x32xf32> to vector<2x8x8xf32>
    %26 = vector.extract_strided_slice %24 {offsets = [0, 0, 8], sizes = [2, 8, 8], strides = [1, 1, 1]} : vector<2x8x32xf32> to vector<2x8x8xf32>
    %27 = vector.extract_strided_slice %24 {offsets = [0, 0, 16], sizes = [2, 8, 8], strides = [1, 1, 1]} : vector<2x8x32xf32> to vector<2x8x8xf32>
    %28 = vector.extract_strided_slice %24 {offsets = [0, 0, 24], sizes = [2, 8, 8], strides = [1, 1, 1]} : vector<2x8x32xf32> to vector<2x8x8xf32>
    %29 = tpu.concatenate %25, %26, %27, %28 in 0 : vector<2x8x8xf32>, vector<2x8x8xf32>, vector<2x8x8xf32>, vector<2x8x8xf32> -> vector<8x8x8xf32>
    %30 = tpu.iota {dimensions = array<i32: 0>} : vector<8x8xi32>
    %31 = tpu.iota {dimensions = array<i32: 1>} : vector<8x8xi32>
    %32 = arith.cmpi sle, %31, %30 : vector<8x8xi32>
    %33 = vector.shape_cast %32 : vector<8x8xi1> to vector<1x8x8xi1>
    "tpu.trace_start"() <{level = 10 : i32, message = "btd,bsd->bts"}> : () -> ()
    %cst_3 = arith.constant dense<0.000000e+00> : vector<8x8x8xf32>
    %34 = tpu.matmul %15, %22, %cst_3 {dimension_numbers = #tpu.dot_dimension_numbers<[2], [2], [1], [1], [0, 0, 0, 1, 1, 1], [0], [0]>, precision = #tpu.contract_precision<fp32>} : vector<8x8x8xf32>, vector<8x8x8xf32>, vector<8x8x8xf32> -> vector<8x8x8xf32>
    %cst_4 = arith.constant -1.000000e+04 : f32
    "tpu.trace_stop"() : () -> ()
    %35 = vector.shape_cast %33 : vector<1x8x8xi1> to vector<1x8x8xi1>
    %36 = vector.broadcast %35 : vector<1x8x8xi1> to vector<8x8x8xi1>
    %37 = vector.broadcast %cst_4 : f32 to vector<8x8x8xf32>
    %38 = arith.select %36, %34, %37 : vector<8x8x8xi1>, vector<8x8x8xf32>
    %cst_5 = arith.constant dense<0xFF800000> : vector<8x8xf32>
    %39 = vector.multi_reduction <maximumf>, %38, %cst_5 [2] : vector<8x8x8xf32> to vector<8x8xf32>
    %40 = vector.shape_cast %39 : vector<8x8xf32> to vector<8x8x1xf32>
    %41 = vector.broadcast %40 : vector<8x8x1xf32> to vector<8x8x8xf32>
    %42 = arith.subf %38, %41 : vector<8x8x8xf32>
    %43 = math.exp %42 : vector<8x8x8xf32>
    %cst_6 = arith.constant dense<0.000000e+00> : vector<8x8xf32>
    %44 = vector.multi_reduction <add>, %43, %cst_6 [2] : vector<8x8x8xf32> to vector<8x8xf32>
    %45 = vector.shape_cast %44 : vector<8x8xf32> to vector<8x8x1xf32>
    %46 = vector.broadcast %45 : vector<8x8x1xf32> to vector<8x8x8xf32>
    %47 = arith.divf %43, %46 : vector<8x8x8xf32>
    "tpu.trace_start"() <{level = 10 : i32, message = "bts,bsd->btd"}> : () -> ()
    %cst_7 = arith.constant dense<0.000000e+00> : vector<8x8x8xf32>
    %48 = tpu.matmul %47, %29, %cst_7 {dimension_numbers = #tpu.dot_dimension_numbers<[2], [1], [1], [2], [0, 0, 0, 1, 1, 2], [0], [0]>, precision = #tpu.contract_precision<fp32>} : vector<8x8x8xf32>, vector<8x8x8xf32>, vector<8x8x8xf32> -> vector<8x8x8xf32>
    "tpu.trace_stop"() : () -> ()
    %49 = vector.extract_strided_slice %2 {offsets = [0, 96], sizes = [32, 32], strides = [1, 1]} : vector<32x128xf32> to vector<32x32xf32>
    %50 = vector.extract_strided_slice %3 {offsets = [0, 96], sizes = [1, 32], strides = [1, 1]} : vector<1x128xf32> to vector<1x32xf32>
    %51 = vector.extract_strided_slice %48 {offsets = [0, 0, 0], sizes = [2, 8, 8], strides = [1, 1, 1]} : vector<8x8x8xf32> to vector<2x8x8xf32>
    %52 = vector.shape_cast %51 : vector<2x8x8xf32> to vector<16x8xf32>
    %53 = vector.extract_strided_slice %49 {offsets = [0, 0], sizes = [8, 32], strides = [1, 1]} : vector<32x32xf32> to vector<8x32xf32>
    %cst_8 = arith.constant dense<0.000000e+00> : vector<16x32xf32>
    %54 = tpu.matmul %52, %53, %cst_8 {dimension_numbers = #tpu.dot_dimension_numbers<[1], [0], [0], [1], [0, 0, 1, 1], [], []>, precision = #tpu.contract_precision<fp32>} : vector<16x8xf32>, vector<8x32xf32>, vector<16x32xf32> -> vector<16x32xf32>
    %55 = vector.broadcast %50 : vector<1x32xf32> to vector<16x32xf32>
    %56 = arith.addf %55, %54 : vector<16x32xf32>
    %57 = vector.extract_strided_slice %48 {offsets = [2, 0, 0], sizes = [2, 8, 8], strides = [1, 1, 1]} : vector<8x8x8xf32> to vector<2x8x8xf32>
    %58 = vector.shape_cast %57 : vector<2x8x8xf32> to vector<16x8xf32>
    %59 = vector.extract_strided_slice %49 {offsets = [8, 0], sizes = [8, 32], strides = [1, 1]} : vector<32x32xf32> to vector<8x32xf32>
    %cst_9 = arith.constant dense<0.000000e+00> : vector<16x32xf32>
    %60 = tpu.matmul %58, %59, %cst_9 {dimension_numbers = #tpu.dot_dimension_numbers<[1], [0], [0], [1], [0, 0, 1, 1], [], []>, precision = #tpu.contract_precision<fp32>} : vector<16x8xf32>, vector<8x32xf32>, vector<16x32xf32> -> vector<16x32xf32>
    %61 = arith.addf %56, %60 : vector<16x32xf32>
    %62 = vector.extract_strided_slice %48 {offsets = [4, 0, 0], sizes = [2, 8, 8], strides = [1, 1, 1]} : vector<8x8x8xf32> to vector<2x8x8xf32>
    %63 = vector.shape_cast %62 : vector<2x8x8xf32> to vector<16x8xf32>
    %64 = vector.extract_strided_slice %49 {offsets = [16, 0], sizes = [8, 32], strides = [1, 1]} : vector<32x32xf32> to vector<8x32xf32>
    %cst_10 = arith.constant dense<0.000000e+00> : vector<16x32xf32>
    %65 = tpu.matmul %63, %64, %cst_10 {dimension_numbers = #tpu.dot_dimension_numbers<[1], [0], [0], [1], [0, 0, 1, 1], [], []>, precision = #tpu.contract_precision<fp32>} : vector<16x8xf32>, vector<8x32xf32>, vector<16x32xf32> -> vector<16x32xf32>
    %66 = arith.addf %61, %65 : vector<16x32xf32>
    %67 = vector.extract_strided_slice %48 {offsets = [6, 0, 0], sizes = [2, 8, 8], strides = [1, 1, 1]} : vector<8x8x8xf32> to vector<2x8x8xf32>
    %68 = vector.shape_cast %67 : vector<2x8x8xf32> to vector<16x8xf32>
    %69 = vector.extract_strided_slice %49 {offsets = [24, 0], sizes = [8, 32], strides = [1, 1]} : vector<32x32xf32> to vector<8x32xf32>
    %cst_11 = arith.constant dense<0.000000e+00> : vector<16x32xf32>
    %70 = tpu.matmul %68, %69, %cst_11 {dimension_numbers = #tpu.dot_dimension_numbers<[1], [0], [0], [1], [0, 0, 1, 1], [], []>, precision = #tpu.contract_precision<fp32>} : vector<16x8xf32>, vector<8x32xf32>, vector<16x32xf32> -> vector<16x32xf32>
    %71 = arith.addf %66, %70 : vector<16x32xf32>
    %c0_12 = arith.constant 0 : index
    %c0_13 = arith.constant 0 : index
    %72 = vector.load %arg2[%c0_12, %c0_13] : memref<16x32xf32, #tpu.memory_space<vmem>>, vector<16x32xf32>
    tpu.vector_store %arg2[%c0_12, %c0_13], %71 {strides = array<i32>} : memref<16x32xf32, #tpu.memory_space<vmem>>, vector<16x32xf32>,
    return
  }
}

</mosaic_0001>

<llo_original>
// kernel: tpu_custom_call.1
$region0: #{tpu_custom_call.1}
  #allocation0 [shape = 'u32[]', space=smem, size = 0x4, offset = 0x4, fixed_abs, tag = 'smem constant byte address 0x4 - core index']
  #allocation1 [shape = 'u32[144,128]{1,0:T(1,128)}', space=vmem, size = 0x12000, scoped, tag = 'internal scratch']
  %s0 = inlined_call_operand.hbm [shape: f32[16,32], index: 0, kind: input, shape index: {}]
  %s1 = inlined_call_operand.hbm [shape: f32[33,128], index: 1, kind: input, shape index: {}]
  %s2 = inlined_call_operand.hbm [shape: f32[16,32], index: 2, kind: output, shape index: {}]
  %s3 = sld [smem:[#allocation0]]
  $region26: #{tpu_custom_call.1} parent=0
    _
  %s5 = ssub.s32 1, %s3
  %s6 = scalar_select 0, %s5, %s3
  $region1: #{tpu_custom_call.1} parent=0
    #allocation2 [shape = 'u8[8192]{0}', space=vmem, size = 0x2000, scoped, tag = 'input window, operand 0, single buffered']
    #allocation3 [shape = 's32[1]{0}', space=sflag, size = 0x4, scoped, tag = 'scoped memory for tpu_custom_call.1']
    #allocation4 [shape = 's32[1]{0}', space=sflag, size = 0x4, scoped, tag = 'scoped memory for tpu_custom_call.1']
    #allocation5 [shape = 'u8[20480]{0}', space=vmem, size = 0x5000, scoped, tag = 'input window, operand 1, single buffered']
    #allocation6 [shape = 's32[1]{0}', space=sflag, size = 0x4, scoped, tag = 'scoped memory for tpu_custom_call.1']
    #allocation7 [shape = 'u8[8192]{0}', space=vmem, size = 0x2000, scoped, tag = 'output window, operand 0, single buffered']
    %7 = vsyncpa [#allocation3], 0
    %8 = vsyncpa [#allocation6], 0
    %9 = vsyncpa [#allocation4], 0
    // Predicated region
    $region2: #{tpu_custom_call.1} parent=1 // pred_check
      _
    $region3: #{tpu_custom_call.1} parent=1 // pred_check_branch
      %11 = sbr.rel (0) target = $region5
    $region4: #{tpu_custom_call.1} parent=1 // pred_region
      %s13 = ssub.s32 256, 256
      %14 = vsyncadd [#allocation3], %s13
      %s15 = sshll.u32 [#allocation2], 4
      %s16 = int_to_ptr.vmem [resolvable:$true] %s15
      %21 = dma.hbm_to_vmem [thread:$0]  %s0, 256, %s16, [#allocation3], 128, 128, 8
    $region5: #{tpu_custom_call.1} parent=1 // pred_fallthru
      _
    // Predicated region
    $region6: #{tpu_custom_call.1} parent=1 // pred_check
      _
    $region7: #{tpu_custom_call.1} parent=1 // pred_check_branch
      %23 = sbr.rel (0) target = $region9
    $region8: #{tpu_custom_call.1} parent=1 // pred_region
      %s25 = ssub.s32 640, 640
      %26 = vsyncadd [#allocation6], %s25
      %s27 = sshll.u32 [#allocation5], 4
      %s28 = int_to_ptr.vmem [resolvable:$true] %s27
      %33 = dma.hbm_to_vmem [thread:$0]  %s1, 640, %s28, [#allocation6], 128, 128, 8
    $region9: #{tpu_custom_call.1} parent=1 // pred_fallthru
      _
    // Predicated region
    $region10: #{tpu_custom_call.1} parent=1 // pred_check
      _
    $region11: #{tpu_custom_call.1} parent=1 // pred_check_branch
      %35 = sbr.rel (0) target = $region13
    $region12: #{tpu_custom_call.1} parent=1 // pred_region
      %36 = dma.done [#allocation3], 256
    $region13: #{tpu_custom_call.1} parent=1 // pred_fallthru
      _
    // Predicated region
    $region14: #{tpu_custom_call.1} parent=1 // pred_check
      _
    $region15: #{tpu_custom_call.1} parent=1 // pred_check_branch
      %38 = sbr.rel (0) target = $region17
    $region16: #{tpu_custom_call.1} parent=1 // pred_region
      %39 = dma.done [#allocation6], 640
    $region17: #{tpu_custom_call.1} parent=1 // pred_fallthru
      _
    %v40 = vld [vmem:[#allocation2] sm:$0xff]
    %v41 = vld [vmem:[#allocation2 + $0x8] sm:$0xff]
    %v42 = vld [vmem:[#allocation5] sm:$0xff]
    %v43 = vld [vmem:[#allocation5 + $0x8] sm:$0xff]
    %v44 = vld [vmem:[#allocation5 + $0x10] sm:$0xff]
    %v45 = vld [vmem:[#allocation5 + $0x18] sm:$0xff]
    %v46 = vld [vmem:[#allocation5 + $0x20] sm:$0x1]
    %v47 = vlaneseq
    %v48 = vshrl.u32 %v47, 7
    %v49 = vsub.s32 0, %v48
    %v50 = vrot.slane %v46, %v49
    %vm51 = vcmask 261120
    %v53 = vsel %vm51, %v40, 0
    %v56 = vsel %vm51, %v41, 0
    %58 = vmatprep.subr.mxu0 0.0
    %59 = vmatpush1.msra.mxu0 0.0
    %60 = vmatprep.subr.mxu0 0.0
    %61 = vmatpush1.msra.mxu0 0.0
    %62 = vmatprep.subr.mxu0 0.0
    %63 = vmatpush1.msra.mxu0 0.0
    %64 = vmatprep.subr.mxu0 0.0
    %65 = vmatpush1.msra.mxu0 0.0
    %66 = vmatprep.subr.mxu0 0.0
    %67 = vmatpush1.msra.mxu0 0.0
    %68 = vmatprep.subr.mxu0 0.0
    %69 = vmatpush1.msra.mxu0 0.0
    %70 = vmatprep.subr.mxu0 0.0
    %71 = vmatpush1.msra.mxu0 0.0
    %72 = vmatprep.subr.mxu0 0.0
    %73 = vmatpush1.msra.mxu0 0.0
    %74 = vmatprep.subr.mxu0 0.0
    %75 = vmatpush1.msra.mxu0 0.0
    %76 = vmatprep.subr.mxu0 0.0
    %77 = vmatpush1.msra.mxu0 0.0
    %78 = vmatprep.subr.mxu0 0.0
    %79 = vmatpush1.msra.mxu0 0.0
    %80 = vmatprep.subr.mxu0 0.0
    %81 = vmatpush1.msra.mxu0 0.0
    %82 = vmatprep.subr.mxu0 0.0
    %v83 = vand.u32 %v45, 4294901760
    %84 = vmatpush1.msra.mxu0 %v83
    %85 = vmatprep.subr.mxu0 0.0
    %v86 = vand.u32 %v44, 4294901760
    %87 = vmatpush1.msra.mxu0 %v86
    %88 = vmatprep.subr.mxu0 0.0
    %v89 = vand.u32 %v43, 4294901760
    %90 = vmatpush1.msra.mxu0 %v89
    %91 = vmatprep.subr.mxu0 0.0
    %v92 = vand.u32 %v42, 4294901760
    %93 = vmatpush1.msra.mxu0 %v92
    %94 = vmatprep.subr.mxu0 0.0
    %95 = vmatpush2.msra.mxu0 0.0
    %96 = vmatprep.subr.mxu0 0.0
    %97 = vmatpush2.msra.mxu0 0.0
    %98 = vmatprep.subr.mxu0 0.0
    %99 = vmatpush2.msra.mxu0 0.0
    %100 = vmatprep.subr.mxu0 0.0
    %101 = vmatpush2.msra.mxu0 0.0
    %102 = vmatprep.subr.mxu0 0.0
    %103 = vmatpush2.msra.mxu0 0.0
    %104 = vmatprep.subr.mxu0 0.0
    %105 = vmatpush2.msra.mxu0 0.0
    %106 = vmatprep.subr.mxu0 0.0
    %107 = vmatpush2.msra.mxu0 0.0
    %108 = vmatprep.subr.mxu0 0.0
    %109 = vmatpush2.msra.mxu0 0.0
    %110 = vmatprep.subr.mxu0 0.0
    %111 = vmatpush2.msra.mxu0 0.0
    %112 = vmatprep.subr.mxu0 0.0
    %113 = vmatpush2.msra.mxu0 0.0
    %114 = vmatprep.subr.mxu0 0.0
    %115 = vmatpush2.msra.mxu0 0.0
    %116 = vmatprep.subr.mxu0 0.0
    %117 = vmatpush2.msra.mxu0 0.0
    %118 = vmatprep.subr.mxu0 0.0
    %119 = vmatpush2.msra.mxu0 0.0
    %120 = vmatprep.subr.mxu0 0.0
    %121 = vmatpush2.msra.mxu0 0.0
    %122 = vmatprep.subr.mxu0 0.0
    %123 = vmatpush2.msra.mxu0 0.0
    %124 = vmatprep.subr.mxu0 0.0
    %125 = vmatpush2.msra.mxu0 0.0
    %126 = vmatprep.mubr.f32.mxu0 0.0
    %v127 = vand.u32 %v53, 4294901760
    %v128 = vsub.f32 %v53, %v127
    %v129 = vand.u32 %v128, 4294901760
    %v130 = vsub.f32 %v128, %v129
    %v131 = vand.u32 %v130, 4294901760
    %132 = vmatmul.mubr.f32.gmra.mxu0 %v131
    %v133 = vpop.f32.mrf.mxu0
    %v134 = vadd.f32 %v50, %v133
    %v135 = vpop.f32.mrf.mxu0
    %136 = vmatprep.mubr.f32.mxu0 0.0
    %v137 = vand.u32 %v56, 4294901760
    %v138 = vsub.f32 %v56, %v137
    %v139 = vand.u32 %v138, 4294901760
    %v140 = vsub.f32 %v138, %v139
    %v141 = vand.u32 %v140, 4294901760
    %142 = vmatmul.mubr.f32.gmra.mxu0 %v141
    %v143 = vpop.f32.mrf.mxu0
    %v144 = vadd.f32 %v50, %v143
    %v145 = vpop.f32.mrf.mxu0
    %146 = vdwg.mxu0
    %147 = vmatprep.subr.mxu0 0.0
    %148 = vmatpush1.msra.mxu0 0.0
    %149 = vmatprep.subr.mxu0 0.0
    %150 = vmatpush1.msra.mxu0 0.0
    %151 = vmatprep.subr.mxu0 0.0
    %152 = vmatpush1.msra.mxu0 0.0
    %153 = vmatprep.subr.mxu0 0.0
    %154 = vmatpush1.msra.mxu0 0.0
    %155 = vmatprep.subr.mxu0 0.0
    %156 = vmatpush1.msra.mxu0 0.0
    %157 = vmatprep.subr.mxu0 0.0
    %158 = vmatpush1.msra.mxu0 0.0
    %159 = vmatprep.subr.mxu0 0.0
    %160 = vmatpush1.msra.mxu0 0.0
    %161 = vmatprep.subr.mxu0 0.0
    %162 = vmatpush1.msra.mxu0 0.0
    %163 = vmatprep.subr.mxu0 0.0
    %164 = vmatpush1.msra.mxu0 0.0
    %165 = vmatprep.subr.mxu0 0.0
    %166 = vmatpush1.msra.mxu0 0.0
    %167 = vmatprep.subr.mxu0 0.0
    %168 = vmatpush1.msra.mxu0 0.0
    %169 = vmatprep.subr.mxu0 0.0
    %170 = vmatpush1.msra.mxu0 0.0
    %171 = vmatprep.subr.mxu0 0.0
    %v172 = vand.u32 %v45, 4294901760
    %v173 = vsub.f32 %v45, %v172
    %v174 = vand.u32 %v173, 4294901760
    %v175 = vsub.f32 %v173, %v174
    %v176 = vand.u32 %v175, 4294901760
    %177 = vmatpush1.msra.mxu0 %v176
    %178 = vmatprep.subr.mxu0 0.0
    %v179 = vand.u32 %v44, 4294901760
    %v180 = vsub.f32 %v44, %v179
    %v181 = vand.u32 %v180, 4294901760
    %v182 = vsub.f32 %v180, %v181
    %v183 = vand.u32 %v182, 4294901760
    %184 = vmatpush1.msra.mxu0 %v183
    %185 = vmatprep.subr.mxu0 0.0
    %v186 = vand.u32 %v43, 4294901760
    %v187 = vsub.f32 %v43, %v186
    %v188 = vand.u32 %v187, 4294901760
    %v189 = vsub.f32 %v187, %v188
    %v190 = vand.u32 %v189, 4294901760
    %191 = vmatpush1.msra.mxu0 %v190
    %192 = vmatprep.subr.mxu0 0.0
    %v193 = vand.u32 %v42, 4294901760
    %v194 = vsub.f32 %v42, %v193
    %v195 = vand.u32 %v194, 4294901760
    %v196 = vsub.f32 %v194, %v195
    %v197 = vand.u32 %v196, 4294901760
    %198 = vmatpush1.msra.mxu0 %v197
    %199 = vmatprep.subr.mxu0 0.0
    %200 = vmatpush2.msra.mxu0 0.0
    %201 = vmatprep.subr.mxu0 0.0
    %202 = vmatpush2.msra.mxu0 0.0
    %203 = vmatprep.subr.mxu0 0.0
    %204 = vmatpush2.msra.mxu0 0.0
    %205 = vmatprep.subr.mxu0 0.0
    %206 = vmatpush2.msra.mxu0 0.0
    %207 = vmatprep.subr.mxu0 0.0
    %208 = vmatpush2.msra.mxu0 0.0
    %209 = vmatprep.subr.mxu0 0.0
    %210 = vmatpush2.msra.mxu0 0.0
    %211 = vmatprep.subr.mxu0 0.0
    %212 = vmatpush2.msra.mxu0 0.0
    %213 = vmatprep.subr.mxu0 0.0
    %214 = vmatpush2.msra.mxu0 0.0
    %215 = vmatprep.subr.mxu0 0.0
    %216 = vmatpush2.msra.mxu0 0.0
    %217 = vmatprep.subr.mxu0 0.0
    %218 = vmatpush2.msra.mxu0 0.0
    %219 = vmatprep.subr.mxu0 0.0
    %220 = vmatpush2.msra.mxu0 0.0
    %221 = vmatprep.subr.mxu0 0.0
    %222 = vmatpush2.msra.mxu0 0.0
    %223 = vmatprep.subr.mxu0 0.0
    %224 = vmatpush2.msra.mxu0 0.0
    %225 = vmatprep.subr.mxu0 0.0
    %226 = vmatpush2.msra.mxu0 0.0
    %227 = vmatprep.subr.mxu0 0.0
    %228 = vmatpush2.msra.mxu0 0.0
    %229 = vmatprep.subr.mxu0 0.0
    %230 = vmatpush2.msra.mxu0 0.0
    %231 = vmatprep.mubr.f32.mxu0 0.0
    %v232 = vand.u32 %v53, 4294901760
    %233 = vmatmul.mubr.f32.gmra.mxu0 %v232
    %v234 = vpop.f32.mrf.mxu0
    %v235 = vadd.f32 %v134, %v234
    %v236 = vpop.f32.mrf.mxu0
    %237 = vmatprep.mubr.f32.mxu0 0.0
    %v238 = vand.u32 %v56, 4294901760
    %239 = vmatmul.mubr.f32.gmra.mxu0 %v238
    %v240 = vpop.f32.mrf.mxu0
    %v241 = vadd.f32 %v144, %v240
    %v242 = vpop.f32.mrf.mxu0
    %243 = vdwg.mxu0
    %244 = vmatprep.subr.mxu0 0.0
    %245 = vmatpush1.msra.mxu0 0.0
    %246 = vmatprep.subr.mxu0 0.0
    %247 = vmatpush1.msra.mxu0 0.0
    %248 = vmatprep.subr.mxu0 0.0
    %249 = vmatpush1.msra.mxu0 0.0
    %250 = vmatprep.subr.mxu0 0.0
    %251 = vmatpush1.msra.mxu0 0.0
    %252 = vmatprep.subr.mxu0 0.0
    %253 = vmatpush1.msra.mxu0 0.0
    %254 = vmatprep.subr.mxu0 0.0
    %255 = vmatpush1.msra.mxu0 0.0
    %256 = vmatprep.subr.mxu0 0.0
    %257 = vmatpush1.msra.mxu0 0.0
    %258 = vmatprep.subr.mxu0 0.0
    %259 = vmatpush1.msra.mxu0 0.0
    %260 = vmatprep.subr.mxu0 0.0
    %261 = vmatpush1.msra.mxu0 0.0
    %262 = vmatprep.subr.mxu0 0.0
    %263 = vmatpush1.msra.mxu0 0.0
    %264 = vmatprep.subr.mxu0 0.0
    %265 = vmatpush1.msra.mxu0 0.0
    %266 = vmatprep.subr.mxu0 0.0
    %267 = vmatpush1.msra.mxu0 0.0
    %268 = vmatprep.subr.mxu0 0.0
    %v269 = vand.u32 %v45, 4294901760
    %v270 = vsub.f32 %v45, %v269
    %271 = vmatpush1.msra.mxu0 %v270
    %272 = vmatprep.subr.mxu0 0.0
    %v273 = vand.u32 %v44, 4294901760
    %v274 = vsub.f32 %v44, %v273
    %275 = vmatpush1.msra.mxu0 %v274
    %276 = vmatprep.subr.mxu0 0.0
    %v277 = vand.u32 %v43, 4294901760
    %v278 = vsub.f32 %v43, %v277
    %279 = vmatpush1.msra.mxu0 %v278
    %280 = vmatprep.subr.mxu0 0.0
    %v281 = vand.u32 %v42, 4294901760
    %v282 = vsub.f32 %v42, %v281
    %283 = vmatpush1.msra.mxu0 %v282
    %284 = vmatprep.subr.mxu0 0.0
    %285 = vmatpush2.msra.mxu0 0.0
    %286 = vmatprep.subr.mxu0 0.0
    %287 = vmatpush2.msra.mxu0 0.0
    %288 = vmatprep.subr.mxu0 0.0
    %289 = vmatpush2.msra.mxu0 0.0
    %290 = vmatprep.subr.mxu0 0.0
    %291 = vmatpush2.msra.mxu0 0.0
    %292 = vmatprep.subr.mxu0 0.0
    %293 = vmatpush2.msra.mxu0 0.0
    %294 = vmatprep.subr.mxu0 0.0
    %295 = vmatpush2.msra.mxu0 0.0
    %296 = vmatprep.subr.mxu0 0.0
    %297 = vmatpush2.msra.mxu0 0.0
    %298 = vmatprep.subr.mxu0 0.0
    %299 = vmatpush2.msra.mxu0 0.0
    %300 = vmatprep.subr.mxu0 0.0
    %301 = vmatpush2.msra.mxu0 0.0
    %302 = vmatprep.subr.mxu0 0.0
    %303 = vmatpush2.msra.mxu0 0.0
    %304 = vmatprep.subr.mxu0 0.0
    %305 = vmatpush2.msra.mxu0 0.0
    %306 = vmatprep.subr.mxu0 0.0
    %307 = vmatpush2.msra.mxu0 0.0
    %308 = vmatprep.subr.mxu0 0.0
    %309 = vmatpush2.msra.mxu0 0.0
    %310 = vmatprep.subr.mxu0 0.0
    %311 = vmatpush2.msra.mxu0 0.0
    %312 = vmatprep.subr.mxu0 0.0
    %313 = vmatpush2.msra.mxu0 0.0
    %314 = vmatprep.subr.mxu0 0.0
    %315 = vmatpush2.msra.mxu0 0.0
    %316 = vmatprep.mubr.f32.mxu0 0.0
    %v317 = vand.u32 %v53, 4294901760
    %v318 = vsub.f32 %v53, %v317
    %319 = vmatmul.mubr.f32.gmra.mxu0 %v318
    %v320 = vpop.f32.mrf.mxu0
    %v321 = vadd.f32 %v235, %v320
    %v322 = vpop.f32.mrf.mxu0
    %323 = vmatprep.mubr.f32.mxu0 0.0
    %v324 = vand.u32 %v56, 4294901760
    %v325 = vsub.f32 %v56, %v324
    %326 = vmatmul.mubr.f32.gmra.mxu0 %v325
    %v327 = vpop.f32.mrf.mxu0
    %v328 = vadd.f32 %v241, %v327
    %v329 = vpop.f32.mrf.mxu0
    %330 = vdwg.mxu0
    %331 = vmatprep.subr.mxu0 0.0
    %332 = vmatpush1.msra.mxu0 0.0
    %333 = vmatprep.subr.mxu0 0.0
    %334 = vmatpush1.msra.mxu0 0.0
    %335 = vmatprep.subr.mxu0 0.0
    %336 = vmatpush1.msra.mxu0 0.0
    %337 = vmatprep.subr.mxu0 0.0
    %338 = vmatpush1.msra.mxu0 0.0
    %339 = vmatprep.subr.mxu0 0.0
    %340 = vmatpush1.msra.mxu0 0.0
    %341 = vmatprep.subr.mxu0 0.0
    %342 = vmatpush1.msra.mxu0 0.0
    %343 = vmatprep.subr.mxu0 0.0
    %344 = vmatpush1.msra.mxu0 0.0
    %345 = vmatprep.subr.mxu0 0.0
    %346 = vmatpush1.msra.mxu0 0.0
    %347 = vmatprep.subr.mxu0 0.0
    %348 = vmatpush1.msra.mxu0 0.0
    %349 = vmatprep.subr.mxu0 0.0
    %350 = vmatpush1.msra.mxu0 0.0
    %351 = vmatprep.subr.mxu0 0.0
    %352 = vmatpush1.msra.mxu0 0.0
    %353 = vmatprep.subr.mxu0 0.0
    %354 = vmatpush1.msra.mxu0 0.0
    %355 = vmatprep.subr.mxu0 0.0
    %v356 = vand.u32 %v45, 4294901760
    %357 = vmatpush1.msra.mxu0 %v356
    %358 = vmatprep.subr.mxu0 0.0
    %v359 = vand.u32 %v44, 4294901760
    %360 = vmatpush1.msra.mxu0 %v359
    %361 = vmatprep.subr.mxu0 0.0
    %v362 = vand.u32 %v43, 4294901760
    %363 = vmatpush1.msra.mxu0 %v362
    %364 = vmatprep.subr.mxu0 0.0
    %v365 = vand.u32 %v42, 4294901760
    %366 = vmatpush1.msra.mxu0 %v365
    %367 = vmatprep.subr.mxu0 0.0
    %368 = vmatpush2.msra.mxu0 0.0
    %369 = vmatprep.subr.mxu0 0.0
    %370 = vmatpush2.msra.mxu0 0.0
    %371 = vmatprep.subr.mxu0 0.0
    %372 = vmatpush2.msra.mxu0 0.0
    %373 = vmatprep.subr.mxu0 0.0
    %374 = vmatpush2.msra.mxu0 0.0
    %375 = vmatprep.subr.mxu0 0.0
    %376 = vmatpush2.msra.mxu0 0.0
    %377 = vmatprep.subr.mxu0 0.0
    %378 = vmatpush2.msra.mxu0 0.0
    %379 = vmatprep.subr.mxu0 0.0
    %380 = vmatpush2.msra.mxu0 0.0
    %381 = vmatprep.subr.mxu0 0.0
    %382 = vmatpush2.msra.mxu0 0.0
    %383 = vmatprep.subr.mxu0 0.0
    %384 = vmatpush2.msra.mxu0 0.0
    %385 = vmatprep.subr.mxu0 0.0
    %386 = vmatpush2.msra.mxu0 0.0
    %387 = vmatprep.subr.mxu0 0.0
    %388 = vmatpush2.msra.mxu0 0.0
    %389 = vmatprep.subr.mxu0 0.0
    %390 = vmatpush2.msra.mxu0 0.0
    %391 = vmatprep.subr.mxu0 0.0
    %392 = vmatpush2.msra.mxu0 0.0
    %393 = vmatprep.subr.mxu0 0.0
    %394 = vmatpush2.msra.mxu0 0.0
    %395 = vmatprep.subr.mxu0 0.0
    %396 = vmatpush2.msra.mxu0 0.0
    %397 = vmatprep.subr.mxu0 0.0
    %398 = vmatpush2.msra.mxu0 0.0
    %399 = vmatprep.mubr.f32.mxu0 0.0
    %v400 = vand.u32 %v53, 4294901760
    %v401 = vsub.f32 %v53, %v400
    %v402 = vand.u32 %v401, 4294901760
    %403 = vmatmul.mubr.f32.gmra.mxu0 %v402
    %v404 = vpop.f32.mrf.mxu0
    %v405 = vadd.f32 %v321, %v404
    %v406 = vpop.f32.mrf.mxu0
    %407 = vmatprep.mubr.f32.mxu0 0.0
    %v408 = vand.u32 %v56, 4294901760
    %v409 = vsub.f32 %v56, %v408
    %v410 = vand.u32 %v409, 4294901760
    %411 = vmatmul.mubr.f32.gmra.mxu0 %v410
    %v412 = vpop.f32.mrf.mxu0
    %v413 = vadd.f32 %v328, %v412
    %v414 = vpop.f32.mrf.mxu0
    %415 = vdwg.mxu0
    %416 = vmatprep.subr.mxu0 0.0
    %417 = vmatpush1.msra.mxu0 0.0
    %418 = vmatprep.subr.mxu0 0.0
    %419 = vmatpush1.msra.mxu0 0.0
    %420 = vmatprep.subr.mxu0 0.0
    %421 = vmatpush1.msra.mxu0 0.0
    %422 = vmatprep.subr.mxu0 0.0
    %423 = vmatpush1.msra.mxu0 0.0
    %424 = vmatprep.subr.mxu0 0.0
    %425 = vmatpush1.msra.mxu0 0.0
    %426 = vmatprep.subr.mxu0 0.0
    %427 = vmatpush1.msra.mxu0 0.0
    %428 = vmatprep.subr.mxu0 0.0
    %429 = vmatpush1.msra.mxu0 0.0
    %430 = vmatprep.subr.mxu0 0.0
    %431 = vmatpush1.msra.mxu0 0.0
    %432 = vmatprep.subr.mxu0 0.0
    %433 = vmatpush1.msra.mxu0 0.0
    %434 = vmatprep.subr.mxu0 0.0
    %435 = vmatpush1.msra.mxu0 0.0
    %436 = vmatprep.subr.mxu0 0.0
    %437 = vmatpush1.msra.mxu0 0.0
    %438 = vmatprep.subr.mxu0 0.0
    %439 = vmatpush1.msra.mxu0 0.0
    %440 = vmatprep.subr.mxu0 0.0
    %v441 = vand.u32 %v45, 4294901760
    %v442 = vsub.f32 %v45, %v441
    %v443 = vand.u32 %v442, 4294901760
    %444 = vmatpush1.msra.mxu0 %v443
    %445 = vmatprep.subr.mxu0 0.0
    %v446 = vand.u32 %v44, 4294901760
    %v447 = vsub.f32 %v44, %v446
    %v448 = vand.u32 %v447, 4294901760
    %449 = vmatpush1.msra.mxu0 %v448
    %450 = vmatprep.subr.mxu0 0.0
    %v451 = vand.u32 %v43, 4294901760
    %v452 = vsub.f32 %v43, %v451
    %v453 = vand.u32 %v452, 4294901760
    %454 = vmatpush1.msra.mxu0 %v453
    %455 = vmatprep.subr.mxu0 0.0
    %v456 = vand.u32 %v42, 4294901760
    %v457 = vsub.f32 %v42, %v456
    %v458 = vand.u32 %v457, 4294901760
    %459 = vmatpush1.msra.mxu0 %v458
    %460 = vmatprep.subr.mxu0 0.0
    %461 = vmatpush2.msra.mxu0 0.0
    %462 = vmatprep.subr.mxu0 0.0
    %463 = vmatpush2.msra.mxu0 0.0
    %464 = vmatprep.subr.mxu0 0.0
    %465 = vmatpush2.msra.mxu0 0.0
    %466 = vmatprep.subr.mxu0 0.0
    %467 = vmatpush2.msra.mxu0 0.0
    %468 = vmatprep.subr.mxu0 0.0
    %469 = vmatpush2.msra.mxu0 0.0
    %470 = vmatprep.subr.mxu0 0.0
    %471 = vmatpush2.msra.mxu0 0.0
    %472 = vmatprep.subr.mxu0 0.0
    %473 = vmatpush2.msra.mxu0 0.0
    %474 = vmatprep.subr.mxu0 0.0
    %475 = vmatpush2.msra.mxu0 0.0
    %476 = vmatprep.subr.mxu0 0.0
    %477 = vmatpush2.msra.mxu0 0.0
    %478 = vmatprep.subr.mxu0 0.0
    %479 = vmatpush2.msra.mxu0 0.0
    %480 = vmatprep.subr.mxu0 0.0
    %481 = vmatpush2.msra.mxu0 0.0
    %482 = vmatprep.subr.mxu0 0.0
    %483 = vmatpush2.msra.mxu0 0.0
    %484 = vmatprep.subr.mxu0 0.0
    %485 = vmatpush2.msra.mxu0 0.0
    %486 = vmatprep.subr.mxu0 0.0
    %487 = vmatpush2.msra.mxu0 0.0
    %488 = vmatprep.subr.mxu0 0.0
    %489 = vmatpush2.msra.mxu0 0.0
    %490 = vmatprep.subr.mxu0 0.0
    %491 = vmatpush2.msra.mxu0 0.0
    %492 = vmatprep.mubr.f32.mxu0 0.0
    %v493 = vand.u32 %v53, 4294901760
    %494 = vmatmul.mubr.f32.gmra.mxu0 %v493
    %v495 = vpop.f32.mrf.mxu0
    %v496 = vadd.f32 %v405, %v495
    %v497 = vpop.f32.mrf.mxu0
    %498 = vmatprep.mubr.f32.mxu0 0.0
    %v499 = vand.u32 %v56, 4294901760
    %500 = vmatmul.mubr.f32.gmra.mxu0 %v499
    %v501 = vpop.f32.mrf.mxu0
    %v502 = vadd.f32 %v413, %v501
    %v503 = vpop.f32.mrf.mxu0
    %504 = vdwg.mxu0
    %505 = vmatprep.subr.mxu0 0.0
    %506 = vmatpush1.msra.mxu0 0.0
    %507 = vmatprep.subr.mxu0 0.0
    %508 = vmatpush1.msra.mxu0 0.0
    %509 = vmatprep.subr.mxu0 0.0
    %510 = vmatpush1.msra.mxu0 0.0
    %511 = vmatprep.subr.mxu0 0.0
    %512 = vmatpush1.msra.mxu0 0.0
    %513 = vmatprep.subr.mxu0 0.0
    %514 = vmatpush1.msra.mxu0 0.0
    %515 = vmatprep.subr.mxu0 0.0
    %516 = vmatpush1.msra.mxu0 0.0
    %517 = vmatprep.subr.mxu0 0.0
    %518 = vmatpush1.msra.mxu0 0.0
    %519 = vmatprep.subr.mxu0 0.0
    %520 = vmatpush1.msra.mxu0 0.0
    %521 = vmatprep.subr.mxu0 0.0
    %522 = vmatpush1.msra.mxu0 0.0
    %523 = vmatprep.subr.mxu0 0.0
    %524 = vmatpush1.msra.mxu0 0.0
    %525 = vmatprep.subr.mxu0 0.0
    %526 = vmatpush1.msra.mxu0 0.0
    %527 = vmatprep.subr.mxu0 0.0
    %528 = vmatpush1.msra.mxu0 0.0
    %529 = vmatprep.subr.mxu0 0.0
    %v530 = vand.u32 %v45, 4294901760
    %531 = vmatpush1.msra.mxu0 %v530
    %532 = vmatprep.subr.mxu0 0.0
    %v533 = vand.u32 %v44, 4294901760
    %534 = vmatpush1.msra.mxu0 %v533
    %535 = vmatprep.subr.mxu0 0.0
    %v536 = vand.u32 %v43, 4294901760
    %537 = vmatpush1.msra.mxu0 %v536
    %538 = vmatprep.subr.mxu0 0.0
    %v539 = vand.u32 %v42, 4294901760
    %540 = vmatpush1.msra.mxu0 %v539
    %541 = vmatprep.subr.mxu0 0.0
    %542 = vmatpush2.msra.mxu0 0.0
    %543 = vmatprep.subr.mxu0 0.0
    %544 = vmatpush2.msra.mxu0 0.0
    %545 = vmatprep.subr.mxu0 0.0
    %546 = vmatpush2.msra.mxu0 0.0
    %547 = vmatprep.subr.mxu0 0.0
    %548 = vmatpush2.msra.mxu0 0.0
    %549 = vmatprep.subr.mxu0 0.0
    %550 = vmatpush2.msra.mxu0 0.0
    %551 = vmatprep.subr.mxu0 0.0
    %552 = vmatpush2.msra.mxu0 0.0
    %553 = vmatprep.subr.mxu0 0.0
    %554 = vmatpush2.msra.mxu0 0.0
    %555 = vmatprep.subr.mxu0 0.0
    %556 = vmatpush2.msra.mxu0 0.0
    %557 = vmatprep.subr.mxu0 0.0
    %558 = vmatpush2.msra.mxu0 0.0
    %559 = vmatprep.subr.mxu0 0.0
    %560 = vmatpush2.msra.mxu0 0.0
    %561 = vmatprep.subr.mxu0 0.0
    %562 = vmatpush2.msra.mxu0 0.0
    %563 = vmatprep.subr.mxu0 0.0
    %564 = vmatpush2.msra.mxu0 0.0
    %565 = vmatprep.subr.mxu0 0.0
    %566 = vmatpush2.msra.mxu0 0.0
    %567 = vmatprep.subr.mxu0 0.0
    %568 = vmatpush2.msra.mxu0 0.0
    %569 = vmatprep.subr.mxu0 0.0
    %570 = vmatpush2.msra.mxu0 0.0
    %571 = vmatprep.subr.mxu0 0.0
    %572 = vmatpush2.msra.mxu0 0.0
    %573 = vmatprep.mubr.f32.mxu0 0.0
    %v574 = vand.u32 %v53, 4294901760
    %575 = vmatmul.mubr.f32.gmra.mxu0 %v574
    %v576 = vpop.f32.mrf.mxu0
    %v577 = vadd.f32 %v496, %v576
    %v578 = vpop.f32.mrf.mxu0
    %579 = vmatprep.mubr.f32.mxu0 0.0
    %v580 = vand.u32 %v56, 4294901760
    %581 = vmatmul.mubr.f32.gmra.mxu0 %v580
    %v582 = vpop.f32.mrf.mxu0
    %v583 = vadd.f32 %v502, %v582
    %v584 = vpop.f32.mrf.mxu0
    %585 = vdwg.mxu0
    %588 = vrot.lane.b32.xlu0 %v577, 120
    %v589 = vpop.permute.xlu0 %588
    %590 = vrot.lane.b32.xlu0 %v583, 120
    %v591 = vpop.permute.xlu0 %590
    %592 = vrot.lane.b32.xlu0 %v577, 112
    %v593 = vpop.permute.xlu0 %592
    %594 = vrot.lane.b32.xlu0 %v583, 112
    %v595 = vpop.permute.xlu0 %594
    %596 = vrot.lane.b32.xlu0 %v577, 104
    %v597 = vpop.permute.xlu0 %596
    %598 = vrot.lane.b32.xlu0 %v583, 104
    %v599 = vpop.permute.xlu0 %598
    %v600 = vlaneseq
    %v601 = vshrl.u32 %v600, 7
    %v602 = vlaneseq
    %v603 = vand.u32 %v602, 127
    %vm604 = vcmp.le.s32.totalorder %v603, %v601
    %605 = vrot.lane.b32.xlu0 %v577, 96
    %v606 = vpop.permute.xlu0 %605
    %vm607 = vcmask 64512
    %v608 = vsel %vm607, %v577, 0
    %v610 = vsel %vm607, %v606, 0
    %612 = vmatprep.subr.mxu0 0.0
    %613 = vmatpush1.xpose.msra.mxu0 0.0
    %614 = vmatprep.subr.mxu0 0.0
    %615 = vmatpush1.xpose.msra.mxu0 0.0
    %616 = vmatprep.subr.mxu0 0.0
    %617 = vmatpush1.xpose.msra.mxu0 0.0
    %618 = vmatprep.subr.mxu0 0.0
    %619 = vmatpush1.xpose.msra.mxu0 0.0
    %620 = vmatprep.subr.mxu0 0.0
    %621 = vmatpush1.xpose.msra.mxu0 0.0
    %622 = vmatprep.subr.mxu0 0.0
    %623 = vmatpush1.xpose.msra.mxu0 0.0
    %624 = vmatprep.subr.mxu0 0.0
    %625 = vmatpush1.xpose.msra.mxu0 0.0
    %626 = vmatprep.subr.mxu0 0.0
    %627 = vmatpush1.xpose.msra.mxu0 0.0
    %628 = vmatprep.subr.mxu0 0.0
    %629 = vmatpush1.xpose.msra.mxu0 0.0
    %630 = vmatprep.subr.mxu0 0.0
    %631 = vmatpush1.xpose.msra.mxu0 0.0
    %632 = vmatprep.subr.mxu0 0.0
    %633 = vmatpush1.xpose.msra.mxu0 0.0
    %634 = vmatprep.subr.mxu0 0.0
    %635 = vmatpush1.xpose.msra.mxu0 0.0
    %636 = vmatprep.subr.mxu0 0.0
    %637 = vmatpush1.xpose.msra.mxu0 0.0
    %638 = vmatprep.subr.mxu0 0.0
    %639 = vmatpush1.xpose.msra.mxu0 0.0
    %640 = vmatprep.subr.mxu0 0.0
    %641 = vmatpush1.xpose.msra.mxu0 0.0
    %642 = vmatprep.subr.mxu0 0.0
    %v643 = vand.u32 %v610, 4294901760
    %644 = vmatpush1.xpose.msra.mxu0 %v643
    %645 = vmatprep.subr.mxu0 0.0
    %646 = vmatpush2.xpose.msra.mxu0 0.0
    %647 = vmatprep.subr.mxu0 0.0
    %648 = vmatpush2.xpose.msra.mxu0 0.0
    %649 = vmatprep.subr.mxu0 0.0
    %650 = vmatpush2.xpose.msra.mxu0 0.0
    %651 = vmatprep.subr.mxu0 0.0
    %652 = vmatpush2.xpose.msra.mxu0 0.0
    %653 = vmatprep.subr.mxu0 0.0
    %654 = vmatpush2.xpose.msra.mxu0 0.0
    %655 = vmatprep.subr.mxu0 0.0
    %656 = vmatpush2.xpose.msra.mxu0 0.0
    %657 = vmatprep.subr.mxu0 0.0
    %658 = vmatpush2.xpose.msra.mxu0 0.0
    %659 = vmatprep.subr.mxu0 0.0
    %660 = vmatpush2.xpose.msra.mxu0 0.0
    %661 = vmatprep.subr.mxu0 0.0
    %662 = vmatpush2.xpose.msra.mxu0 0.0
    %663 = vmatprep.subr.mxu0 0.0
    %664 = vmatpush2.xpose.msra.mxu0 0.0
    %665 = vmatprep.subr.mxu0 0.0
    %666 = vmatpush2.xpose.msra.mxu0 0.0
    %667 = vmatprep.subr.mxu0 0.0
    %668 = vmatpush2.xpose.msra.mxu0 0.0
    %669 = vmatprep.subr.mxu0 0.0
    %670 = vmatpush2.xpose.msra.mxu0 0.0
    %671 = vmatprep.subr.mxu0 0.0
    %672 = vmatpush2.xpose.msra.mxu0 0.0
    %673 = vmatprep.subr.mxu0 0.0
    %674 = vmatpush2.xpose.msra.mxu0 0.0
    %675 = vmatprep.subr.mxu0 0.0
    %676 = vmatpush2.xpose.msra.mxu0 0.0
    %677 = vmatprep.mubr.f32.mxu0 0.0
    %v678 = vand.u32 %v608, 4294901760
    %v679 = vsub.f32 %v608, %v678
    %v680 = vand.u32 %v679, 4294901760
    %v681 = vsub.f32 %v679, %v680
    %v682 = vand.u32 %v681, 4294901760
    %683 = vmatmul.mubr.f32.gmra.mxu0 %v682
    %v684 = vpop.f32.mrf.mxu0
    %v685 = vadd.f32 0.0, %v684
    %v686 = vpop.f32.mrf.mxu0
    %687 = vdwg.mxu0
    %688 = vmatprep.subr.mxu0 0.0
    %689 = vmatpush1.xpose.msra.mxu0 0.0
    %690 = vmatprep.subr.mxu0 0.0
    %691 = vmatpush1.xpose.msra.mxu0 0.0
    %692 = vmatprep.subr.mxu0 0.0
    %693 = vmatpush1.xpose.msra.mxu0 0.0
    %694 = vmatprep.subr.mxu0 0.0
    %695 = vmatpush1.xpose.msra.mxu0 0.0
    %696 = vmatprep.subr.mxu0 0.0
    %697 = vmatpush1.xpose.msra.mxu0 0.0
    %698 = vmatprep.subr.mxu0 0.0
    %699 = vmatpush1.xpose.msra.mxu0 0.0
    %700 = vmatprep.subr.mxu0 0.0
    %701 = vmatpush1.xpose.msra.mxu0 0.0
    %702 = vmatprep.subr.mxu0 0.0
    %703 = vmatpush1.xpose.msra.mxu0 0.0
    %704 = vmatprep.subr.mxu0 0.0
    %705 = vmatpush1.xpose.msra.mxu0 0.0
    %706 = vmatprep.subr.mxu0 0.0
    %707 = vmatpush1.xpose.msra.mxu0 0.0
    %708 = vmatprep.subr.mxu0 0.0
    %709 = vmatpush1.xpose.msra.mxu0 0.0
    %710 = vmatprep.subr.mxu0 0.0
    %711 = vmatpush1.xpose.msra.mxu0 0.0
    %712 = vmatprep.subr.mxu0 0.0
    %713 = vmatpush1.xpose.msra.mxu0 0.0
    %714 = vmatprep.subr.mxu0 0.0
    %715 = vmatpush1.xpose.msra.mxu0 0.0
    %716 = vmatprep.subr.mxu0 0.0
    %717 = vmatpush1.xpose.msra.mxu0 0.0
    %718 = vmatprep.subr.mxu0 0.0
    %v719 = vand.u32 %v610, 4294901760
    %v720 = vsub.f32 %v610, %v719
    %v721 = vand.u32 %v720, 4294901760
    %v722 = vsub.f32 %v720, %v721
    %v723 = vand.u32 %v722, 4294901760
    %724 = vmatpush1.xpose.msra.mxu0 %v723
    %725 = vmatprep.subr.mxu0 0.0
    %726 = vmatpush2.xpose.msra.mxu0 0.0
    %727 = vmatprep.subr.mxu0 0.0
    %728 = vmatpush2.xpose.msra.mxu0 0.0
    %729 = vmatprep.subr.mxu0 0.0
    %730 = vmatpush2.xpose.msra.mxu0 0.0
    %731 = vmatprep.subr.mxu0 0.0
    %732 = vmatpush2.xpose.msra.mxu0 0.0
    %733 = vmatprep.subr.mxu0 0.0
    %734 = vmatpush2.xpose.msra.mxu0 0.0
    %735 = vmatprep.subr.mxu0 0.0
    %736 = vmatpush2.xpose.msra.mxu0 0.0
    %737 = vmatprep.subr.mxu0 0.0
    %738 = vmatpush2.xpose.msra.mxu0 0.0
    %739 = vmatprep.subr.mxu0 0.0
    %740 = vmatpush2.xpose.msra.mxu0 0.0
    %741 = vmatprep.subr.mxu0 0.0
    %742 = vmatpush2.xpose.msra.mxu0 0.0
    %743 = vmatprep.subr.mxu0 0.0
    %744 = vmatpush2.xpose.msra.mxu0 0.0
    %745 = vmatprep.subr.mxu0 0.0
    %746 = vmatpush2.xpose.msra.mxu0 0.0
    %747 = vmatprep.subr.mxu0 0.0
    %748 = vmatpush2.xpose.msra.mxu0 0.0
    %749 = vmatprep.subr.mxu0 0.0
    %750 = vmatpush2.xpose.msra.mxu0 0.0
    %751 = vmatprep.subr.mxu0 0.0
    %752 = vmatpush2.xpose.msra.mxu0 0.0
    %753 = vmatprep.subr.mxu0 0.0
    %754 = vmatpush2.xpose.msra.mxu0 0.0
    %755 = vmatprep.subr.mxu0 0.0
    %756 = vmatpush2.xpose.msra.mxu0 0.0
    %757 = vmatprep.mubr.f32.mxu0 0.0
    %v758 = vand.u32 %v608, 4294901760
    %759 = vmatmul.mubr.f32.gmra.mxu0 %v758
    %v760 = vpop.f32.mrf.mxu0
    %v761 = vadd.f32 %v685, %v760
    %v762 = vpop.f32.mrf.mxu0
    %763 = vdwg.mxu0
    %764 = vmatprep.subr.mxu0 0.0
    %765 = vmatpush1.xpose.msra.mxu0 0.0
    %766 = vmatprep.subr.mxu0 0.0
    %767 = vmatpush1.xpose.msra.mxu0 0.0
    %768 = vmatprep.subr.mxu0 0.0
    %769 = vmatpush1.xpose.msra.mxu0 0.0
    %770 = vmatprep.subr.mxu0 0.0
    %771 = vmatpush1.xpose.msra.mxu0 0.0
    %772 = vmatprep.subr.mxu0 0.0
    %773 = vmatpush1.xpose.msra.mxu0 0.0
    %774 = vmatprep.subr.mxu0 0.0
    %775 = vmatpush1.xpose.msra.mxu0 0.0
    %776 = vmatprep.subr.mxu0 0.0
    %777 = vmatpush1.xpose.msra.mxu0 0.0
    %778 = vmatprep.subr.mxu0 0.0
    %779 = vmatpush1.xpose.msra.mxu0 0.0
    %780 = vmatprep.subr.mxu0 0.0
    %781 = vmatpush1.xpose.msra.mxu0 0.0
    %782 = vmatprep.subr.mxu0 0.0
    %783 = vmatpush1.xpose.msra.mxu0 0.0
    %784 = vmatprep.subr.mxu0 0.0
    %785 = vmatpush1.xpose.msra.mxu0 0.0
    %786 = vmatprep.subr.mxu0 0.0
    %787 = vmatpush1.xpose.msra.mxu0 0.0
    %788 = vmatprep.subr.mxu0 0.0
    %789 = vmatpush1.xpose.msra.mxu0 0.0
    %790 = vmatprep.subr.mxu0 0.0
    %791 = vmatpush1.xpose.msra.mxu0 0.0
    %792 = vmatprep.subr.mxu0 0.0
    %793 = vmatpush1.xpose.msra.mxu0 0.0
    %794 = vmatprep.subr.mxu0 0.0
    %v795 = vand.u32 %v610, 4294901760
    %v796 = vsub.f32 %v610, %v795
    %797 = vmatpush1.xpose.msra.mxu0 %v796
    %798 = vmatprep.subr.mxu0 0.0
    %799 = vmatpush2.xpose.msra.mxu0 0.0
    %800 = vmatprep.subr.mxu0 0.0
    %801 = vmatpush2.xpose.msra.mxu0 0.0
    %802 = vmatprep.subr.mxu0 0.0
    %803 = vmatpush2.xpose.msra.mxu0 0.0
    %804 = vmatprep.subr.mxu0 0.0
    %805 = vmatpush2.xpose.msra.mxu0 0.0
    %806 = vmatprep.subr.mxu0 0.0
    %807 = vmatpush2.xpose.msra.mxu0 0.0
    %808 = vmatprep.subr.mxu0 0.0
    %809 = vmatpush2.xpose.msra.mxu0 0.0
    %810 = vmatprep.subr.mxu0 0.0
    %811 = vmatpush2.xpose.msra.mxu0 0.0
    %812 = vmatprep.subr.mxu0 0.0
    %813 = vmatpush2.xpose.msra.mxu0 0.0
    %814 = vmatprep.subr.mxu0 0.0
    %815 = vmatpush2.xpose.msra.mxu0 0.0
    %816 = vmatprep.subr.mxu0 0.0
    %817 = vmatpush2.xpose.msra.mxu0 0.0
    %818 = vmatprep.subr.mxu0 0.0
    %819 = vmatpush2.xpose.msra.mxu0 0.0
    %820 = vmatprep.subr.mxu0 0.0
    %821 = vmatpush2.xpose.msra.mxu0 0.0
    %822 = vmatprep.subr.mxu0 0.0
    %823 = vmatpush2.xpose.msra.mxu0 0.0
    %824 = vmatprep.subr.mxu0 0.0
    %825 = vmatpush2.xpose.msra.mxu0 0.0
    %826 = vmatprep.subr.mxu0 0.0
    %827 = vmatpush2.xpose.msra.mxu0 0.0
    %828 = vmatprep.subr.mxu0 0.0
    %829 = vmatpush2.xpose.msra.mxu0 0.0
    %830 = vmatprep.mubr.f32.mxu0 0.0
    %v831 = vand.u32 %v608, 4294901760
    %v832 = vsub.f32 %v608, %v831
    %833 = vmatmul.mubr.f32.gmra.mxu0 %v832
    %v834 = vpop.f32.mrf.mxu0
    %v835 = vadd.f32 %v761, %v834
    %v836 = vpop.f32.mrf.mxu0
    %837 = vdwg.mxu0
    %838 = vmatprep.subr.mxu0 0.0
    %839 = vmatpush1.xpose.msra.mxu0 0.0
    %840 = vmatprep.subr.mxu0 0.0
    %841 = vmatpush1.xpose.msra.mxu0 0.0
    %842 = vmatprep.subr.mxu0 0.0
    %843 = vmatpush1.xpose.msra.mxu0 0.0
    %844 = vmatprep.subr.mxu0 0.0
    %845 = vmatpush1.xpose.msra.mxu0 0.0
    %846 = vmatprep.subr.mxu0 0.0
    %847 = vmatpush1.xpose.msra.mxu0 0.0
    %848 = vmatprep.subr.mxu0 0.0
    %849 = vmatpush1.xpose.msra.mxu0 0.0
    %850 = vmatprep.subr.mxu0 0.0
    %851 = vmatpush1.xpose.msra.mxu0 0.0
    %852 = vmatprep.subr.mxu0 0.0
    %853 = vmatpush1.xpose.msra.mxu0 0.0
    %854 = vmatprep.subr.mxu0 0.0
    %855 = vmatpush1.xpose.msra.mxu0 0.0
    %856 = vmatprep.subr.mxu0 0.0
    %857 = vmatpush1.xpose.msra.mxu0 0.0
    %858 = vmatprep.subr.mxu0 0.0
    %859 = vmatpush1.xpose.msra.mxu0 0.0
    %860 = vmatprep.subr.mxu0 0.0
    %861 = vmatpush1.xpose.msra.mxu0 0.0
    %862 = vmatprep.subr.mxu0 0.0
    %863 = vmatpush1.xpose.msra.mxu0 0.0
    %864 = vmatprep.subr.mxu0 0.0
    %865 = vmatpush1.xpose.msra.mxu0 0.0
    %866 = vmatprep.subr.mxu0 0.0
    %867 = vmatpush1.xpose.msra.mxu0 0.0
    %868 = vmatprep.subr.mxu0 0.0
    %v869 = vand.u32 %v610, 4294901760
    %870 = vmatpush1.xpose.msra.mxu0 %v869
    %871 = vmatprep.subr.mxu0 0.0
    %872 = vmatpush2.xpose.msra.mxu0 0.0
    %873 = vmatprep.subr.mxu0 0.0
    %874 = vmatpush2.xpose.msra.mxu0 0.0
    %875 = vmatprep.subr.mxu0 0.0
    %876 = vmatpush2.xpose.msra.mxu0 0.0
    %877 = vmatprep.subr.mxu0 0.0
    %878 = vmatpush2.xpose.msra.mxu0 0.0
    %879 = vmatprep.subr.mxu0 0.0
    %880 = vmatpush2.xpose.msra.mxu0 0.0
    %881 = vmatprep.subr.mxu0 0.0
    %882 = vmatpush2.xpose.msra.mxu0 0.0
    %883 = vmatprep.subr.mxu0 0.0
    %884 = vmatpush2.xpose.msra.mxu0 0.0
    %885 = vmatprep.subr.mxu0 0.0
    %886 = vmatpush2.xpose.msra.mxu0 0.0
    %887 = vmatprep.subr.mxu0 0.0
    %888 = vmatpush2.xpose.msra.mxu0 0.0
    %889 = vmatprep.subr.mxu0 0.0
    %890 = vmatpush2.xpose.msra.mxu0 0.0
    %891 = vmatprep.subr.mxu0 0.0
    %892 = vmatpush2.xpose.msra.mxu0 0.0
    %893 = vmatprep.subr.mxu0 0.0
    %894 = vmatpush2.xpose.msra.mxu0 0.0
    %895 = vmatprep.subr.mxu0 0.0
    %896 = vmatpush2.xpose.msra.mxu0 0.0
    %897 = vmatprep.subr.mxu0 0.0
    %898 = vmatpush2.xpose.msra.mxu0 0.0
    %899 = vmatprep.subr.mxu0 0.0
    %900 = vmatpush2.xpose.msra.mxu0 0.0
    %901 = vmatprep.subr.mxu0 0.0
    %902 = vmatpush2.xpose.msra.mxu0 0.0
    %903 = vmatprep.mubr.f32.mxu0 0.0
    %v904 = vand.u32 %v608, 4294901760
    %v905 = vsub.f32 %v608, %v904
    %v906 = vand.u32 %v905, 4294901760
    %907 = vmatmul.mubr.f32.gmra.mxu0 %v906
    %v908 = vpop.f32.mrf.mxu0
    %v909 = vadd.f32 %v835, %v908
    %v910 = vpop.f32.mrf.mxu0
    %911 = vdwg.mxu0
    %912 = vmatprep.subr.mxu0 0.0
    %913 = vmatpush1.xpose.msra.mxu0 0.0
    %914 = vmatprep.subr.mxu0 0.0
    %915 = vmatpush1.xpose.msra.mxu0 0.0
    %916 = vmatprep.subr.mxu0 0.0
    %917 = vmatpush1.xpose.msra.mxu0 0.0
    %918 = vmatprep.subr.mxu0 0.0
    %919 = vmatpush1.xpose.msra.mxu0 0.0
    %920 = vmatprep.subr.mxu0 0.0
    %921 = vmatpush1.xpose.msra.mxu0 0.0
    %922 = vmatprep.subr.mxu0 0.0
    %923 = vmatpush1.xpose.msra.mxu0 0.0
    %924 = vmatprep.subr.mxu0 0.0
    %925 = vmatpush1.xpose.msra.mxu0 0.0
    %926 = vmatprep.subr.mxu0 0.0
    %927 = vmatpush1.xpose.msra.mxu0 0.0
    %928 = vmatprep.subr.mxu0 0.0
    %929 = vmatpush1.xpose.msra.mxu0 0.0
    %930 = vmatprep.subr.mxu0 0.0
    %931 = vmatpush1.xpose.msra.mxu0 0.0
    %932 = vmatprep.subr.mxu0 0.0
    %933 = vmatpush1.xpose.msra.mxu0 0.0
    %934 = vmatprep.subr.mxu0 0.0
    %935 = vmatpush1.xpose.msra.mxu0 0.0
    %936 = vmatprep.subr.mxu0 0.0
    %937 = vmatpush1.xpose.msra.mxu0 0.0
    %938 = vmatprep.subr.mxu0 0.0
    %939 = vmatpush1.xpose.msra.mxu0 0.0
    %940 = vmatprep.subr.mxu0 0.0
    %941 = vmatpush1.xpose.msra.mxu0 0.0
    %942 = vmatprep.subr.mxu0 0.0
    %v943 = vand.u32 %v610, 4294901760
    %v944 = vsub.f32 %v610, %v943
    %v945 = vand.u32 %v944, 4294901760
    %946 = vmatpush1.xpose.msra.mxu0 %v945
    %947 = vmatprep.subr.mxu0 0.0
    %948 = vmatpush2.xpose.msra.mxu0 0.0
    %949 = vmatprep.subr.mxu0 0.0
    %950 = vmatpush2.xpose.msra.mxu0 0.0
    %951 = vmatprep.subr.mxu0 0.0
    %952 = vmatpush2.xpose.msra.mxu0 0.0
    %953 = vmatprep.subr.mxu0 0.0
    %954 = vmatpush2.xpose.msra.mxu0 0.0
    %955 = vmatprep.subr.mxu0 0.0
    %956 = vmatpush2.xpose.msra.mxu0 0.0
    %957 = vmatprep.subr.mxu0 0.0
    %958 = vmatpush2.xpose.msra.mxu0 0.0
    %959 = vmatprep.subr.mxu0 0.0
    %960 = vmatpush2.xpose.msra.mxu0 0.0
    %961 = vmatprep.subr.mxu0 0.0
    %962 = vmatpush2.xpose.msra.mxu0 0.0
    %963 = vmatprep.subr.mxu0 0.0
    %964 = vmatpush2.xpose.msra.mxu0 0.0
    %965 = vmatprep.subr.mxu0 0.0
    %966 = vmatpush2.xpose.msra.mxu0 0.0
    %967 = vmatprep.subr.mxu0 0.0
    %968 = vmatpush2.xpose.msra.mxu0 0.0
    %969 = vmatprep.subr.mxu0 0.0
    %970 = vmatpush2.xpose.msra.mxu0 0.0
    %971 = vmatprep.subr.mxu0 0.0
    %972 = vmatpush2.xpose.msra.mxu0 0.0
    %973 = vmatprep.subr.mxu0 0.0
    %974 = vmatpush2.xpose.msra.mxu0 0.0
    %975 = vmatprep.subr.mxu0 0.0
    %976 = vmatpush2.xpose.msra.mxu0 0.0
    %977 = vmatprep.subr.mxu0 0.0
    %978 = vmatpush2.xpose.msra.mxu0 0.0
    %979 = vmatprep.mubr.f32.mxu0 0.0
    %v980 = vand.u32 %v608, 4294901760
    %981 = vmatmul.mubr.f32.gmra.mxu0 %v980
    %v982 = vpop.f32.mrf.mxu0
    %v983 = vadd.f32 %v909, %v982
    %v984 = vpop.f32.mrf.mxu0
    %985 = vdwg.mxu0
    %986 = vmatprep.subr.mxu0 0.0
    %987 = vmatpush1.xpose.msra.mxu0 0.0
    %988 = vmatprep.subr.mxu0 0.0
    %989 = vmatpush1.xpose.msra.mxu0 0.0
    %990 = vmatprep.subr.mxu0 0.0
    %991 = vmatpush1.xpose.msra.mxu0 0.0
    %992 = vmatprep.subr.mxu0 0.0
    %993 = vmatpush1.xpose.msra.mxu0 0.0
    %994 = vmatprep.subr.mxu0 0.0
    %995 = vmatpush1.xpose.msra.mxu0 0.0
    %996 = vmatprep.subr.mxu0 0.0
    %997 = vmatpush1.xpose.msra.mxu0 0.0
    %998 = vmatprep.subr.mxu0 0.0
    %999 = vmatpush1.xpose.msra.mxu0 0.0
    %1000 = vmatprep.subr.mxu0 0.0
    %1001 = vmatpush1.xpose.msra.mxu0 0.0
    %1002 = vmatprep.subr.mxu0 0.0
    %1003 = vmatpush1.xpose.msra.mxu0 0.0
    %1004 = vmatprep.subr.mxu0 0.0
    %1005 = vmatpush1.xpose.msra.mxu0 0.0
    %1006 = vmatprep.subr.mxu0 0.0
    %1007 = vmatpush1.xpose.msra.mxu0 0.0
    %1008 = vmatprep.subr.mxu0 0.0
    %1009 = vmatpush1.xpose.msra.mxu0 0.0
    %1010 = vmatprep.subr.mxu0 0.0
    %1011 = vmatpush1.xpose.msra.mxu0 0.0
    %1012 = vmatprep.subr.mxu0 0.0
    %1013 = vmatpush1.xpose.msra.mxu0 0.0
    %1014 = vmatprep.subr.mxu0 0.0
    %1015 = vmatpush1.xpose.msra.mxu0 0.0
    %1016 = vmatprep.subr.mxu0 0.0
    %v1017 = vand.u32 %v610, 4294901760
    %1018 = vmatpush1.xpose.msra.mxu0 %v1017
    %1019 = vmatprep.subr.mxu0 0.0
    %1020 = vmatpush2.xpose.msra.mxu0 0.0
    %1021 = vmatprep.subr.mxu0 0.0
    %1022 = vmatpush2.xpose.msra.mxu0 0.0
    %1023 = vmatprep.subr.mxu0 0.0
    %1024 = vmatpush2.xpose.msra.mxu0 0.0
    %1025 = vmatprep.subr.mxu0 0.0
    %1026 = vmatpush2.xpose.msra.mxu0 0.0
    %1027 = vmatprep.subr.mxu0 0.0
    %1028 = vmatpush2.xpose.msra.mxu0 0.0
    %1029 = vmatprep.subr.mxu0 0.0
    %1030 = vmatpush2.xpose.msra.mxu0 0.0
    %1031 = vmatprep.subr.mxu0 0.0
    %1032 = vmatpush2.xpose.msra.mxu0 0.0
    %1033 = vmatprep.subr.mxu0 0.0
    %1034 = vmatpush2.xpose.msra.mxu0 0.0
    %1035 = vmatprep.subr.mxu0 0.0
    %1036 = vmatpush2.xpose.msra.mxu0 0.0
    %1037 = vmatprep.subr.mxu0 0.0
    %1038 = vmatpush2.xpose.msra.mxu0 0.0
    %1039 = vmatprep.subr.mxu0 0.0
    %1040 = vmatpush2.xpose.msra.mxu0 0.0
    %1041 = vmatprep.subr.mxu0 0.0
    %1042 = vmatpush2.xpose.msra.mxu0 0.0
    %1043 = vmatprep.subr.mxu0 0.0
    %1044 = vmatpush2.xpose.msra.mxu0 0.0
    %1045 = vmatprep.subr.mxu0 0.0
    %1046 = vmatpush2.xpose.msra.mxu0 0.0
    %1047 = vmatprep.subr.mxu0 0.0
    %1048 = vmatpush2.xpose.msra.mxu0 0.0
    %1049 = vmatprep.subr.mxu0 0.0
    %1050 = vmatpush2.xpose.msra.mxu0 0.0
    %1051 = vmatprep.mubr.f32.mxu0 0.0
    %v1052 = vand.u32 %v608, 4294901760
    %1053 = vmatmul.mubr.f32.gmra.mxu0 %v1052
    %v1054 = vpop.f32.mrf.mxu0
    %v1055 = vadd.f32 %v983, %v1054
    %v1056 = vpop.f32.mrf.mxu0
    %1057 = vdwg.mxu0
    %1058 = vrot.lane.b32.xlu0 %v583, 96
    %v1059 = vpop.permute.xlu0 %1058
    %v1060 = vsel %vm607, %v583, 0
    %v1062 = vsel %vm607, %v1059, 0
    %1064 = vmatprep.subr.mxu0 0.0
    %1065 = vmatpush1.xpose.msra.mxu0 0.0
    %1066 = vmatprep.subr.mxu0 0.0
    %1067 = vmatpush1.xpose.msra.mxu0 0.0
    %1068 = vmatprep.subr.mxu0 0.0
    %1069 = vmatpush1.xpose.msra.mxu0 0.0
    %1070 = vmatprep.subr.mxu0 0.0
    %1071 = vmatpush1.xpose.msra.mxu0 0.0
    %1072 = vmatprep.subr.mxu0 0.0
    %1073 = vmatpush1.xpose.msra.mxu0 0.0
    %1074 = vmatprep.subr.mxu0 0.0
    %1075 = vmatpush1.xpose.msra.mxu0 0.0
    %1076 = vmatprep.subr.mxu0 0.0
    %1077 = vmatpush1.xpose.msra.mxu0 0.0
    %1078 = vmatprep.subr.mxu0 0.0
    %1079 = vmatpush1.xpose.msra.mxu0 0.0
    %1080 = vmatprep.subr.mxu0 0.0
    %1081 = vmatpush1.xpose.msra.mxu0 0.0
    %1082 = vmatprep.subr.mxu0 0.0
    %1083 = vmatpush1.xpose.msra.mxu0 0.0
    %1084 = vmatprep.subr.mxu0 0.0
    %1085 = vmatpush1.xpose.msra.mxu0 0.0
    %1086 = vmatprep.subr.mxu0 0.0
    %1087 = vmatpush1.xpose.msra.mxu0 0.0
    %1088 = vmatprep.subr.mxu0 0.0
    %1089 = vmatpush1.xpose.msra.mxu0 0.0
    %1090 = vmatprep.subr.mxu0 0.0
    %1091 = vmatpush1.xpose.msra.mxu0 0.0
    %1092 = vmatprep.subr.mxu0 0.0
    %1093 = vmatpush1.xpose.msra.mxu0 0.0
    %1094 = vmatprep.subr.mxu0 0.0
    %v1095 = vand.u32 %v1062, 4294901760
    %1096 = vmatpush1.xpose.msra.mxu0 %v1095
    %1097 = vmatprep.subr.mxu0 0.0
    %1098 = vmatpush2.xpose.msra.mxu0 0.0
    %1099 = vmatprep.subr.mxu0 0.0
    %1100 = vmatpush2.xpose.msra.mxu0 0.0
    %1101 = vmatprep.subr.mxu0 0.0
    %1102 = vmatpush2.xpose.msra.mxu0 0.0
    %1103 = vmatprep.subr.mxu0 0.0
    %1104 = vmatpush2.xpose.msra.mxu0 0.0
    %1105 = vmatprep.subr.mxu0 0.0
    %1106 = vmatpush2.xpose.msra.mxu0 0.0
    %1107 = vmatprep.subr.mxu0 0.0
    %1108 = vmatpush2.xpose.msra.mxu0 0.0
    %1109 = vmatprep.subr.mxu0 0.0
    %1110 = vmatpush2.xpose.msra.mxu0 0.0
    %1111 = vmatprep.subr.mxu0 0.0
    %1112 = vmatpush2.xpose.msra.mxu0 0.0
    %1113 = vmatprep.subr.mxu0 0.0
    %1114 = vmatpush2.xpose.msra.mxu0 0.0
    %1115 = vmatprep.subr.mxu0 0.0
    %1116 = vmatpush2.xpose.msra.mxu0 0.0
    %1117 = vmatprep.subr.mxu0 0.0
    %1118 = vmatpush2.xpose.msra.mxu0 0.0
    %1119 = vmatprep.subr.mxu0 0.0
    %1120 = vmatpush2.xpose.msra.mxu0 0.0
    %1121 = vmatprep.subr.mxu0 0.0
    %1122 = vmatpush2.xpose.msra.mxu0 0.0
    %1123 = vmatprep.subr.mxu0 0.0
    %1124 = vmatpush2.xpose.msra.mxu0 0.0
    %1125 = vmatprep.subr.mxu0 0.0
    %1126 = vmatpush2.xpose.msra.mxu0 0.0
    %1127 = vmatprep.subr.mxu0 0.0
    %1128 = vmatpush2.xpose.msra.mxu0 0.0
    %1129 = vmatprep.mubr.f32.mxu0 0.0
    %v1130 = vand.u32 %v1060, 4294901760
    %v1131 = vsub.f32 %v1060, %v1130
    %v1132 = vand.u32 %v1131, 4294901760
    %v1133 = vsub.f32 %v1131, %v1132
    %v1134 = vand.u32 %v1133, 4294901760
    %1135 = vmatmul.mubr.f32.gmra.mxu0 %v1134
    %v1136 = vpop.f32.mrf.mxu0
    %v1137 = vadd.f32 0.0, %v1136
    %v1138 = vpop.f32.mrf.mxu0
    %1139 = vdwg.mxu0
    %1140 = vmatprep.subr.mxu0 0.0
    %1141 = vmatpush1.xpose.msra.mxu0 0.0
    %1142 = vmatprep.subr.mxu0 0.0
    %1143 = vmatpush1.xpose.msra.mxu0 0.0
    %1144 = vmatprep.subr.mxu0 0.0
    %1145 = vmatpush1.xpose.msra.mxu0 0.0
    %1146 = vmatprep.subr.mxu0 0.0
    %1147 = vmatpush1.xpose.msra.mxu0 0.0
    %1148 = vmatprep.subr.mxu0 0.0
    %1149 = vmatpush1.xpose.msra.mxu0 0.0
    %1150 = vmatprep.subr.mxu0 0.0
    %1151 = vmatpush1.xpose.msra.mxu0 0.0
    %1152 = vmatprep.subr.mxu0 0.0
    %1153 = vmatpush1.xpose.msra.mxu0 0.0
    %1154 = vmatprep.subr.mxu0 0.0
    %1155 = vmatpush1.xpose.msra.mxu0 0.0
    %1156 = vmatprep.subr.mxu0 0.0
    %1157 = vmatpush1.xpose.msra.mxu0 0.0
    %1158 = vmatprep.subr.mxu0 0.0
    %1159 = vmatpush1.xpose.msra.mxu0 0.0
    %1160 = vmatprep.subr.mxu0 0.0
    %1161 = vmatpush1.xpose.msra.mxu0 0.0
    %1162 = vmatprep.subr.mxu0 0.0
    %1163 = vmatpush1.xpose.msra.mxu0 0.0
    %1164 = vmatprep.subr.mxu0 0.0
    %1165 = vmatpush1.xpose.msra.mxu0 0.0
    %1166 = vmatprep.subr.mxu0 0.0
    %1167 = vmatpush1.xpose.msra.mxu0 0.0
    %1168 = vmatprep.subr.mxu0 0.0
    %1169 = vmatpush1.xpose.msra.mxu0 0.0
    %1170 = vmatprep.subr.mxu0 0.0
    %v1171 = vand.u32 %v1062, 4294901760
    %v1172 = vsub.f32 %v1062, %v1171
    %v1173 = vand.u32 %v1172, 4294901760
    %v1174 = vsub.f32 %v1172, %v1173
    %v1175 = vand.u32 %v1174, 4294901760
    %1176 = vmatpush1.xpose.msra.mxu0 %v1175
    %1177 = vmatprep.subr.mxu0 0.0
    %1178 = vmatpush2.xpose.msra.mxu0 0.0
    %1179 = vmatprep.subr.mxu0 0.0
    %1180 = vmatpush2.xpose.msra.mxu0 0.0
    %1181 = vmatprep.subr.mxu0 0.0
    %1182 = vmatpush2.xpose.msra.mxu0 0.0
    %1183 = vmatprep.subr.mxu0 0.0
    %1184 = vmatpush2.xpose.msra.mxu0 0.0
    %1185 = vmatprep.subr.mxu0 0.0
    %1186 = vmatpush2.xpose.msra.mxu0 0.0
    %1187 = vmatprep.subr.mxu0 0.0
    %1188 = vmatpush2.xpose.msra.mxu0 0.0
    %1189 = vmatprep.subr.mxu0 0.0
    %1190 = vmatpush2.xpose.msra.mxu0 0.0
    %1191 = vmatprep.subr.mxu0 0.0
    %1192 = vmatpush2.xpose.msra.mxu0 0.0
    %1193 = vmatprep.subr.mxu0 0.0
    %1194 = vmatpush2.xpose.msra.mxu0 0.0
    %1195 = vmatprep.subr.mxu0 0.0
    %1196 = vmatpush2.xpose.msra.mxu0 0.0
    %1197 = vmatprep.subr.mxu0 0.0
    %1198 = vmatpush2.xpose.msra.mxu0 0.0
    %1199 = vmatprep.subr.mxu0 0.0
    %1200 = vmatpush2.xpose.msra.mxu0 0.0
    %1201 = vmatprep.subr.mxu0 0.0
    %1202 = vmatpush2.xpose.msra.mxu0 0.0
    %1203 = vmatprep.subr.mxu0 0.0
    %1204 = vmatpush2.xpose.msra.mxu0 0.0
    %1205 = vmatprep.subr.mxu0 0.0
    %1206 = vmatpush2.xpose.msra.mxu0 0.0
    %1207 = vmatprep.subr.mxu0 0.0
    %1208 = vmatpush2.xpose.msra.mxu0 0.0
    %1209 = vmatprep.mubr.f32.mxu0 0.0
    %v1210 = vand.u32 %v1060, 4294901760
    %1211 = vmatmul.mubr.f32.gmra.mxu0 %v1210
    %v1212 = vpop.f32.mrf.mxu0
    %v1213 = vadd.f32 %v1137, %v1212
    %v1214 = vpop.f32.mrf.mxu0
    %1215 = vdwg.mxu0
    %1216 = vmatprep.subr.mxu0 0.0
    %1217 = vmatpush1.xpose.msra.mxu0 0.0
    %1218 = vmatprep.subr.mxu0 0.0
    %1219 = vmatpush1.xpose.msra.mxu0 0.0
    %1220 = vmatprep.subr.mxu0 0.0
    %1221 = vmatpush1.xpose.msra.mxu0 0.0
    %1222 = vmatprep.subr.mxu0 0.0
    %1223 = vmatpush1.xpose.msra.mxu0 0.0
    %1224 = vmatprep.subr.mxu0 0.0
    %1225 = vmatpush1.xpose.msra.mxu0 0.0
    %1226 = vmatprep.subr.mxu0 0.0
    %1227 = vmatpush1.xpose.msra.mxu0 0.0
    %1228 = vmatprep.subr.mxu0 0.0
    %1229 = vmatpush1.xpose.msra.mxu0 0.0
    %1230 = vmatprep.subr.mxu0 0.0
    %1231 = vmatpush1.xpose.msra.mxu0 0.0
    %1232 = vmatprep.subr.mxu0 0.0
    %1233 = vmatpush1.xpose.msra.mxu0 0.0
    %1234 = vmatprep.subr.mxu0 0.0
    %1235 = vmatpush1.xpose.msra.mxu0 0.0
    %1236 = vmatprep.subr.mxu0 0.0
    %1237 = vmatpush1.xpose.msra.mxu0 0.0
    %1238 = vmatprep.subr.mxu0 0.0
    %1239 = vmatpush1.xpose.msra.mxu0 0.0
    %1240 = vmatprep.subr.mxu0 0.0
    %1241 = vmatpush1.xpose.msra.mxu0 0.0
    %1242 = vmatprep.subr.mxu0 0.0
    %1243 = vmatpush1.xpose.msra.mxu0 0.0
    %1244 = vmatprep.subr.mxu0 0.0
    %1245 = vmatpush1.xpose.msra.mxu0 0.0
    %1246 = vmatprep.subr.mxu0 0.0
    %v1247 = vand.u32 %v1062, 4294901760
    %v1248 = vsub.f32 %v1062, %v1247
    %1249 = vmatpush1.xpose.msra.mxu0 %v1248
    %1250 = vmatprep.subr.mxu0 0.0
    %1251 = vmatpush2.xpose.msra.mxu0 0.0
    %1252 = vmatprep.subr.mxu0 0.0
    %1253 = vmatpush2.xpose.msra.mxu0 0.0
    %1254 = vmatprep.subr.mxu0 0.0
    %1255 = vmatpush2.xpose.msra.mxu0 0.0
    %1256 = vmatprep.subr.mxu0 0.0
    %1257 = vmatpush2.xpose.msra.mxu0 0.0
    %1258 = vmatprep.subr.mxu0 0.0
    %1259 = vmatpush2.xpose.msra.mxu0 0.0
    %1260 = vmatprep.subr.mxu0 0.0
    %1261 = vmatpush2.xpose.msra.mxu0 0.0
    %1262 = vmatprep.subr.mxu0 0.0
    %1263 = vmatpush2.xpose.msra.mxu0 0.0
    %1264 = vmatprep.subr.mxu0 0.0
    %1265 = vmatpush2.xpose.msra.mxu0 0.0
    %1266 = vmatprep.subr.mxu0 0.0
    %1267 = vmatpush2.xpose.msra.mxu0 0.0
    %1268 = vmatprep.subr.mxu0 0.0
    %1269 = vmatpush2.xpose.msra.mxu0 0.0
    %1270 = vmatprep.subr.mxu0 0.0
    %1271 = vmatpush2.xpose.msra.mxu0 0.0
    %1272 = vmatprep.subr.mxu0 0.0
    %1273 = vmatpush2.xpose.msra.mxu0 0.0
    %1274 = vmatprep.subr.mxu0 0.0
    %1275 = vmatpush2.xpose.msra.mxu0 0.0
    %1276 = vmatprep.subr.mxu0 0.0
    %1277 = vmatpush2.xpose.msra.mxu0 0.0
    %1278 = vmatprep.subr.mxu0 0.0
    %1279 = vmatpush2.xpose.msra.mxu0 0.0
    %1280 = vmatprep.subr.mxu0 0.0
    %1281 = vmatpush2.xpose.msra.mxu0 0.0
    %1282 = vmatprep.mubr.f32.mxu0 0.0
    %v1283 = vand.u32 %v1060, 4294901760
    %v1284 = vsub.f32 %v1060, %v1283
    %1285 = vmatmul.mubr.f32.gmra.mxu0 %v1284
    %v1286 = vpop.f32.mrf.mxu0
    %v1287 = vadd.f32 %v1213, %v1286
    %v1288 = vpop.f32.mrf.mxu0
    %1289 = vdwg.mxu0
    %1290 = vmatprep.subr.mxu0 0.0
    %1291 = vmatpush1.xpose.msra.mxu0 0.0
    %1292 = vmatprep.subr.mxu0 0.0
    %1293 = vmatpush1.xpose.msra.mxu0 0.0
    %1294 = vmatprep.subr.mxu0 0.0
    %1295 = vmatpush1.xpose.msra.mxu0 0.0
    %1296 = vmatprep.subr.mxu0 0.0
    %1297 = vmatpush1.xpose.msra.mxu0 0.0
    %1298 = vmatprep.subr.mxu0 0.0
    %1299 = vmatpush1.xpose.msra.mxu0 0.0
    %1300 = vmatprep.subr.mxu0 0.0
    %1301 = vmatpush1.xpose.msra.mxu0 0.0
    %1302 = vmatprep.subr.mxu0 0.0
    %1303 = vmatpush1.xpose.msra.mxu0 0.0
    %1304 = vmatprep.subr.mxu0 0.0
    %1305 = vmatpush1.xpose.msra.mxu0 0.0
    %1306 = vmatprep.subr.mxu0 0.0
    %1307 = vmatpush1.xpose.msra.mxu0 0.0
    %1308 = vmatprep.subr.mxu0 0.0
    %1309 = vmatpush1.xpose.msra.mxu0 0.0
    %1310 = vmatprep.subr.mxu0 0.0
    %1311 = vmatpush1.xpose.msra.mxu0 0.0
    %1312 = vmatprep.subr.mxu0 0.0
    %1313 = vmatpush1.xpose.msra.mxu0 0.0
    %1314 = vmatprep.subr.mxu0 0.0
    %1315 = vmatpush1.xpose.msra.mxu0 0.0
    %1316 = vmatprep.subr.mxu0 0.0
    %1317 = vmatpush1.xpose.msra.mxu0 0.0
    %1318 = vmatprep.subr.mxu0 0.0
    %1319 = vmatpush1.xpose.msra.mxu0 0.0
    %1320 = vmatprep.subr.mxu0 0.0
    %v1321 = vand.u32 %v1062, 4294901760
    %1322 = vmatpush1.xpose.msra.mxu0 %v1321
    %1323 = vmatprep.subr.mxu0 0.0
    %1324 = vmatpush2.xpose.msra.mxu0 0.0
    %1325 = vmatprep.subr.mxu0 0.0
    %1326 = vmatpush2.xpose.msra.mxu0 0.0
    %1327 = vmatprep.subr.mxu0 0.0
    %1328 = vmatpush2.xpose.msra.mxu0 0.0
    %1329 = vmatprep.subr.mxu0 0.0
    %1330 = vmatpush2.xpose.msra.mxu0 0.0
    %1331 = vmatprep.subr.mxu0 0.0
    %1332 = vmatpush2.xpose.msra.mxu0 0.0
    %1333 = vmatprep.subr.mxu0 0.0
    %1334 = vmatpush2.xpose.msra.mxu0 0.0
    %1335 = vmatprep.subr.mxu0 0.0
    %1336 = vmatpush2.xpose.msra.mxu0 0.0
    %1337 = vmatprep.subr.mxu0 0.0
    %1338 = vmatpush2.xpose.msra.mxu0 0.0
    %1339 = vmatprep.subr.mxu0 0.0
    %1340 = vmatpush2.xpose.msra.mxu0 0.0
    %1341 = vmatprep.subr.mxu0 0.0
    %1342 = vmatpush2.xpose.msra.mxu0 0.0
    %1343 = vmatprep.subr.mxu0 0.0
    %1344 = vmatpush2.xpose.msra.mxu0 0.0
    %1345 = vmatprep.subr.mxu0 0.0
    %1346 = vmatpush2.xpose.msra.mxu0 0.0
    %1347 = vmatprep.subr.mxu0 0.0
    %1348 = vmatpush2.xpose.msra.mxu0 0.0
    %1349 = vmatprep.subr.mxu0 0.0
    %1350 = vmatpush2.xpose.msra.mxu0 0.0
    %1351 = vmatprep.subr.mxu0 0.0
    %1352 = vmatpush2.xpose.msra.mxu0 0.0
    %1353 = vmatprep.subr.mxu0 0.0
    %1354 = vmatpush2.xpose.msra.mxu0 0.0
    %1355 = vmatprep.mubr.f32.mxu0 0.0
    %v1356 = vand.u32 %v1060, 4294901760
    %v1357 = vsub.f32 %v1060, %v1356
    %v1358 = vand.u32 %v1357, 4294901760
    %1359 = vmatmul.mubr.f32.gmra.mxu0 %v1358
    %v1360 = vpop.f32.mrf.mxu0
    %v1361 = vadd.f32 %v1287, %v1360
    %v1362 = vpop.f32.mrf.mxu0
    %1363 = vdwg.mxu0
    %1364 = vmatprep.subr.mxu0 0.0
    %1365 = vmatpush1.xpose.msra.mxu0 0.0
    %1366 = vmatprep.subr.mxu0 0.0
    %1367 = vmatpush1.xpose.msra.mxu0 0.0
    %1368 = vmatprep.subr.mxu0 0.0
    %1369 = vmatpush1.xpose.msra.mxu0 0.0
    %1370 = vmatprep.subr.mxu0 0.0
    %1371 = vmatpush1.xpose.msra.mxu0 0.0
    %1372 = vmatprep.subr.mxu0 0.0
    %1373 = vmatpush1.xpose.msra.mxu0 0.0
    %1374 = vmatprep.subr.mxu0 0.0
    %1375 = vmatpush1.xpose.msra.mxu0 0.0
    %1376 = vmatprep.subr.mxu0 0.0
    %1377 = vmatpush1.xpose.msra.mxu0 0.0
    %1378 = vmatprep.subr.mxu0 0.0
    %1379 = vmatpush1.xpose.msra.mxu0 0.0
    %1380 = vmatprep.subr.mxu0 0.0
    %1381 = vmatpush1.xpose.msra.mxu0 0.0
    %1382 = vmatprep.subr.mxu0 0.0
    %1383 = vmatpush1.xpose.msra.mxu0 0.0
    %1384 = vmatprep.subr.mxu0 0.0
    %1385 = vmatpush1.xpose.msra.mxu0 0.0
    %1386 = vmatprep.subr.mxu0 0.0
    %1387 = vmatpush1.xpose.msra.mxu0 0.0
    %1388 = vmatprep.subr.mxu0 0.0
    %1389 = vmatpush1.xpose.msra.mxu0 0.0
    %1390 = vmatprep.subr.mxu0 0.0
    %1391 = vmatpush1.xpose.msra.mxu0 0.0
    %1392 = vmatprep.subr.mxu0 0.0
    %1393 = vmatpush1.xpose.msra.mxu0 0.0
    %1394 = vmatprep.subr.mxu0 0.0
    %v1395 = vand.u32 %v1062, 4294901760
    %v1396 = vsub.f32 %v1062, %v1395
    %v1397 = vand.u32 %v1396, 4294901760
    %1398 = vmatpush1.xpose.msra.mxu0 %v1397
    %1399 = vmatprep.subr.mxu0 0.0
    %1400 = vmatpush2.xpose.msra.mxu0 0.0
    %1401 = vmatprep.subr.mxu0 0.0
    %1402 = vmatpush2.xpose.msra.mxu0 0.0
    %1403 = vmatprep.subr.mxu0 0.0
    %1404 = vmatpush2.xpose.msra.mxu0 0.0
    %1405 = vmatprep.subr.mxu0 0.0
    %1406 = vmatpush2.xpose.msra.mxu0 0.0
    %1407 = vmatprep.subr.mxu0 0.0
    %1408 = vmatpush2.xpose.msra.mxu0 0.0
    %1409 = vmatprep.subr.mxu0 0.0
    %1410 = vmatpush2.xpose.msra.mxu0 0.0
    %1411 = vmatprep.subr.mxu0 0.0
    %1412 = vmatpush2.xpose.msra.mxu0 0.0
    %1413 = vmatprep.subr.mxu0 0.0
    %1414 = vmatpush2.xpose.msra.mxu0 0.0
    %1415 = vmatprep.subr.mxu0 0.0
    %1416 = vmatpush2.xpose.msra.mxu0 0.0
    %1417 = vmatprep.subr.mxu0 0.0
    %1418 = vmatpush2.xpose.msra.mxu0 0.0
    %1419 = vmatprep.subr.mxu0 0.0
    %1420 = vmatpush2.xpose.msra.mxu0 0.0
    %1421 = vmatprep.subr.mxu0 0.0
    %1422 = vmatpush2.xpose.msra.mxu0 0.0
    %1423 = vmatprep.subr.mxu0 0.0
    %1424 = vmatpush2.xpose.msra.mxu0 0.0
    %1425 = vmatprep.subr.mxu0 0.0
    %1426 = vmatpush2.xpose.msra.mxu0 0.0
    %1427 = vmatprep.subr.mxu0 0.0
    %1428 = vmatpush2.xpose.msra.mxu0 0.0
    %1429 = vmatprep.subr.mxu0 0.0
    %1430 = vmatpush2.xpose.msra.mxu0 0.0
    %1431 = vmatprep.mubr.f32.mxu0 0.0
    %v1432 = vand.u32 %v1060, 4294901760
    %1433 = vmatmul.mubr.f32.gmra.mxu0 %v1432
    %v1434 = vpop.f32.mrf.mxu0
    %v1435 = vadd.f32 %v1361, %v1434
    %v1436 = vpop.f32.mrf.mxu0
    %1437 = vdwg.mxu0
    %1438 = vmatprep.subr.mxu0 0.0
    %1439 = vmatpush1.xpose.msra.mxu0 0.0
    %1440 = vmatprep.subr.mxu0 0.0
    %1441 = vmatpush1.xpose.msra.mxu0 0.0
    %1442 = vmatprep.subr.mxu0 0.0
    %1443 = vmatpush1.xpose.msra.mxu0 0.0
    %1444 = vmatprep.subr.mxu0 0.0
    %1445 = vmatpush1.xpose.msra.mxu0 0.0
    %1446 = vmatprep.subr.mxu0 0.0
    %1447 = vmatpush1.xpose.msra.mxu0 0.0
    %1448 = vmatprep.subr.mxu0 0.0
    %1449 = vmatpush1.xpose.msra.mxu0 0.0
    %1450 = vmatprep.subr.mxu0 0.0
    %1451 = vmatpush1.xpose.msra.mxu0 0.0
    %1452 = vmatprep.subr.mxu0 0.0
    %1453 = vmatpush1.xpose.msra.mxu0 0.0
    %1454 = vmatprep.subr.mxu0 0.0
    %1455 = vmatpush1.xpose.msra.mxu0 0.0
    %1456 = vmatprep.subr.mxu0 0.0
    %1457 = vmatpush1.xpose.msra.mxu0 0.0
    %1458 = vmatprep.subr.mxu0 0.0
    %1459 = vmatpush1.xpose.msra.mxu0 0.0
    %1460 = vmatprep.subr.mxu0 0.0
    %1461 = vmatpush1.xpose.msra.mxu0 0.0
    %1462 = vmatprep.subr.mxu0 0.0
    %1463 = vmatpush1.xpose.msra.mxu0 0.0
    %1464 = vmatprep.subr.mxu0 0.0
    %1465 = vmatpush1.xpose.msra.mxu0 0.0
    %1466 = vmatprep.subr.mxu0 0.0
    %1467 = vmatpush1.xpose.msra.mxu0 0.0
    %1468 = vmatprep.subr.mxu0 0.0
    %v1469 = vand.u32 %v1062, 4294901760
    %1470 = vmatpush1.xpose.msra.mxu0 %v1469
    %1471 = vmatprep.subr.mxu0 0.0
    %1472 = vmatpush2.xpose.msra.mxu0 0.0
    %1473 = vmatprep.subr.mxu0 0.0
    %1474 = vmatpush2.xpose.msra.mxu0 0.0
    %1475 = vmatprep.subr.mxu0 0.0
    %1476 = vmatpush2.xpose.msra.mxu0 0.0
    %1477 = vmatprep.subr.mxu0 0.0
    %1478 = vmatpush2.xpose.msra.mxu0 0.0
    %1479 = vmatprep.subr.mxu0 0.0
    %1480 = vmatpush2.xpose.msra.mxu0 0.0
    %1481 = vmatprep.subr.mxu0 0.0
    %1482 = vmatpush2.xpose.msra.mxu0 0.0
    %1483 = vmatprep.subr.mxu0 0.0
    %1484 = vmatpush2.xpose.msra.mxu0 0.0
    %1485 = vmatprep.subr.mxu0 0.0
    %1486 = vmatpush2.xpose.msra.mxu0 0.0
    %1487 = vmatprep.subr.mxu0 0.0
    %1488 = vmatpush2.xpose.msra.mxu0 0.0
    %1489 = vmatprep.subr.mxu0 0.0
    %1490 = vmatpush2.xpose.msra.mxu0 0.0
    %1491 = vmatprep.subr.mxu0 0.0
    %1492 = vmatpush2.xpose.msra.mxu0 0.0
    %1493 = vmatprep.subr.mxu0 0.0
    %1494 = vmatpush2.xpose.msra.mxu0 0.0
    %1495 = vmatprep.subr.mxu0 0.0
    %1496 = vmatpush2.xpose.msra.mxu0 0.0
    %1497 = vmatprep.subr.mxu0 0.0
    %1498 = vmatpush2.xpose.msra.mxu0 0.0
    %1499 = vmatprep.subr.mxu0 0.0
    %1500 = vmatpush2.xpose.msra.mxu0 0.0
    %1501 = vmatprep.subr.mxu0 0.0
    %1502 = vmatpush2.xpose.msra.mxu0 0.0
    %1503 = vmatprep.mubr.f32.mxu0 0.0
    %v1504 = vand.u32 %v1060, 4294901760
    %1505 = vmatmul.mubr.f32.gmra.mxu0 %v1504
    %v1506 = vpop.f32.mrf.mxu0
    %v1507 = vadd.f32 %v1435, %v1506
    %v1508 = vpop.f32.mrf.mxu0
    %1509 = vdwg.mxu0
    %1510 = vrot.lane.b32.xlu0 %v589, 96
    %v1511 = vpop.permute.xlu0 %1510
    %v1512 = vsel %vm607, %v589, 0
    %v1514 = vsel %vm607, %v1511, 0
    %1516 = vmatprep.subr.mxu0 0.0
    %1517 = vmatpush1.xpose.msra.mxu0 0.0
    %1518 = vmatprep.subr.mxu0 0.0
    %1519 = vmatpush1.xpose.msra.mxu0 0.0
    %1520 = vmatprep.subr.mxu0 0.0
    %1521 = vmatpush1.xpose.msra.mxu0 0.0
    %1522 = vmatprep.subr.mxu0 0.0
    %1523 = vmatpush1.xpose.msra.mxu0 0.0
    %1524 = vmatprep.subr.mxu0 0.0
    %1525 = vmatpush1.xpose.msra.mxu0 0.0
    %1526 = vmatprep.subr.mxu0 0.0
    %1527 = vmatpush1.xpose.msra.mxu0 0.0
    %1528 = vmatprep.subr.mxu0 0.0
    %1529 = vmatpush1.xpose.msra.mxu0 0.0
    %1530 = vmatprep.subr.mxu0 0.0
    %1531 = vmatpush1.xpose.msra.mxu0 0.0
    %1532 = vmatprep.subr.mxu0 0.0
    %1533 = vmatpush1.xpose.msra.mxu0 0.0
    %1534 = vmatprep.subr.mxu0 0.0
    %1535 = vmatpush1.xpose.msra.mxu0 0.0
    %1536 = vmatprep.subr.mxu0 0.0
    %1537 = vmatpush1.xpose.msra.mxu0 0.0
    %1538 = vmatprep.subr.mxu0 0.0
    %1539 = vmatpush1.xpose.msra.mxu0 0.0
    %1540 = vmatprep.subr.mxu0 0.0
    %1541 = vmatpush1.xpose.msra.mxu0 0.0
    %1542 = vmatprep.subr.mxu0 0.0
    %1543 = vmatpush1.xpose.msra.mxu0 0.0
    %1544 = vmatprep.subr.mxu0 0.0
    %1545 = vmatpush1.xpose.msra.mxu0 0.0
    %1546 = vmatprep.subr.mxu0 0.0
    %v1547 = vand.u32 %v1514, 4294901760
    %1548 = vmatpush1.xpose.msra.mxu0 %v1547
    %1549 = vmatprep.subr.mxu0 0.0
    %1550 = vmatpush2.xpose.msra.mxu0 0.0
    %1551 = vmatprep.subr.mxu0 0.0
    %1552 = vmatpush2.xpose.msra.mxu0 0.0
    %1553 = vmatprep.subr.mxu0 0.0
    %1554 = vmatpush2.xpose.msra.mxu0 0.0
    %1555 = vmatprep.subr.mxu0 0.0
    %1556 = vmatpush2.xpose.msra.mxu0 0.0
    %1557 = vmatprep.subr.mxu0 0.0
    %1558 = vmatpush2.xpose.msra.mxu0 0.0
    %1559 = vmatprep.subr.mxu0 0.0
    %1560 = vmatpush2.xpose.msra.mxu0 0.0
    %1561 = vmatprep.subr.mxu0 0.0
    %1562 = vmatpush2.xpose.msra.mxu0 0.0
    %1563 = vmatprep.subr.mxu0 0.0
    %1564 = vmatpush2.xpose.msra.mxu0 0.0
    %1565 = vmatprep.subr.mxu0 0.0
    %1566 = vmatpush2.xpose.msra.mxu0 0.0
    %1567 = vmatprep.subr.mxu0 0.0
    %1568 = vmatpush2.xpose.msra.mxu0 0.0
    %1569 = vmatprep.subr.mxu0 0.0
    %1570 = vmatpush2.xpose.msra.mxu0 0.0
    %1571 = vmatprep.subr.mxu0 0.0
    %1572 = vmatpush2.xpose.msra.mxu0 0.0
    %1573 = vmatprep.subr.mxu0 0.0
    %1574 = vmatpush2.xpose.msra.mxu0 0.0
    %1575 = vmatprep.subr.mxu0 0.0
    %1576 = vmatpush2.xpose.msra.mxu0 0.0
    %1577 = vmatprep.subr.mxu0 0.0
    %1578 = vmatpush2.xpose.msra.mxu0 0.0
    %1579 = vmatprep.subr.mxu0 0.0
    %1580 = vmatpush2.xpose.msra.mxu0 0.0
    %1581 = vmatprep.mubr.f32.mxu0 0.0
    %v1582 = vand.u32 %v1512, 4294901760
    %v1583 = vsub.f32 %v1512, %v1582
    %v1584 = vand.u32 %v1583, 4294901760
    %v1585 = vsub.f32 %v1583, %v1584
    %v1586 = vand.u32 %v1585, 4294901760
    %1587 = vmatmul.mubr.f32.gmra.mxu0 %v1586
    %v1588 = vpop.f32.mrf.mxu0
    %v1589 = vadd.f32 0.0, %v1588
    %v1590 = vpop.f32.mrf.mxu0
    %1591 = vdwg.mxu0
    %1592 = vmatprep.subr.mxu0 0.0
    %1593 = vmatpush1.xpose.msra.mxu0 0.0
    %1594 = vmatprep.subr.mxu0 0.0
    %1595 = vmatpush1.xpose.msra.mxu0 0.0
    %1596 = vmatprep.subr.mxu0 0.0
    %1597 = vmatpush1.xpose.msra.mxu0 0.0
    %1598 = vmatprep.subr.mxu0 0.0
    %1599 = vmatpush1.xpose.msra.mxu0 0.0
    %1600 = vmatprep.subr.mxu0 0.0
    %1601 = vmatpush1.xpose.msra.mxu0 0.0
    %1602 = vmatprep.subr.mxu0 0.0
    %1603 = vmatpush1.xpose.msra.mxu0 0.0
    %1604 = vmatprep.subr.mxu0 0.0
    %1605 = vmatpush1.xpose.msra.mxu0 0.0
    %1606 = vmatprep.subr.mxu0 0.0
    %1607 = vmatpush1.xpose.msra.mxu0 0.0
    %1608 = vmatprep.subr.mxu0 0.0
    %1609 = vmatpush1.xpose.msra.mxu0 0.0
    %1610 = vmatprep.subr.mxu0 0.0
    %1611 = vmatpush1.xpose.msra.mxu0 0.0
    %1612 = vmatprep.subr.mxu0 0.0
    %1613 = vmatpush1.xpose.msra.mxu0 0.0
    %1614 = vmatprep.subr.mxu0 0.0
    %1615 = vmatpush1.xpose.msra.mxu0 0.0
    %1616 = vmatprep.subr.mxu0 0.0
    %1617 = vmatpush1.xpose.msra.mxu0 0.0
    %1618 = vmatprep.subr.mxu0 0.0
    %1619 = vmatpush1.xpose.msra.mxu0 0.0
    %1620 = vmatprep.subr.mxu0 0.0
    %1621 = vmatpush1.xpose.msra.mxu0 0.0
    %1622 = vmatprep.subr.mxu0 0.0
    %v1623 = vand.u32 %v1514, 4294901760
    %v1624 = vsub.f32 %v1514, %v1623
    %v1625 = vand.u32 %v1624, 4294901760
    %v1626 = vsub.f32 %v1624, %v1625
    %v1627 = vand.u32 %v1626, 4294901760
    %1628 = vmatpush1.xpose.msra.mxu0 %v1627
    %1629 = vmatprep.subr.mxu0 0.0
    %1630 = vmatpush2.xpose.msra.mxu0 0.0
    %1631 = vmatprep.subr.mxu0 0.0
    %1632 = vmatpush2.xpose.msra.mxu0 0.0
    %1633 = vmatprep.subr.mxu0 0.0
    %1634 = vmatpush2.xpose.msra.mxu0 0.0
    %1635 = vmatprep.subr.mxu0 0.0
    %1636 = vmatpush2.xpose.msra.mxu0 0.0
    %1637 = vmatprep.subr.mxu0 0.0
    %1638 = vmatpush2.xpose.msra.mxu0 0.0
    %1639 = vmatprep.subr.mxu0 0.0
    %1640 = vmatpush2.xpose.msra.mxu0 0.0
    %1641 = vmatprep.subr.mxu0 0.0
    %1642 = vmatpush2.xpose.msra.mxu0 0.0
    %1643 = vmatprep.subr.mxu0 0.0
    %1644 = vmatpush2.xpose.msra.mxu0 0.0
    %1645 = vmatprep.subr.mxu0 0.0
    %1646 = vmatpush2.xpose.msra.mxu0 0.0
    %1647 = vmatprep.subr.mxu0 0.0
    %1648 = vmatpush2.xpose.msra.mxu0 0.0
    %1649 = vmatprep.subr.mxu0 0.0
    %1650 = vmatpush2.xpose.msra.mxu0 0.0
    %1651 = vmatprep.subr.mxu0 0.0
    %1652 = vmatpush2.xpose.msra.mxu0 0.0
    %1653 = vmatprep.subr.mxu0 0.0
    %1654 = vmatpush2.xpose.msra.mxu0 0.0
    %1655 = vmatprep.subr.mxu0 0.0
    %1656 = vmatpush2.xpose.msra.mxu0 0.0
    %1657 = vmatprep.subr.mxu0 0.0
    %1658 = vmatpush2.xpose.msra.mxu0 0.0
    %1659 = vmatprep.subr.mxu0 0.0
    %1660 = vmatpush2.xpose.msra.mxu0 0.0
    %1661 = vmatprep.mubr.f32.mxu0 0.0
    %v1662 = vand.u32 %v1512, 4294901760
    %1663 = vmatmul.mubr.f32.gmra.mxu0 %v1662
    %v1664 = vpop.f32.mrf.mxu0
    %v1665 = vadd.f32 %v1589, %v1664
    %v1666 = vpop.f32.mrf.mxu0
    %1667 = vdwg.mxu0
    %1668 = vmatprep.subr.mxu0 0.0
    %1669 = vmatpush1.xpose.msra.mxu0 0.0
    %1670 = vmatprep.subr.mxu0 0.0
    %1671 = vmatpush1.xpose.msra.mxu0 0.0
    %1672 = vmatprep.subr.mxu0 0.0
    %1673 = vmatpush1.xpose.msra.mxu0 0.0
    %1674 = vmatprep.subr.mxu0 0.0
    %1675 = vmatpush1.xpose.msra.mxu0 0.0
    %1676 = vmatprep.subr.mxu0 0.0
    %1677 = vmatpush1.xpose.msra.mxu0 0.0
    %1678 = vmatprep.subr.mxu0 0.0
    %1679 = vmatpush1.xpose.msra.mxu0 0.0
    %1680 = vmatprep.subr.mxu0 0.0
    %1681 = vmatpush1.xpose.msra.mxu0 0.0
    %1682 = vmatprep.subr.mxu0 0.0
    %1683 = vmatpush1.xpose.msra.mxu0 0.0
    %1684 = vmatprep.subr.mxu0 0.0
    %1685 = vmatpush1.xpose.msra.mxu0 0.0
    %1686 = vmatprep.subr.mxu0 0.0
    %1687 = vmatpush1.xpose.msra.mxu0 0.0
    %1688 = vmatprep.subr.mxu0 0.0
    %1689 = vmatpush1.xpose.msra.mxu0 0.0
    %1690 = vmatprep.subr.mxu0 0.0
    %1691 = vmatpush1.xpose.msra.mxu0 0.0
    %1692 = vmatprep.subr.mxu0 0.0
    %1693 = vmatpush1.xpose.msra.mxu0 0.0
    %1694 = vmatprep.subr.mxu0 0.0
    %1695 = vmatpush1.xpose.msra.mxu0 0.0
    %1696 = vmatprep.subr.mxu0 0.0
    %1697 = vmatpush1.xpose.msra.mxu0 0.0
    %1698 = vmatprep.subr.mxu0 0.0
    %v1699 = vand.u32 %v1514, 4294901760
    %v1700 = vsub.f32 %v1514, %v1699
    %1701 = vmatpush1.xpose.msra.mxu0 %v1700
    %1702 = vmatprep.subr.mxu0 0.0
    %1703 = vmatpush2.xpose.msra.mxu0 0.0
    %1704 = vmatprep.subr.mxu0 0.0
    %1705 = vmatpush2.xpose.msra.mxu0 0.0
    %1706 = vmatprep.subr.mxu0 0.0
    %1707 = vmatpush2.xpose.msra.mxu0 0.0
    %1708 = vmatprep.subr.mxu0 0.0
    %1709 = vmatpush2.xpose.msra.mxu0 0.0
    %1710 = vmatprep.subr.mxu0 0.0
    %1711 = vmatpush2.xpose.msra.mxu0 0.0
    %1712 = vmatprep.subr.mxu0 0.0
    %1713 = vmatpush2.xpose.msra.mxu0 0.0
    %1714 = vmatprep.subr.mxu0 0.0
    %1715 = vmatpush2.xpose.msra.mxu0 0.0
    %1716 = vmatprep.subr.mxu0 0.0
    %1717 = vmatpush2.xpose.msra.mxu0 0.0
    %1718 = vmatprep.subr.mxu0 0.0
    %1719 = vmatpush2.xpose.msra.mxu0 0.0
    %1720 = vmatprep.subr.mxu0 0.0
    %1721 = vmatpush2.xpose.msra.mxu0 0.0
    %1722 = vmatprep.subr.mxu0 0.0
    %1723 = vmatpush2.xpose.msra.mxu0 0.0
    %1724 = vmatprep.subr.mxu0 0.0
    %1725 = vmatpush2.xpose.msra.mxu0 0.0
    %1726 = vmatprep.subr.mxu0 0.0
    %1727 = vmatpush2.xpose.msra.mxu0 0.0
    %1728 = vmatprep.subr.mxu0 0.0
    %1729 = vmatpush2.xpose.msra.mxu0 0.0
    %1730 = vmatprep.subr.mxu0 0.0
    %1731 = vmatpush2.xpose.msra.mxu0 0.0
    %1732 = vmatprep.subr.mxu0 0.0
    %1733 = vmatpush2.xpose.msra.mxu0 0.0
    %1734 = vmatprep.mubr.f32.mxu0 0.0
    %v1735 = vand.u32 %v1512, 4294901760
    %v1736 = vsub.f32 %v1512, %v1735
    %1737 = vmatmul.mubr.f32.gmra.mxu0 %v1736
    %v1738 = vpop.f32.mrf.mxu0
    %v1739 = vadd.f32 %v1665, %v1738
    %v1740 = vpop.f32.mrf.mxu0
    %1741 = vdwg.mxu0
    %1742 = vmatprep.subr.mxu0 0.0
    %1743 = vmatpush1.xpose.msra.mxu0 0.0
    %1744 = vmatprep.subr.mxu0 0.0
    %1745 = vmatpush1.xpose.msra.mxu0 0.0
    %1746 = vmatprep.subr.mxu0 0.0
    %1747 = vmatpush1.xpose.msra.mxu0 0.0
    %1748 = vmatprep.subr.mxu0 0.0
    %1749 = vmatpush1.xpose.msra.mxu0 0.0
    %1750 = vmatprep.subr.mxu0 0.0
    %1751 = vmatpush1.xpose.msra.mxu0 0.0
    %1752 = vmatprep.subr.mxu0 0.0
    %1753 = vmatpush1.xpose.msra.mxu0 0.0
    %1754 = vmatprep.subr.mxu0 0.0
    %1755 = vmatpush1.xpose.msra.mxu0 0.0
    %1756 = vmatprep.subr.mxu0 0.0
    %1757 = vmatpush1.xpose.msra.mxu0 0.0
    %1758 = vmatprep.subr.mxu0 0.0
    %1759 = vmatpush1.xpose.msra.mxu0 0.0
    %1760 = vmatprep.subr.mxu0 0.0
    %1761 = vmatpush1.xpose.msra.mxu0 0.0
    %1762 = vmatprep.subr.mxu0 0.0
    %1763 = vmatpush1.xpose.msra.mxu0 0.0
    %1764 = vmatprep.subr.mxu0 0.0
    %1765 = vmatpush1.xpose.msra.mxu0 0.0
    %1766 = vmatprep.subr.mxu0 0.0
    %1767 = vmatpush1.xpose.msra.mxu0 0.0
    %1768 = vmatprep.subr.mxu0 0.0
    %1769 = vmatpush1.xpose.msra.mxu0 0.0
    %1770 = vmatprep.subr.mxu0 0.0
    %1771 = vmatpush1.xpose.msra.mxu0 0.0
    %1772 = vmatprep.subr.mxu0 0.0
    %v1773 = vand.u32 %v1514, 4294901760
    %1774 = vmatpush1.xpose.msra.mxu0 %v1773
    %1775 = vmatprep.subr.mxu0 0.0
    %1776 = vmatpush2.xpose.msra.mxu0 0.0
    %1777 = vmatprep.subr.mxu0 0.0
    %1778 = vmatpush2.xpose.msra.mxu0 0.0
    %1779 = vmatprep.subr.mxu0 0.0
    %1780 = vmatpush2.xpose.msra.mxu0 0.0
    %1781 = vmatprep.subr.mxu0 0.0
    %1782 = vmatpush2.xpose.msra.mxu0 0.0
    %1783 = vmatprep.subr.mxu0 0.0
    %1784 = vmatpush2.xpose.msra.mxu0 0.0
    %1785 = vmatprep.subr.mxu0 0.0
    %1786 = vmatpush2.xpose.msra.mxu0 0.0
    %1787 = vmatprep.subr.mxu0 0.0
    %1788 = vmatpush2.xpose.msra.mxu0 0.0
    %1789 = vmatprep.subr.mxu0 0.0
    %1790 = vmatpush2.xpose.msra.mxu0 0.0
    %1791 = vmatprep.subr.mxu0 0.0
    %1792 = vmatpush2.xpose.msra.mxu0 0.0
    %1793 = vmatprep.subr.mxu0 0.0
    %1794 = vmatpush2.xpose.msra.mxu0 0.0
    %1795 = vmatprep.subr.mxu0 0.0
    %1796 = vmatpush2.xpose.msra.mxu0 0.0
    %1797 = vmatprep.subr.mxu0 0.0
    %1798 = vmatpush2.xpose.msra.mxu0 0.0
    %1799 = vmatprep.subr.mxu0 0.0
    %1800 = vmatpush2.xpose.msra.mxu0 0.0
    %1801 = vmatprep.subr.mxu0 0.0
    %1802 = vmatpush2.xpose.msra.mxu0 0.0
    %1803 = vmatprep.subr.mxu0 0.0
    %1804 = vmatpush2.xpose.msra.mxu0 0.0
    %1805 = vmatprep.subr.mxu0 0.0
    %1806 = vmatpush2.xpose.msra.mxu0 0.0
    %1807 = vmatprep.mubr.f32.mxu0 0.0
    %v1808 = vand.u32 %v1512, 4294901760
    %v1809 = vsub.f32 %v1512, %v1808
    %v1810 = vand.u32 %v1809, 4294901760
    %1811 = vmatmul.mubr.f32.gmra.mxu0 %v1810
    %v1812 = vpop.f32.mrf.mxu0
    %v1813 = vadd.f32 %v1739, %v1812
    %v1814 = vpop.f32.mrf.mxu0
    %1815 = vdwg.mxu0
    %1816 = vmatprep.subr.mxu0 0.0
    %1817 = vmatpush1.xpose.msra.mxu0 0.0
    %1818 = vmatprep.subr.mxu0 0.0
    %1819 = vmatpush1.xpose.msra.mxu0 0.0
    %1820 = vmatprep.subr.mxu0 0.0
    %1821 = vmatpush1.xpose.msra.mxu0 0.0
    %1822 = vmatprep.subr.mxu0 0.0
    %1823 = vmatpush1.xpose.msra.mxu0 0.0
    %1824 = vmatprep.subr.mxu0 0.0
    %1825 = vmatpush1.xpose.msra.mxu0 0.0
    %1826 = vmatprep.subr.mxu0 0.0
    %1827 = vmatpush1.xpose.msra.mxu0 0.0
    %1828 = vmatprep.subr.mxu0 0.0
    %1829 = vmatpush1.xpose.msra.mxu0 0.0
    %1830 = vmatprep.subr.mxu0 0.0
    %1831 = vmatpush1.xpose.msra.mxu0 0.0
    %1832 = vmatprep.subr.mxu0 0.0
    %1833 = vmatpush1.xpose.msra.mxu0 0.0
    %1834 = vmatprep.subr.mxu0 0.0
    %1835 = vmatpush1.xpose.msra.mxu0 0.0
    %1836 = vmatprep.subr.mxu0 0.0
    %1837 = vmatpush1.xpose.msra.mxu0 0.0
    %1838 = vmatprep.subr.mxu0 0.0
    %1839 = vmatpush1.xpose.msra.mxu0 0.0
    %1840 = vmatprep.subr.mxu0 0.0
    %1841 = vmatpush1.xpose.msra.mxu0 0.0
    %1842 = vmatprep.subr.mxu0 0.0
    %1843 = vmatpush1.xpose.msra.mxu0 0.0
    %1844 = vmatprep.subr.mxu0 0.0
    %1845 = vmatpush1.xpose.msra.mxu0 0.0
    %1846 = vmatprep.subr.mxu0 0.0
    %v1847 = vand.u32 %v1514, 4294901760
    %v1848 = vsub.f32 %v1514, %v1847
    %v1849 = vand.u32 %v1848, 4294901760
    %1850 = vmatpush1.xpose.msra.mxu0 %v1849
    %1851 = vmatprep.subr.mxu0 0.0
    %1852 = vmatpush2.xpose.msra.mxu0 0.0
    %1853 = vmatprep.subr.mxu0 0.0
    %1854 = vmatpush2.xpose.msra.mxu0 0.0
    %1855 = vmatprep.subr.mxu0 0.0
    %1856 = vmatpush2.xpose.msra.mxu0 0.0
    %1857 = vmatprep.subr.mxu0 0.0
    %1858 = vmatpush2.xpose.msra.mxu0 0.0
    %1859 = vmatprep.subr.mxu0 0.0
    %1860 = vmatpush2.xpose.msra.mxu0 0.0
    %1861 = vmatprep.subr.mxu0 0.0
    %1862 = vmatpush2.xpose.msra.mxu0 0.0
    %1863 = vmatprep.subr.mxu0 0.0
    %1864 = vmatpush2.xpose.msra.mxu0 0.0
    %1865 = vmatprep.subr.mxu0 0.0
    %1866 = vmatpush2.xpose.msra.mxu0 0.0
    %1867 = vmatprep.subr.mxu0 0.0
    %1868 = vmatpush2.xpose.msra.mxu0 0.0
    %1869 = vmatprep.subr.mxu0 0.0
    %1870 = vmatpush2.xpose.msra.mxu0 0.0
    %1871 = vmatprep.subr.mxu0 0.0
    %1872 = vmatpush2.xpose.msra.mxu0 0.0
    %1873 = vmatprep.subr.mxu0 0.0
    %1874 = vmatpush2.xpose.msra.mxu0 0.0
    %1875 = vmatprep.subr.mxu0 0.0
    %1876 = vmatpush2.xpose.msra.mxu0 0.0
    %1877 = vmatprep.subr.mxu0 0.0
    %1878 = vmatpush2.xpose.msra.mxu0 0.0
    %1879 = vmatprep.subr.mxu0 0.0
    %1880 = vmatpush2.xpose.msra.mxu0 0.0
    %1881 = vmatprep.subr.mxu0 0.0
    %1882 = vmatpush2.xpose.msra.mxu0 0.0
    %1883 = vmatprep.mubr.f32.mxu0 0.0
    %v1884 = vand.u32 %v1512, 4294901760
    %1885 = vmatmul.mubr.f32.gmra.mxu0 %v1884
    %v1886 = vpop.f32.mrf.mxu0
    %v1887 = vadd.f32 %v1813, %v1886
    %v1888 = vpop.f32.mrf.mxu0
    %1889 = vdwg.mxu0
    %1890 = vmatprep.subr.mxu0 0.0
    %1891 = vmatpush1.xpose.msra.mxu0 0.0
    %1892 = vmatprep.subr.mxu0 0.0
    %1893 = vmatpush1.xpose.msra.mxu0 0.0
    %1894 = vmatprep.subr.mxu0 0.0
    %1895 = vmatpush1.xpose.msra.mxu0 0.0
    %1896 = vmatprep.subr.mxu0 0.0
    %1897 = vmatpush1.xpose.msra.mxu0 0.0
    %1898 = vmatprep.subr.mxu0 0.0
    %1899 = vmatpush1.xpose.msra.mxu0 0.0
    %1900 = vmatprep.subr.mxu0 0.0
    %1901 = vmatpush1.xpose.msra.mxu0 0.0
    %1902 = vmatprep.subr.mxu0 0.0
    %1903 = vmatpush1.xpose.msra.mxu0 0.0
    %1904 = vmatprep.subr.mxu0 0.0
    %1905 = vmatpush1.xpose.msra.mxu0 0.0
    %1906 = vmatprep.subr.mxu0 0.0
    %1907 = vmatpush1.xpose.msra.mxu0 0.0
    %1908 = vmatprep.subr.mxu0 0.0
    %1909 = vmatpush1.xpose.msra.mxu0 0.0
    %1910 = vmatprep.subr.mxu0 0.0
    %1911 = vmatpush1.xpose.msra.mxu0 0.0
    %1912 = vmatprep.subr.mxu0 0.0
    %1913 = vmatpush1.xpose.msra.mxu0 0.0
    %1914 = vmatprep.subr.mxu0 0.0
    %1915 = vmatpush1.xpose.msra.mxu0 0.0
    %1916 = vmatprep.subr.mxu0 0.0
    %1917 = vmatpush1.xpose.msra.mxu0 0.0
    %1918 = vmatprep.subr.mxu0 0.0
    %1919 = vmatpush1.xpose.msra.mxu0 0.0
    %1920 = vmatprep.subr.mxu0 0.0
    %v1921 = vand.u32 %v1514, 4294901760
    %1922 = vmatpush1.xpose.msra.mxu0 %v1921
    %1923 = vmatprep.subr.mxu0 0.0
    %1924 = vmatpush2.xpose.msra.mxu0 0.0
    %1925 = vmatprep.subr.mxu0 0.0
    %1926 = vmatpush2.xpose.msra.mxu0 0.0
    %1927 = vmatprep.subr.mxu0 0.0
    %1928 = vmatpush2.xpose.msra.mxu0 0.0
    %1929 = vmatprep.subr.mxu0 0.0
    %1930 = vmatpush2.xpose.msra.mxu0 0.0
    %1931 = vmatprep.subr.mxu0 0.0
    %1932 = vmatpush2.xpose.msra.mxu0 0.0
    %1933 = vmatprep.subr.mxu0 0.0
    %1934 = vmatpush2.xpose.msra.mxu0 0.0
    %1935 = vmatprep.subr.mxu0 0.0
    %1936 = vmatpush2.xpose.msra.mxu0 0.0
    %1937 = vmatprep.subr.mxu0 0.0
    %1938 = vmatpush2.xpose.msra.mxu0 0.0
    %1939 = vmatprep.subr.mxu0 0.0
    %1940 = vmatpush2.xpose.msra.mxu0 0.0
    %1941 = vmatprep.subr.mxu0 0.0
    %1942 = vmatpush2.xpose.msra.mxu0 0.0
    %1943 = vmatprep.subr.mxu0 0.0
    %1944 = vmatpush2.xpose.msra.mxu0 0.0
    %1945 = vmatprep.subr.mxu0 0.0
    %1946 = vmatpush2.xpose.msra.mxu0 0.0
    %1947 = vmatprep.subr.mxu0 0.0
    %1948 = vmatpush2.xpose.msra.mxu0 0.0
    %1949 = vmatprep.subr.mxu0 0.0
    %1950 = vmatpush2.xpose.msra.mxu0 0.0
    %1951 = vmatprep.subr.mxu0 0.0
    %1952 = vmatpush2.xpose.msra.mxu0 0.0
    %1953 = vmatprep.subr.mxu0 0.0
    %1954 = vmatpush2.xpose.msra.mxu0 0.0
    %1955 = vmatprep.mubr.f32.mxu0 0.0
    %v1956 = vand.u32 %v1512, 4294901760
    %1957 = vmatmul.mubr.f32.gmra.mxu0 %v1956
    %v1958 = vpop.f32.mrf.mxu0
    %v1959 = vadd.f32 %v1887, %v1958
    %v1960 = vpop.f32.mrf.mxu0
    %1961 = vdwg.mxu0
    %1962 = vrot.lane.b32.xlu0 %v591, 96
    %v1963 = vpop.permute.xlu0 %1962
    %v1964 = vsel %vm607, %v591, 0
    %v1966 = vsel %vm607, %v1963, 0
    %1968 = vmatprep.subr.mxu0 0.0
    %1969 = vmatpush1.xpose.msra.mxu0 0.0
    %1970 = vmatprep.subr.mxu0 0.0
    %1971 = vmatpush1.xpose.msra.mxu0 0.0
    %1972 = vmatprep.subr.mxu0 0.0
    %1973 = vmatpush1.xpose.msra.mxu0 0.0
    %1974 = vmatprep.subr.mxu0 0.0
    %1975 = vmatpush1.xpose.msra.mxu0 0.0
    %1976 = vmatprep.subr.mxu0 0.0
    %1977 = vmatpush1.xpose.msra.mxu0 0.0
    %1978 = vmatprep.subr.mxu0 0.0
    %1979 = vmatpush1.xpose.msra.mxu0 0.0
    %1980 = vmatprep.subr.mxu0 0.0
    %1981 = vmatpush1.xpose.msra.mxu0 0.0
    %1982 = vmatprep.subr.mxu0 0.0
    %1983 = vmatpush1.xpose.msra.mxu0 0.0
    %1984 = vmatprep.subr.mxu0 0.0
    %1985 = vmatpush1.xpose.msra.mxu0 0.0
    %1986 = vmatprep.subr.mxu0 0.0
    %1987 = vmatpush1.xpose.msra.mxu0 0.0
    %1988 = vmatprep.subr.mxu0 0.0
    %1989 = vmatpush1.xpose.msra.mxu0 0.0
    %1990 = vmatprep.subr.mxu0 0.0
    %1991 = vmatpush1.xpose.msra.mxu0 0.0
    %1992 = vmatprep.subr.mxu0 0.0
    %1993 = vmatpush1.xpose.msra.mxu0 0.0
    %1994 = vmatprep.subr.mxu0 0.0
    %1995 = vmatpush1.xpose.msra.mxu0 0.0
    %1996 = vmatprep.subr.mxu0 0.0
    %1997 = vmatpush1.xpose.msra.mxu0 0.0
    %1998 = vmatprep.subr.mxu0 0.0
    %v1999 = vand.u32 %v1966, 4294901760
    %2000 = vmatpush1.xpose.msra.mxu0 %v1999
    %2001 = vmatprep.subr.mxu0 0.0
    %2002 = vmatpush2.xpose.msra.mxu0 0.0
    %2003 = vmatprep.subr.mxu0 0.0
    %2004 = vmatpush2.xpose.msra.mxu0 0.0
    %2005 = vmatprep.subr.mxu0 0.0
    %2006 = vmatpush2.xpose.msra.mxu0 0.0
    %2007 = vmatprep.subr.mxu0 0.0
    %2008 = vmatpush2.xpose.msra.mxu0 0.0
    %2009 = vmatprep.subr.mxu0 0.0
    %2010 = vmatpush2.xpose.msra.mxu0 0.0
    %2011 = vmatprep.subr.mxu0 0.0
    %2012 = vmatpush2.xpose.msra.mxu0 0.0
    %2013 = vmatprep.subr.mxu0 0.0
    %2014 = vmatpush2.xpose.msra.mxu0 0.0
    %2015 = vmatprep.subr.mxu0 0.0
    %2016 = vmatpush2.xpose.msra.mxu0 0.0
    %2017 = vmatprep.subr.mxu0 0.0
    %2018 = vmatpush2.xpose.msra.mxu0 0.0
    %2019 = vmatprep.subr.mxu0 0.0
    %2020 = vmatpush2.xpose.msra.mxu0 0.0
    %2021 = vmatprep.subr.mxu0 0.0
    %2022 = vmatpush2.xpose.msra.mxu0 0.0
    %2023 = vmatprep.subr.mxu0 0.0
    %2024 = vmatpush2.xpose.msra.mxu0 0.0
    %2025 = vmatprep.subr.mxu0 0.0
    %2026 = vmatpush2.xpose.msra.mxu0 0.0
    %2027 = vmatprep.subr.mxu0 0.0
    %2028 = vmatpush2.xpose.msra.mxu0 0.0
    %2029 = vmatprep.subr.mxu0 0.0
    %2030 = vmatpush2.xpose.msra.mxu0 0.0
    %2031 = vmatprep.subr.mxu0 0.0
    %2032 = vmatpush2.xpose.msra.mxu0 0.0
    %2033 = vmatprep.mubr.f32.mxu0 0.0
    %v2034 = vand.u32 %v1964, 4294901760
    %v2035 = vsub.f32 %v1964, %v2034
    %v2036 = vand.u32 %v2035, 4294901760
    %v2037 = vsub.f32 %v2035, %v2036
    %v2038 = vand.u32 %v2037, 4294901760
    %2039 = vmatmul.mubr.f32.gmra.mxu0 %v2038
    %v2040 = vpop.f32.mrf.mxu0
    %v2041 = vadd.f32 0.0, %v2040
    %v2042 = vpop.f32.mrf.mxu0
    %2043 = vdwg.mxu0
    %2044 = vmatprep.subr.mxu0 0.0
    %2045 = vmatpush1.xpose.msra.mxu0 0.0
    %2046 = vmatprep.subr.mxu0 0.0
    %2047 = vmatpush1.xpose.msra.mxu0 0.0
    %2048 = vmatprep.subr.mxu0 0.0
    %2049 = vmatpush1.xpose.msra.mxu0 0.0
    %2050 = vmatprep.subr.mxu0 0.0
    %2051 = vmatpush1.xpose.msra.mxu0 0.0
    %2052 = vmatprep.subr.mxu0 0.0
    %2053 = vmatpush1.xpose.msra.mxu0 0.0
    %2054 = vmatprep.subr.mxu0 0.0
    %2055 = vmatpush1.xpose.msra.mxu0 0.0
    %2056 = vmatprep.subr.mxu0 0.0
    %2057 = vmatpush1.xpose.msra.mxu0 0.0
    %2058 = vmatprep.subr.mxu0 0.0
    %2059 = vmatpush1.xpose.msra.mxu0 0.0
    %2060 = vmatprep.subr.mxu0 0.0
    %2061 = vmatpush1.xpose.msra.mxu0 0.0
    %2062 = vmatprep.subr.mxu0 0.0
    %2063 = vmatpush1.xpose.msra.mxu0 0.0
    %2064 = vmatprep.subr.mxu0 0.0
    %2065 = vmatpush1.xpose.msra.mxu0 0.0
    %2066 = vmatprep.subr.mxu0 0.0
    %2067 = vmatpush1.xpose.msra.mxu0 0.0
    %2068 = vmatprep.subr.mxu0 0.0
    %2069 = vmatpush1.xpose.msra.mxu0 0.0
    %2070 = vmatprep.subr.mxu0 0.0
    %2071 = vmatpush1.xpose.msra.mxu0 0.0
    %2072 = vmatprep.subr.mxu0 0.0
    %2073 = vmatpush1.xpose.msra.mxu0 0.0
    %2074 = vmatprep.subr.mxu0 0.0
    %v2075 = vand.u32 %v1966, 4294901760
    %v2076 = vsub.f32 %v1966, %v2075
    %v2077 = vand.u32 %v2076, 4294901760
    %v2078 = vsub.f32 %v2076, %v2077
    %v2079 = vand.u32 %v2078, 4294901760
    %2080 = vmatpush1.xpose.msra.mxu0 %v2079
    %2081 = vmatprep.subr.mxu0 0.0
    %2082 = vmatpush2.xpose.msra.mxu0 0.0
    %2083 = vmatprep.subr.mxu0 0.0
    %2084 = vmatpush2.xpose.msra.mxu0 0.0
    %2085 = vmatprep.subr.mxu0 0.0
    %2086 = vmatpush2.xpose.msra.mxu0 0.0
    %2087 = vmatprep.subr.mxu0 0.0
    %2088 = vmatpush2.xpose.msra.mxu0 0.0
    %2089 = vmatprep.subr.mxu0 0.0
    %2090 = vmatpush2.xpose.msra.mxu0 0.0
    %2091 = vmatprep.subr.mxu0 0.0
    %2092 = vmatpush2.xpose.msra.mxu0 0.0
    %2093 = vmatprep.subr.mxu0 0.0
    %2094 = vmatpush2.xpose.msra.mxu0 0.0
    %2095 = vmatprep.subr.mxu0 0.0
    %2096 = vmatpush2.xpose.msra.mxu0 0.0
    %2097 = vmatprep.subr.mxu0 0.0
    %2098 = vmatpush2.xpose.msra.mxu0 0.0
    %2099 = vmatprep.subr.mxu0 0.0
    %2100 = vmatpush2.xpose.msra.mxu0 0.0
    %2101 = vmatprep.subr.mxu0 0.0
    %2102 = vmatpush2.xpose.msra.mxu0 0.0
    %2103 = vmatprep.subr.mxu0 0.0
    %2104 = vmatpush2.xpose.msra.mxu0 0.0
    %2105 = vmatprep.subr.mxu0 0.0
    %2106 = vmatpush2.xpose.msra.mxu0 0.0
    %2107 = vmatprep.subr.mxu0 0.0
    %2108 = vmatpush2.xpose.msra.mxu0 0.0
    %2109 = vmatprep.subr.mxu0 0.0
    %2110 = vmatpush2.xpose.msra.mxu0 0.0
    %2111 = vmatprep.subr.mxu0 0.0
    %2112 = vmatpush2.xpose.msra.mxu0 0.0
    %2113 = vmatprep.mubr.f32.mxu0 0.0
    %v2114 = vand.u32 %v1964, 4294901760
    %2115 = vmatmul.mubr.f32.gmra.mxu0 %v2114
    %v2116 = vpop.f32.mrf.mxu0
    %v2117 = vadd.f32 %v2041, %v2116
    %v2118 = vpop.f32.mrf.mxu0
    %2119 = vdwg.mxu0
    %2120 = vmatprep.subr.mxu0 0.0
    %2121 = vmatpush1.xpose.msra.mxu0 0.0
    %2122 = vmatprep.subr.mxu0 0.0
    %2123 = vmatpush1.xpose.msra.mxu0 0.0
    %2124 = vmatprep.subr.mxu0 0.0
    %2125 = vmatpush1.xpose.msra.mxu0 0.0
    %2126 = vmatprep.subr.mxu0 0.0
    %2127 = vmatpush1.xpose.msra.mxu0 0.0
    %2128 = vmatprep.subr.mxu0 0.0
    %2129 = vmatpush1.xpose.msra.mxu0 0.0
    %2130 = vmatprep.subr.mxu0 0.0
    %2131 = vmatpush1.xpose.msra.mxu0 0.0
    %2132 = vmatprep.subr.mxu0 0.0
    %2133 = vmatpush1.xpose.msra.mxu0 0.0
    %2134 = vmatprep.subr.mxu0 0.0
    %2135 = vmatpush1.xpose.msra.mxu0 0.0
    %2136 = vmatprep.subr.mxu0 0.0
    %2137 = vmatpush1.xpose.msra.mxu0 0.0
    %2138 = vmatprep.subr.mxu0 0.0
    %2139 = vmatpush1.xpose.msra.mxu0 0.0
    %2140 = vmatprep.subr.mxu0 0.0
    %2141 = vmatpush1.xpose.msra.mxu0 0.0
    %2142 = vmatprep.subr.mxu0 0.0
    %2143 = vmatpush1.xpose.msra.mxu0 0.0
    %2144 = vmatprep.subr.mxu0 0.0
    %2145 = vmatpush1.xpose.msra.mxu0 0.0
    %2146 = vmatprep.subr.mxu0 0.0
    %2147 = vmatpush1.xpose.msra.mxu0 0.0
    %2148 = vmatprep.subr.mxu0 0.0
    %2149 = vmatpush1.xpose.msra.mxu0 0.0
    %2150 = vmatprep.subr.mxu0 0.0
    %v2151 = vand.u32 %v1966, 4294901760
    %v2152 = vsub.f32 %v1966, %v2151
    %2153 = vmatpush1.xpose.msra.mxu0 %v2152
    %2154 = vmatprep.subr.mxu0 0.0
    %2155 = vmatpush2.xpose.msra.mxu0 0.0
    %2156 = vmatprep.subr.mxu0 0.0
    %2157 = vmatpush2.xpose.msra.mxu0 0.0
    %2158 = vmatprep.subr.mxu0 0.0
    %2159 = vmatpush2.xpose.msra.mxu0 0.0
    %2160 = vmatprep.subr.mxu0 0.0
    %2161 = vmatpush2.xpose.msra.mxu0 0.0
    %2162 = vmatprep.subr.mxu0 0.0
    %2163 = vmatpush2.xpose.msra.mxu0 0.0
    %2164 = vmatprep.subr.mxu0 0.0
    %2165 = vmatpush2.xpose.msra.mxu0 0.0
    %2166 = vmatprep.subr.mxu0 0.0
    %2167 = vmatpush2.xpose.msra.mxu0 0.0
    %2168 = vmatprep.subr.mxu0 0.0
    %2169 = vmatpush2.xpose.msra.mxu0 0.0
    %2170 = vmatprep.subr.mxu0 0.0
    %2171 = vmatpush2.xpose.msra.mxu0 0.0
    %2172 = vmatprep.subr.mxu0 0.0
    %2173 = vmatpush2.xpose.msra.mxu0 0.0
    %2174 = vmatprep.subr.mxu0 0.0
    %2175 = vmatpush2.xpose.msra.mxu0 0.0
    %2176 = vmatprep.subr.mxu0 0.0
    %2177 = vmatpush2.xpose.msra.mxu0 0.0
    %2178 = vmatprep.subr.mxu0 0.0
    %2179 = vmatpush2.xpose.msra.mxu0 0.0
    %2180 = vmatprep.subr.mxu0 0.0
    %2181 = vmatpush2.xpose.msra.mxu0 0.0
    %2182 = vmatprep.subr.mxu0 0.0
    %2183 = vmatpush2.xpose.msra.mxu0 0.0
    %2184 = vmatprep.subr.mxu0 0.0
    %2185 = vmatpush2.xpose.msra.mxu0 0.0
    %2186 = vmatprep.mubr.f32.mxu0 0.0
    %v2187 = vand.u32 %v1964, 4294901760
    %v2188 = vsub.f32 %v1964, %v2187
    %2189 = vmatmul.mubr.f32.gmra.mxu0 %v2188
    %v2190 = vpop.f32.mrf.mxu0
    %v2191 = vadd.f32 %v2117, %v2190
    %v2192 = vpop.f32.mrf.mxu0
    %2193 = vdwg.mxu0
    %2194 = vmatprep.subr.mxu0 0.0
    %2195 = vmatpush1.xpose.msra.mxu0 0.0
    %2196 = vmatprep.subr.mxu0 0.0
    %2197 = vmatpush1.xpose.msra.mxu0 0.0
    %2198 = vmatprep.subr.mxu0 0.0
    %2199 = vmatpush1.xpose.msra.mxu0 0.0
    %2200 = vmatprep.subr.mxu0 0.0
    %2201 = vmatpush1.xpose.msra.mxu0 0.0
    %2202 = vmatprep.subr.mxu0 0.0
    %2203 = vmatpush1.xpose.msra.mxu0 0.0
    %2204 = vmatprep.subr.mxu0 0.0
    %2205 = vmatpush1.xpose.msra.mxu0 0.0
    %2206 = vmatprep.subr.mxu0 0.0
    %2207 = vmatpush1.xpose.msra.mxu0 0.0
    %2208 = vmatprep.subr.mxu0 0.0
    %2209 = vmatpush1.xpose.msra.mxu0 0.0
    %2210 = vmatprep.subr.mxu0 0.0
    %2211 = vmatpush1.xpose.msra.mxu0 0.0
    %2212 = vmatprep.subr.mxu0 0.0
    %2213 = vmatpush1.xpose.msra.mxu0 0.0
    %2214 = vmatprep.subr.mxu0 0.0
    %2215 = vmatpush1.xpose.msra.mxu0 0.0
    %2216 = vmatprep.subr.mxu0 0.0
    %2217 = vmatpush1.xpose.msra.mxu0 0.0
    %2218 = vmatprep.subr.mxu0 0.0
    %2219 = vmatpush1.xpose.msra.mxu0 0.0
    %2220 = vmatprep.subr.mxu0 0.0
    %2221 = vmatpush1.xpose.msra.mxu0 0.0
    %2222 = vmatprep.subr.mxu0 0.0
    %2223 = vmatpush1.xpose.msra.mxu0 0.0
    %2224 = vmatprep.subr.mxu0 0.0
    %v2225 = vand.u32 %v1966, 4294901760
    %2226 = vmatpush1.xpose.msra.mxu0 %v2225
    %2227 = vmatprep.subr.mxu0 0.0
    %2228 = vmatpush2.xpose.msra.mxu0 0.0
    %2229 = vmatprep.subr.mxu0 0.0
    %2230 = vmatpush2.xpose.msra.mxu0 0.0
    %2231 = vmatprep.subr.mxu0 0.0
    %2232 = vmatpush2.xpose.msra.mxu0 0.0
    %2233 = vmatprep.subr.mxu0 0.0
    %2234 = vmatpush2.xpose.msra.mxu0 0.0
    %2235 = vmatprep.subr.mxu0 0.0
    %2236 = vmatpush2.xpose.msra.mxu0 0.0
    %2237 = vmatprep.subr.mxu0 0.0
    %2238 = vmatpush2.xpose.msra.mxu0 0.0
    %2239 = vmatprep.subr.mxu0 0.0
    %2240 = vmatpush2.xpose.msra.mxu0 0.0
    %2241 = vmatprep.subr.mxu0 0.0
    %2242 = vmatpush2.xpose.msra.mxu0 0.0
    %2243 = vmatprep.subr.mxu0 0.0
    %2244 = vmatpush2.xpose.msra.mxu0 0.0
    %2245 = vmatprep.subr.mxu0 0.0
    %2246 = vmatpush2.xpose.msra.mxu0 0.0
    %2247 = vmatprep.subr.mxu0 0.0
    %2248 = vmatpush2.xpose.msra.mxu0 0.0
    %2249 = vmatprep.subr.mxu0 0.0
    %2250 = vmatpush2.xpose.msra.mxu0 0.0
    %2251 = vmatprep.subr.mxu0 0.0
    %2252 = vmatpush2.xpose.msra.mxu0 0.0
    %2253 = vmatprep.subr.mxu0 0.0
    %2254 = vmatpush2.xpose.msra.mxu0 0.0
    %2255 = vmatprep.subr.mxu0 0.0
    %2256 = vmatpush2.xpose.msra.mxu0 0.0
    %2257 = vmatprep.subr.mxu0 0.0
    %2258 = vmatpush2.xpose.msra.mxu0 0.0
    %2259 = vmatprep.mubr.f32.mxu0 0.0
    %v2260 = vand.u32 %v1964, 4294901760
    %v2261 = vsub.f32 %v1964, %v2260
    %v2262 = vand.u32 %v2261, 4294901760
    %2263 = vmatmul.mubr.f32.gmra.mxu0 %v2262
    %v2264 = vpop.f32.mrf.mxu0
    %v2265 = vadd.f32 %v2191, %v2264
    %v2266 = vpop.f32.mrf.mxu0
    %2267 = vdwg.mxu0
    %2268 = vmatprep.subr.mxu0 0.0
    %2269 = vmatpush1.xpose.msra.mxu0 0.0
    %2270 = vmatprep.subr.mxu0 0.0
    %2271 = vmatpush1.xpose.msra.mxu0 0.0
    %2272 = vmatprep.subr.mxu0 0.0
    %2273 = vmatpush1.xpose.msra.mxu0 0.0
    %2274 = vmatprep.subr.mxu0 0.0
    %2275 = vmatpush1.xpose.msra.mxu0 0.0
    %2276 = vmatprep.subr.mxu0 0.0
    %2277 = vmatpush1.xpose.msra.mxu0 0.0
    %2278 = vmatprep.subr.mxu0 0.0
    %2279 = vmatpush1.xpose.msra.mxu0 0.0
    %2280 = vmatprep.subr.mxu0 0.0
    %2281 = vmatpush1.xpose.msra.mxu0 0.0
    %2282 = vmatprep.subr.mxu0 0.0
    %2283 = vmatpush1.xpose.msra.mxu0 0.0
    %2284 = vmatprep.subr.mxu0 0.0
    %2285 = vmatpush1.xpose.msra.mxu0 0.0
    %2286 = vmatprep.subr.mxu0 0.0
    %2287 = vmatpush1.xpose.msra.mxu0 0.0
    %2288 = vmatprep.subr.mxu0 0.0
    %2289 = vmatpush1.xpose.msra.mxu0 0.0
    %2290 = vmatprep.subr.mxu0 0.0
    %2291 = vmatpush1.xpose.msra.mxu0 0.0
    %2292 = vmatprep.subr.mxu0 0.0
    %2293 = vmatpush1.xpose.msra.mxu0 0.0
    %2294 = vmatprep.subr.mxu0 0.0
    %2295 = vmatpush1.xpose.msra.mxu0 0.0
    %2296 = vmatprep.subr.mxu0 0.0
    %2297 = vmatpush1.xpose.msra.mxu0 0.0
    %2298 = vmatprep.subr.mxu0 0.0
    %v2299 = vand.u32 %v1966, 4294901760
    %v2300 = vsub.f32 %v1966, %v2299
    %v2301 = vand.u32 %v2300, 4294901760
    %2302 = vmatpush1.xpose.msra.mxu0 %v2301
    %2303 = vmatprep.subr.mxu0 0.0
    %2304 = vmatpush2.xpose.msra.mxu0 0.0
    %2305 = vmatprep.subr.mxu0 0.0
    %2306 = vmatpush2.xpose.msra.mxu0 0.0
    %2307 = vmatprep.subr.mxu0 0.0
    %2308 = vmatpush2.xpose.msra.mxu0 0.0
    %2309 = vmatprep.subr.mxu0 0.0
    %2310 = vmatpush2.xpose.msra.mxu0 0.0
    %2311 = vmatprep.subr.mxu0 0.0
    %2312 = vmatpush2.xpose.msra.mxu0 0.0
    %2313 = vmatprep.subr.mxu0 0.0
    %2314 = vmatpush2.xpose.msra.mxu0 0.0
    %2315 = vmatprep.subr.mxu0 0.0
    %2316 = vmatpush2.xpose.msra.mxu0 0.0
    %2317 = vmatprep.subr.mxu0 0.0
    %2318 = vmatpush2.xpose.msra.mxu0 0.0
    %2319 = vmatprep.subr.mxu0 0.0
    %2320 = vmatpush2.xpose.msra.mxu0 0.0
    %2321 = vmatprep.subr.mxu0 0.0
    %2322 = vmatpush2.xpose.msra.mxu0 0.0
    %2323 = vmatprep.subr.mxu0 0.0
    %2324 = vmatpush2.xpose.msra.mxu0 0.0
    %2325 = vmatprep.subr.mxu0 0.0
    %2326 = vmatpush2.xpose.msra.mxu0 0.0
    %2327 = vmatprep.subr.mxu0 0.0
    %2328 = vmatpush2.xpose.msra.mxu0 0.0
    %2329 = vmatprep.subr.mxu0 0.0
    %2330 = vmatpush2.xpose.msra.mxu0 0.0
    %2331 = vmatprep.subr.mxu0 0.0
    %2332 = vmatpush2.xpose.msra.mxu0 0.0
    %2333 = vmatprep.subr.mxu0 0.0
    %2334 = vmatpush2.xpose.msra.mxu0 0.0
    %2335 = vmatprep.mubr.f32.mxu0 0.0
    %v2336 = vand.u32 %v1964, 4294901760
    %2337 = vmatmul.mubr.f32.gmra.mxu0 %v2336
    %v2338 = vpop.f32.mrf.mxu0
    %v2339 = vadd.f32 %v2265, %v2338
    %v2340 = vpop.f32.mrf.mxu0
    %2341 = vdwg.mxu0
    %2342 = vmatprep.subr.mxu0 0.0
    %2343 = vmatpush1.xpose.msra.mxu0 0.0
    %2344 = vmatprep.subr.mxu0 0.0
    %2345 = vmatpush1.xpose.msra.mxu0 0.0
    %2346 = vmatprep.subr.mxu0 0.0
    %2347 = vmatpush1.xpose.msra.mxu0 0.0
    %2348 = vmatprep.subr.mxu0 0.0
    %2349 = vmatpush1.xpose.msra.mxu0 0.0
    %2350 = vmatprep.subr.mxu0 0.0
    %2351 = vmatpush1.xpose.msra.mxu0 0.0
    %2352 = vmatprep.subr.mxu0 0.0
    %2353 = vmatpush1.xpose.msra.mxu0 0.0
    %2354 = vmatprep.subr.mxu0 0.0
    %2355 = vmatpush1.xpose.msra.mxu0 0.0
    %2356 = vmatprep.subr.mxu0 0.0
    %2357 = vmatpush1.xpose.msra.mxu0 0.0
    %2358 = vmatprep.subr.mxu0 0.0
    %2359 = vmatpush1.xpose.msra.mxu0 0.0
    %2360 = vmatprep.subr.mxu0 0.0
    %2361 = vmatpush1.xpose.msra.mxu0 0.0
    %2362 = vmatprep.subr.mxu0 0.0
    %2363 = vmatpush1.xpose.msra.mxu0 0.0
    %2364 = vmatprep.subr.mxu0 0.0
    %2365 = vmatpush1.xpose.msra.mxu0 0.0
    %2366 = vmatprep.subr.mxu0 0.0
    %2367 = vmatpush1.xpose.msra.mxu0 0.0
    %2368 = vmatprep.subr.mxu0 0.0
    %2369 = vmatpush1.xpose.msra.mxu0 0.0
    %2370 = vmatprep.subr.mxu0 0.0
    %2371 = vmatpush1.xpose.msra.mxu0 0.0
    %2372 = vmatprep.subr.mxu0 0.0
    %v2373 = vand.u32 %v1966, 4294901760
    %2374 = vmatpush1.xpose.msra.mxu0 %v2373
    %2375 = vmatprep.subr.mxu0 0.0
    %2376 = vmatpush2.xpose.msra.mxu0 0.0
    %2377 = vmatprep.subr.mxu0 0.0
    %2378 = vmatpush2.xpose.msra.mxu0 0.0
    %2379 = vmatprep.subr.mxu0 0.0
    %2380 = vmatpush2.xpose.msra.mxu0 0.0
    %2381 = vmatprep.subr.mxu0 0.0
    %2382 = vmatpush2.xpose.msra.mxu0 0.0
    %2383 = vmatprep.subr.mxu0 0.0
    %2384 = vmatpush2.xpose.msra.mxu0 0.0
    %2385 = vmatprep.subr.mxu0 0.0
    %2386 = vmatpush2.xpose.msra.mxu0 0.0
    %2387 = vmatprep.subr.mxu0 0.0
    %2388 = vmatpush2.xpose.msra.mxu0 0.0
    %2389 = vmatprep.subr.mxu0 0.0
    %2390 = vmatpush2.xpose.msra.mxu0 0.0
    %2391 = vmatprep.subr.mxu0 0.0
    %2392 = vmatpush2.xpose.msra.mxu0 0.0
    %2393 = vmatprep.subr.mxu0 0.0
    %2394 = vmatpush2.xpose.msra.mxu0 0.0
    %2395 = vmatprep.subr.mxu0 0.0
    %2396 = vmatpush2.xpose.msra.mxu0 0.0
    %2397 = vmatprep.subr.mxu0 0.0
    %2398 = vmatpush2.xpose.msra.mxu0 0.0
    %2399 = vmatprep.subr.mxu0 0.0
    %2400 = vmatpush2.xpose.msra.mxu0 0.0
    %2401 = vmatprep.subr.mxu0 0.0
    %2402 = vmatpush2.xpose.msra.mxu0 0.0
    %2403 = vmatprep.subr.mxu0 0.0
    %2404 = vmatpush2.xpose.msra.mxu0 0.0
    %2405 = vmatprep.subr.mxu0 0.0
    %2406 = vmatpush2.xpose.msra.mxu0 0.0
    %2407 = vmatprep.mubr.f32.mxu0 0.0
    %v2408 = vand.u32 %v1964, 4294901760
    %2409 = vmatmul.mubr.f32.gmra.mxu0 %v2408
    %v2410 = vpop.f32.mrf.mxu0
    %v2411 = vadd.f32 %v2339, %v2410
    %v2412 = vpop.f32.mrf.mxu0
    %2413 = vdwg.mxu0
    %2414 = vrot.lane.b32.xlu0 %v593, 96
    %v2415 = vpop.permute.xlu0 %2414
    %v2416 = vsel %vm607, %v593, 0
    %v2418 = vsel %vm607, %v2415, 0
    %2420 = vmatprep.subr.mxu0 0.0
    %2421 = vmatpush1.xpose.msra.mxu0 0.0
    %2422 = vmatprep.subr.mxu0 0.0
    %2423 = vmatpush1.xpose.msra.mxu0 0.0
    %2424 = vmatprep.subr.mxu0 0.0
    %2425 = vmatpush1.xpose.msra.mxu0 0.0
    %2426 = vmatprep.subr.mxu0 0.0
    %2427 = vmatpush1.xpose.msra.mxu0 0.0
    %2428 = vmatprep.subr.mxu0 0.0
    %2429 = vmatpush1.xpose.msra.mxu0 0.0
    %2430 = vmatprep.subr.mxu0 0.0
    %2431 = vmatpush1.xpose.msra.mxu0 0.0
    %2432 = vmatprep.subr.mxu0 0.0
    %2433 = vmatpush1.xpose.msra.mxu0 0.0
    %2434 = vmatprep.subr.mxu0 0.0
    %2435 = vmatpush1.xpose.msra.mxu0 0.0
    %2436 = vmatprep.subr.mxu0 0.0
    %2437 = vmatpush1.xpose.msra.mxu0 0.0
    %2438 = vmatprep.subr.mxu0 0.0
    %2439 = vmatpush1.xpose.msra.mxu0 0.0
    %2440 = vmatprep.subr.mxu0 0.0
    %2441 = vmatpush1.xpose.msra.mxu0 0.0
    %2442 = vmatprep.subr.mxu0 0.0
    %2443 = vmatpush1.xpose.msra.mxu0 0.0
    %2444 = vmatprep.subr.mxu0 0.0
    %2445 = vmatpush1.xpose.msra.mxu0 0.0
    %2446 = vmatprep.subr.mxu0 0.0
    %2447 = vmatpush1.xpose.msra.mxu0 0.0
    %2448 = vmatprep.subr.mxu0 0.0
    %2449 = vmatpush1.xpose.msra.mxu0 0.0
    %2450 = vmatprep.subr.mxu0 0.0
    %v2451 = vand.u32 %v2418, 4294901760
    %2452 = vmatpush1.xpose.msra.mxu0 %v2451
    %2453 = vmatprep.subr.mxu0 0.0
    %2454 = vmatpush2.xpose.msra.mxu0 0.0
    %2455 = vmatprep.subr.mxu0 0.0
    %2456 = vmatpush2.xpose.msra.mxu0 0.0
    %2457 = vmatprep.subr.mxu0 0.0
    %2458 = vmatpush2.xpose.msra.mxu0 0.0
    %2459 = vmatprep.subr.mxu0 0.0
    %2460 = vmatpush2.xpose.msra.mxu0 0.0
    %2461 = vmatprep.subr.mxu0 0.0
    %2462 = vmatpush2.xpose.msra.mxu0 0.0
    %2463 = vmatprep.subr.mxu0 0.0
    %2464 = vmatpush2.xpose.msra.mxu0 0.0
    %2465 = vmatprep.subr.mxu0 0.0
    %2466 = vmatpush2.xpose.msra.mxu0 0.0
    %2467 = vmatprep.subr.mxu0 0.0
    %2468 = vmatpush2.xpose.msra.mxu0 0.0
    %2469 = vmatprep.subr.mxu0 0.0
    %2470 = vmatpush2.xpose.msra.mxu0 0.0
    %2471 = vmatprep.subr.mxu0 0.0
    %2472 = vmatpush2.xpose.msra.mxu0 0.0
    %2473 = vmatprep.subr.mxu0 0.0
    %2474 = vmatpush2.xpose.msra.mxu0 0.0
    %2475 = vmatprep.subr.mxu0 0.0
    %2476 = vmatpush2.xpose.msra.mxu0 0.0
    %2477 = vmatprep.subr.mxu0 0.0
    %2478 = vmatpush2.xpose.msra.mxu0 0.0
    %2479 = vmatprep.subr.mxu0 0.0
    %2480 = vmatpush2.xpose.msra.mxu0 0.0
    %2481 = vmatprep.subr.mxu0 0.0
    %2482 = vmatpush2.xpose.msra.mxu0 0.0
    %2483 = vmatprep.subr.mxu0 0.0
    %2484 = vmatpush2.xpose.msra.mxu0 0.0
    %2485 = vmatprep.mubr.f32.mxu0 0.0
    %v2486 = vand.u32 %v2416, 4294901760
    %v2487 = vsub.f32 %v2416, %v2486
    %v2488 = vand.u32 %v2487, 4294901760
    %v2489 = vsub.f32 %v2487, %v2488
    %v2490 = vand.u32 %v2489, 4294901760
    %2491 = vmatmul.mubr.f32.gmra.mxu0 %v2490
    %v2492 = vpop.f32.mrf.mxu0
    %v2493 = vadd.f32 0.0, %v2492
    %v2494 = vpop.f32.mrf.mxu0
    %2495 = vdwg.mxu0
    %2496 = vmatprep.subr.mxu0 0.0
    %2497 = vmatpush1.xpose.msra.mxu0 0.0
    %2498 = vmatprep.subr.mxu0 0.0
    %2499 = vmatpush1.xpose.msra.mxu0 0.0
    %2500 = vmatprep.subr.mxu0 0.0
    %2501 = vmatpush1.xpose.msra.mxu0 0.0
    %2502 = vmatprep.subr.mxu0 0.0
    %2503 = vmatpush1.xpose.msra.mxu0 0.0
    %2504 = vmatprep.subr.mxu0 0.0
    %2505 = vmatpush1.xpose.msra.mxu0 0.0
    %2506 = vmatprep.subr.mxu0 0.0
    %2507 = vmatpush1.xpose.msra.mxu0 0.0
    %2508 = vmatprep.subr.mxu0 0.0
    %2509 = vmatpush1.xpose.msra.mxu0 0.0
    %2510 = vmatprep.subr.mxu0 0.0
    %2511 = vmatpush1.xpose.msra.mxu0 0.0
    %2512 = vmatprep.subr.mxu0 0.0
    %2513 = vmatpush1.xpose.msra.mxu0 0.0
    %2514 = vmatprep.subr.mxu0 0.0
    %2515 = vmatpush1.xpose.msra.mxu0 0.0
    %2516 = vmatprep.subr.mxu0 0.0
    %2517 = vmatpush1.xpose.msra.mxu0 0.0
    %2518 = vmatprep.subr.mxu0 0.0
    %2519 = vmatpush1.xpose.msra.mxu0 0.0
    %2520 = vmatprep.subr.mxu0 0.0
    %2521 = vmatpush1.xpose.msra.mxu0 0.0
    %2522 = vmatprep.subr.mxu0 0.0
    %2523 = vmatpush1.xpose.msra.mxu0 0.0
    %2524 = vmatprep.subr.mxu0 0.0
    %2525 = vmatpush1.xpose.msra.mxu0 0.0
    %2526 = vmatprep.subr.mxu0 0.0
    %v2527 = vand.u32 %v2418, 4294901760
    %v2528 = vsub.f32 %v2418, %v2527
    %v2529 = vand.u32 %v2528, 4294901760
    %v2530 = vsub.f32 %v2528, %v2529
    %v2531 = vand.u32 %v2530, 4294901760
    %2532 = vmatpush1.xpose.msra.mxu0 %v2531
    %2533 = vmatprep.subr.mxu0 0.0
    %2534 = vmatpush2.xpose.msra.mxu0 0.0
    %2535 = vmatprep.subr.mxu0 0.0
    %2536 = vmatpush2.xpose.msra.mxu0 0.0
    %2537 = vmatprep.subr.mxu0 0.0
    %2538 = vmatpush2.xpose.msra.mxu0 0.0
    %2539 = vmatprep.subr.mxu0 0.0
    %2540 = vmatpush2.xpose.msra.mxu0 0.0
    %2541 = vmatprep.subr.mxu0 0.0
    %2542 = vmatpush2.xpose.msra.mxu0 0.0
    %2543 = vmatprep.subr.mxu0 0.0
    %2544 = vmatpush2.xpose.msra.mxu0 0.0
    %2545 = vmatprep.subr.mxu0 0.0
    %2546 = vmatpush2.xpose.msra.mxu0 0.0
    %2547 = vmatprep.subr.mxu0 0.0
    %2548 = vmatpush2.xpose.msra.mxu0 0.0
    %2549 = vmatprep.subr.mxu0 0.0
    %2550 = vmatpush2.xpose.msra.mxu0 0.0
    %2551 = vmatprep.subr.mxu0 0.0
    %2552 = vmatpush2.xpose.msra.mxu0 0.0
    %2553 = vmatprep.subr.mxu0 0.0
    %2554 = vmatpush2.xpose.msra.mxu0 0.0
    %2555 = vmatprep.subr.mxu0 0.0
    %2556 = vmatpush2.xpose.msra.mxu0 0.0
    %2557 = vmatprep.subr.mxu0 0.0
    %2558 = vmatpush2.xpose.msra.mxu0 0.0
    %2559 = vmatprep.subr.mxu0 0.0
    %2560 = vmatpush2.xpose.msra.mxu0 0.0
    %2561 = vmatprep.subr.mxu0 0.0
    %2562 = vmatpush2.xpose.msra.mxu0 0.0
    %2563 = vmatprep.subr.mxu0 0.0
    %2564 = vmatpush2.xpose.msra.mxu0 0.0
    %2565 = vmatprep.mubr.f32.mxu0 0.0
    %v2566 = vand.u32 %v2416, 4294901760
    %2567 = vmatmul.mubr.f32.gmra.mxu0 %v2566
    %v2568 = vpop.f32.mrf.mxu0
    %v2569 = vadd.f32 %v2493, %v2568
    %v2570 = vpop.f32.mrf.mxu0
    %2571 = vdwg.mxu0
    %2572 = vmatprep.subr.mxu0 0.0
    %2573 = vmatpush1.xpose.msra.mxu0 0.0
    %2574 = vmatprep.subr.mxu0 0.0
    %2575 = vmatpush1.xpose.msra.mxu0 0.0
    %2576 = vmatprep.subr.mxu0 0.0
    %2577 = vmatpush1.xpose.msra.mxu0 0.0
    %2578 = vmatprep.subr.mxu0 0.0
    %2579 = vmatpush1.xpose.msra.mxu0 0.0
    %2580 = vmatprep.subr.mxu0 0.0
    %2581 = vmatpush1.xpose.msra.mxu0 0.0
    %2582 = vmatprep.subr.mxu0 0.0
    %2583 = vmatpush1.xpose.msra.mxu0 0.0
    %2584 = vmatprep.subr.mxu0 0.0
    %2585 = vmatpush1.xpose.msra.mxu0 0.0
    %2586 = vmatprep.subr.mxu0 0.0
    %2587 = vmatpush1.xpose.msra.mxu0 0.0
    %2588 = vmatprep.subr.mxu0 0.0
    %2589 = vmatpush1.xpose.msra.mxu0 0.0
    %2590 = vmatprep.subr.mxu0 0.0
    %2591 = vmatpush1.xpose.msra.mxu0 0.0
    %2592 = vmatprep.subr.mxu0 0.0
    %2593 = vmatpush1.xpose.msra.mxu0 0.0
    %2594 = vmatprep.subr.mxu0 0.0
    %2595 = vmatpush1.xpose.msra.mxu0 0.0
    %2596 = vmatprep.subr.mxu0 0.0
    %2597 = vmatpush1.xpose.msra.mxu0 0.0
    %2598 = vmatprep.subr.mxu0 0.0
    %2599 = vmatpush1.xpose.msra.mxu0 0.0
    %2600 = vmatprep.subr.mxu0 0.0
    %2601 = vmatpush1.xpose.msra.mxu0 0.0
    %2602 = vmatprep.subr.mxu0 0.0
    %v2603 = vand.u32 %v2418, 4294901760
    %v2604 = vsub.f32 %v2418, %v2603
    %2605 = vmatpush1.xpose.msra.mxu0 %v2604
    %2606 = vmatprep.subr.mxu0 0.0
    %2607 = vmatpush2.xpose.msra.mxu0 0.0
    %2608 = vmatprep.subr.mxu0 0.0
    %2609 = vmatpush2.xpose.msra.mxu0 0.0
    %2610 = vmatprep.subr.mxu0 0.0
    %2611 = vmatpush2.xpose.msra.mxu0 0.0
    %2612 = vmatprep.subr.mxu0 0.0
    %2613 = vmatpush2.xpose.msra.mxu0 0.0
    %2614 = vmatprep.subr.mxu0 0.0
    %2615 = vmatpush2.xpose.msra.mxu0 0.0
    %2616 = vmatprep.subr.mxu0 0.0
    %2617 = vmatpush2.xpose.msra.mxu0 0.0
    %2618 = vmatprep.subr.mxu0 0.0
    %2619 = vmatpush2.xpose.msra.mxu0 0.0
    %2620 = vmatprep.subr.mxu0 0.0
    %2621 = vmatpush2.xpose.msra.mxu0 0.0
    %2622 = vmatprep.subr.mxu0 0.0
    %2623 = vmatpush2.xpose.msra.mxu0 0.0
    %2624 = vmatprep.subr.mxu0 0.0
    %2625 = vmatpush2.xpose.msra.mxu0 0.0
    %2626 = vmatprep.subr.mxu0 0.0
    %2627 = vmatpush2.xpose.msra.mxu0 0.0
    %2628 = vmatprep.subr.mxu0 0.0
    %2629 = vmatpush2.xpose.msra.mxu0 0.0
    %2630 = vmatprep.subr.mxu0 0.0
    %2631 = vmatpush2.xpose.msra.mxu0 0.0
    %2632 = vmatprep.subr.mxu0 0.0
    %2633 = vmatpush2.xpose.msra.mxu0 0.0
    %2634 = vmatprep.subr.mxu0 0.0
    %2635 = vmatpush2.xpose.msra.mxu0 0.0
    %2636 = vmatprep.subr.mxu0 0.0
    %2637 = vmatpush2.xpose.msra.mxu0 0.0
    %2638 = vmatprep.mubr.f32.mxu0 0.0
    %v2639 = vand.u32 %v2416, 4294901760
    %v2640 = vsub.f32 %v2416, %v2639
    %2641 = vmatmul.mubr.f32.gmra.mxu0 %v2640
    %v2642 = vpop.f32.mrf.mxu0
    %v2643 = vadd.f32 %v2569, %v2642
    %v2644 = vpop.f32.mrf.mxu0
    %2645 = vdwg.mxu0
    %2646 = vmatprep.subr.mxu0 0.0
    %2647 = vmatpush1.xpose.msra.mxu0 0.0
    %2648 = vmatprep.subr.mxu0 0.0
    %2649 = vmatpush1.xpose.msra.mxu0 0.0
    %2650 = vmatprep.subr.mxu0 0.0
    %2651 = vmatpush1.xpose.msra.mxu0 0.0
    %2652 = vmatprep.subr.mxu0 0.0
    %2653 = vmatpush1.xpose.msra.mxu0 0.0
    %2654 = vmatprep.subr.mxu0 0.0
    %2655 = vmatpush1.xpose.msra.mxu0 0.0
    %2656 = vmatprep.subr.mxu0 0.0
    %2657 = vmatpush1.xpose.msra.mxu0 0.0
    %2658 = vmatprep.subr.mxu0 0.0
    %2659 = vmatpush1.xpose.msra.mxu0 0.0
    %2660 = vmatprep.subr.mxu0 0.0
    %2661 = vmatpush1.xpose.msra.mxu0 0.0
    %2662 = vmatprep.subr.mxu0 0.0
    %2663 = vmatpush1.xpose.msra.mxu0 0.0
    %2664 = vmatprep.subr.mxu0 0.0
    %2665 = vmatpush1.xpose.msra.mxu0 0.0
    %2666 = vmatprep.subr.mxu0 0.0
    %2667 = vmatpush1.xpose.msra.mxu0 0.0
    %2668 = vmatprep.subr.mxu0 0.0
    %2669 = vmatpush1.xpose.msra.mxu0 0.0
    %2670 = vmatprep.subr.mxu0 0.0
    %2671 = vmatpush1.xpose.msra.mxu0 0.0
    %2672 = vmatprep.subr.mxu0 0.0
    %2673 = vmatpush1.xpose.msra.mxu0 0.0
    %2674 = vmatprep.subr.mxu0 0.0
    %2675 = vmatpush1.xpose.msra.mxu0 0.0
    %2676 = vmatprep.subr.mxu0 0.0
    %v2677 = vand.u32 %v2418, 4294901760
    %2678 = vmatpush1.xpose.msra.mxu0 %v2677
    %2679 = vmatprep.subr.mxu0 0.0
    %2680 = vmatpush2.xpose.msra.mxu0 0.0
    %2681 = vmatprep.subr.mxu0 0.0
    %2682 = vmatpush2.xpose.msra.mxu0 0.0
    %2683 = vmatprep.subr.mxu0 0.0
    %2684 = vmatpush2.xpose.msra.mxu0 0.0
    %2685 = vmatprep.subr.mxu0 0.0
    %2686 = vmatpush2.xpose.msra.mxu0 0.0
    %2687 = vmatprep.subr.mxu0 0.0
    %2688 = vmatpush2.xpose.msra.mxu0 0.0
    %2689 = vmatprep.subr.mxu0 0.0
    %2690 = vmatpush2.xpose.msra.mxu0 0.0
    %2691 = vmatprep.subr.mxu0 0.0
    %2692 = vmatpush2.xpose.msra.mxu0 0.0
    %2693 = vmatprep.subr.mxu0 0.0
    %2694 = vmatpush2.xpose.msra.mxu0 0.0
    %2695 = vmatprep.subr.mxu0 0.0
    %2696 = vmatpush2.xpose.msra.mxu0 0.0
    %2697 = vmatprep.subr.mxu0 0.0
    %2698 = vmatpush2.xpose.msra.mxu0 0.0
    %2699 = vmatprep.subr.mxu0 0.0
    %2700 = vmatpush2.xpose.msra.mxu0 0.0
    %2701 = vmatprep.subr.mxu0 0.0
    %2702 = vmatpush2.xpose.msra.mxu0 0.0
    %2703 = vmatprep.subr.mxu0 0.0
    %2704 = vmatpush2.xpose.msra.mxu0 0.0
    %2705 = vmatprep.subr.mxu0 0.0
    %2706 = vmatpush2.xpose.msra.mxu0 0.0
    %2707 = vmatprep.subr.mxu0 0.0
    %2708 = vmatpush2.xpose.msra.mxu0 0.0
    %2709 = vmatprep.subr.mxu0 0.0
    %2710 = vmatpush2.xpose.msra.mxu0 0.0
    %2711 = vmatprep.mubr.f32.mxu0 0.0
    %v2712 = vand.u32 %v2416, 4294901760
    %v2713 = vsub.f32 %v2416, %v2712
    %v2714 = vand.u32 %v2713, 4294901760
    %2715 = vmatmul.mubr.f32.gmra.mxu0 %v2714
    %v2716 = vpop.f32.mrf.mxu0
    %v2717 = vadd.f32 %v2643, %v2716
    %v2718 = vpop.f32.mrf.mxu0
    %2719 = vdwg.mxu0
    %2720 = vmatprep.subr.mxu0 0.0
    %2721 = vmatpush1.xpose.msra.mxu0 0.0
    %2722 = vmatprep.subr.mxu0 0.0
    %2723 = vmatpush1.xpose.msra.mxu0 0.0
    %2724 = vmatprep.subr.mxu0 0.0
    %2725 = vmatpush1.xpose.msra.mxu0 0.0
    %2726 = vmatprep.subr.mxu0 0.0
    %2727 = vmatpush1.xpose.msra.mxu0 0.0
    %2728 = vmatprep.subr.mxu0 0.0
    %2729 = vmatpush1.xpose.msra.mxu0 0.0
    %2730 = vmatprep.subr.mxu0 0.0
    %2731 = vmatpush1.xpose.msra.mxu0 0.0
    %2732 = vmatprep.subr.mxu0 0.0
    %2733 = vmatpush1.xpose.msra.mxu0 0.0
    %2734 = vmatprep.subr.mxu0 0.0
    %2735 = vmatpush1.xpose.msra.mxu0 0.0
    %2736 = vmatprep.subr.mxu0 0.0
    %2737 = vmatpush1.xpose.msra.mxu0 0.0
    %2738 = vmatprep.subr.mxu0 0.0
    %2739 = vmatpush1.xpose.msra.mxu0 0.0
    %2740 = vmatprep.subr.mxu0 0.0
    %2741 = vmatpush1.xpose.msra.mxu0 0.0
    %2742 = vmatprep.subr.mxu0 0.0
    %2743 = vmatpush1.xpose.msra.mxu0 0.0
    %2744 = vmatprep.subr.mxu0 0.0
    %2745 = vmatpush1.xpose.msra.mxu0 0.0
    %2746 = vmatprep.subr.mxu0 0.0
    %2747 = vmatpush1.xpose.msra.mxu0 0.0
    %2748 = vmatprep.subr.mxu0 0.0
    %2749 = vmatpush1.xpose.msra.mxu0 0.0
    %2750 = vmatprep.subr.mxu0 0.0
    %v2751 = vand.u32 %v2418, 4294901760
    %v2752 = vsub.f32 %v2418, %v2751
    %v2753 = vand.u32 %v2752, 4294901760
    %2754 = vmatpush1.xpose.msra.mxu0 %v2753
    %2755 = vmatprep.subr.mxu0 0.0
    %2756 = vmatpush2.xpose.msra.mxu0 0.0
    %2757 = vmatprep.subr.mxu0 0.0
    %2758 = vmatpush2.xpose.msra.mxu0 0.0
    %2759 = vmatprep.subr.mxu0 0.0
    %2760 = vmatpush2.xpose.msra.mxu0 0.0
    %2761 = vmatprep.subr.mxu0 0.0
    %2762 = vmatpush2.xpose.msra.mxu0 0.0
    %2763 = vmatprep.subr.mxu0 0.0
    %2764 = vmatpush2.xpose.msra.mxu0 0.0
    %2765 = vmatprep.subr.mxu0 0.0
    %2766 = vmatpush2.xpose.msra.mxu0 0.0
    %2767 = vmatprep.subr.mxu0 0.0
    %2768 = vmatpush2.xpose.msra.mxu0 0.0
    %2769 = vmatprep.subr.mxu0 0.0
    %2770 = vmatpush2.xpose.msra.mxu0 0.0
    %2771 = vmatprep.subr.mxu0 0.0
    %2772 = vmatpush2.xpose.msra.mxu0 0.0
    %2773 = vmatprep.subr.mxu0 0.0
    %2774 = vmatpush2.xpose.msra.mxu0 0.0
    %2775 = vmatprep.subr.mxu0 0.0
    %2776 = vmatpush2.xpose.msra.mxu0 0.0
    %2777 = vmatprep.subr.mxu0 0.0
    %2778 = vmatpush2.xpose.msra.mxu0 0.0
    %2779 = vmatprep.subr.mxu0 0.0
    %2780 = vmatpush2.xpose.msra.mxu0 0.0
    %2781 = vmatprep.subr.mxu0 0.0
    %2782 = vmatpush2.xpose.msra.mxu0 0.0
    %2783 = vmatprep.subr.mxu0 0.0
    %2784 = vmatpush2.xpose.msra.mxu0 0.0
    %2785 = vmatprep.subr.mxu0 0.0
    %2786 = vmatpush2.xpose.msra.mxu0 0.0
    %2787 = vmatprep.mubr.f32.mxu0 0.0
    %v2788 = vand.u32 %v2416, 4294901760
    %2789 = vmatmul.mubr.f32.gmra.mxu0 %v2788
    %v2790 = vpop.f32.mrf.mxu0
    %v2791 = vadd.f32 %v2717, %v2790
    %v2792 = vpop.f32.mrf.mxu0
    %2793 = vdwg.mxu0
    %2794 = vmatprep.subr.mxu0 0.0
    %2795 = vmatpush1.xpose.msra.mxu0 0.0
    %2796 = vmatprep.subr.mxu0 0.0
    %2797 = vmatpush1.xpose.msra.mxu0 0.0
    %2798 = vmatprep.subr.mxu0 0.0
    %2799 = vmatpush1.xpose.msra.mxu0 0.0
    %2800 = vmatprep.subr.mxu0 0.0
    %2801 = vmatpush1.xpose.msra.mxu0 0.0
    %2802 = vmatprep.subr.mxu0 0.0
    %2803 = vmatpush1.xpose.msra.mxu0 0.0
    %2804 = vmatprep.subr.mxu0 0.0
    %2805 = vmatpush1.xpose.msra.mxu0 0.0
    %2806 = vmatprep.subr.mxu0 0.0
    %2807 = vmatpush1.xpose.msra.mxu0 0.0
    %2808 = vmatprep.subr.mxu0 0.0
    %2809 = vmatpush1.xpose.msra.mxu0 0.0
    %2810 = vmatprep.subr.mxu0 0.0
    %2811 = vmatpush1.xpose.msra.mxu0 0.0
    %2812 = vmatprep.subr.mxu0 0.0
    %2813 = vmatpush1.xpose.msra.mxu0 0.0
    %2814 = vmatprep.subr.mxu0 0.0
    %2815 = vmatpush1.xpose.msra.mxu0 0.0
    %2816 = vmatprep.subr.mxu0 0.0
    %2817 = vmatpush1.xpose.msra.mxu0 0.0
    %2818 = vmatprep.subr.mxu0 0.0
    %2819 = vmatpush1.xpose.msra.mxu0 0.0
    %2820 = vmatprep.subr.mxu0 0.0
    %2821 = vmatpush1.xpose.msra.mxu0 0.0
    %2822 = vmatprep.subr.mxu0 0.0
    %2823 = vmatpush1.xpose.msra.mxu0 0.0
    %2824 = vmatprep.subr.mxu0 0.0
    %v2825 = vand.u32 %v2418, 4294901760
    %2826 = vmatpush1.xpose.msra.mxu0 %v2825
    %2827 = vmatprep.subr.mxu0 0.0
    %2828 = vmatpush2.xpose.msra.mxu0 0.0
    %2829 = vmatprep.subr.mxu0 0.0
    %2830 = vmatpush2.xpose.msra.mxu0 0.0
    %2831 = vmatprep.subr.mxu0 0.0
    %2832 = vmatpush2.xpose.msra.mxu0 0.0
    %2833 = vmatprep.subr.mxu0 0.0
    %2834 = vmatpush2.xpose.msra.mxu0 0.0
    %2835 = vmatprep.subr.mxu0 0.0
    %2836 = vmatpush2.xpose.msra.mxu0 0.0
    %2837 = vmatprep.subr.mxu0 0.0
    %2838 = vmatpush2.xpose.msra.mxu0 0.0
    %2839 = vmatprep.subr.mxu0 0.0
    %2840 = vmatpush2.xpose.msra.mxu0 0.0
    %2841 = vmatprep.subr.mxu0 0.0
    %2842 = vmatpush2.xpose.msra.mxu0 0.0
    %2843 = vmatprep.subr.mxu0 0.0
    %2844 = vmatpush2.xpose.msra.mxu0 0.0
    %2845 = vmatprep.subr.mxu0 0.0
    %2846 = vmatpush2.xpose.msra.mxu0 0.0
    %2847 = vmatprep.subr.mxu0 0.0
    %2848 = vmatpush2.xpose.msra.mxu0 0.0
    %2849 = vmatprep.subr.mxu0 0.0
    %2850 = vmatpush2.xpose.msra.mxu0 0.0
    %2851 = vmatprep.subr.mxu0 0.0
    %2852 = vmatpush2.xpose.msra.mxu0 0.0
    %2853 = vmatprep.subr.mxu0 0.0
    %2854 = vmatpush2.xpose.msra.mxu0 0.0
    %2855 = vmatprep.subr.mxu0 0.0
    %2856 = vmatpush2.xpose.msra.mxu0 0.0
    %2857 = vmatprep.subr.mxu0 0.0
    %2858 = vmatpush2.xpose.msra.mxu0 0.0
    %2859 = vmatprep.mubr.f32.mxu0 0.0
    %v2860 = vand.u32 %v2416, 4294901760
    %2861 = vmatmul.mubr.f32.gmra.mxu0 %v2860
    %v2862 = vpop.f32.mrf.mxu0
    %v2863 = vadd.f32 %v2791, %v2862
    %v2864 = vpop.f32.mrf.mxu0
    %2865 = vdwg.mxu0
    %2866 = vrot.lane.b32.xlu0 %v595, 96
    %v2867 = vpop.permute.xlu0 %2866
    %v2868 = vsel %vm607, %v595, 0
    %v2870 = vsel %vm607, %v2867, 0
    %2872 = vmatprep.subr.mxu0 0.0
    %2873 = vmatpush1.xpose.msra.mxu0 0.0
    %2874 = vmatprep.subr.mxu0 0.0
    %2875 = vmatpush1.xpose.msra.mxu0 0.0
    %2876 = vmatprep.subr.mxu0 0.0
    %2877 = vmatpush1.xpose.msra.mxu0 0.0
    %2878 = vmatprep.subr.mxu0 0.0
    %2879 = vmatpush1.xpose.msra.mxu0 0.0
    %2880 = vmatprep.subr.mxu0 0.0
    %2881 = vmatpush1.xpose.msra.mxu0 0.0
    %2882 = vmatprep.subr.mxu0 0.0
    %2883 = vmatpush1.xpose.msra.mxu0 0.0
    %2884 = vmatprep.subr.mxu0 0.0
    %2885 = vmatpush1.xpose.msra.mxu0 0.0
    %2886 = vmatprep.subr.mxu0 0.0
    %2887 = vmatpush1.xpose.msra.mxu0 0.0
    %2888 = vmatprep.subr.mxu0 0.0
    %2889 = vmatpush1.xpose.msra.mxu0 0.0
    %2890 = vmatprep.subr.mxu0 0.0
    %2891 = vmatpush1.xpose.msra.mxu0 0.0
    %2892 = vmatprep.subr.mxu0 0.0
    %2893 = vmatpush1.xpose.msra.mxu0 0.0
    %2894 = vmatprep.subr.mxu0 0.0
    %2895 = vmatpush1.xpose.msra.mxu0 0.0
    %2896 = vmatprep.subr.mxu0 0.0
    %2897 = vmatpush1.xpose.msra.mxu0 0.0
    %2898 = vmatprep.subr.mxu0 0.0
    %2899 = vmatpush1.xpose.msra.mxu0 0.0
    %2900 = vmatprep.subr.mxu0 0.0
    %2901 = vmatpush1.xpose.msra.mxu0 0.0
    %2902 = vmatprep.subr.mxu0 0.0
    %v2903 = vand.u32 %v2870, 4294901760
    %2904 = vmatpush1.xpose.msra.mxu0 %v2903
    %2905 = vmatprep.subr.mxu0 0.0
    %2906 = vmatpush2.xpose.msra.mxu0 0.0
    %2907 = vmatprep.subr.mxu0 0.0
    %2908 = vmatpush2.xpose.msra.mxu0 0.0
    %2909 = vmatprep.subr.mxu0 0.0
    %2910 = vmatpush2.xpose.msra.mxu0 0.0
    %2911 = vmatprep.subr.mxu0 0.0
    %2912 = vmatpush2.xpose.msra.mxu0 0.0
    %2913 = vmatprep.subr.mxu0 0.0
    %2914 = vmatpush2.xpose.msra.mxu0 0.0
    %2915 = vmatprep.subr.mxu0 0.0
    %2916 = vmatpush2.xpose.msra.mxu0 0.0
    %2917 = vmatprep.subr.mxu0 0.0
    %2918 = vmatpush2.xpose.msra.mxu0 0.0
    %2919 = vmatprep.subr.mxu0 0.0
    %2920 = vmatpush2.xpose.msra.mxu0 0.0
    %2921 = vmatprep.subr.mxu0 0.0
    %2922 = vmatpush2.xpose.msra.mxu0 0.0
    %2923 = vmatprep.subr.mxu0 0.0
    %2924 = vmatpush2.xpose.msra.mxu0 0.0
    %2925 = vmatprep.subr.mxu0 0.0
    %2926 = vmatpush2.xpose.msra.mxu0 0.0
    %2927 = vmatprep.subr.mxu0 0.0
    %2928 = vmatpush2.xpose.msra.mxu0 0.0
    %2929 = vmatprep.subr.mxu0 0.0
    %2930 = vmatpush2.xpose.msra.mxu0 0.0
    %2931 = vmatprep.subr.mxu0 0.0
    %2932 = vmatpush2.xpose.msra.mxu0 0.0
    %2933 = vmatprep.subr.mxu0 0.0
    %2934 = vmatpush2.xpose.msra.mxu0 0.0
    %2935 = vmatprep.subr.mxu0 0.0
    %2936 = vmatpush2.xpose.msra.mxu0 0.0
    %2937 = vmatprep.mubr.f32.mxu0 0.0
    %v2938 = vand.u32 %v2868, 4294901760
    %v2939 = vsub.f32 %v2868, %v2938
    %v2940 = vand.u32 %v2939, 4294901760
    %v2941 = vsub.f32 %v2939, %v2940
    %v2942 = vand.u32 %v2941, 4294901760
    %2943 = vmatmul.mubr.f32.gmra.mxu0 %v2942
    %v2944 = vpop.f32.mrf.mxu0
    %v2945 = vadd.f32 0.0, %v2944
    %v2946 = vpop.f32.mrf.mxu0
    %2947 = vdwg.mxu0
    %2948 = vmatprep.subr.mxu0 0.0
    %2949 = vmatpush1.xpose.msra.mxu0 0.0
    %2950 = vmatprep.subr.mxu0 0.0
    %2951 = vmatpush1.xpose.msra.mxu0 0.0
    %2952 = vmatprep.subr.mxu0 0.0
    %2953 = vmatpush1.xpose.msra.mxu0 0.0
    %2954 = vmatprep.subr.mxu0 0.0
    %2955 = vmatpush1.xpose.msra.mxu0 0.0
    %2956 = vmatprep.subr.mxu0 0.0
    %2957 = vmatpush1.xpose.msra.mxu0 0.0
    %2958 = vmatprep.subr.mxu0 0.0
    %2959 = vmatpush1.xpose.msra.mxu0 0.0
    %2960 = vmatprep.subr.mxu0 0.0
    %2961 = vmatpush1.xpose.msra.mxu0 0.0
    %2962 = vmatprep.subr.mxu0 0.0
    %2963 = vmatpush1.xpose.msra.mxu0 0.0
    %2964 = vmatprep.subr.mxu0 0.0
    %2965 = vmatpush1.xpose.msra.mxu0 0.0
    %2966 = vmatprep.subr.mxu0 0.0
    %2967 = vmatpush1.xpose.msra.mxu0 0.0
    %2968 = vmatprep.subr.mxu0 0.0
    %2969 = vmatpush1.xpose.msra.mxu0 0.0
    %2970 = vmatprep.subr.mxu0 0.0
    %2971 = vmatpush1.xpose.msra.mxu0 0.0
    %2972 = vmatprep.subr.mxu0 0.0
    %2973 = vmatpush1.xpose.msra.mxu0 0.0
    %2974 = vmatprep.subr.mxu0 0.0
    %2975 = vmatpush1.xpose.msra.mxu0 0.0
    %2976 = vmatprep.subr.mxu0 0.0
    %2977 = vmatpush1.xpose.msra.mxu0 0.0
    %2978 = vmatprep.subr.mxu0 0.0
    %v2979 = vand.u32 %v2870, 4294901760
    %v2980 = vsub.f32 %v2870, %v2979
    %v2981 = vand.u32 %v2980, 4294901760
    %v2982 = vsub.f32 %v2980, %v2981
    %v2983 = vand.u32 %v2982, 4294901760
    %2984 = vmatpush1.xpose.msra.mxu0 %v2983
    %2985 = vmatprep.subr.mxu0 0.0
    %2986 = vmatpush2.xpose.msra.mxu0 0.0
    %2987 = vmatprep.subr.mxu0 0.0
    %2988 = vmatpush2.xpose.msra.mxu0 0.0
    %2989 = vmatprep.subr.mxu0 0.0
    %2990 = vmatpush2.xpose.msra.mxu0 0.0
    %2991 = vmatprep.subr.mxu0 0.0
    %2992 = vmatpush2.xpose.msra.mxu0 0.0
    %2993 = vmatprep.subr.mxu0 0.0
    %2994 = vmatpush2.xpose.msra.mxu0 0.0
    %2995 = vmatprep.subr.mxu0 0.0
    %2996 = vmatpush2.xpose.msra.mxu0 0.0
    %2997 = vmatprep.subr.mxu0 0.0
    %2998 = vmatpush2.xpose.msra.mxu0 0.0
    %2999 = vmatprep.subr.mxu0 0.0
    %3000 = vmatpush2.xpose.msra.mxu0 0.0
    %3001 = vmatprep.subr.mxu0 0.0
    %3002 = vmatpush2.xpose.msra.mxu0 0.0
    %3003 = vmatprep.subr.mxu0 0.0
    %3004 = vmatpush2.xpose.msra.mxu0 0.0
    %3005 = vmatprep.subr.mxu0 0.0
    %3006 = vmatpush2.xpose.msra.mxu0 0.0
    %3007 = vmatprep.subr.mxu0 0.0
    %3008 = vmatpush2.xpose.msra.mxu0 0.0
    %3009 = vmatprep.subr.mxu0 0.0
    %3010 = vmatpush2.xpose.msra.mxu0 0.0
    %3011 = vmatprep.subr.mxu0 0.0
    %3012 = vmatpush2.xpose.msra.mxu0 0.0
    %3013 = vmatprep.subr.mxu0 0.0
    %3014 = vmatpush2.xpose.msra.mxu0 0.0
    %3015 = vmatprep.subr.mxu0 0.0
    %3016 = vmatpush2.xpose.msra.mxu0 0.0
    %3017 = vmatprep.mubr.f32.mxu0 0.0
    %v3018 = vand.u32 %v2868, 4294901760
    %3019 = vmatmul.mubr.f32.gmra.mxu0 %v3018
    %v3020 = vpop.f32.mrf.mxu0
    %v3021 = vadd.f32 %v2945, %v3020
    %v3022 = vpop.f32.mrf.mxu0
    %3023 = vdwg.mxu0
    %3024 = vmatprep.subr.mxu0 0.0
    %3025 = vmatpush1.xpose.msra.mxu0 0.0
    %3026 = vmatprep.subr.mxu0 0.0
    %3027 = vmatpush1.xpose.msra.mxu0 0.0
    %3028 = vmatprep.subr.mxu0 0.0
    %3029 = vmatpush1.xpose.msra.mxu0 0.0
    %3030 = vmatprep.subr.mxu0 0.0
    %3031 = vmatpush1.xpose.msra.mxu0 0.0
    %3032 = vmatprep.subr.mxu0 0.0
    %3033 = vmatpush1.xpose.msra.mxu0 0.0
    %3034 = vmatprep.subr.mxu0 0.0
    %3035 = vmatpush1.xpose.msra.mxu0 0.0
    %3036 = vmatprep.subr.mxu0 0.0
    %3037 = vmatpush1.xpose.msra.mxu0 0.0
    %3038 = vmatprep.subr.mxu0 0.0
    %3039 = vmatpush1.xpose.msra.mxu0 0.0
    %3040 = vmatprep.subr.mxu0 0.0
    %3041 = vmatpush1.xpose.msra.mxu0 0.0
    %3042 = vmatprep.subr.mxu0 0.0
    %3043 = vmatpush1.xpose.msra.mxu0 0.0
    %3044 = vmatprep.subr.mxu0 0.0
    %3045 = vmatpush1.xpose.msra.mxu0 0.0
    %3046 = vmatprep.subr.mxu0 0.0
    %3047 = vmatpush1.xpose.msra.mxu0 0.0
    %3048 = vmatprep.subr.mxu0 0.0
    %3049 = vmatpush1.xpose.msra.mxu0 0.0
    %3050 = vmatprep.subr.mxu0 0.0
    %3051 = vmatpush1.xpose.msra.mxu0 0.0
    %3052 = vmatprep.subr.mxu0 0.0
    %3053 = vmatpush1.xpose.msra.mxu0 0.0
    %3054 = vmatprep.subr.mxu0 0.0
    %v3055 = vand.u32 %v2870, 4294901760
    %v3056 = vsub.f32 %v2870, %v3055
    %3057 = vmatpush1.xpose.msra.mxu0 %v3056
    %3058 = vmatprep.subr.mxu0 0.0
    %3059 = vmatpush2.xpose.msra.mxu0 0.0
    %3060 = vmatprep.subr.mxu0 0.0
    %3061 = vmatpush2.xpose.msra.mxu0 0.0
    %3062 = vmatprep.subr.mxu0 0.0
    %3063 = vmatpush2.xpose.msra.mxu0 0.0
    %3064 = vmatprep.subr.mxu0 0.0
    %3065 = vmatpush2.xpose.msra.mxu0 0.0
    %3066 = vmatprep.subr.mxu0 0.0
    %3067 = vmatpush2.xpose.msra.mxu0 0.0
    %3068 = vmatprep.subr.mxu0 0.0
    %3069 = vmatpush2.xpose.msra.mxu0 0.0
    %3070 = vmatprep.subr.mxu0 0.0
    %3071 = vmatpush2.xpose.msra.mxu0 0.0
    %3072 = vmatprep.subr.mxu0 0.0
    %3073 = vmatpush2.xpose.msra.mxu0 0.0
    %3074 = vmatprep.subr.mxu0 0.0
    %3075 = vmatpush2.xpose.msra.mxu0 0.0
    %3076 = vmatprep.subr.mxu0 0.0
    %3077 = vmatpush2.xpose.msra.mxu0 0.0
    %3078 = vmatprep.subr.mxu0 0.0
    %3079 = vmatpush2.xpose.msra.mxu0 0.0
    %3080 = vmatprep.subr.mxu0 0.0
    %3081 = vmatpush2.xpose.msra.mxu0 0.0
    %3082 = vmatprep.subr.mxu0 0.0
    %3083 = vmatpush2.xpose.msra.mxu0 0.0
    %3084 = vmatprep.subr.mxu0 0.0
    %3085 = vmatpush2.xpose.msra.mxu0 0.0
    %3086 = vmatprep.subr.mxu0 0.0
    %3087 = vmatpush2.xpose.msra.mxu0 0.0
    %3088 = vmatprep.subr.mxu0 0.0
    %3089 = vmatpush2.xpose.msra.mxu0 0.0
    %3090 = vmatprep.mubr.f32.mxu0 0.0
    %v3091 = vand.u32 %v2868, 4294901760
    %v3092 = vsub.f32 %v2868, %v3091
    %3093 = vmatmul.mubr.f32.gmra.mxu0 %v3092
    %v3094 = vpop.f32.mrf.mxu0
    %v3095 = vadd.f32 %v3021, %v3094
    %v3096 = vpop.f32.mrf.mxu0
    %3097 = vdwg.mxu0
    %3098 = vmatprep.subr.mxu0 0.0
    %3099 = vmatpush1.xpose.msra.mxu0 0.0
    %3100 = vmatprep.subr.mxu0 0.0
    %3101 = vmatpush1.xpose.msra.mxu0 0.0
    %3102 = vmatprep.subr.mxu0 0.0
    %3103 = vmatpush1.xpose.msra.mxu0 0.0
    %3104 = vmatprep.subr.mxu0 0.0
    %3105 = vmatpush1.xpose.msra.mxu0 0.0
    %3106 = vmatprep.subr.mxu0 0.0
    %3107 = vmatpush1.xpose.msra.mxu0 0.0
    %3108 = vmatprep.subr.mxu0 0.0
    %3109 = vmatpush1.xpose.msra.mxu0 0.0
    %3110 = vmatprep.subr.mxu0 0.0
    %3111 = vmatpush1.xpose.msra.mxu0 0.0
    %3112 = vmatprep.subr.mxu0 0.0
    %3113 = vmatpush1.xpose.msra.mxu0 0.0
    %3114 = vmatprep.subr.mxu0 0.0
    %3115 = vmatpush1.xpose.msra.mxu0 0.0
    %3116 = vmatprep.subr.mxu0 0.0
    %3117 = vmatpush1.xpose.msra.mxu0 0.0
    %3118 = vmatprep.subr.mxu0 0.0
    %3119 = vmatpush1.xpose.msra.mxu0 0.0
    %3120 = vmatprep.subr.mxu0 0.0
    %3121 = vmatpush1.xpose.msra.mxu0 0.0
    %3122 = vmatprep.subr.mxu0 0.0
    %3123 = vmatpush1.xpose.msra.mxu0 0.0
    %3124 = vmatprep.subr.mxu0 0.0
    %3125 = vmatpush1.xpose.msra.mxu0 0.0
    %3126 = vmatprep.subr.mxu0 0.0
    %3127 = vmatpush1.xpose.msra.mxu0 0.0
    %3128 = vmatprep.subr.mxu0 0.0
    %v3129 = vand.u32 %v2870, 4294901760
    %3130 = vmatpush1.xpose.msra.mxu0 %v3129
    %3131 = vmatprep.subr.mxu0 0.0
    %3132 = vmatpush2.xpose.msra.mxu0 0.0
    %3133 = vmatprep.subr.mxu0 0.0
    %3134 = vmatpush2.xpose.msra.mxu0 0.0
    %3135 = vmatprep.subr.mxu0 0.0
    %3136 = vmatpush2.xpose.msra.mxu0 0.0
    %3137 = vmatprep.subr.mxu0 0.0
    %3138 = vmatpush2.xpose.msra.mxu0 0.0
    %3139 = vmatprep.subr.mxu0 0.0
    %3140 = vmatpush2.xpose.msra.mxu0 0.0
    %3141 = vmatprep.subr.mxu0 0.0
    %3142 = vmatpush2.xpose.msra.mxu0 0.0
    %3143 = vmatprep.subr.mxu0 0.0
    %3144 = vmatpush2.xpose.msra.mxu0 0.0
    %3145 = vmatprep.subr.mxu0 0.0
    %3146 = vmatpush2.xpose.msra.mxu0 0.0
    %3147 = vmatprep.subr.mxu0 0.0
    %3148 = vmatpush2.xpose.msra.mxu0 0.0
    %3149 = vmatprep.subr.mxu0 0.0
    %3150 = vmatpush2.xpose.msra.mxu0 0.0
    %3151 = vmatprep.subr.mxu0 0.0
    %3152 = vmatpush2.xpose.msra.mxu0 0.0
    %3153 = vmatprep.subr.mxu0 0.0
    %3154 = vmatpush2.xpose.msra.mxu0 0.0
    %3155 = vmatprep.subr.mxu0 0.0
    %3156 = vmatpush2.xpose.msra.mxu0 0.0
    %3157 = vmatprep.subr.mxu0 0.0
    %3158 = vmatpush2.xpose.msra.mxu0 0.0
    %3159 = vmatprep.subr.mxu0 0.0
    %3160 = vmatpush2.xpose.msra.mxu0 0.0
    %3161 = vmatprep.subr.mxu0 0.0
    %3162 = vmatpush2.xpose.msra.mxu0 0.0
    %3163 = vmatprep.mubr.f32.mxu0 0.0
    %v3164 = vand.u32 %v2868, 4294901760
    %v3165 = vsub.f32 %v2868, %v3164
    %v3166 = vand.u32 %v3165, 4294901760
    %3167 = vmatmul.mubr.f32.gmra.mxu0 %v3166
    %v3168 = vpop.f32.mrf.mxu0
    %v3169 = vadd.f32 %v3095, %v3168
    %v3170 = vpop.f32.mrf.mxu0
    %3171 = vdwg.mxu0
    %3172 = vmatprep.subr.mxu0 0.0
    %3173 = vmatpush1.xpose.msra.mxu0 0.0
    %3174 = vmatprep.subr.mxu0 0.0
    %3175 = vmatpush1.xpose.msra.mxu0 0.0
    %3176 = vmatprep.subr.mxu0 0.0
    %3177 = vmatpush1.xpose.msra.mxu0 0.0
    %3178 = vmatprep.subr.mxu0 0.0
    %3179 = vmatpush1.xpose.msra.mxu0 0.0
    %3180 = vmatprep.subr.mxu0 0.0
    %3181 = vmatpush1.xpose.msra.mxu0 0.0
    %3182 = vmatprep.subr.mxu0 0.0
    %3183 = vmatpush1.xpose.msra.mxu0 0.0
    %3184 = vmatprep.subr.mxu0 0.0
    %3185 = vmatpush1.xpose.msra.mxu0 0.0
    %3186 = vmatprep.subr.mxu0 0.0
    %3187 = vmatpush1.xpose.msra.mxu0 0.0
    %3188 = vmatprep.subr.mxu0 0.0
    %3189 = vmatpush1.xpose.msra.mxu0 0.0
    %3190 = vmatprep.subr.mxu0 0.0
    %3191 = vmatpush1.xpose.msra.mxu0 0.0
    %3192 = vmatprep.subr.mxu0 0.0
    %3193 = vmatpush1.xpose.msra.mxu0 0.0
    %3194 = vmatprep.subr.mxu0 0.0
    %3195 = vmatpush1.xpose.msra.mxu0 0.0
    %3196 = vmatprep.subr.mxu0 0.0
    %3197 = vmatpush1.xpose.msra.mxu0 0.0
    %3198 = vmatprep.subr.mxu0 0.0
    %3199 = vmatpush1.xpose.msra.mxu0 0.0
    %3200 = vmatprep.subr.mxu0 0.0
    %3201 = vmatpush1.xpose.msra.mxu0 0.0
    %3202 = vmatprep.subr.mxu0 0.0
    %v3203 = vand.u32 %v2870, 4294901760
    %v3204 = vsub.f32 %v2870, %v3203
    %v3205 = vand.u32 %v3204, 4294901760
    %3206 = vmatpush1.xpose.msra.mxu0 %v3205
    %3207 = vmatprep.subr.mxu0 0.0
    %3208 = vmatpush2.xpose.msra.mxu0 0.0
    %3209 = vmatprep.subr.mxu0 0.0
    %3210 = vmatpush2.xpose.msra.mxu0 0.0
    %3211 = vmatprep.subr.mxu0 0.0
    %3212 = vmatpush2.xpose.msra.mxu0 0.0
    %3213 = vmatprep.subr.mxu0 0.0
    %3214 = vmatpush2.xpose.msra.mxu0 0.0
    %3215 = vmatprep.subr.mxu0 0.0
    %3216 = vmatpush2.xpose.msra.mxu0 0.0
    %3217 = vmatprep.subr.mxu0 0.0
    %3218 = vmatpush2.xpose.msra.mxu0 0.0
    %3219 = vmatprep.subr.mxu0 0.0
    %3220 = vmatpush2.xpose.msra.mxu0 0.0
    %3221 = vmatprep.subr.mxu0 0.0
    %3222 = vmatpush2.xpose.msra.mxu0 0.0
    %3223 = vmatprep.subr.mxu0 0.0
    %3224 = vmatpush2.xpose.msra.mxu0 0.0
    %3225 = vmatprep.subr.mxu0 0.0
    %3226 = vmatpush2.xpose.msra.mxu0 0.0
    %3227 = vmatprep.subr.mxu0 0.0
    %3228 = vmatpush2.xpose.msra.mxu0 0.0
    %3229 = vmatprep.subr.mxu0 0.0
    %3230 = vmatpush2.xpose.msra.mxu0 0.0
    %3231 = vmatprep.subr.mxu0 0.0
    %3232 = vmatpush2.xpose.msra.mxu0 0.0
    %3233 = vmatprep.subr.mxu0 0.0
    %3234 = vmatpush2.xpose.msra.mxu0 0.0
    %3235 = vmatprep.subr.mxu0 0.0
    %3236 = vmatpush2.xpose.msra.mxu0 0.0
    %3237 = vmatprep.subr.mxu0 0.0
    %3238 = vmatpush2.xpose.msra.mxu0 0.0
    %3239 = vmatprep.mubr.f32.mxu0 0.0
    %v3240 = vand.u32 %v2868, 4294901760
    %3241 = vmatmul.mubr.f32.gmra.mxu0 %v3240
    %v3242 = vpop.f32.mrf.mxu0
    %v3243 = vadd.f32 %v3169, %v3242
    %v3244 = vpop.f32.mrf.mxu0
    %3245 = vdwg.mxu0
    %3246 = vmatprep.subr.mxu0 0.0
    %3247 = vmatpush1.xpose.msra.mxu0 0.0
    %3248 = vmatprep.subr.mxu0 0.0
    %3249 = vmatpush1.xpose.msra.mxu0 0.0
    %3250 = vmatprep.subr.mxu0 0.0
    %3251 = vmatpush1.xpose.msra.mxu0 0.0
    %3252 = vmatprep.subr.mxu0 0.0
    %3253 = vmatpush1.xpose.msra.mxu0 0.0
    %3254 = vmatprep.subr.mxu0 0.0
    %3255 = vmatpush1.xpose.msra.mxu0 0.0
    %3256 = vmatprep.subr.mxu0 0.0
    %3257 = vmatpush1.xpose.msra.mxu0 0.0
    %3258 = vmatprep.subr.mxu0 0.0
    %3259 = vmatpush1.xpose.msra.mxu0 0.0
    %3260 = vmatprep.subr.mxu0 0.0
    %3261 = vmatpush1.xpose.msra.mxu0 0.0
    %3262 = vmatprep.subr.mxu0 0.0
    %3263 = vmatpush1.xpose.msra.mxu0 0.0
    %3264 = vmatprep.subr.mxu0 0.0
    %3265 = vmatpush1.xpose.msra.mxu0 0.0
    %3266 = vmatprep.subr.mxu0 0.0
    %3267 = vmatpush1.xpose.msra.mxu0 0.0
    %3268 = vmatprep.subr.mxu0 0.0
    %3269 = vmatpush1.xpose.msra.mxu0 0.0
    %3270 = vmatprep.subr.mxu0 0.0
    %3271 = vmatpush1.xpose.msra.mxu0 0.0
    %3272 = vmatprep.subr.mxu0 0.0
    %3273 = vmatpush1.xpose.msra.mxu0 0.0
    %3274 = vmatprep.subr.mxu0 0.0
    %3275 = vmatpush1.xpose.msra.mxu0 0.0
    %3276 = vmatprep.subr.mxu0 0.0
    %v3277 = vand.u32 %v2870, 4294901760
    %3278 = vmatpush1.xpose.msra.mxu0 %v3277
    %3279 = vmatprep.subr.mxu0 0.0
    %3280 = vmatpush2.xpose.msra.mxu0 0.0
    %3281 = vmatprep.subr.mxu0 0.0
    %3282 = vmatpush2.xpose.msra.mxu0 0.0
    %3283 = vmatprep.subr.mxu0 0.0
    %3284 = vmatpush2.xpose.msra.mxu0 0.0
    %3285 = vmatprep.subr.mxu0 0.0
    %3286 = vmatpush2.xpose.msra.mxu0 0.0
    %3287 = vmatprep.subr.mxu0 0.0
    %3288 = vmatpush2.xpose.msra.mxu0 0.0
    %3289 = vmatprep.subr.mxu0 0.0
    %3290 = vmatpush2.xpose.msra.mxu0 0.0
    %3291 = vmatprep.subr.mxu0 0.0
    %3292 = vmatpush2.xpose.msra.mxu0 0.0
    %3293 = vmatprep.subr.mxu0 0.0
    %3294 = vmatpush2.xpose.msra.mxu0 0.0
    %3295 = vmatprep.subr.mxu0 0.0
    %3296 = vmatpush2.xpose.msra.mxu0 0.0
    %3297 = vmatprep.subr.mxu0 0.0
    %3298 = vmatpush2.xpose.msra.mxu0 0.0
    %3299 = vmatprep.subr.mxu0 0.0
    %3300 = vmatpush2.xpose.msra.mxu0 0.0
    %3301 = vmatprep.subr.mxu0 0.0
    %3302 = vmatpush2.xpose.msra.mxu0 0.0
    %3303 = vmatprep.subr.mxu0 0.0
    %3304 = vmatpush2.xpose.msra.mxu0 0.0
    %3305 = vmatprep.subr.mxu0 0.0
    %3306 = vmatpush2.xpose.msra.mxu0 0.0
    %3307 = vmatprep.subr.mxu0 0.0
    %3308 = vmatpush2.xpose.msra.mxu0 0.0
    %3309 = vmatprep.subr.mxu0 0.0
    %3310 = vmatpush2.xpose.msra.mxu0 0.0
    %3311 = vmatprep.mubr.f32.mxu0 0.0
    %v3312 = vand.u32 %v2868, 4294901760
    %3313 = vmatmul.mubr.f32.gmra.mxu0 %v3312
    %v3314 = vpop.f32.mrf.mxu0
    %v3315 = vadd.f32 %v3243, %v3314
    %v3316 = vpop.f32.mrf.mxu0
    %3317 = vdwg.mxu0
    %3318 = vrot.lane.b32.xlu0 %v597, 96
    %v3319 = vpop.permute.xlu0 %3318
    %v3320 = vsel %vm607, %v597, 0
    %v3322 = vsel %vm607, %v3319, 0
    %3324 = vmatprep.subr.mxu0 0.0
    %3325 = vmatpush1.xpose.msra.mxu0 0.0
    %3326 = vmatprep.subr.mxu0 0.0
    %3327 = vmatpush1.xpose.msra.mxu0 0.0
    %3328 = vmatprep.subr.mxu0 0.0
    %3329 = vmatpush1.xpose.msra.mxu0 0.0
    %3330 = vmatprep.subr.mxu0 0.0
    %3331 = vmatpush1.xpose.msra.mxu0 0.0
    %3332 = vmatprep.subr.mxu0 0.0
    %3333 = vmatpush1.xpose.msra.mxu0 0.0
    %3334 = vmatprep.subr.mxu0 0.0
    %3335 = vmatpush1.xpose.msra.mxu0 0.0
    %3336 = vmatprep.subr.mxu0 0.0
    %3337 = vmatpush1.xpose.msra.mxu0 0.0
    %3338 = vmatprep.subr.mxu0 0.0
    %3339 = vmatpush1.xpose.msra.mxu0 0.0
    %3340 = vmatprep.subr.mxu0 0.0
    %3341 = vmatpush1.xpose.msra.mxu0 0.0
    %3342 = vmatprep.subr.mxu0 0.0
    %3343 = vmatpush1.xpose.msra.mxu0 0.0
    %3344 = vmatprep.subr.mxu0 0.0
    %3345 = vmatpush1.xpose.msra.mxu0 0.0
    %3346 = vmatprep.subr.mxu0 0.0
    %3347 = vmatpush1.xpose.msra.mxu0 0.0
    %3348 = vmatprep.subr.mxu0 0.0
    %3349 = vmatpush1.xpose.msra.mxu0 0.0
    %3350 = vmatprep.subr.mxu0 0.0
    %3351 = vmatpush1.xpose.msra.mxu0 0.0
    %3352 = vmatprep.subr.mxu0 0.0
    %3353 = vmatpush1.xpose.msra.mxu0 0.0
    %3354 = vmatprep.subr.mxu0 0.0
    %v3355 = vand.u32 %v3322, 4294901760
    %3356 = vmatpush1.xpose.msra.mxu0 %v3355
    %3357 = vmatprep.subr.mxu0 0.0
    %3358 = vmatpush2.xpose.msra.mxu0 0.0
    %3359 = vmatprep.subr.mxu0 0.0
    %3360 = vmatpush2.xpose.msra.mxu0 0.0
    %3361 = vmatprep.subr.mxu0 0.0
    %3362 = vmatpush2.xpose.msra.mxu0 0.0
    %3363 = vmatprep.subr.mxu0 0.0
    %3364 = vmatpush2.xpose.msra.mxu0 0.0
    %3365 = vmatprep.subr.mxu0 0.0
    %3366 = vmatpush2.xpose.msra.mxu0 0.0
    %3367 = vmatprep.subr.mxu0 0.0
    %3368 = vmatpush2.xpose.msra.mxu0 0.0
    %3369 = vmatprep.subr.mxu0 0.0
    %3370 = vmatpush2.xpose.msra.mxu0 0.0
    %3371 = vmatprep.subr.mxu0 0.0
    %3372 = vmatpush2.xpose.msra.mxu0 0.0
    %3373 = vmatprep.subr.mxu0 0.0
    %3374 = vmatpush2.xpose.msra.mxu0 0.0
    %3375 = vmatprep.subr.mxu0 0.0
    %3376 = vmatpush2.xpose.msra.mxu0 0.0
    %3377 = vmatprep.subr.mxu0 0.0
    %3378 = vmatpush2.xpose.msra.mxu0 0.0
    %3379 = vmatprep.subr.mxu0 0.0
    %3380 = vmatpush2.xpose.msra.mxu0 0.0
    %3381 = vmatprep.subr.mxu0 0.0
    %3382 = vmatpush2.xpose.msra.mxu0 0.0
    %3383 = vmatprep.subr.mxu0 0.0
    %3384 = vmatpush2.xpose.msra.mxu0 0.0
    %3385 = vmatprep.subr.mxu0 0.0
    %3386 = vmatpush2.xpose.msra.mxu0 0.0
    %3387 = vmatprep.subr.mxu0 0.0
    %3388 = vmatpush2.xpose.msra.mxu0 0.0
    %3389 = vmatprep.mubr.f32.mxu0 0.0
    %v3390 = vand.u32 %v3320, 4294901760
    %v3391 = vsub.f32 %v3320, %v3390
    %v3392 = vand.u32 %v3391, 4294901760
    %v3393 = vsub.f32 %v3391, %v3392
    %v3394 = vand.u32 %v3393, 4294901760
    %3395 = vmatmul.mubr.f32.gmra.mxu0 %v3394
    %v3396 = vpop.f32.mrf.mxu0
    %v3397 = vadd.f32 0.0, %v3396
    %v3398 = vpop.f32.mrf.mxu0
    %3399 = vdwg.mxu0
    %3400 = vmatprep.subr.mxu0 0.0
    %3401 = vmatpush1.xpose.msra.mxu0 0.0
    %3402 = vmatprep.subr.mxu0 0.0
    %3403 = vmatpush1.xpose.msra.mxu0 0.0
    %3404 = vmatprep.subr.mxu0 0.0
    %3405 = vmatpush1.xpose.msra.mxu0 0.0
    %3406 = vmatprep.subr.mxu0 0.0
    %3407 = vmatpush1.xpose.msra.mxu0 0.0
    %3408 = vmatprep.subr.mxu0 0.0
    %3409 = vmatpush1.xpose.msra.mxu0 0.0
    %3410 = vmatprep.subr.mxu0 0.0
    %3411 = vmatpush1.xpose.msra.mxu0 0.0
    %3412 = vmatprep.subr.mxu0 0.0
    %3413 = vmatpush1.xpose.msra.mxu0 0.0
    %3414 = vmatprep.subr.mxu0 0.0
    %3415 = vmatpush1.xpose.msra.mxu0 0.0
    %3416 = vmatprep.subr.mxu0 0.0
    %3417 = vmatpush1.xpose.msra.mxu0 0.0
    %3418 = vmatprep.subr.mxu0 0.0
    %3419 = vmatpush1.xpose.msra.mxu0 0.0
    %3420 = vmatprep.subr.mxu0 0.0
    %3421 = vmatpush1.xpose.msra.mxu0 0.0
    %3422 = vmatprep.subr.mxu0 0.0
    %3423 = vmatpush1.xpose.msra.mxu0 0.0
    %3424 = vmatprep.subr.mxu0 0.0
    %3425 = vmatpush1.xpose.msra.mxu0 0.0
    %3426 = vmatprep.subr.mxu0 0.0
    %3427 = vmatpush1.xpose.msra.mxu0 0.0
    %3428 = vmatprep.subr.mxu0 0.0
    %3429 = vmatpush1.xpose.msra.mxu0 0.0
    %3430 = vmatprep.subr.mxu0 0.0
    %v3431 = vand.u32 %v3322, 4294901760
    %v3432 = vsub.f32 %v3322, %v3431
    %v3433 = vand.u32 %v3432, 4294901760
    %v3434 = vsub.f32 %v3432, %v3433
    %v3435 = vand.u32 %v3434, 4294901760
    %3436 = vmatpush1.xpose.msra.mxu0 %v3435
    %3437 = vmatprep.subr.mxu0 0.0
    %3438 = vmatpush2.xpose.msra.mxu0 0.0
    %3439 = vmatprep.subr.mxu0 0.0
    %3440 = vmatpush2.xpose.msra.mxu0 0.0
    %3441 = vmatprep.subr.mxu0 0.0
    %3442 = vmatpush2.xpose.msra.mxu0 0.0
    %3443 = vmatprep.subr.mxu0 0.0
    %3444 = vmatpush2.xpose.msra.mxu0 0.0
    %3445 = vmatprep.subr.mxu0 0.0
    %3446 = vmatpush2.xpose.msra.mxu0 0.0
    %3447 = vmatprep.subr.mxu0 0.0
    %3448 = vmatpush2.xpose.msra.mxu0 0.0
    %3449 = vmatprep.subr.mxu0 0.0
    %3450 = vmatpush2.xpose.msra.mxu0 0.0
    %3451 = vmatprep.subr.mxu0 0.0
    %3452 = vmatpush2.xpose.msra.mxu0 0.0
    %3453 = vmatprep.subr.mxu0 0.0
    %3454 = vmatpush2.xpose.msra.mxu0 0.0
    %3455 = vmatprep.subr.mxu0 0.0
    %3456 = vmatpush2.xpose.msra.mxu0 0.0
    %3457 = vmatprep.subr.mxu0 0.0
    %3458 = vmatpush2.xpose.msra.mxu0 0.0
    %3459 = vmatprep.subr.mxu0 0.0
    %3460 = vmatpush2.xpose.msra.mxu0 0.0
    %3461 = vmatprep.subr.mxu0 0.0
    %3462 = vmatpush2.xpose.msra.mxu0 0.0
    %3463 = vmatprep.subr.mxu0 0.0
    %3464 = vmatpush2.xpose.msra.mxu0 0.0
    %3465 = vmatprep.subr.mxu0 0.0
    %3466 = vmatpush2.xpose.msra.mxu0 0.0
    %3467 = vmatprep.subr.mxu0 0.0
    %3468 = vmatpush2.xpose.msra.mxu0 0.0
    %3469 = vmatprep.mubr.f32.mxu0 0.0
    %v3470 = vand.u32 %v3320, 4294901760
    %3471 = vmatmul.mubr.f32.gmra.mxu0 %v3470
    %v3472 = vpop.f32.mrf.mxu0
    %v3473 = vadd.f32 %v3397, %v3472
    %v3474 = vpop.f32.mrf.mxu0
    %3475 = vdwg.mxu0
    %3476 = vmatprep.subr.mxu0 0.0
    %3477 = vmatpush1.xpose.msra.mxu0 0.0
    %3478 = vmatprep.subr.mxu0 0.0
    %3479 = vmatpush1.xpose.msra.mxu0 0.0
    %3480 = vmatprep.subr.mxu0 0.0
    %3481 = vmatpush1.xpose.msra.mxu0 0.0
    %3482 = vmatprep.subr.mxu0 0.0
    %3483 = vmatpush1.xpose.msra.mxu0 0.0
    %3484 = vmatprep.subr.mxu0 0.0
    %3485 = vmatpush1.xpose.msra.mxu0 0.0
    %3486 = vmatprep.subr.mxu0 0.0
    %3487 = vmatpush1.xpose.msra.mxu0 0.0
    %3488 = vmatprep.subr.mxu0 0.0
    %3489 = vmatpush1.xpose.msra.mxu0 0.0
    %3490 = vmatprep.subr.mxu0 0.0
    %3491 = vmatpush1.xpose.msra.mxu0 0.0
    %3492 = vmatprep.subr.mxu0 0.0
    %3493 = vmatpush1.xpose.msra.mxu0 0.0
    %3494 = vmatprep.subr.mxu0 0.0
    %3495 = vmatpush1.xpose.msra.mxu0 0.0
    %3496 = vmatprep.subr.mxu0 0.0
    %3497 = vmatpush1.xpose.msra.mxu0 0.0
    %3498 = vmatprep.subr.mxu0 0.0
    %3499 = vmatpush1.xpose.msra.mxu0 0.0
    %3500 = vmatprep.subr.mxu0 0.0
    %3501 = vmatpush1.xpose.msra.mxu0 0.0
    %3502 = vmatprep.subr.mxu0 0.0
    %3503 = vmatpush1.xpose.msra.mxu0 0.0
    %3504 = vmatprep.subr.mxu0 0.0
    %3505 = vmatpush1.xpose.msra.mxu0 0.0
    %3506 = vmatprep.subr.mxu0 0.0
    %v3507 = vand.u32 %v3322, 4294901760
    %v3508 = vsub.f32 %v3322, %v3507
    %3509 = vmatpush1.xpose.msra.mxu0 %v3508
    %3510 = vmatprep.subr.mxu0 0.0
    %3511 = vmatpush2.xpose.msra.mxu0 0.0
    %3512 = vmatprep.subr.mxu0 0.0
    %3513 = vmatpush2.xpose.msra.mxu0 0.0
    %3514 = vmatprep.subr.mxu0 0.0
    %3515 = vmatpush2.xpose.msra.mxu0 0.0
    %3516 = vmatprep.subr.mxu0 0.0
    %3517 = vmatpush2.xpose.msra.mxu0 0.0
    %3518 = vmatprep.subr.mxu0 0.0
    %3519 = vmatpush2.xpose.msra.mxu0 0.0
    %3520 = vmatprep.subr.mxu0 0.0
    %3521 = vmatpush2.xpose.msra.mxu0 0.0
    %3522 = vmatprep.subr.mxu0 0.0
    %3523 = vmatpush2.xpose.msra.mxu0 0.0
    %3524 = vmatprep.subr.mxu0 0.0
    %3525 = vmatpush2.xpose.msra.mxu0 0.0
    %3526 = vmatprep.subr.mxu0 0.0
    %3527 = vmatpush2.xpose.msra.mxu0 0.0
    %3528 = vmatprep.subr.mxu0 0.0
    %3529 = vmatpush2.xpose.msra.mxu0 0.0
    %3530 = vmatprep.subr.mxu0 0.0
    %3531 = vmatpush2.xpose.msra.mxu0 0.0
    %3532 = vmatprep.subr.mxu0 0.0
    %3533 = vmatpush2.xpose.msra.mxu0 0.0
    %3534 = vmatprep.subr.mxu0 0.0
    %3535 = vmatpush2.xpose.msra.mxu0 0.0
    %3536 = vmatprep.subr.mxu0 0.0
    %3537 = vmatpush2.xpose.msra.mxu0 0.0
    %3538 = vmatprep.subr.mxu0 0.0
    %3539 = vmatpush2.xpose.msra.mxu0 0.0
    %3540 = vmatprep.subr.mxu0 0.0
    %3541 = vmatpush2.xpose.msra.mxu0 0.0
    %3542 = vmatprep.mubr.f32.mxu0 0.0
    %v3543 = vand.u32 %v3320, 4294901760
    %v3544 = vsub.f32 %v3320, %v3543
    %3545 = vmatmul.mubr.f32.gmra.mxu0 %v3544
    %v3546 = vpop.f32.mrf.mxu0
    %v3547 = vadd.f32 %v3473, %v3546
    %v3548 = vpop.f32.mrf.mxu0
    %3549 = vdwg.mxu0
    %3550 = vmatprep.subr.mxu0 0.0
    %3551 = vmatpush1.xpose.msra.mxu0 0.0
    %3552 = vmatprep.subr.mxu0 0.0
    %3553 = vmatpush1.xpose.msra.mxu0 0.0
    %3554 = vmatprep.subr.mxu0 0.0
    %3555 = vmatpush1.xpose.msra.mxu0 0.0
    %3556 = vmatprep.subr.mxu0 0.0
    %3557 = vmatpush1.xpose.msra.mxu0 0.0
    %3558 = vmatprep.subr.mxu0 0.0
    %3559 = vmatpush1.xpose.msra.mxu0 0.0
    %3560 = vmatprep.subr.mxu0 0.0
    %3561 = vmatpush1.xpose.msra.mxu0 0.0
    %3562 = vmatprep.subr.mxu0 0.0
    %3563 = vmatpush1.xpose.msra.mxu0 0.0
    %3564 = vmatprep.subr.mxu0 0.0
    %3565 = vmatpush1.xpose.msra.mxu0 0.0
    %3566 = vmatprep.subr.mxu0 0.0
    %3567 = vmatpush1.xpose.msra.mxu0 0.0
    %3568 = vmatprep.subr.mxu0 0.0
    %3569 = vmatpush1.xpose.msra.mxu0 0.0
    %3570 = vmatprep.subr.mxu0 0.0
    %3571 = vmatpush1.xpose.msra.mxu0 0.0
    %3572 = vmatprep.subr.mxu0 0.0
    %3573 = vmatpush1.xpose.msra.mxu0 0.0
    %3574 = vmatprep.subr.mxu0 0.0
    %3575 = vmatpush1.xpose.msra.mxu0 0.0
    %3576 = vmatprep.subr.mxu0 0.0
    %3577 = vmatpush1.xpose.msra.mxu0 0.0
    %3578 = vmatprep.subr.mxu0 0.0
    %3579 = vmatpush1.xpose.msra.mxu0 0.0
    %3580 = vmatprep.subr.mxu0 0.0
    %v3581 = vand.u32 %v3322, 4294901760
    %3582 = vmatpush1.xpose.msra.mxu0 %v3581
    %3583 = vmatprep.subr.mxu0 0.0
    %3584 = vmatpush2.xpose.msra.mxu0 0.0
    %3585 = vmatprep.subr.mxu0 0.0
    %3586 = vmatpush2.xpose.msra.mxu0 0.0
    %3587 = vmatprep.subr.mxu0 0.0
    %3588 = vmatpush2.xpose.msra.mxu0 0.0
    %3589 = vmatprep.subr.mxu0 0.0
    %3590 = vmatpush2.xpose.msra.mxu0 0.0
    %3591 = vmatprep.subr.mxu0 0.0
    %3592 = vmatpush2.xpose.msra.mxu0 0.0
    %3593 = vmatprep.subr.mxu0 0.0
    %3594 = vmatpush2.xpose.msra.mxu0 0.0
    %3595 = vmatprep.subr.mxu0 0.0
    %3596 = vmatpush2.xpose.msra.mxu0 0.0
    %3597 = vmatprep.subr.mxu0 0.0
    %3598 = vmatpush2.xpose.msra.mxu0 0.0
    %3599 = vmatprep.subr.mxu0 0.0
    %3600 = vmatpush2.xpose.msra.mxu0 0.0
    %3601 = vmatprep.subr.mxu0 0.0
    %3602 = vmatpush2.xpose.msra.mxu0 0.0
    %3603 = vmatprep.subr.mxu0 0.0
    %3604 = vmatpush2.xpose.msra.mxu0 0.0
    %3605 = vmatprep.subr.mxu0 0.0
    %3606 = vmatpush2.xpose.msra.mxu0 0.0
    %3607 = vmatprep.subr.mxu0 0.0
    %3608 = vmatpush2.xpose.msra.mxu0 0.0
    %3609 = vmatprep.subr.mxu0 0.0
    %3610 = vmatpush2.xpose.msra.mxu0 0.0
    %3611 = vmatprep.subr.mxu0 0.0
    %3612 = vmatpush2.xpose.msra.mxu0 0.0
    %3613 = vmatprep.subr.mxu0 0.0
    %3614 = vmatpush2.xpose.msra.mxu0 0.0
    %3615 = vmatprep.mubr.f32.mxu0 0.0
    %v3616 = vand.u32 %v3320, 4294901760
    %v3617 = vsub.f32 %v3320, %v3616
    %v3618 = vand.u32 %v3617, 4294901760
    %3619 = vmatmul.mubr.f32.gmra.mxu0 %v3618
    %v3620 = vpop.f32.mrf.mxu0
    %v3621 = vadd.f32 %v3547, %v3620
    %v3622 = vpop.f32.mrf.mxu0
    %3623 = vdwg.mxu0
    %3624 = vmatprep.subr.mxu0 0.0
    %3625 = vmatpush1.xpose.msra.mxu0 0.0
    %3626 = vmatprep.subr.mxu0 0.0
    %3627 = vmatpush1.xpose.msra.mxu0 0.0
    %3628 = vmatprep.subr.mxu0 0.0
    %3629 = vmatpush1.xpose.msra.mxu0 0.0
    %3630 = vmatprep.subr.mxu0 0.0
    %3631 = vmatpush1.xpose.msra.mxu0 0.0
    %3632 = vmatprep.subr.mxu0 0.0
    %3633 = vmatpush1.xpose.msra.mxu0 0.0
    %3634 = vmatprep.subr.mxu0 0.0
    %3635 = vmatpush1.xpose.msra.mxu0 0.0
    %3636 = vmatprep.subr.mxu0 0.0
    %3637 = vmatpush1.xpose.msra.mxu0 0.0
    %3638 = vmatprep.subr.mxu0 0.0
    %3639 = vmatpush1.xpose.msra.mxu0 0.0
    %3640 = vmatprep.subr.mxu0 0.0
    %3641 = vmatpush1.xpose.msra.mxu0 0.0
    %3642 = vmatprep.subr.mxu0 0.0
    %3643 = vmatpush1.xpose.msra.mxu0 0.0
    %3644 = vmatprep.subr.mxu0 0.0
    %3645 = vmatpush1.xpose.msra.mxu0 0.0
    %3646 = vmatprep.subr.mxu0 0.0
    %3647 = vmatpush1.xpose.msra.mxu0 0.0
    %3648 = vmatprep.subr.mxu0 0.0
    %3649 = vmatpush1.xpose.msra.mxu0 0.0
    %3650 = vmatprep.subr.mxu0 0.0
    %3651 = vmatpush1.xpose.msra.mxu0 0.0
    %3652 = vmatprep.subr.mxu0 0.0
    %3653 = vmatpush1.xpose.msra.mxu0 0.0
    %3654 = vmatprep.subr.mxu0 0.0
    %v3655 = vand.u32 %v3322, 4294901760
    %v3656 = vsub.f32 %v3322, %v3655
    %v3657 = vand.u32 %v3656, 4294901760
    %3658 = vmatpush1.xpose.msra.mxu0 %v3657
    %3659 = vmatprep.subr.mxu0 0.0
    %3660 = vmatpush2.xpose.msra.mxu0 0.0
    %3661 = vmatprep.subr.mxu0 0.0
    %3662 = vmatpush2.xpose.msra.mxu0 0.0
    %3663 = vmatprep.subr.mxu0 0.0
    %3664 = vmatpush2.xpose.msra.mxu0 0.0
    %3665 = vmatprep.subr.mxu0 0.0
    %3666 = vmatpush2.xpose.msra.mxu0 0.0
    %3667 = vmatprep.subr.mxu0 0.0
    %3668 = vmatpush2.xpose.msra.mxu0 0.0
    %3669 = vmatprep.subr.mxu0 0.0
    %3670 = vmatpush2.xpose.msra.mxu0 0.0
    %3671 = vmatprep.subr.mxu0 0.0
    %3672 = vmatpush2.xpose.msra.mxu0 0.0
    %3673 = vmatprep.subr.mxu0 0.0
    %3674 = vmatpush2.xpose.msra.mxu0 0.0
    %3675 = vmatprep.subr.mxu0 0.0
    %3676 = vmatpush2.xpose.msra.mxu0 0.0
    %3677 = vmatprep.subr.mxu0 0.0
    %3678 = vmatpush2.xpose.msra.mxu0 0.0
    %3679 = vmatprep.subr.mxu0 0.0
    %3680 = vmatpush2.xpose.msra.mxu0 0.0
    %3681 = vmatprep.subr.mxu0 0.0
    %3682 = vmatpush2.xpose.msra.mxu0 0.0
    %3683 = vmatprep.subr.mxu0 0.0
    %3684 = vmatpush2.xpose.msra.mxu0 0.0
    %3685 = vmatprep.subr.mxu0 0.0
    %3686 = vmatpush2.xpose.msra.mxu0 0.0
    %3687 = vmatprep.subr.mxu0 0.0
    %3688 = vmatpush2.xpose.msra.mxu0 0.0
    %3689 = vmatprep.subr.mxu0 0.0
    %3690 = vmatpush2.xpose.msra.mxu0 0.0
    %3691 = vmatprep.mubr.f32.mxu0 0.0
    %v3692 = vand.u32 %v3320, 4294901760
    %3693 = vmatmul.mubr.f32.gmra.mxu0 %v3692
    %v3694 = vpop.f32.mrf.mxu0
    %v3695 = vadd.f32 %v3621, %v3694
    %v3696 = vpop.f32.mrf.mxu0
    %3697 = vdwg.mxu0
    %3698 = vmatprep.subr.mxu0 0.0
    %3699 = vmatpush1.xpose.msra.mxu0 0.0
    %3700 = vmatprep.subr.mxu0 0.0
    %3701 = vmatpush1.xpose.msra.mxu0 0.0
    %3702 = vmatprep.subr.mxu0 0.0
    %3703 = vmatpush1.xpose.msra.mxu0 0.0
    %3704 = vmatprep.subr.mxu0 0.0
    %3705 = vmatpush1.xpose.msra.mxu0 0.0
    %3706 = vmatprep.subr.mxu0 0.0
    %3707 = vmatpush1.xpose.msra.mxu0 0.0
    %3708 = vmatprep.subr.mxu0 0.0
    %3709 = vmatpush1.xpose.msra.mxu0 0.0
    %3710 = vmatprep.subr.mxu0 0.0
    %3711 = vmatpush1.xpose.msra.mxu0 0.0
    %3712 = vmatprep.subr.mxu0 0.0
    %3713 = vmatpush1.xpose.msra.mxu0 0.0
    %3714 = vmatprep.subr.mxu0 0.0
    %3715 = vmatpush1.xpose.msra.mxu0 0.0
    %3716 = vmatprep.subr.mxu0 0.0
    %3717 = vmatpush1.xpose.msra.mxu0 0.0
    %3718 = vmatprep.subr.mxu0 0.0
    %3719 = vmatpush1.xpose.msra.mxu0 0.0
    %3720 = vmatprep.subr.mxu0 0.0
    %3721 = vmatpush1.xpose.msra.mxu0 0.0
    %3722 = vmatprep.subr.mxu0 0.0
    %3723 = vmatpush1.xpose.msra.mxu0 0.0
    %3724 = vmatprep.subr.mxu0 0.0
    %3725 = vmatpush1.xpose.msra.mxu0 0.0
    %3726 = vmatprep.subr.mxu0 0.0
    %3727 = vmatpush1.xpose.msra.mxu0 0.0
    %3728 = vmatprep.subr.mxu0 0.0
    %v3729 = vand.u32 %v3322, 4294901760
    %3730 = vmatpush1.xpose.msra.mxu0 %v3729
    %3731 = vmatprep.subr.mxu0 0.0
    %3732 = vmatpush2.xpose.msra.mxu0 0.0
    %3733 = vmatprep.subr.mxu0 0.0
    %3734 = vmatpush2.xpose.msra.mxu0 0.0
    %3735 = vmatprep.subr.mxu0 0.0
    %3736 = vmatpush2.xpose.msra.mxu0 0.0
    %3737 = vmatprep.subr.mxu0 0.0
    %3738 = vmatpush2.xpose.msra.mxu0 0.0
    %3739 = vmatprep.subr.mxu0 0.0
    %3740 = vmatpush2.xpose.msra.mxu0 0.0
    %3741 = vmatprep.subr.mxu0 0.0
    %3742 = vmatpush2.xpose.msra.mxu0 0.0
    %3743 = vmatprep.subr.mxu0 0.0
    %3744 = vmatpush2.xpose.msra.mxu0 0.0
    %3745 = vmatprep.subr.mxu0 0.0
    %3746 = vmatpush2.xpose.msra.mxu0 0.0
    %3747 = vmatprep.subr.mxu0 0.0
    %3748 = vmatpush2.xpose.msra.mxu0 0.0
    %3749 = vmatprep.subr.mxu0 0.0
    %3750 = vmatpush2.xpose.msra.mxu0 0.0
    %3751 = vmatprep.subr.mxu0 0.0
    %3752 = vmatpush2.xpose.msra.mxu0 0.0
    %3753 = vmatprep.subr.mxu0 0.0
    %3754 = vmatpush2.xpose.msra.mxu0 0.0
    %3755 = vmatprep.subr.mxu0 0.0
    %3756 = vmatpush2.xpose.msra.mxu0 0.0
    %3757 = vmatprep.subr.mxu0 0.0
    %3758 = vmatpush2.xpose.msra.mxu0 0.0
    %3759 = vmatprep.subr.mxu0 0.0
    %3760 = vmatpush2.xpose.msra.mxu0 0.0
    %3761 = vmatprep.subr.mxu0 0.0
    %3762 = vmatpush2.xpose.msra.mxu0 0.0
    %3763 = vmatprep.mubr.f32.mxu0 0.0
    %v3764 = vand.u32 %v3320, 4294901760
    %3765 = vmatmul.mubr.f32.gmra.mxu0 %v3764
    %v3766 = vpop.f32.mrf.mxu0
    %v3767 = vadd.f32 %v3695, %v3766
    %v3768 = vpop.f32.mrf.mxu0
    %3769 = vdwg.mxu0
    %3770 = vrot.lane.b32.xlu0 %v599, 96
    %v3771 = vpop.permute.xlu0 %3770
    %v3772 = vsel %vm607, %v599, 0
    %v3774 = vsel %vm607, %v3771, 0
    %3776 = vmatprep.subr.mxu0 0.0
    %3777 = vmatpush1.xpose.msra.mxu0 0.0
    %3778 = vmatprep.subr.mxu0 0.0
    %3779 = vmatpush1.xpose.msra.mxu0 0.0
    %3780 = vmatprep.subr.mxu0 0.0
    %3781 = vmatpush1.xpose.msra.mxu0 0.0
    %3782 = vmatprep.subr.mxu0 0.0
    %3783 = vmatpush1.xpose.msra.mxu0 0.0
    %3784 = vmatprep.subr.mxu0 0.0
    %3785 = vmatpush1.xpose.msra.mxu0 0.0
    %3786 = vmatprep.subr.mxu0 0.0
    %3787 = vmatpush1.xpose.msra.mxu0 0.0
    %3788 = vmatprep.subr.mxu0 0.0
    %3789 = vmatpush1.xpose.msra.mxu0 0.0
    %3790 = vmatprep.subr.mxu0 0.0
    %3791 = vmatpush1.xpose.msra.mxu0 0.0
    %3792 = vmatprep.subr.mxu0 0.0
    %3793 = vmatpush1.xpose.msra.mxu0 0.0
    %3794 = vmatprep.subr.mxu0 0.0
    %3795 = vmatpush1.xpose.msra.mxu0 0.0
    %3796 = vmatprep.subr.mxu0 0.0
    %3797 = vmatpush1.xpose.msra.mxu0 0.0
    %3798 = vmatprep.subr.mxu0 0.0
    %3799 = vmatpush1.xpose.msra.mxu0 0.0
    %3800 = vmatprep.subr.mxu0 0.0
    %3801 = vmatpush1.xpose.msra.mxu0 0.0
    %3802 = vmatprep.subr.mxu0 0.0
    %3803 = vmatpush1.xpose.msra.mxu0 0.0
    %3804 = vmatprep.subr.mxu0 0.0
    %3805 = vmatpush1.xpose.msra.mxu0 0.0
    %3806 = vmatprep.subr.mxu0 0.0
    %v3807 = vand.u32 %v3774, 4294901760
    %3808 = vmatpush1.xpose.msra.mxu0 %v3807
    %3809 = vmatprep.subr.mxu0 0.0
    %3810 = vmatpush2.xpose.msra.mxu0 0.0
    %3811 = vmatprep.subr.mxu0 0.0
    %3812 = vmatpush2.xpose.msra.mxu0 0.0
    %3813 = vmatprep.subr.mxu0 0.0
    %3814 = vmatpush2.xpose.msra.mxu0 0.0
    %3815 = vmatprep.subr.mxu0 0.0
    %3816 = vmatpush2.xpose.msra.mxu0 0.0
    %3817 = vmatprep.subr.mxu0 0.0
    %3818 = vmatpush2.xpose.msra.mxu0 0.0
    %3819 = vmatprep.subr.mxu0 0.0
    %3820 = vmatpush2.xpose.msra.mxu0 0.0
    %3821 = vmatprep.subr.mxu0 0.0
    %3822 = vmatpush2.xpose.msra.mxu0 0.0
    %3823 = vmatprep.subr.mxu0 0.0
    %3824 = vmatpush2.xpose.msra.mxu0 0.0
    %3825 = vmatprep.subr.mxu0 0.0
    %3826 = vmatpush2.xpose.msra.mxu0 0.0
    %3827 = vmatprep.subr.mxu0 0.0
    %3828 = vmatpush2.xpose.msra.mxu0 0.0
    %3829 = vmatprep.subr.mxu0 0.0
    %3830 = vmatpush2.xpose.msra.mxu0 0.0
    %3831 = vmatprep.subr.mxu0 0.0
    %3832 = vmatpush2.xpose.msra.mxu0 0.0
    %3833 = vmatprep.subr.mxu0 0.0
    %3834 = vmatpush2.xpose.msra.mxu0 0.0
    %3835 = vmatprep.subr.mxu0 0.0
    %3836 = vmatpush2.xpose.msra.mxu0 0.0
    %3837 = vmatprep.subr.mxu0 0.0
    %3838 = vmatpush2.xpose.msra.mxu0 0.0
    %3839 = vmatprep.subr.mxu0 0.0
    %3840 = vmatpush2.xpose.msra.mxu0 0.0
    %3841 = vmatprep.mubr.f32.mxu0 0.0
    %v3842 = vand.u32 %v3772, 4294901760
    %v3843 = vsub.f32 %v3772, %v3842
    %v3844 = vand.u32 %v3843, 4294901760
    %v3845 = vsub.f32 %v3843, %v3844
    %v3846 = vand.u32 %v3845, 4294901760
    %3847 = vmatmul.mubr.f32.gmra.mxu0 %v3846
    %v3848 = vpop.f32.mrf.mxu0
    %v3849 = vadd.f32 0.0, %v3848
    %v3850 = vpop.f32.mrf.mxu0
    %3851 = vdwg.mxu0
    %3852 = vmatprep.subr.mxu0 0.0
    %3853 = vmatpush1.xpose.msra.mxu0 0.0
    %3854 = vmatprep.subr.mxu0 0.0
    %3855 = vmatpush1.xpose.msra.mxu0 0.0
    %3856 = vmatprep.subr.mxu0 0.0
    %3857 = vmatpush1.xpose.msra.mxu0 0.0
    %3858 = vmatprep.subr.mxu0 0.0
    %3859 = vmatpush1.xpose.msra.mxu0 0.0
    %3860 = vmatprep.subr.mxu0 0.0
    %3861 = vmatpush1.xpose.msra.mxu0 0.0
    %3862 = vmatprep.subr.mxu0 0.0
    %3863 = vmatpush1.xpose.msra.mxu0 0.0
    %3864 = vmatprep.subr.mxu0 0.0
    %3865 = vmatpush1.xpose.msra.mxu0 0.0
    %3866 = vmatprep.subr.mxu0 0.0
    %3867 = vmatpush1.xpose.msra.mxu0 0.0
    %3868 = vmatprep.subr.mxu0 0.0
    %3869 = vmatpush1.xpose.msra.mxu0 0.0
    %3870 = vmatprep.subr.mxu0 0.0
    %3871 = vmatpush1.xpose.msra.mxu0 0.0
    %3872 = vmatprep.subr.mxu0 0.0
    %3873 = vmatpush1.xpose.msra.mxu0 0.0
    %3874 = vmatprep.subr.mxu0 0.0
    %3875 = vmatpush1.xpose.msra.mxu0 0.0
    %3876 = vmatprep.subr.mxu0 0.0
    %3877 = vmatpush1.xpose.msra.mxu0 0.0
    %3878 = vmatprep.subr.mxu0 0.0
    %3879 = vmatpush1.xpose.msra.mxu0 0.0
    %3880 = vmatprep.subr.mxu0 0.0
    %3881 = vmatpush1.xpose.msra.mxu0 0.0
    %3882 = vmatprep.subr.mxu0 0.0
    %v3883 = vand.u32 %v3774, 4294901760
    %v3884 = vsub.f32 %v3774, %v3883
    %v3885 = vand.u32 %v3884, 4294901760
    %v3886 = vsub.f32 %v3884, %v3885
    %v3887 = vand.u32 %v3886, 4294901760
    %3888 = vmatpush1.xpose.msra.mxu0 %v3887
    %3889 = vmatprep.subr.mxu0 0.0
    %3890 = vmatpush2.xpose.msra.mxu0 0.0
    %3891 = vmatprep.subr.mxu0 0.0
    %3892 = vmatpush2.xpose.msra.mxu0 0.0
    %3893 = vmatprep.subr.mxu0 0.0
    %3894 = vmatpush2.xpose.msra.mxu0 0.0
    %3895 = vmatprep.subr.mxu0 0.0
    %3896 = vmatpush2.xpose.msra.mxu0 0.0
    %3897 = vmatprep.subr.mxu0 0.0
    %3898 = vmatpush2.xpose.msra.mxu0 0.0
    %3899 = vmatprep.subr.mxu0 0.0
    %3900 = vmatpush2.xpose.msra.mxu0 0.0
    %3901 = vmatprep.subr.mxu0 0.0
    %3902 = vmatpush2.xpose.msra.mxu0 0.0
    %3903 = vmatprep.subr.mxu0 0.0
    %3904 = vmatpush2.xpose.msra.mxu0 0.0
    %3905 = vmatprep.subr.mxu0 0.0
    %3906 = vmatpush2.xpose.msra.mxu0 0.0
    %3907 = vmatprep.subr.mxu0 0.0
    %3908 = vmatpush2.xpose.msra.mxu0 0.0
    %3909 = vmatprep.subr.mxu0 0.0
    %3910 = vmatpush2.xpose.msra.mxu0 0.0
    %3911 = vmatprep.subr.mxu0 0.0
    %3912 = vmatpush2.xpose.msra.mxu0 0.0
    %3913 = vmatprep.subr.mxu0 0.0
    %3914 = vmatpush2.xpose.msra.mxu0 0.0
    %3915 = vmatprep.subr.mxu0 0.0
    %3916 = vmatpush2.xpose.msra.mxu0 0.0
    %3917 = vmatprep.subr.mxu0 0.0
    %3918 = vmatpush2.xpose.msra.mxu0 0.0
    %3919 = vmatprep.subr.mxu0 0.0
    %3920 = vmatpush2.xpose.msra.mxu0 0.0
    %3921 = vmatprep.mubr.f32.mxu0 0.0
    %v3922 = vand.u32 %v3772, 4294901760
    %3923 = vmatmul.mubr.f32.gmra.mxu0 %v3922
    %v3924 = vpop.f32.mrf.mxu0
    %v3925 = vadd.f32 %v3849, %v3924
    %v3926 = vpop.f32.mrf.mxu0
    %3927 = vdwg.mxu0
    %3928 = vmatprep.subr.mxu0 0.0
    %3929 = vmatpush1.xpose.msra.mxu0 0.0
    %3930 = vmatprep.subr.mxu0 0.0
    %3931 = vmatpush1.xpose.msra.mxu0 0.0
    %3932 = vmatprep.subr.mxu0 0.0
    %3933 = vmatpush1.xpose.msra.mxu0 0.0
    %3934 = vmatprep.subr.mxu0 0.0
    %3935 = vmatpush1.xpose.msra.mxu0 0.0
    %3936 = vmatprep.subr.mxu0 0.0
    %3937 = vmatpush1.xpose.msra.mxu0 0.0
    %3938 = vmatprep.subr.mxu0 0.0
    %3939 = vmatpush1.xpose.msra.mxu0 0.0
    %3940 = vmatprep.subr.mxu0 0.0
    %3941 = vmatpush1.xpose.msra.mxu0 0.0
    %3942 = vmatprep.subr.mxu0 0.0
    %3943 = vmatpush1.xpose.msra.mxu0 0.0
    %3944 = vmatprep.subr.mxu0 0.0
    %3945 = vmatpush1.xpose.msra.mxu0 0.0
    %3946 = vmatprep.subr.mxu0 0.0
    %3947 = vmatpush1.xpose.msra.mxu0 0.0
    %3948 = vmatprep.subr.mxu0 0.0
    %3949 = vmatpush1.xpose.msra.mxu0 0.0
    %3950 = vmatprep.subr.mxu0 0.0
    %3951 = vmatpush1.xpose.msra.mxu0 0.0
    %3952 = vmatprep.subr.mxu0 0.0
    %3953 = vmatpush1.xpose.msra.mxu0 0.0
    %3954 = vmatprep.subr.mxu0 0.0
    %3955 = vmatpush1.xpose.msra.mxu0 0.0
    %3956 = vmatprep.subr.mxu0 0.0
    %3957 = vmatpush1.xpose.msra.mxu0 0.0
    %3958 = vmatprep.subr.mxu0 0.0
    %v3959 = vand.u32 %v3774, 4294901760
    %v3960 = vsub.f32 %v3774, %v3959
    %3961 = vmatpush1.xpose.msra.mxu0 %v3960
    %3962 = vmatprep.subr.mxu0 0.0
    %3963 = vmatpush2.xpose.msra.mxu0 0.0
    %3964 = vmatprep.subr.mxu0 0.0
    %3965 = vmatpush2.xpose.msra.mxu0 0.0
    %3966 = vmatprep.subr.mxu0 0.0
    %3967 = vmatpush2.xpose.msra.mxu0 0.0
    %3968 = vmatprep.subr.mxu0 0.0
    %3969 = vmatpush2.xpose.msra.mxu0 0.0
    %3970 = vmatprep.subr.mxu0 0.0
    %3971 = vmatpush2.xpose.msra.mxu0 0.0
    %3972 = vmatprep.subr.mxu0 0.0
    %3973 = vmatpush2.xpose.msra.mxu0 0.0
    %3974 = vmatprep.subr.mxu0 0.0
    %3975 = vmatpush2.xpose.msra.mxu0 0.0
    %3976 = vmatprep.subr.mxu0 0.0
    %3977 = vmatpush2.xpose.msra.mxu0 0.0
    %3978 = vmatprep.subr.mxu0 0.0
    %3979 = vmatpush2.xpose.msra.mxu0 0.0
    %3980 = vmatprep.subr.mxu0 0.0
    %3981 = vmatpush2.xpose.msra.mxu0 0.0
    %3982 = vmatprep.subr.mxu0 0.0
    %3983 = vmatpush2.xpose.msra.mxu0 0.0
    %3984 = vmatprep.subr.mxu0 0.0
    %3985 = vmatpush2.xpose.msra.mxu0 0.0
    %3986 = vmatprep.subr.mxu0 0.0
    %3987 = vmatpush2.xpose.msra.mxu0 0.0
    %3988 = vmatprep.subr.mxu0 0.0
    %3989 = vmatpush2.xpose.msra.mxu0 0.0
    %3990 = vmatprep.subr.mxu0 0.0
    %3991 = vmatpush2.xpose.msra.mxu0 0.0
    %3992 = vmatprep.subr.mxu0 0.0
    %3993 = vmatpush2.xpose.msra.mxu0 0.0
    %3994 = vmatprep.mubr.f32.mxu0 0.0
    %v3995 = vand.u32 %v3772, 4294901760
    %v3996 = vsub.f32 %v3772, %v3995
    %3997 = vmatmul.mubr.f32.gmra.mxu0 %v3996
    %v3998 = vpop.f32.mrf.mxu0
    %v3999 = vadd.f32 %v3925, %v3998
    %v4000 = vpop.f32.mrf.mxu0
    %4001 = vdwg.mxu0
    %4002 = vmatprep.subr.mxu0 0.0
    %4003 = vmatpush1.xpose.msra.mxu0 0.0
    %4004 = vmatprep.subr.mxu0 0.0
    %4005 = vmatpush1.xpose.msra.mxu0 0.0
    %4006 = vmatprep.subr.mxu0 0.0
    %4007 = vmatpush1.xpose.msra.mxu0 0.0
    %4008 = vmatprep.subr.mxu0 0.0
    %4009 = vmatpush1.xpose.msra.mxu0 0.0
    %4010 = vmatprep.subr.mxu0 0.0
    %4011 = vmatpush1.xpose.msra.mxu0 0.0
    %4012 = vmatprep.subr.mxu0 0.0
    %4013 = vmatpush1.xpose.msra.mxu0 0.0
    %4014 = vmatprep.subr.mxu0 0.0
    %4015 = vmatpush1.xpose.msra.mxu0 0.0
    %4016 = vmatprep.subr.mxu0 0.0
    %4017 = vmatpush1.xpose.msra.mxu0 0.0
    %4018 = vmatprep.subr.mxu0 0.0
    %4019 = vmatpush1.xpose.msra.mxu0 0.0
    %4020 = vmatprep.subr.mxu0 0.0
    %4021 = vmatpush1.xpose.msra.mxu0 0.0
    %4022 = vmatprep.subr.mxu0 0.0
    %4023 = vmatpush1.xpose.msra.mxu0 0.0
    %4024 = vmatprep.subr.mxu0 0.0
    %4025 = vmatpush1.xpose.msra.mxu0 0.0
    %4026 = vmatprep.subr.mxu0 0.0
    %4027 = vmatpush1.xpose.msra.mxu0 0.0
    %4028 = vmatprep.subr.mxu0 0.0
    %4029 = vmatpush1.xpose.msra.mxu0 0.0
    %4030 = vmatprep.subr.mxu0 0.0
    %4031 = vmatpush1.xpose.msra.mxu0 0.0
    %4032 = vmatprep.subr.mxu0 0.0
    %v4033 = vand.u32 %v3774, 4294901760
    %4034 = vmatpush1.xpose.msra.mxu0 %v4033
    %4035 = vmatprep.subr.mxu0 0.0
    %4036 = vmatpush2.xpose.msra.mxu0 0.0
    %4037 = vmatprep.subr.mxu0 0.0
    %4038 = vmatpush2.xpose.msra.mxu0 0.0
    %4039 = vmatprep.subr.mxu0 0.0
    %4040 = vmatpush2.xpose.msra.mxu0 0.0
    %4041 = vmatprep.subr.mxu0 0.0
    %4042 = vmatpush2.xpose.msra.mxu0 0.0
    %4043 = vmatprep.subr.mxu0 0.0
    %4044 = vmatpush2.xpose.msra.mxu0 0.0
    %4045 = vmatprep.subr.mxu0 0.0
    %4046 = vmatpush2.xpose.msra.mxu0 0.0
    %4047 = vmatprep.subr.mxu0 0.0
    %4048 = vmatpush2.xpose.msra.mxu0 0.0
    %4049 = vmatprep.subr.mxu0 0.0
    %4050 = vmatpush2.xpose.msra.mxu0 0.0
    %4051 = vmatprep.subr.mxu0 0.0
    %4052 = vmatpush2.xpose.msra.mxu0 0.0
    %4053 = vmatprep.subr.mxu0 0.0
    %4054 = vmatpush2.xpose.msra.mxu0 0.0
    %4055 = vmatprep.subr.mxu0 0.0
    %4056 = vmatpush2.xpose.msra.mxu0 0.0
    %4057 = vmatprep.subr.mxu0 0.0
    %4058 = vmatpush2.xpose.msra.mxu0 0.0
    %4059 = vmatprep.subr.mxu0 0.0
    %4060 = vmatpush2.xpose.msra.mxu0 0.0
    %4061 = vmatprep.subr.mxu0 0.0
    %4062 = vmatpush2.xpose.msra.mxu0 0.0
    %4063 = vmatprep.subr.mxu0 0.0
    %4064 = vmatpush2.xpose.msra.mxu0 0.0
    %4065 = vmatprep.subr.mxu0 0.0
    %4066 = vmatpush2.xpose.msra.mxu0 0.0
    %4067 = vmatprep.mubr.f32.mxu0 0.0
    %v4068 = vand.u32 %v3772, 4294901760
    %v4069 = vsub.f32 %v3772, %v4068
    %v4070 = vand.u32 %v4069, 4294901760
    %4071 = vmatmul.mubr.f32.gmra.mxu0 %v4070
    %v4072 = vpop.f32.mrf.mxu0
    %v4073 = vadd.f32 %v3999, %v4072
    %v4074 = vpop.f32.mrf.mxu0
    %4075 = vdwg.mxu0
    %4076 = vmatprep.subr.mxu0 0.0
    %4077 = vmatpush1.xpose.msra.mxu0 0.0
    %4078 = vmatprep.subr.mxu0 0.0
    %4079 = vmatpush1.xpose.msra.mxu0 0.0
    %4080 = vmatprep.subr.mxu0 0.0
    %4081 = vmatpush1.xpose.msra.mxu0 0.0
    %4082 = vmatprep.subr.mxu0 0.0
    %4083 = vmatpush1.xpose.msra.mxu0 0.0
    %4084 = vmatprep.subr.mxu0 0.0
    %4085 = vmatpush1.xpose.msra.mxu0 0.0
    %4086 = vmatprep.subr.mxu0 0.0
    %4087 = vmatpush1.xpose.msra.mxu0 0.0
    %4088 = vmatprep.subr.mxu0 0.0
    %4089 = vmatpush1.xpose.msra.mxu0 0.0
    %4090 = vmatprep.subr.mxu0 0.0
    %4091 = vmatpush1.xpose.msra.mxu0 0.0
    %4092 = vmatprep.subr.mxu0 0.0
    %4093 = vmatpush1.xpose.msra.mxu0 0.0
    %4094 = vmatprep.subr.mxu0 0.0
    %4095 = vmatpush1.xpose.msra.mxu0 0.0
    %4096 = vmatprep.subr.mxu0 0.0
    %4097 = vmatpush1.xpose.msra.mxu0 0.0
    %4098 = vmatprep.subr.mxu0 0.0
    %4099 = vmatpush1.xpose.msra.mxu0 0.0
    %4100 = vmatprep.subr.mxu0 0.0
    %4101 = vmatpush1.xpose.msra.mxu0 0.0
    %4102 = vmatprep.subr.mxu0 0.0
    %4103 = vmatpush1.xpose.msra.mxu0 0.0
    %4104 = vmatprep.subr.mxu0 0.0
    %4105 = vmatpush1.xpose.msra.mxu0 0.0
    %4106 = vmatprep.subr.mxu0 0.0
    %v4107 = vand.u32 %v3774, 4294901760
    %v4108 = vsub.f32 %v3774, %v4107
    %v4109 = vand.u32 %v4108, 4294901760
    %4110 = vmatpush1.xpose.msra.mxu0 %v4109
    %4111 = vmatprep.subr.mxu0 0.0
    %4112 = vmatpush2.xpose.msra.mxu0 0.0
    %4113 = vmatprep.subr.mxu0 0.0
    %4114 = vmatpush2.xpose.msra.mxu0 0.0
    %4115 = vmatprep.subr.mxu0 0.0
    %4116 = vmatpush2.xpose.msra.mxu0 0.0
    %4117 = vmatprep.subr.mxu0 0.0
    %4118 = vmatpush2.xpose.msra.mxu0 0.0
    %4119 = vmatprep.subr.mxu0 0.0
    %4120 = vmatpush2.xpose.msra.mxu0 0.0
    %4121 = vmatprep.subr.mxu0 0.0
    %4122 = vmatpush2.xpose.msra.mxu0 0.0
    %4123 = vmatprep.subr.mxu0 0.0
    %4124 = vmatpush2.xpose.msra.mxu0 0.0
    %4125 = vmatprep.subr.mxu0 0.0
    %4126 = vmatpush2.xpose.msra.mxu0 0.0
    %4127 = vmatprep.subr.mxu0 0.0
    %4128 = vmatpush2.xpose.msra.mxu0 0.0
    %4129 = vmatprep.subr.mxu0 0.0
    %4130 = vmatpush2.xpose.msra.mxu0 0.0
    %4131 = vmatprep.subr.mxu0 0.0
    %4132 = vmatpush2.xpose.msra.mxu0 0.0
    %4133 = vmatprep.subr.mxu0 0.0
    %4134 = vmatpush2.xpose.msra.mxu0 0.0
    %4135 = vmatprep.subr.mxu0 0.0
    %4136 = vmatpush2.xpose.msra.mxu0 0.0
    %4137 = vmatprep.subr.mxu0 0.0
    %4138 = vmatpush2.xpose.msra.mxu0 0.0
    %4139 = vmatprep.subr.mxu0 0.0
    %4140 = vmatpush2.xpose.msra.mxu0 0.0
    %4141 = vmatprep.subr.mxu0 0.0
    %4142 = vmatpush2.xpose.msra.mxu0 0.0
    %4143 = vmatprep.mubr.f32.mxu0 0.0
    %v4144 = vand.u32 %v3772, 4294901760
    %4145 = vmatmul.mubr.f32.gmra.mxu0 %v4144
    %v4146 = vpop.f32.mrf.mxu0
    %v4147 = vadd.f32 %v4073, %v4146
    %v4148 = vpop.f32.mrf.mxu0
    %4149 = vdwg.mxu0
    %4150 = vmatprep.subr.mxu0 0.0
    %4151 = vmatpush1.xpose.msra.mxu0 0.0
    %4152 = vmatprep.subr.mxu0 0.0
    %4153 = vmatpush1.xpose.msra.mxu0 0.0
    %4154 = vmatprep.subr.mxu0 0.0
    %4155 = vmatpush1.xpose.msra.mxu0 0.0
    %4156 = vmatprep.subr.mxu0 0.0
    %4157 = vmatpush1.xpose.msra.mxu0 0.0
    %4158 = vmatprep.subr.mxu0 0.0
    %4159 = vmatpush1.xpose.msra.mxu0 0.0
    %4160 = vmatprep.subr.mxu0 0.0
    %4161 = vmatpush1.xpose.msra.mxu0 0.0
    %4162 = vmatprep.subr.mxu0 0.0
    %4163 = vmatpush1.xpose.msra.mxu0 0.0
    %4164 = vmatprep.subr.mxu0 0.0
    %4165 = vmatpush1.xpose.msra.mxu0 0.0
    %4166 = vmatprep.subr.mxu0 0.0
    %4167 = vmatpush1.xpose.msra.mxu0 0.0
    %4168 = vmatprep.subr.mxu0 0.0
    %4169 = vmatpush1.xpose.msra.mxu0 0.0
    %4170 = vmatprep.subr.mxu0 0.0
    %4171 = vmatpush1.xpose.msra.mxu0 0.0
    %4172 = vmatprep.subr.mxu0 0.0
    %4173 = vmatpush1.xpose.msra.mxu0 0.0
    %4174 = vmatprep.subr.mxu0 0.0
    %4175 = vmatpush1.xpose.msra.mxu0 0.0
    %4176 = vmatprep.subr.mxu0 0.0
    %4177 = vmatpush1.xpose.msra.mxu0 0.0
    %4178 = vmatprep.subr.mxu0 0.0
    %4179 = vmatpush1.xpose.msra.mxu0 0.0
    %4180 = vmatprep.subr.mxu0 0.0
    %v4181 = vand.u32 %v3774, 4294901760
    %4182 = vmatpush1.xpose.msra.mxu0 %v4181
    %4183 = vmatprep.subr.mxu0 0.0
    %4184 = vmatpush2.xpose.msra.mxu0 0.0
    %4185 = vmatprep.subr.mxu0 0.0
    %4186 = vmatpush2.xpose.msra.mxu0 0.0
    %4187 = vmatprep.subr.mxu0 0.0
    %4188 = vmatpush2.xpose.msra.mxu0 0.0
    %4189 = vmatprep.subr.mxu0 0.0
    %4190 = vmatpush2.xpose.msra.mxu0 0.0
    %4191 = vmatprep.subr.mxu0 0.0
    %4192 = vmatpush2.xpose.msra.mxu0 0.0
    %4193 = vmatprep.subr.mxu0 0.0
    %4194 = vmatpush2.xpose.msra.mxu0 0.0
    %4195 = vmatprep.subr.mxu0 0.0
    %4196 = vmatpush2.xpose.msra.mxu0 0.0
    %4197 = vmatprep.subr.mxu0 0.0
    %4198 = vmatpush2.xpose.msra.mxu0 0.0
    %4199 = vmatprep.subr.mxu0 0.0
    %4200 = vmatpush2.xpose.msra.mxu0 0.0
    %4201 = vmatprep.subr.mxu0 0.0
    %4202 = vmatpush2.xpose.msra.mxu0 0.0
    %4203 = vmatprep.subr.mxu0 0.0
    %4204 = vmatpush2.xpose.msra.mxu0 0.0
    %4205 = vmatprep.subr.mxu0 0.0
    %4206 = vmatpush2.xpose.msra.mxu0 0.0
    %4207 = vmatprep.subr.mxu0 0.0
    %4208 = vmatpush2.xpose.msra.mxu0 0.0
    %4209 = vmatprep.subr.mxu0 0.0
    %4210 = vmatpush2.xpose.msra.mxu0 0.0
    %4211 = vmatprep.subr.mxu0 0.0
    %4212 = vmatpush2.xpose.msra.mxu0 0.0
    %4213 = vmatprep.subr.mxu0 0.0
    %4214 = vmatpush2.xpose.msra.mxu0 0.0
    %4215 = vmatprep.mubr.f32.mxu0 0.0
    %v4216 = vand.u32 %v3772, 4294901760
    %4217 = vmatmul.mubr.f32.gmra.mxu0 %v4216
    %v4218 = vpop.f32.mrf.mxu0
    %v4219 = vadd.f32 %v4147, %v4218
    %v4220 = vpop.f32.mrf.mxu0
    %4221 = vdwg.mxu0
    %v4222 = vsel %vm604, 1, 0
    %vm4223 = vcmp.eq.s32.totalorder %v4222, 1
    %v4224 = vsel %vm4223, %v1055, -10000.0
    %v4225 = vsel %vm4223, %v1507, -10000.0
    %v4226 = vsel %vm4223, %v1959, -10000.0
    %v4227 = vsel %vm4223, %v2411, -10000.0
    %v4228 = vsel %vm4223, %v2863, -10000.0
    %v4229 = vsel %vm4223, %v3315, -10000.0
    %v4230 = vsel %vm4223, %v3767, -10000.0
    %v4231 = vsel %vm4223, %v4219, -10000.0
    %v4232 = vsel %vm607, %v4224, -inf
    %4233 = vmax.xlane.f32.xlu0 %v4232
    %v4234 = vpop.xlane.xlu0 %4233
    %v4235 = vsel %vm607, %v4225, -inf
    %4236 = vmax.xlane.f32.xlu0 %v4235
    %v4237 = vpop.xlane.xlu0 %4236
    %v4238 = vsel %vm607, %v4226, -inf
    %4239 = vmax.xlane.f32.xlu0 %v4238
    %v4240 = vpop.xlane.xlu0 %4239
    %v4241 = vsel %vm607, %v4227, -inf
    %4242 = vmax.xlane.f32.xlu0 %v4241
    %v4243 = vpop.xlane.xlu0 %4242
    %v4244 = vsel %vm607, %v4228, -inf
    %4245 = vmax.xlane.f32.xlu0 %v4244
    %v4246 = vpop.xlane.xlu0 %4245
    %v4247 = vsel %vm607, %v4229, -inf
    %4248 = vmax.xlane.f32.xlu0 %v4247
    %v4249 = vpop.xlane.xlu0 %4248
    %v4250 = vsel %vm607, %v4230, -inf
    %4251 = vmax.xlane.f32.xlu0 %v4250
    %v4252 = vpop.xlane.xlu0 %4251
    %v4253 = vsel %vm607, %v4231, -inf
    %4254 = vmax.xlane.f32.xlu0 %v4253
    %v4255 = vpop.xlane.xlu0 %4254
    %v4256 = vsub.f32 %v4224, %v4234
    %v4257 = vsub.f32 %v4225, %v4237
    %v4258 = vsub.f32 %v4226, %v4240
    %v4259 = vsub.f32 %v4227, %v4243
    %v4260 = vsub.f32 %v4228, %v4246
    %v4261 = vsub.f32 %v4229, %v4249
    %v4262 = vsub.f32 %v4230, %v4252
    %v4263 = vsub.f32 %v4231, %v4255
    %v4264 = vmul.f32 %v4256, 1.442695
    %v4265 = vpow.pop %v4264
    %v4266 = vmul.f32 %v4257, 1.442695
    %v4267 = vpow.pop %v4266
    %v4268 = vmul.f32 %v4258, 1.442695
    %v4269 = vpow.pop %v4268
    %v4270 = vmul.f32 %v4259, 1.442695
    %v4271 = vpow.pop %v4270
    %v4272 = vmul.f32 %v4260, 1.442695
    %v4273 = vpow.pop %v4272
    %v4274 = vmul.f32 %v4261, 1.442695
    %v4275 = vpow.pop %v4274
    %v4276 = vmul.f32 %v4262, 1.442695
    %v4277 = vpow.pop %v4276
    %v4278 = vmul.f32 %v4263, 1.442695
    %v4279 = vpow.pop %v4278
    %v4280 = vsel %vm607, %v4265, 0.0
    %4281 = vadd.xlane.f32.xlu0 %v4280
    %v4282 = vpop.xlane.xlu0 %4281
    %v4283 = vsel %vm607, %v4267, 0.0
    %4284 = vadd.xlane.f32.xlu0 %v4283
    %v4285 = vpop.xlane.xlu0 %4284
    %v4286 = vsel %vm607, %v4269, 0.0
    %4287 = vadd.xlane.f32.xlu0 %v4286
    %v4288 = vpop.xlane.xlu0 %4287
    %v4289 = vsel %vm607, %v4271, 0.0
    %4290 = vadd.xlane.f32.xlu0 %v4289
    %v4291 = vpop.xlane.xlu0 %4290
    %v4292 = vsel %vm607, %v4273, 0.0
    %4293 = vadd.xlane.f32.xlu0 %v4292
    %v4294 = vpop.xlane.xlu0 %4293
    %v4295 = vsel %vm607, %v4275, 0.0
    %4296 = vadd.xlane.f32.xlu0 %v4295
    %v4297 = vpop.xlane.xlu0 %4296
    %v4298 = vsel %vm607, %v4277, 0.0
    %4299 = vadd.xlane.f32.xlu0 %v4298
    %v4300 = vpop.xlane.xlu0 %4299
    %v4301 = vsel %vm607, %v4279, 0.0
    %4302 = vadd.xlane.f32.xlu0 %v4301
    %v4303 = vpop.xlane.xlu0 %4302
    %v4304 = vrcp.pop %v4282
    %v4305 = vmul.f32 %v4265, %v4304
    %v4306 = vrcp.pop %v4285
    %v4307 = vmul.f32 %v4267, %v4306
    %v4308 = vrcp.pop %v4288
    %v4309 = vmul.f32 %v4269, %v4308
    %v4310 = vrcp.pop %v4291
    %v4311 = vmul.f32 %v4271, %v4310
    %v4312 = vrcp.pop %v4294
    %v4313 = vmul.f32 %v4273, %v4312
    %v4314 = vrcp.pop %v4297
    %v4315 = vmul.f32 %v4275, %v4314
    %v4316 = vrcp.pop %v4300
    %v4317 = vmul.f32 %v4277, %v4316
    %v4318 = vrcp.pop %v4303
    %v4319 = vmul.f32 %v4279, %v4318
    %4320 = vrot.lane.b32.xlu0 %v577, 64
    %v4321 = vpop.permute.xlu0 %4320
    %v4324 = vsel %vm607, %v4305, 0
    %4326 = vmatprep.subr.mxu0 0.0
    %4327 = vmatpush1.msra.mxu0 0.0
    %4328 = vmatprep.subr.mxu0 0.0
    %4329 = vmatpush1.msra.mxu0 0.0
    %4330 = vmatprep.subr.mxu0 0.0
    %4331 = vmatpush1.msra.mxu0 0.0
    %4332 = vmatprep.subr.mxu0 0.0
    %4333 = vmatpush1.msra.mxu0 0.0
    %4334 = vmatprep.subr.mxu0 0.0
    %4335 = vmatpush1.msra.mxu0 0.0
    %4336 = vmatprep.subr.mxu0 0.0
    %4337 = vmatpush1.msra.mxu0 0.0
    %4338 = vmatprep.subr.mxu0 0.0
    %4339 = vmatpush1.msra.mxu0 0.0
    %4340 = vmatprep.subr.mxu0 0.0
    %4341 = vmatpush1.msra.mxu0 0.0
    %4342 = vmatprep.subr.mxu0 0.0
    %4343 = vmatpush1.msra.mxu0 0.0
    %4344 = vmatprep.subr.mxu0 0.0
    %4345 = vmatpush1.msra.mxu0 0.0
    %4346 = vmatprep.subr.mxu0 0.0
    %4347 = vmatpush1.msra.mxu0 0.0
    %4348 = vmatprep.subr.mxu0 0.0
    %4349 = vmatpush1.msra.mxu0 0.0
    %4350 = vmatprep.subr.mxu0 0.0
    %4351 = vmatpush1.msra.mxu0 0.0
    %4352 = vmatprep.subr.mxu0 0.0
    %4353 = vmatpush1.msra.mxu0 0.0
    %4354 = vmatprep.subr.mxu0 0.0
    %4355 = vmatpush1.msra.mxu0 0.0
    %4356 = vmatprep.subr.mxu0 0.0
    %v4357 = vand.u32 %v4321, 4294901760
    %4358 = vmatpush1.msra.mxu0 %v4357
    %4359 = vmatprep.subr.mxu0 0.0
    %4360 = vmatpush2.msra.mxu0 0.0
    %4361 = vmatprep.subr.mxu0 0.0
    %4362 = vmatpush2.msra.mxu0 0.0
    %4363 = vmatprep.subr.mxu0 0.0
    %4364 = vmatpush2.msra.mxu0 0.0
    %4365 = vmatprep.subr.mxu0 0.0
    %4366 = vmatpush2.msra.mxu0 0.0
    %4367 = vmatprep.subr.mxu0 0.0
    %4368 = vmatpush2.msra.mxu0 0.0
    %4369 = vmatprep.subr.mxu0 0.0
    %4370 = vmatpush2.msra.mxu0 0.0
    %4371 = vmatprep.subr.mxu0 0.0
    %4372 = vmatpush2.msra.mxu0 0.0
    %4373 = vmatprep.subr.mxu0 0.0
    %4374 = vmatpush2.msra.mxu0 0.0
    %4375 = vmatprep.subr.mxu0 0.0
    %4376 = vmatpush2.msra.mxu0 0.0
    %4377 = vmatprep.subr.mxu0 0.0
    %4378 = vmatpush2.msra.mxu0 0.0
    %4379 = vmatprep.subr.mxu0 0.0
    %4380 = vmatpush2.msra.mxu0 0.0
    %4381 = vmatprep.subr.mxu0 0.0
    %4382 = vmatpush2.msra.mxu0 0.0
    %4383 = vmatprep.subr.mxu0 0.0
    %4384 = vmatpush2.msra.mxu0 0.0
    %4385 = vmatprep.subr.mxu0 0.0
    %4386 = vmatpush2.msra.mxu0 0.0
    %4387 = vmatprep.subr.mxu0 0.0
    %4388 = vmatpush2.msra.mxu0 0.0
    %4389 = vmatprep.subr.mxu0 0.0
    %4390 = vmatpush2.msra.mxu0 0.0
    %4391 = vmatprep.mubr.f32.mxu0 0.0
    %v4392 = vand.u32 %v4324, 4294901760
    %v4393 = vsub.f32 %v4324, %v4392
    %v4394 = vand.u32 %v4393, 4294901760
    %v4395 = vsub.f32 %v4393, %v4394
    %v4396 = vand.u32 %v4395, 4294901760
    %4397 = vmatmul.mubr.f32.gmra.mxu0 %v4396
    %v4398 = vpop.f32.mrf.mxu0
    %v4399 = vadd.f32 0.0, %v4398
    %v4400 = vpop.f32.mrf.mxu0
    %4401 = vdwg.mxu0
    %4402 = vmatprep.subr.mxu0 0.0
    %4403 = vmatpush1.msra.mxu0 0.0
    %4404 = vmatprep.subr.mxu0 0.0
    %4405 = vmatpush1.msra.mxu0 0.0
    %4406 = vmatprep.subr.mxu0 0.0
    %4407 = vmatpush1.msra.mxu0 0.0
    %4408 = vmatprep.subr.mxu0 0.0
    %4409 = vmatpush1.msra.mxu0 0.0
    %4410 = vmatprep.subr.mxu0 0.0
    %4411 = vmatpush1.msra.mxu0 0.0
    %4412 = vmatprep.subr.mxu0 0.0
    %4413 = vmatpush1.msra.mxu0 0.0
    %4414 = vmatprep.subr.mxu0 0.0
    %4415 = vmatpush1.msra.mxu0 0.0
    %4416 = vmatprep.subr.mxu0 0.0
    %4417 = vmatpush1.msra.mxu0 0.0
    %4418 = vmatprep.subr.mxu0 0.0
    %4419 = vmatpush1.msra.mxu0 0.0
    %4420 = vmatprep.subr.mxu0 0.0
    %4421 = vmatpush1.msra.mxu0 0.0
    %4422 = vmatprep.subr.mxu0 0.0
    %4423 = vmatpush1.msra.mxu0 0.0
    %4424 = vmatprep.subr.mxu0 0.0
    %4425 = vmatpush1.msra.mxu0 0.0
    %4426 = vmatprep.subr.mxu0 0.0
    %4427 = vmatpush1.msra.mxu0 0.0
    %4428 = vmatprep.subr.mxu0 0.0
    %4429 = vmatpush1.msra.mxu0 0.0
    %4430 = vmatprep.subr.mxu0 0.0
    %4431 = vmatpush1.msra.mxu0 0.0
    %4432 = vmatprep.subr.mxu0 0.0
    %v4433 = vand.u32 %v4321, 4294901760
    %v4434 = vsub.f32 %v4321, %v4433
    %v4435 = vand.u32 %v4434, 4294901760
    %v4436 = vsub.f32 %v4434, %v4435
    %v4437 = vand.u32 %v4436, 4294901760
    %4438 = vmatpush1.msra.mxu0 %v4437
    %4439 = vmatprep.subr.mxu0 0.0
    %4440 = vmatpush2.msra.mxu0 0.0
    %4441 = vmatprep.subr.mxu0 0.0
    %4442 = vmatpush2.msra.mxu0 0.0
    %4443 = vmatprep.subr.mxu0 0.0
    %4444 = vmatpush2.msra.mxu0 0.0
    %4445 = vmatprep.subr.mxu0 0.0
    %4446 = vmatpush2.msra.mxu0 0.0
    %4447 = vmatprep.subr.mxu0 0.0
    %4448 = vmatpush2.msra.mxu0 0.0
    %4449 = vmatprep.subr.mxu0 0.0
    %4450 = vmatpush2.msra.mxu0 0.0
    %4451 = vmatprep.subr.mxu0 0.0
    %4452 = vmatpush2.msra.mxu0 0.0
    %4453 = vmatprep.subr.mxu0 0.0
    %4454 = vmatpush2.msra.mxu0 0.0
    %4455 = vmatprep.subr.mxu0 0.0
    %4456 = vmatpush2.msra.mxu0 0.0
    %4457 = vmatprep.subr.mxu0 0.0
    %4458 = vmatpush2.msra.mxu0 0.0
    %4459 = vmatprep.subr.mxu0 0.0
    %4460 = vmatpush2.msra.mxu0 0.0
    %4461 = vmatprep.subr.mxu0 0.0
    %4462 = vmatpush2.msra.mxu0 0.0
    %4463 = vmatprep.subr.mxu0 0.0
    %4464 = vmatpush2.msra.mxu0 0.0
    %4465 = vmatprep.subr.mxu0 0.0
    %4466 = vmatpush2.msra.mxu0 0.0
    %4467 = vmatprep.subr.mxu0 0.0
    %4468 = vmatpush2.msra.mxu0 0.0
    %4469 = vmatprep.subr.mxu0 0.0
    %4470 = vmatpush2.msra.mxu0 0.0
    %4471 = vmatprep.mubr.f32.mxu0 0.0
    %v4472 = vand.u32 %v4324, 4294901760
    %4473 = vmatmul.mubr.f32.gmra.mxu0 %v4472
    %v4474 = vpop.f32.mrf.mxu0
    %v4475 = vadd.f32 %v4399, %v4474
    %v4476 = vpop.f32.mrf.mxu0
    %4477 = vdwg.mxu0
    %4478 = vmatprep.subr.mxu0 0.0
    %4479 = vmatpush1.msra.mxu0 0.0
    %4480 = vmatprep.subr.mxu0 0.0
    %4481 = vmatpush1.msra.mxu0 0.0
    %4482 = vmatprep.subr.mxu0 0.0
    %4483 = vmatpush1.msra.mxu0 0.0
    %4484 = vmatprep.subr.mxu0 0.0
    %4485 = vmatpush1.msra.mxu0 0.0
    %4486 = vmatprep.subr.mxu0 0.0
    %4487 = vmatpush1.msra.mxu0 0.0
    %4488 = vmatprep.subr.mxu0 0.0
    %4489 = vmatpush1.msra.mxu0 0.0
    %4490 = vmatprep.subr.mxu0 0.0
    %4491 = vmatpush1.msra.mxu0 0.0
    %4492 = vmatprep.subr.mxu0 0.0
    %4493 = vmatpush1.msra.mxu0 0.0
    %4494 = vmatprep.subr.mxu0 0.0
    %4495 = vmatpush1.msra.mxu0 0.0
    %4496 = vmatprep.subr.mxu0 0.0
    %4497 = vmatpush1.msra.mxu0 0.0
    %4498 = vmatprep.subr.mxu0 0.0
    %4499 = vmatpush1.msra.mxu0 0.0
    %4500 = vmatprep.subr.mxu0 0.0
    %4501 = vmatpush1.msra.mxu0 0.0
    %4502 = vmatprep.subr.mxu0 0.0
    %4503 = vmatpush1.msra.mxu0 0.0
    %4504 = vmatprep.subr.mxu0 0.0
    %4505 = vmatpush1.msra.mxu0 0.0
    %4506 = vmatprep.subr.mxu0 0.0
    %4507 = vmatpush1.msra.mxu0 0.0
    %4508 = vmatprep.subr.mxu0 0.0
    %v4509 = vand.u32 %v4321, 4294901760
    %v4510 = vsub.f32 %v4321, %v4509
    %4511 = vmatpush1.msra.mxu0 %v4510
    %4512 = vmatprep.subr.mxu0 0.0
    %4513 = vmatpush2.msra.mxu0 0.0
    %4514 = vmatprep.subr.mxu0 0.0
    %4515 = vmatpush2.msra.mxu0 0.0
    %4516 = vmatprep.subr.mxu0 0.0
    %4517 = vmatpush2.msra.mxu0 0.0
    %4518 = vmatprep.subr.mxu0 0.0
    %4519 = vmatpush2.msra.mxu0 0.0
    %4520 = vmatprep.subr.mxu0 0.0
    %4521 = vmatpush2.msra.mxu0 0.0
    %4522 = vmatprep.subr.mxu0 0.0
    %4523 = vmatpush2.msra.mxu0 0.0
    %4524 = vmatprep.subr.mxu0 0.0
    %4525 = vmatpush2.msra.mxu0 0.0
    %4526 = vmatprep.subr.mxu0 0.0
    %4527 = vmatpush2.msra.mxu0 0.0
    %4528 = vmatprep.subr.mxu0 0.0
    %4529 = vmatpush2.msra.mxu0 0.0
    %4530 = vmatprep.subr.mxu0 0.0
    %4531 = vmatpush2.msra.mxu0 0.0
    %4532 = vmatprep.subr.mxu0 0.0
    %4533 = vmatpush2.msra.mxu0 0.0
    %4534 = vmatprep.subr.mxu0 0.0
    %4535 = vmatpush2.msra.mxu0 0.0
    %4536 = vmatprep.subr.mxu0 0.0
    %4537 = vmatpush2.msra.mxu0 0.0
    %4538 = vmatprep.subr.mxu0 0.0
    %4539 = vmatpush2.msra.mxu0 0.0
    %4540 = vmatprep.subr.mxu0 0.0
    %4541 = vmatpush2.msra.mxu0 0.0
    %4542 = vmatprep.subr.mxu0 0.0
    %4543 = vmatpush2.msra.mxu0 0.0
    %4544 = vmatprep.mubr.f32.mxu0 0.0
    %v4545 = vand.u32 %v4324, 4294901760
    %v4546 = vsub.f32 %v4324, %v4545
    %4547 = vmatmul.mubr.f32.gmra.mxu0 %v4546
    %v4548 = vpop.f32.mrf.mxu0
    %v4549 = vadd.f32 %v4475, %v4548
    %v4550 = vpop.f32.mrf.mxu0
    %4551 = vdwg.mxu0
    %4552 = vmatprep.subr.mxu0 0.0
    %4553 = vmatpush1.msra.mxu0 0.0
    %4554 = vmatprep.subr.mxu0 0.0
    %4555 = vmatpush1.msra.mxu0 0.0
    %4556 = vmatprep.subr.mxu0 0.0
    %4557 = vmatpush1.msra.mxu0 0.0
    %4558 = vmatprep.subr.mxu0 0.0
    %4559 = vmatpush1.msra.mxu0 0.0
    %4560 = vmatprep.subr.mxu0 0.0
    %4561 = vmatpush1.msra.mxu0 0.0
    %4562 = vmatprep.subr.mxu0 0.0
    %4563 = vmatpush1.msra.mxu0 0.0
    %4564 = vmatprep.subr.mxu0 0.0
    %4565 = vmatpush1.msra.mxu0 0.0
    %4566 = vmatprep.subr.mxu0 0.0
    %4567 = vmatpush1.msra.mxu0 0.0
    %4568 = vmatprep.subr.mxu0 0.0
    %4569 = vmatpush1.msra.mxu0 0.0
    %4570 = vmatprep.subr.mxu0 0.0
    %4571 = vmatpush1.msra.mxu0 0.0
    %4572 = vmatprep.subr.mxu0 0.0
    %4573 = vmatpush1.msra.mxu0 0.0
    %4574 = vmatprep.subr.mxu0 0.0
    %4575 = vmatpush1.msra.mxu0 0.0
    %4576 = vmatprep.subr.mxu0 0.0
    %4577 = vmatpush1.msra.mxu0 0.0
    %4578 = vmatprep.subr.mxu0 0.0
    %4579 = vmatpush1.msra.mxu0 0.0
    %4580 = vmatprep.subr.mxu0 0.0
    %4581 = vmatpush1.msra.mxu0 0.0
    %4582 = vmatprep.subr.mxu0 0.0
    %v4583 = vand.u32 %v4321, 4294901760
    %4584 = vmatpush1.msra.mxu0 %v4583
    %4585 = vmatprep.subr.mxu0 0.0
    %4586 = vmatpush2.msra.mxu0 0.0
    %4587 = vmatprep.subr.mxu0 0.0
    %4588 = vmatpush2.msra.mxu0 0.0
    %4589 = vmatprep.subr.mxu0 0.0
    %4590 = vmatpush2.msra.mxu0 0.0
    %4591 = vmatprep.subr.mxu0 0.0
    %4592 = vmatpush2.msra.mxu0 0.0
    %4593 = vmatprep.subr.mxu0 0.0
    %4594 = vmatpush2.msra.mxu0 0.0
    %4595 = vmatprep.subr.mxu0 0.0
    %4596 = vmatpush2.msra.mxu0 0.0
    %4597 = vmatprep.subr.mxu0 0.0
    %4598 = vmatpush2.msra.mxu0 0.0
    %4599 = vmatprep.subr.mxu0 0.0
    %4600 = vmatpush2.msra.mxu0 0.0
    %4601 = vmatprep.subr.mxu0 0.0
    %4602 = vmatpush2.msra.mxu0 0.0
    %4603 = vmatprep.subr.mxu0 0.0
    %4604 = vmatpush2.msra.mxu0 0.0
    %4605 = vmatprep.subr.mxu0 0.0
    %4606 = vmatpush2.msra.mxu0 0.0
    %4607 = vmatprep.subr.mxu0 0.0
    %4608 = vmatpush2.msra.mxu0 0.0
    %4609 = vmatprep.subr.mxu0 0.0
    %4610 = vmatpush2.msra.mxu0 0.0
    %4611 = vmatprep.subr.mxu0 0.0
    %4612 = vmatpush2.msra.mxu0 0.0
    %4613 = vmatprep.subr.mxu0 0.0
    %4614 = vmatpush2.msra.mxu0 0.0
    %4615 = vmatprep.subr.mxu0 0.0
    %4616 = vmatpush2.msra.mxu0 0.0
    %4617 = vmatprep.mubr.f32.mxu0 0.0
    %v4618 = vand.u32 %v4324, 4294901760
    %v4619 = vsub.f32 %v4324, %v4618
    %v4620 = vand.u32 %v4619, 4294901760
    %4621 = vmatmul.mubr.f32.gmra.mxu0 %v4620
    %v4622 = vpop.f32.mrf.mxu0
    %v4623 = vadd.f32 %v4549, %v4622
    %v4624 = vpop.f32.mrf.mxu0
    %4625 = vdwg.mxu0
    %4626 = vmatprep.subr.mxu0 0.0
    %4627 = vmatpush1.msra.mxu0 0.0
    %4628 = vmatprep.subr.mxu0 0.0
    %4629 = vmatpush1.msra.mxu0 0.0
    %4630 = vmatprep.subr.mxu0 0.0
    %4631 = vmatpush1.msra.mxu0 0.0
    %4632 = vmatprep.subr.mxu0 0.0
    %4633 = vmatpush1.msra.mxu0 0.0
    %4634 = vmatprep.subr.mxu0 0.0
    %4635 = vmatpush1.msra.mxu0 0.0
    %4636 = vmatprep.subr.mxu0 0.0
    %4637 = vmatpush1.msra.mxu0 0.0
    %4638 = vmatprep.subr.mxu0 0.0
    %4639 = vmatpush1.msra.mxu0 0.0
    %4640 = vmatprep.subr.mxu0 0.0
    %4641 = vmatpush1.msra.mxu0 0.0
    %4642 = vmatprep.subr.mxu0 0.0
    %4643 = vmatpush1.msra.mxu0 0.0
    %4644 = vmatprep.subr.mxu0 0.0
    %4645 = vmatpush1.msra.mxu0 0.0
    %4646 = vmatprep.subr.mxu0 0.0
    %4647 = vmatpush1.msra.mxu0 0.0
    %4648 = vmatprep.subr.mxu0 0.0
    %4649 = vmatpush1.msra.mxu0 0.0
    %4650 = vmatprep.subr.mxu0 0.0
    %4651 = vmatpush1.msra.mxu0 0.0
    %4652 = vmatprep.subr.mxu0 0.0
    %4653 = vmatpush1.msra.mxu0 0.0
    %4654 = vmatprep.subr.mxu0 0.0
    %4655 = vmatpush1.msra.mxu0 0.0
    %4656 = vmatprep.subr.mxu0 0.0
    %v4657 = vand.u32 %v4321, 4294901760
    %v4658 = vsub.f32 %v4321, %v4657
    %v4659 = vand.u32 %v4658, 4294901760
    %4660 = vmatpush1.msra.mxu0 %v4659
    %4661 = vmatprep.subr.mxu0 0.0
    %4662 = vmatpush2.msra.mxu0 0.0
    %4663 = vmatprep.subr.mxu0 0.0
    %4664 = vmatpush2.msra.mxu0 0.0
    %4665 = vmatprep.subr.mxu0 0.0
    %4666 = vmatpush2.msra.mxu0 0.0
    %4667 = vmatprep.subr.mxu0 0.0
    %4668 = vmatpush2.msra.mxu0 0.0
    %4669 = vmatprep.subr.mxu0 0.0
    %4670 = vmatpush2.msra.mxu0 0.0
    %4671 = vmatprep.subr.mxu0 0.0
    %4672 = vmatpush2.msra.mxu0 0.0
    %4673 = vmatprep.subr.mxu0 0.0
    %4674 = vmatpush2.msra.mxu0 0.0
    %4675 = vmatprep.subr.mxu0 0.0
    %4676 = vmatpush2.msra.mxu0 0.0
    %4677 = vmatprep.subr.mxu0 0.0
    %4678 = vmatpush2.msra.mxu0 0.0
    %4679 = vmatprep.subr.mxu0 0.0
    %4680 = vmatpush2.msra.mxu0 0.0
    %4681 = vmatprep.subr.mxu0 0.0
    %4682 = vmatpush2.msra.mxu0 0.0
    %4683 = vmatprep.subr.mxu0 0.0
    %4684 = vmatpush2.msra.mxu0 0.0
    %4685 = vmatprep.subr.mxu0 0.0
    %4686 = vmatpush2.msra.mxu0 0.0
    %4687 = vmatprep.subr.mxu0 0.0
    %4688 = vmatpush2.msra.mxu0 0.0
    %4689 = vmatprep.subr.mxu0 0.0
    %4690 = vmatpush2.msra.mxu0 0.0
    %4691 = vmatprep.subr.mxu0 0.0
    %4692 = vmatpush2.msra.mxu0 0.0
    %4693 = vmatprep.mubr.f32.mxu0 0.0
    %v4694 = vand.u32 %v4324, 4294901760
    %4695 = vmatmul.mubr.f32.gmra.mxu0 %v4694
    %v4696 = vpop.f32.mrf.mxu0
    %v4697 = vadd.f32 %v4623, %v4696
    %v4698 = vpop.f32.mrf.mxu0
    %4699 = vdwg.mxu0
    %4700 = vmatprep.subr.mxu0 0.0
    %4701 = vmatpush1.msra.mxu0 0.0
    %4702 = vmatprep.subr.mxu0 0.0
    %4703 = vmatpush1.msra.mxu0 0.0
    %4704 = vmatprep.subr.mxu0 0.0
    %4705 = vmatpush1.msra.mxu0 0.0
    %4706 = vmatprep.subr.mxu0 0.0
    %4707 = vmatpush1.msra.mxu0 0.0
    %4708 = vmatprep.subr.mxu0 0.0
    %4709 = vmatpush1.msra.mxu0 0.0
    %4710 = vmatprep.subr.mxu0 0.0
    %4711 = vmatpush1.msra.mxu0 0.0
    %4712 = vmatprep.subr.mxu0 0.0
    %4713 = vmatpush1.msra.mxu0 0.0
    %4714 = vmatprep.subr.mxu0 0.0
    %4715 = vmatpush1.msra.mxu0 0.0
    %4716 = vmatprep.subr.mxu0 0.0
    %4717 = vmatpush1.msra.mxu0 0.0
    %4718 = vmatprep.subr.mxu0 0.0
    %4719 = vmatpush1.msra.mxu0 0.0
    %4720 = vmatprep.subr.mxu0 0.0
    %4721 = vmatpush1.msra.mxu0 0.0
    %4722 = vmatprep.subr.mxu0 0.0
    %4723 = vmatpush1.msra.mxu0 0.0
    %4724 = vmatprep.subr.mxu0 0.0
    %4725 = vmatpush1.msra.mxu0 0.0
    %4726 = vmatprep.subr.mxu0 0.0
    %4727 = vmatpush1.msra.mxu0 0.0
    %4728 = vmatprep.subr.mxu0 0.0
    %4729 = vmatpush1.msra.mxu0 0.0
    %4730 = vmatprep.subr.mxu0 0.0
    %v4731 = vand.u32 %v4321, 4294901760
    %4732 = vmatpush1.msra.mxu0 %v4731
    %4733 = vmatprep.subr.mxu0 0.0
    %4734 = vmatpush2.msra.mxu0 0.0
    %4735 = vmatprep.subr.mxu0 0.0
    %4736 = vmatpush2.msra.mxu0 0.0
    %4737 = vmatprep.subr.mxu0 0.0
    %4738 = vmatpush2.msra.mxu0 0.0
    %4739 = vmatprep.subr.mxu0 0.0
    %4740 = vmatpush2.msra.mxu0 0.0
    %4741 = vmatprep.subr.mxu0 0.0
    %4742 = vmatpush2.msra.mxu0 0.0
    %4743 = vmatprep.subr.mxu0 0.0
    %4744 = vmatpush2.msra.mxu0 0.0
    %4745 = vmatprep.subr.mxu0 0.0
    %4746 = vmatpush2.msra.mxu0 0.0
    %4747 = vmatprep.subr.mxu0 0.0
    %4748 = vmatpush2.msra.mxu0 0.0
    %4749 = vmatprep.subr.mxu0 0.0
    %4750 = vmatpush2.msra.mxu0 0.0
    %4751 = vmatprep.subr.mxu0 0.0
    %4752 = vmatpush2.msra.mxu0 0.0
    %4753 = vmatprep.subr.mxu0 0.0
    %4754 = vmatpush2.msra.mxu0 0.0
    %4755 = vmatprep.subr.mxu0 0.0
    %4756 = vmatpush2.msra.mxu0 0.0
    %4757 = vmatprep.subr.mxu0 0.0
    %4758 = vmatpush2.msra.mxu0 0.0
    %4759 = vmatprep.subr.mxu0 0.0
    %4760 = vmatpush2.msra.mxu0 0.0
    %4761 = vmatprep.subr.mxu0 0.0
    %4762 = vmatpush2.msra.mxu0 0.0
    %4763 = vmatprep.subr.mxu0 0.0
    %4764 = vmatpush2.msra.mxu0 0.0
    %4765 = vmatprep.mubr.f32.mxu0 0.0
    %v4766 = vand.u32 %v4324, 4294901760
    %4767 = vmatmul.mubr.f32.gmra.mxu0 %v4766
    %v4768 = vpop.f32.mrf.mxu0
    %v4769 = vadd.f32 %v4697, %v4768
    %v4770 = vpop.f32.mrf.mxu0
    %4771 = vdwg.mxu0
    %4772 = vrot.lane.b32.xlu0 %v583, 64
    %v4773 = vpop.permute.xlu0 %4772
    %v4776 = vsel %vm607, %v4307, 0
    %4778 = vmatprep.subr.mxu0 0.0
    %4779 = vmatpush1.msra.mxu0 0.0
    %4780 = vmatprep.subr.mxu0 0.0
    %4781 = vmatpush1.msra.mxu0 0.0
    %4782 = vmatprep.subr.mxu0 0.0
    %4783 = vmatpush1.msra.mxu0 0.0
    %4784 = vmatprep.subr.mxu0 0.0
    %4785 = vmatpush1.msra.mxu0 0.0
    %4786 = vmatprep.subr.mxu0 0.0
    %4787 = vmatpush1.msra.mxu0 0.0
    %4788 = vmatprep.subr.mxu0 0.0
    %4789 = vmatpush1.msra.mxu0 0.0
    %4790 = vmatprep.subr.mxu0 0.0
    %4791 = vmatpush1.msra.mxu0 0.0
    %4792 = vmatprep.subr.mxu0 0.0
    %4793 = vmatpush1.msra.mxu0 0.0
    %4794 = vmatprep.subr.mxu0 0.0
    %4795 = vmatpush1.msra.mxu0 0.0
    %4796 = vmatprep.subr.mxu0 0.0
    %4797 = vmatpush1.msra.mxu0 0.0
    %4798 = vmatprep.subr.mxu0 0.0
    %4799 = vmatpush1.msra.mxu0 0.0
    %4800 = vmatprep.subr.mxu0 0.0
    %4801 = vmatpush1.msra.mxu0 0.0
    %4802 = vmatprep.subr.mxu0 0.0
    %4803 = vmatpush1.msra.mxu0 0.0
    %4804 = vmatprep.subr.mxu0 0.0
    %4805 = vmatpush1.msra.mxu0 0.0
    %4806 = vmatprep.subr.mxu0 0.0
    %4807 = vmatpush1.msra.mxu0 0.0
    %4808 = vmatprep.subr.mxu0 0.0
    %v4809 = vand.u32 %v4773, 4294901760
    %4810 = vmatpush1.msra.mxu0 %v4809
    %4811 = vmatprep.subr.mxu0 0.0
    %4812 = vmatpush2.msra.mxu0 0.0
    %4813 = vmatprep.subr.mxu0 0.0
    %4814 = vmatpush2.msra.mxu0 0.0
    %4815 = vmatprep.subr.mxu0 0.0
    %4816 = vmatpush2.msra.mxu0 0.0
    %4817 = vmatprep.subr.mxu0 0.0
    %4818 = vmatpush2.msra.mxu0 0.0
    %4819 = vmatprep.subr.mxu0 0.0
    %4820 = vmatpush2.msra.mxu0 0.0
    %4821 = vmatprep.subr.mxu0 0.0
    %4822 = vmatpush2.msra.mxu0 0.0
    %4823 = vmatprep.subr.mxu0 0.0
    %4824 = vmatpush2.msra.mxu0 0.0
    %4825 = vmatprep.subr.mxu0 0.0
    %4826 = vmatpush2.msra.mxu0 0.0
    %4827 = vmatprep.subr.mxu0 0.0
    %4828 = vmatpush2.msra.mxu0 0.0
    %4829 = vmatprep.subr.mxu0 0.0
    %4830 = vmatpush2.msra.mxu0 0.0
    %4831 = vmatprep.subr.mxu0 0.0
    %4832 = vmatpush2.msra.mxu0 0.0
    %4833 = vmatprep.subr.mxu0 0.0
    %4834 = vmatpush2.msra.mxu0 0.0
    %4835 = vmatprep.subr.mxu0 0.0
    %4836 = vmatpush2.msra.mxu0 0.0
    %4837 = vmatprep.subr.mxu0 0.0
    %4838 = vmatpush2.msra.mxu0 0.0
    %4839 = vmatprep.subr.mxu0 0.0
    %4840 = vmatpush2.msra.mxu0 0.0
    %4841 = vmatprep.subr.mxu0 0.0
    %4842 = vmatpush2.msra.mxu0 0.0
    %4843 = vmatprep.mubr.f32.mxu0 0.0
    %v4844 = vand.u32 %v4776, 4294901760
    %v4845 = vsub.f32 %v4776, %v4844
    %v4846 = vand.u32 %v4845, 4294901760
    %v4847 = vsub.f32 %v4845, %v4846
    %v4848 = vand.u32 %v4847, 4294901760
    %4849 = vmatmul.mubr.f32.gmra.mxu0 %v4848
    %v4850 = vpop.f32.mrf.mxu0
    %v4851 = vadd.f32 0.0, %v4850
    %v4852 = vpop.f32.mrf.mxu0
    %4853 = vdwg.mxu0
    %4854 = vmatprep.subr.mxu0 0.0
    %4855 = vmatpush1.msra.mxu0 0.0
    %4856 = vmatprep.subr.mxu0 0.0
    %4857 = vmatpush1.msra.mxu0 0.0
    %4858 = vmatprep.subr.mxu0 0.0
    %4859 = vmatpush1.msra.mxu0 0.0
    %4860 = vmatprep.subr.mxu0 0.0
    %4861 = vmatpush1.msra.mxu0 0.0
    %4862 = vmatprep.subr.mxu0 0.0
    %4863 = vmatpush1.msra.mxu0 0.0
    %4864 = vmatprep.subr.mxu0 0.0
    %4865 = vmatpush1.msra.mxu0 0.0
    %4866 = vmatprep.subr.mxu0 0.0
    %4867 = vmatpush1.msra.mxu0 0.0
    %4868 = vmatprep.subr.mxu0 0.0
    %4869 = vmatpush1.msra.mxu0 0.0
    %4870 = vmatprep.subr.mxu0 0.0
    %4871 = vmatpush1.msra.mxu0 0.0
    %4872 = vmatprep.subr.mxu0 0.0
    %4873 = vmatpush1.msra.mxu0 0.0
    %4874 = vmatprep.subr.mxu0 0.0
    %4875 = vmatpush1.msra.mxu0 0.0
    %4876 = vmatprep.subr.mxu0 0.0
    %4877 = vmatpush1.msra.mxu0 0.0
    %4878 = vmatprep.subr.mxu0 0.0
    %4879 = vmatpush1.msra.mxu0 0.0
    %4880 = vmatprep.subr.mxu0 0.0
    %4881 = vmatpush1.msra.mxu0 0.0
    %4882 = vmatprep.subr.mxu0 0.0
    %4883 = vmatpush1.msra.mxu0 0.0
    %4884 = vmatprep.subr.mxu0 0.0
    %v4885 = vand.u32 %v4773, 4294901760
    %v4886 = vsub.f32 %v4773, %v4885
    %v4887 = vand.u32 %v4886, 4294901760
    %v4888 = vsub.f32 %v4886, %v4887
    %v4889 = vand.u32 %v4888, 4294901760
    %4890 = vmatpush1.msra.mxu0 %v4889
    %4891 = vmatprep.subr.mxu0 0.0
    %4892 = vmatpush2.msra.mxu0 0.0
    %4893 = vmatprep.subr.mxu0 0.0
    %4894 = vmatpush2.msra.mxu0 0.0
    %4895 = vmatprep.subr.mxu0 0.0
    %4896 = vmatpush2.msra.mxu0 0.0
    %4897 = vmatprep.subr.mxu0 0.0
    %4898 = vmatpush2.msra.mxu0 0.0
    %4899 = vmatprep.subr.mxu0 0.0
    %4900 = vmatpush2.msra.mxu0 0.0
    %4901 = vmatprep.subr.mxu0 0.0
    %4902 = vmatpush2.msra.mxu0 0.0
    %4903 = vmatprep.subr.mxu0 0.0
    %4904 = vmatpush2.msra.mxu0 0.0
    %4905 = vmatprep.subr.mxu0 0.0
    %4906 = vmatpush2.msra.mxu0 0.0
    %4907 = vmatprep.subr.mxu0 0.0
    %4908 = vmatpush2.msra.mxu0 0.0
    %4909 = vmatprep.subr.mxu0 0.0
    %4910 = vmatpush2.msra.mxu0 0.0
    %4911 = vmatprep.subr.mxu0 0.0
    %4912 = vmatpush2.msra.mxu0 0.0
    %4913 = vmatprep.subr.mxu0 0.0
    %4914 = vmatpush2.msra.mxu0 0.0
    %4915 = vmatprep.subr.mxu0 0.0
    %4916 = vmatpush2.msra.mxu0 0.0
    %4917 = vmatprep.subr.mxu0 0.0
    %4918 = vmatpush2.msra.mxu0 0.0
    %4919 = vmatprep.subr.mxu0 0.0
    %4920 = vmatpush2.msra.mxu0 0.0
    %4921 = vmatprep.subr.mxu0 0.0
    %4922 = vmatpush2.msra.mxu0 0.0
    %4923 = vmatprep.mubr.f32.mxu0 0.0
    %v4924 = vand.u32 %v4776, 4294901760
    %4925 = vmatmul.mubr.f32.gmra.mxu0 %v4924
    %v4926 = vpop.f32.mrf.mxu0
    %v4927 = vadd.f32 %v4851, %v4926
    %v4928 = vpop.f32.mrf.mxu0
    %4929 = vdwg.mxu0
    %4930 = vmatprep.subr.mxu0 0.0
    %4931 = vmatpush1.msra.mxu0 0.0
    %4932 = vmatprep.subr.mxu0 0.0
    %4933 = vmatpush1.msra.mxu0 0.0
    %4934 = vmatprep.subr.mxu0 0.0
    %4935 = vmatpush1.msra.mxu0 0.0
    %4936 = vmatprep.subr.mxu0 0.0
    %4937 = vmatpush1.msra.mxu0 0.0
    %4938 = vmatprep.subr.mxu0 0.0
    %4939 = vmatpush1.msra.mxu0 0.0
    %4940 = vmatprep.subr.mxu0 0.0
    %4941 = vmatpush1.msra.mxu0 0.0
    %4942 = vmatprep.subr.mxu0 0.0
    %4943 = vmatpush1.msra.mxu0 0.0
    %4944 = vmatprep.subr.mxu0 0.0
    %4945 = vmatpush1.msra.mxu0 0.0
    %4946 = vmatprep.subr.mxu0 0.0
    %4947 = vmatpush1.msra.mxu0 0.0
    %4948 = vmatprep.subr.mxu0 0.0
    %4949 = vmatpush1.msra.mxu0 0.0
    %4950 = vmatprep.subr.mxu0 0.0
    %4951 = vmatpush1.msra.mxu0 0.0
    %4952 = vmatprep.subr.mxu0 0.0
    %4953 = vmatpush1.msra.mxu0 0.0
    %4954 = vmatprep.subr.mxu0 0.0
    %4955 = vmatpush1.msra.mxu0 0.0
    %4956 = vmatprep.subr.mxu0 0.0
    %4957 = vmatpush1.msra.mxu0 0.0
    %4958 = vmatprep.subr.mxu0 0.0
    %4959 = vmatpush1.msra.mxu0 0.0
    %4960 = vmatprep.subr.mxu0 0.0
    %v4961 = vand.u32 %v4773, 4294901760
    %v4962 = vsub.f32 %v4773, %v4961
    %4963 = vmatpush1.msra.mxu0 %v4962
    %4964 = vmatprep.subr.mxu0 0.0
    %4965 = vmatpush2.msra.mxu0 0.0
    %4966 = vmatprep.subr.mxu0 0.0
    %4967 = vmatpush2.msra.mxu0 0.0
    %4968 = vmatprep.subr.mxu0 0.0
    %4969 = vmatpush2.msra.mxu0 0.0
    %4970 = vmatprep.subr.mxu0 0.0
    %4971 = vmatpush2.msra.mxu0 0.0
    %4972 = vmatprep.subr.mxu0 0.0
    %4973 = vmatpush2.msra.mxu0 0.0
    %4974 = vmatprep.subr.mxu0 0.0
    %4975 = vmatpush2.msra.mxu0 0.0
    %4976 = vmatprep.subr.mxu0 0.0
    %4977 = vmatpush2.msra.mxu0 0.0
    %4978 = vmatprep.subr.mxu0 0.0
    %4979 = vmatpush2.msra.mxu0 0.0
    %4980 = vmatprep.subr.mxu0 0.0
    %4981 = vmatpush2.msra.mxu0 0.0
    %4982 = vmatprep.subr.mxu0 0.0
    %4983 = vmatpush2.msra.mxu0 0.0
    %4984 = vmatprep.subr.mxu0 0.0
    %4985 = vmatpush2.msra.mxu0 0.0
    %4986 = vmatprep.subr.mxu0 0.0
    %4987 = vmatpush2.msra.mxu0 0.0
    %4988 = vmatprep.subr.mxu0 0.0
    %4989 = vmatpush2.msra.mxu0 0.0
    %4990 = vmatprep.subr.mxu0 0.0
    %4991 = vmatpush2.msra.mxu0 0.0
    %4992 = vmatprep.subr.mxu0 0.0
    %4993 = vmatpush2.msra.mxu0 0.0
    %4994 = vmatprep.subr.mxu0 0.0
    %4995 = vmatpush2.msra.mxu0 0.0
    %4996 = vmatprep.mubr.f32.mxu0 0.0
    %v4997 = vand.u32 %v4776, 4294901760
    %v4998 = vsub.f32 %v4776, %v4997
    %4999 = vmatmul.mubr.f32.gmra.mxu0 %v4998
    %v5000 = vpop.f32.mrf.mxu0
    %v5001 = vadd.f32 %v4927, %v5000
    %v5002 = vpop.f32.mrf.mxu0
    %5003 = vdwg.mxu0
    %5004 = vmatprep.subr.mxu0 0.0
    %5005 = vmatpush1.msra.mxu0 0.0
    %5006 = vmatprep.subr.mxu0 0.0
    %5007 = vmatpush1.msra.mxu0 0.0
    %5008 = vmatprep.subr.mxu0 0.0
    %5009 = vmatpush1.msra.mxu0 0.0
    %5010 = vmatprep.subr.mxu0 0.0
    %5011 = vmatpush1.msra.mxu0 0.0
    %5012 = vmatprep.subr.mxu0 0.0
    %5013 = vmatpush1.msra.mxu0 0.0
    %5014 = vmatprep.subr.mxu0 0.0
    %5015 = vmatpush1.msra.mxu0 0.0
    %5016 = vmatprep.subr.mxu0 0.0
    %5017 = vmatpush1.msra.mxu0 0.0
    %5018 = vmatprep.subr.mxu0 0.0
    %5019 = vmatpush1.msra.mxu0 0.0
    %5020 = vmatprep.subr.mxu0 0.0
    %5021 = vmatpush1.msra.mxu0 0.0
    %5022 = vmatprep.subr.mxu0 0.0
    %5023 = vmatpush1.msra.mxu0 0.0
    %5024 = vmatprep.subr.mxu0 0.0
    %5025 = vmatpush1.msra.mxu0 0.0
    %5026 = vmatprep.subr.mxu0 0.0
    %5027 = vmatpush1.msra.mxu0 0.0
    %5028 = vmatprep.subr.mxu0 0.0
    %5029 = vmatpush1.msra.mxu0 0.0
    %5030 = vmatprep.subr.mxu0 0.0
    %5031 = vmatpush1.msra.mxu0 0.0
    %5032 = vmatprep.subr.mxu0 0.0
    %5033 = vmatpush1.msra.mxu0 0.0
    %5034 = vmatprep.subr.mxu0 0.0
    %v5035 = vand.u32 %v4773, 4294901760
    %5036 = vmatpush1.msra.mxu0 %v5035
    %5037 = vmatprep.subr.mxu0 0.0
    %5038 = vmatpush2.msra.mxu0 0.0
    %5039 = vmatprep.subr.mxu0 0.0
    %5040 = vmatpush2.msra.mxu0 0.0
    %5041 = vmatprep.subr.mxu0 0.0
    %5042 = vmatpush2.msra.mxu0 0.0
    %5043 = vmatprep.subr.mxu0 0.0
    %5044 = vmatpush2.msra.mxu0 0.0
    %5045 = vmatprep.subr.mxu0 0.0
    %5046 = vmatpush2.msra.mxu0 0.0
    %5047 = vmatprep.subr.mxu0 0.0
    %5048 = vmatpush2.msra.mxu0 0.0
    %5049 = vmatprep.subr.mxu0 0.0
    %5050 = vmatpush2.msra.mxu0 0.0
    %5051 = vmatprep.subr.mxu0 0.0
    %5052 = vmatpush2.msra.mxu0 0.0
    %5053 = vmatprep.subr.mxu0 0.0
    %5054 = vmatpush2.msra.mxu0 0.0
    %5055 = vmatprep.subr.mxu0 0.0
    %5056 = vmatpush2.msra.mxu0 0.0
    %5057 = vmatprep.subr.mxu0 0.0
    %5058 = vmatpush2.msra.mxu0 0.0
    %5059 = vmatprep.subr.mxu0 0.0
    %5060 = vmatpush2.msra.mxu0 0.0
    %5061 = vmatprep.subr.mxu0 0.0
    %5062 = vmatpush2.msra.mxu0 0.0
    %5063 = vmatprep.subr.mxu0 0.0
    %5064 = vmatpush2.msra.mxu0 0.0
    %5065 = vmatprep.subr.mxu0 0.0
    %5066 = vmatpush2.msra.mxu0 0.0
    %5067 = vmatprep.subr.mxu0 0.0
    %5068 = vmatpush2.msra.mxu0 0.0
    %5069 = vmatprep.mubr.f32.mxu0 0.0
    %v5070 = vand.u32 %v4776, 4294901760
    %v5071 = vsub.f32 %v4776, %v5070
    %v5072 = vand.u32 %v5071, 4294901760
    %5073 = vmatmul.mubr.f32.gmra.mxu0 %v5072
    %v5074 = vpop.f32.mrf.mxu0
    %v5075 = vadd.f32 %v5001, %v5074
    %v5076 = vpop.f32.mrf.mxu0
    %5077 = vdwg.mxu0
    %5078 = vmatprep.subr.mxu0 0.0
    %5079 = vmatpush1.msra.mxu0 0.0
    %5080 = vmatprep.subr.mxu0 0.0
    %5081 = vmatpush1.msra.mxu0 0.0
    %5082 = vmatprep.subr.mxu0 0.0
    %5083 = vmatpush1.msra.mxu0 0.0
    %5084 = vmatprep.subr.mxu0 0.0
    %5085 = vmatpush1.msra.mxu0 0.0
    %5086 = vmatprep.subr.mxu0 0.0
    %5087 = vmatpush1.msra.mxu0 0.0
    %5088 = vmatprep.subr.mxu0 0.0
    %5089 = vmatpush1.msra.mxu0 0.0
    %5090 = vmatprep.subr.mxu0 0.0
    %5091 = vmatpush1.msra.mxu0 0.0
    %5092 = vmatprep.subr.mxu0 0.0
    %5093 = vmatpush1.msra.mxu0 0.0
    %5094 = vmatprep.subr.mxu0 0.0
    %5095 = vmatpush1.msra.mxu0 0.0
    %5096 = vmatprep.subr.mxu0 0.0
    %5097 = vmatpush1.msra.mxu0 0.0
    %5098 = vmatprep.subr.mxu0 0.0
    %5099 = vmatpush1.msra.mxu0 0.0
    %5100 = vmatprep.subr.mxu0 0.0
    %5101 = vmatpush1.msra.mxu0 0.0
    %5102 = vmatprep.subr.mxu0 0.0
    %5103 = vmatpush1.msra.mxu0 0.0
    %5104 = vmatprep.subr.mxu0 0.0
    %5105 = vmatpush1.msra.mxu0 0.0
    %5106 = vmatprep.subr.mxu0 0.0
    %5107 = vmatpush1.msra.mxu0 0.0
    %5108 = vmatprep.subr.mxu0 0.0
    %v5109 = vand.u32 %v4773, 4294901760
    %v5110 = vsub.f32 %v4773, %v5109
    %v5111 = vand.u32 %v5110, 4294901760
    %5112 = vmatpush1.msra.mxu0 %v5111
    %5113 = vmatprep.subr.mxu0 0.0
    %5114 = vmatpush2.msra.mxu0 0.0
    %5115 = vmatprep.subr.mxu0 0.0
    %5116 = vmatpush2.msra.mxu0 0.0
    %5117 = vmatprep.subr.mxu0 0.0
    %5118 = vmatpush2.msra.mxu0 0.0
    %5119 = vmatprep.subr.mxu0 0.0
    %5120 = vmatpush2.msra.mxu0 0.0
    %5121 = vmatprep.subr.mxu0 0.0
    %5122 = vmatpush2.msra.mxu0 0.0
    %5123 = vmatprep.subr.mxu0 0.0
    %5124 = vmatpush2.msra.mxu0 0.0
    %5125 = vmatprep.subr.mxu0 0.0
    %5126 = vmatpush2.msra.mxu0 0.0
    %5127 = vmatprep.subr.mxu0 0.0
    %5128 = vmatpush2.msra.mxu0 0.0
    %5129 = vmatprep.subr.mxu0 0.0
    %5130 = vmatpush2.msra.mxu0 0.0
    %5131 = vmatprep.subr.mxu0 0.0
    %5132 = vmatpush2.msra.mxu0 0.0
    %5133 = vmatprep.subr.mxu0 0.0
    %5134 = vmatpush2.msra.mxu0 0.0
    %5135 = vmatprep.subr.mxu0 0.0
    %5136 = vmatpush2.msra.mxu0 0.0
    %5137 = vmatprep.subr.mxu0 0.0
    %5138 = vmatpush2.msra.mxu0 0.0
    %5139 = vmatprep.subr.mxu0 0.0
    %5140 = vmatpush2.msra.mxu0 0.0
    %5141 = vmatprep.subr.mxu0 0.0
    %5142 = vmatpush2.msra.mxu0 0.0
    %5143 = vmatprep.subr.mxu0 0.0
    %5144 = vmatpush2.msra.mxu0 0.0
    %5145 = vmatprep.mubr.f32.mxu0 0.0
    %v5146 = vand.u32 %v4776, 4294901760
    %5147 = vmatmul.mubr.f32.gmra.mxu0 %v5146
    %v5148 = vpop.f32.mrf.mxu0
    %v5149 = vadd.f32 %v5075, %v5148
    %v5150 = vpop.f32.mrf.mxu0
    %5151 = vdwg.mxu0
    %5152 = vmatprep.subr.mxu0 0.0
    %5153 = vmatpush1.msra.mxu0 0.0
    %5154 = vmatprep.subr.mxu0 0.0
    %5155 = vmatpush1.msra.mxu0 0.0
    %5156 = vmatprep.subr.mxu0 0.0
    %5157 = vmatpush1.msra.mxu0 0.0
    %5158 = vmatprep.subr.mxu0 0.0
    %5159 = vmatpush1.msra.mxu0 0.0
    %5160 = vmatprep.subr.mxu0 0.0
    %5161 = vmatpush1.msra.mxu0 0.0
    %5162 = vmatprep.subr.mxu0 0.0
    %5163 = vmatpush1.msra.mxu0 0.0
    %5164 = vmatprep.subr.mxu0 0.0
    %5165 = vmatpush1.msra.mxu0 0.0
    %5166 = vmatprep.subr.mxu0 0.0
    %5167 = vmatpush1.msra.mxu0 0.0
    %5168 = vmatprep.subr.mxu0 0.0
    %5169 = vmatpush1.msra.mxu0 0.0
    %5170 = vmatprep.subr.mxu0 0.0
    %5171 = vmatpush1.msra.mxu0 0.0
    %5172 = vmatprep.subr.mxu0 0.0
    %5173 = vmatpush1.msra.mxu0 0.0
    %5174 = vmatprep.subr.mxu0 0.0
    %5175 = vmatpush1.msra.mxu0 0.0
    %5176 = vmatprep.subr.mxu0 0.0
    %5177 = vmatpush1.msra.mxu0 0.0
    %5178 = vmatprep.subr.mxu0 0.0
    %5179 = vmatpush1.msra.mxu0 0.0
    %5180 = vmatprep.subr.mxu0 0.0
    %5181 = vmatpush1.msra.mxu0 0.0
    %5182 = vmatprep.subr.mxu0 0.0
    %v5183 = vand.u32 %v4773, 4294901760
    %5184 = vmatpush1.msra.mxu0 %v5183
    %5185 = vmatprep.subr.mxu0 0.0
    %5186 = vmatpush2.msra.mxu0 0.0
    %5187 = vmatprep.subr.mxu0 0.0
    %5188 = vmatpush2.msra.mxu0 0.0
    %5189 = vmatprep.subr.mxu0 0.0
    %5190 = vmatpush2.msra.mxu0 0.0
    %5191 = vmatprep.subr.mxu0 0.0
    %5192 = vmatpush2.msra.mxu0 0.0
    %5193 = vmatprep.subr.mxu0 0.0
    %5194 = vmatpush2.msra.mxu0 0.0
    %5195 = vmatprep.subr.mxu0 0.0
    %5196 = vmatpush2.msra.mxu0 0.0
    %5197 = vmatprep.subr.mxu0 0.0
    %5198 = vmatpush2.msra.mxu0 0.0
    %5199 = vmatprep.subr.mxu0 0.0
    %5200 = vmatpush2.msra.mxu0 0.0
    %5201 = vmatprep.subr.mxu0 0.0
    %5202 = vmatpush2.msra.mxu0 0.0
    %5203 = vmatprep.subr.mxu0 0.0
    %5204 = vmatpush2.msra.mxu0 0.0
    %5205 = vmatprep.subr.mxu0 0.0
    %5206 = vmatpush2.msra.mxu0 0.0
    %5207 = vmatprep.subr.mxu0 0.0
    %5208 = vmatpush2.msra.mxu0 0.0
    %5209 = vmatprep.subr.mxu0 0.0
    %5210 = vmatpush2.msra.mxu0 0.0
    %5211 = vmatprep.subr.mxu0 0.0
    %5212 = vmatpush2.msra.mxu0 0.0
    %5213 = vmatprep.subr.mxu0 0.0
    %5214 = vmatpush2.msra.mxu0 0.0
    %5215 = vmatprep.subr.mxu0 0.0
    %5216 = vmatpush2.msra.mxu0 0.0
    %5217 = vmatprep.mubr.f32.mxu0 0.0
    %v5218 = vand.u32 %v4776, 4294901760
    %5219 = vmatmul.mubr.f32.gmra.mxu0 %v5218
    %v5220 = vpop.f32.mrf.mxu0
    %v5221 = vadd.f32 %v5149, %v5220
    %v5222 = vpop.f32.mrf.mxu0
    %5223 = vdwg.mxu0
    %5224 = vrot.lane.b32.xlu0 %v589, 64
    %v5225 = vpop.permute.xlu0 %5224
    %v5228 = vsel %vm607, %v4309, 0
    %5230 = vmatprep.subr.mxu0 0.0
    %5231 = vmatpush1.msra.mxu0 0.0
    %5232 = vmatprep.subr.mxu0 0.0
    %5233 = vmatpush1.msra.mxu0 0.0
    %5234 = vmatprep.subr.mxu0 0.0
    %5235 = vmatpush1.msra.mxu0 0.0
    %5236 = vmatprep.subr.mxu0 0.0
    %5237 = vmatpush1.msra.mxu0 0.0
    %5238 = vmatprep.subr.mxu0 0.0
    %5239 = vmatpush1.msra.mxu0 0.0
    %5240 = vmatprep.subr.mxu0 0.0
    %5241 = vmatpush1.msra.mxu0 0.0
    %5242 = vmatprep.subr.mxu0 0.0
    %5243 = vmatpush1.msra.mxu0 0.0
    %5244 = vmatprep.subr.mxu0 0.0
    %5245 = vmatpush1.msra.mxu0 0.0
    %5246 = vmatprep.subr.mxu0 0.0
    %5247 = vmatpush1.msra.mxu0 0.0
    %5248 = vmatprep.subr.mxu0 0.0
    %5249 = vmatpush1.msra.mxu0 0.0
    %5250 = vmatprep.subr.mxu0 0.0
    %5251 = vmatpush1.msra.mxu0 0.0
    %5252 = vmatprep.subr.mxu0 0.0
    %5253 = vmatpush1.msra.mxu0 0.0
    %5254 = vmatprep.subr.mxu0 0.0
    %5255 = vmatpush1.msra.mxu0 0.0
    %5256 = vmatprep.subr.mxu0 0.0
    %5257 = vmatpush1.msra.mxu0 0.0
    %5258 = vmatprep.subr.mxu0 0.0
    %5259 = vmatpush1.msra.mxu0 0.0
    %5260 = vmatprep.subr.mxu0 0.0
    %v5261 = vand.u32 %v5225, 4294901760
    %5262 = vmatpush1.msra.mxu0 %v5261
    %5263 = vmatprep.subr.mxu0 0.0
    %5264 = vmatpush2.msra.mxu0 0.0
    %5265 = vmatprep.subr.mxu0 0.0
    %5266 = vmatpush2.msra.mxu0 0.0
    %5267 = vmatprep.subr.mxu0 0.0
    %5268 = vmatpush2.msra.mxu0 0.0
    %5269 = vmatprep.subr.mxu0 0.0
    %5270 = vmatpush2.msra.mxu0 0.0
    %5271 = vmatprep.subr.mxu0 0.0
    %5272 = vmatpush2.msra.mxu0 0.0
    %5273 = vmatprep.subr.mxu0 0.0
    %5274 = vmatpush2.msra.mxu0 0.0
    %5275 = vmatprep.subr.mxu0 0.0
    %5276 = vmatpush2.msra.mxu0 0.0
    %5277 = vmatprep.subr.mxu0 0.0
    %5278 = vmatpush2.msra.mxu0 0.0
    %5279 = vmatprep.subr.mxu0 0.0
    %5280 = vmatpush2.msra.mxu0 0.0
    %5281 = vmatprep.subr.mxu0 0.0
    %5282 = vmatpush2.msra.mxu0 0.0
    %5283 = vmatprep.subr.mxu0 0.0
    %5284 = vmatpush2.msra.mxu0 0.0
    %5285 = vmatprep.subr.mxu0 0.0
    %5286 = vmatpush2.msra.mxu0 0.0
    %5287 = vmatprep.subr.mxu0 0.0
    %5288 = vmatpush2.msra.mxu0 0.0
    %5289 = vmatprep.subr.mxu0 0.0
    %5290 = vmatpush2.msra.mxu0 0.0
    %5291 = vmatprep.subr.mxu0 0.0
    %5292 = vmatpush2.msra.mxu0 0.0
    %5293 = vmatprep.subr.mxu0 0.0
    %5294 = vmatpush2.msra.mxu0 0.0
    %5295 = vmatprep.mubr.f32.mxu0 0.0
    %v5296 = vand.u32 %v5228, 4294901760
    %v5297 = vsub.f32 %v5228, %v5296
    %v5298 = vand.u32 %v5297, 4294901760
    %v5299 = vsub.f32 %v5297, %v5298
    %v5300 = vand.u32 %v5299, 4294901760
    %5301 = vmatmul.mubr.f32.gmra.mxu0 %v5300
    %v5302 = vpop.f32.mrf.mxu0
    %v5303 = vadd.f32 0.0, %v5302
    %v5304 = vpop.f32.mrf.mxu0
    %5305 = vdwg.mxu0
    %5306 = vmatprep.subr.mxu0 0.0
    %5307 = vmatpush1.msra.mxu0 0.0
    %5308 = vmatprep.subr.mxu0 0.0
    %5309 = vmatpush1.msra.mxu0 0.0
    %5310 = vmatprep.subr.mxu0 0.0
    %5311 = vmatpush1.msra.mxu0 0.0
    %5312 = vmatprep.subr.mxu0 0.0
    %5313 = vmatpush1.msra.mxu0 0.0
    %5314 = vmatprep.subr.mxu0 0.0
    %5315 = vmatpush1.msra.mxu0 0.0
    %5316 = vmatprep.subr.mxu0 0.0
    %5317 = vmatpush1.msra.mxu0 0.0
    %5318 = vmatprep.subr.mxu0 0.0
    %5319 = vmatpush1.msra.mxu0 0.0
    %5320 = vmatprep.subr.mxu0 0.0
    %5321 = vmatpush1.msra.mxu0 0.0
    %5322 = vmatprep.subr.mxu0 0.0
    %5323 = vmatpush1.msra.mxu0 0.0
    %5324 = vmatprep.subr.mxu0 0.0
    %5325 = vmatpush1.msra.mxu0 0.0
    %5326 = vmatprep.subr.mxu0 0.0
    %5327 = vmatpush1.msra.mxu0 0.0
    %5328 = vmatprep.subr.mxu0 0.0
    %5329 = vmatpush1.msra.mxu0 0.0
    %5330 = vmatprep.subr.mxu0 0.0
    %5331 = vmatpush1.msra.mxu0 0.0
    %5332 = vmatprep.subr.mxu0 0.0
    %5333 = vmatpush1.msra.mxu0 0.0
    %5334 = vmatprep.subr.mxu0 0.0
    %5335 = vmatpush1.msra.mxu0 0.0
    %5336 = vmatprep.subr.mxu0 0.0
    %v5337 = vand.u32 %v5225, 4294901760
    %v5338 = vsub.f32 %v5225, %v5337
    %v5339 = vand.u32 %v5338, 4294901760
    %v5340 = vsub.f32 %v5338, %v5339
    %v5341 = vand.u32 %v5340, 4294901760
    %5342 = vmatpush1.msra.mxu0 %v5341
    %5343 = vmatprep.subr.mxu0 0.0
    %5344 = vmatpush2.msra.mxu0 0.0
    %5345 = vmatprep.subr.mxu0 0.0
    %5346 = vmatpush2.msra.mxu0 0.0
    %5347 = vmatprep.subr.mxu0 0.0
    %5348 = vmatpush2.msra.mxu0 0.0
    %5349 = vmatprep.subr.mxu0 0.0
    %5350 = vmatpush2.msra.mxu0 0.0
    %5351 = vmatprep.subr.mxu0 0.0
    %5352 = vmatpush2.msra.mxu0 0.0
    %5353 = vmatprep.subr.mxu0 0.0
    %5354 = vmatpush2.msra.mxu0 0.0
    %5355 = vmatprep.subr.mxu0 0.0
    %5356 = vmatpush2.msra.mxu0 0.0
    %5357 = vmatprep.subr.mxu0 0.0
    %5358 = vmatpush2.msra.mxu0 0.0
    %5359 = vmatprep.subr.mxu0 0.0
    %5360 = vmatpush2.msra.mxu0 0.0
    %5361 = vmatprep.subr.mxu0 0.0
    %5362 = vmatpush2.msra.mxu0 0.0
    %5363 = vmatprep.subr.mxu0 0.0
    %5364 = vmatpush2.msra.mxu0 0.0
    %5365 = vmatprep.subr.mxu0 0.0
    %5366 = vmatpush2.msra.mxu0 0.0
    %5367 = vmatprep.subr.mxu0 0.0
    %5368 = vmatpush2.msra.mxu0 0.0
    %5369 = vmatprep.subr.mxu0 0.0
    %5370 = vmatpush2.msra.mxu0 0.0
    %5371 = vmatprep.subr.mxu0 0.0
    %5372 = vmatpush2.msra.mxu0 0.0
    %5373 = vmatprep.subr.mxu0 0.0
    %5374 = vmatpush2.msra.mxu0 0.0
    %5375 = vmatprep.mubr.f32.mxu0 0.0
    %v5376 = vand.u32 %v5228, 4294901760
    %5377 = vmatmul.mubr.f32.gmra.mxu0 %v5376
    %v5378 = vpop.f32.mrf.mxu0
    %v5379 = vadd.f32 %v5303, %v5378
    %v5380 = vpop.f32.mrf.mxu0
    %5381 = vdwg.mxu0
    %5382 = vmatprep.subr.mxu0 0.0
    %5383 = vmatpush1.msra.mxu0 0.0
    %5384 = vmatprep.subr.mxu0 0.0
    %5385 = vmatpush1.msra.mxu0 0.0
    %5386 = vmatprep.subr.mxu0 0.0
    %5387 = vmatpush1.msra.mxu0 0.0
    %5388 = vmatprep.subr.mxu0 0.0
    %5389 = vmatpush1.msra.mxu0 0.0
    %5390 = vmatprep.subr.mxu0 0.0
    %5391 = vmatpush1.msra.mxu0 0.0
    %5392 = vmatprep.subr.mxu0 0.0
    %5393 = vmatpush1.msra.mxu0 0.0
    %5394 = vmatprep.subr.mxu0 0.0
    %5395 = vmatpush1.msra.mxu0 0.0
    %5396 = vmatprep.subr.mxu0 0.0
    %5397 = vmatpush1.msra.mxu0 0.0
    %5398 = vmatprep.subr.mxu0 0.0
    %5399 = vmatpush1.msra.mxu0 0.0
    %5400 = vmatprep.subr.mxu0 0.0
    %5401 = vmatpush1.msra.mxu0 0.0
    %5402 = vmatprep.subr.mxu0 0.0
    %5403 = vmatpush1.msra.mxu0 0.0
    %5404 = vmatprep.subr.mxu0 0.0
    %5405 = vmatpush1.msra.mxu0 0.0
    %5406 = vmatprep.subr.mxu0 0.0
    %5407 = vmatpush1.msra.mxu0 0.0
    %5408 = vmatprep.subr.mxu0 0.0
    %5409 = vmatpush1.msra.mxu0 0.0
    %5410 = vmatprep.subr.mxu0 0.0
    %5411 = vmatpush1.msra.mxu0 0.0
    %5412 = vmatprep.subr.mxu0 0.0
    %v5413 = vand.u32 %v5225, 4294901760
    %v5414 = vsub.f32 %v5225, %v5413
    %5415 = vmatpush1.msra.mxu0 %v5414
    %5416 = vmatprep.subr.mxu0 0.0
    %5417 = vmatpush2.msra.mxu0 0.0
    %5418 = vmatprep.subr.mxu0 0.0
    %5419 = vmatpush2.msra.mxu0 0.0
    %5420 = vmatprep.subr.mxu0 0.0
    %5421 = vmatpush2.msra.mxu0 0.0
    %5422 = vmatprep.subr.mxu0 0.0
    %5423 = vmatpush2.msra.mxu0 0.0
    %5424 = vmatprep.subr.mxu0 0.0
    %5425 = vmatpush2.msra.mxu0 0.0
    %5426 = vmatprep.subr.mxu0 0.0
    %5427 = vmatpush2.msra.mxu0 0.0
    %5428 = vmatprep.subr.mxu0 0.0
    %5429 = vmatpush2.msra.mxu0 0.0
    %5430 = vmatprep.subr.mxu0 0.0
    %5431 = vmatpush2.msra.mxu0 0.0
    %5432 = vmatprep.subr.mxu0 0.0
    %5433 = vmatpush2.msra.mxu0 0.0
    %5434 = vmatprep.subr.mxu0 0.0
    %5435 = vmatpush2.msra.mxu0 0.0
    %5436 = vmatprep.subr.mxu0 0.0
    %5437 = vmatpush2.msra.mxu0 0.0
    %5438 = vmatprep.subr.mxu0 0.0
    %5439 = vmatpush2.msra.mxu0 0.0
    %5440 = vmatprep.subr.mxu0 0.0
    %5441 = vmatpush2.msra.mxu0 0.0
    %5442 = vmatprep.subr.mxu0 0.0
    %5443 = vmatpush2.msra.mxu0 0.0
    %5444 = vmatprep.subr.mxu0 0.0
    %5445 = vmatpush2.msra.mxu0 0.0
    %5446 = vmatprep.subr.mxu0 0.0
    %5447 = vmatpush2.msra.mxu0 0.0
    %5448 = vmatprep.mubr.f32.mxu0 0.0
    %v5449 = vand.u32 %v5228, 4294901760
    %v5450 = vsub.f32 %v5228, %v5449
    %5451 = vmatmul.mubr.f32.gmra.mxu0 %v5450
    %v5452 = vpop.f32.mrf.mxu0
    %v5453 = vadd.f32 %v5379, %v5452
    %v5454 = vpop.f32.mrf.mxu0
    %5455 = vdwg.mxu0
    %5456 = vmatprep.subr.mxu0 0.0
    %5457 = vmatpush1.msra.mxu0 0.0
    %5458 = vmatprep.subr.mxu0 0.0
    %5459 = vmatpush1.msra.mxu0 0.0
    %5460 = vmatprep.subr.mxu0 0.0
    %5461 = vmatpush1.msra.mxu0 0.0
    %5462 = vmatprep.subr.mxu0 0.0
    %5463 = vmatpush1.msra.mxu0 0.0
    %5464 = vmatprep.subr.mxu0 0.0
    %5465 = vmatpush1.msra.mxu0 0.0
    %5466 = vmatprep.subr.mxu0 0.0
    %5467 = vmatpush1.msra.mxu0 0.0
    %5468 = vmatprep.subr.mxu0 0.0
    %5469 = vmatpush1.msra.mxu0 0.0
    %5470 = vmatprep.subr.mxu0 0.0
    %5471 = vmatpush1.msra.mxu0 0.0
    %5472 = vmatprep.subr.mxu0 0.0
    %5473 = vmatpush1.msra.mxu0 0.0
    %5474 = vmatprep.subr.mxu0 0.0
    %5475 = vmatpush1.msra.mxu0 0.0
    %5476 = vmatprep.subr.mxu0 0.0
    %5477 = vmatpush1.msra.mxu0 0.0
    %5478 = vmatprep.subr.mxu0 0.0
    %5479 = vmatpush1.msra.mxu0 0.0
    %5480 = vmatprep.subr.mxu0 0.0
    %5481 = vmatpush1.msra.mxu0 0.0
    %5482 = vmatprep.subr.mxu0 0.0
    %5483 = vmatpush1.msra.mxu0 0.0
    %5484 = vmatprep.subr.mxu0 0.0
    %5485 = vmatpush1.msra.mxu0 0.0
    %5486 = vmatprep.subr.mxu0 0.0
    %v5487 = vand.u32 %v5225, 4294901760
    %5488 = vmatpush1.msra.mxu0 %v5487
    %5489 = vmatprep.subr.mxu0 0.0
    %5490 = vmatpush2.msra.mxu0 0.0
    %5491 = vmatprep.subr.mxu0 0.0
    %5492 = vmatpush2.msra.mxu0 0.0
    %5493 = vmatprep.subr.mxu0 0.0
    %5494 = vmatpush2.msra.mxu0 0.0
    %5495 = vmatprep.subr.mxu0 0.0
    %5496 = vmatpush2.msra.mxu0 0.0
    %5497 = vmatprep.subr.mxu0 0.0
    %5498 = vmatpush2.msra.mxu0 0.0
    %5499 = vmatprep.subr.mxu0 0.0
    %5500 = vmatpush2.msra.mxu0 0.0
    %5501 = vmatprep.subr.mxu0 0.0
    %5502 = vmatpush2.msra.mxu0 0.0
    %5503 = vmatprep.subr.mxu0 0.0
    %5504 = vmatpush2.msra.mxu0 0.0
    %5505 = vmatprep.subr.mxu0 0.0
    %5506 = vmatpush2.msra.mxu0 0.0
    %5507 = vmatprep.subr.mxu0 0.0
    %5508 = vmatpush2.msra.mxu0 0.0
    %5509 = vmatprep.subr.mxu0 0.0
    %5510 = vmatpush2.msra.mxu0 0.0
    %5511 = vmatprep.subr.mxu0 0.0
    %5512 = vmatpush2.msra.mxu0 0.0
    %5513 = vmatprep.subr.mxu0 0.0
    %5514 = vmatpush2.msra.mxu0 0.0
    %5515 = vmatprep.subr.mxu0 0.0
    %5516 = vmatpush2.msra.mxu0 0.0
    %5517 = vmatprep.subr.mxu0 0.0
    %5518 = vmatpush2.msra.mxu0 0.0
    %5519 = vmatprep.subr.mxu0 0.0
    %5520 = vmatpush2.msra.mxu0 0.0
    %5521 = vmatprep.mubr.f32.mxu0 0.0
    %v5522 = vand.u32 %v5228, 4294901760
    %v5523 = vsub.f32 %v5228, %v5522
    %v5524 = vand.u32 %v5523, 4294901760
    %5525 = vmatmul.mubr.f32.gmra.mxu0 %v5524
    %v5526 = vpop.f32.mrf.mxu0
    %v5527 = vadd.f32 %v5453, %v5526
    %v5528 = vpop.f32.mrf.mxu0
    %5529 = vdwg.mxu0
    %5530 = vmatprep.subr.mxu0 0.0
    %5531 = vmatpush1.msra.mxu0 0.0
    %5532 = vmatprep.subr.mxu0 0.0
    %5533 = vmatpush1.msra.mxu0 0.0
    %5534 = vmatprep.subr.mxu0 0.0
    %5535 = vmatpush1.msra.mxu0 0.0
    %5536 = vmatprep.subr.mxu0 0.0
    %5537 = vmatpush1.msra.mxu0 0.0
    %5538 = vmatprep.subr.mxu0 0.0
    %5539 = vmatpush1.msra.mxu0 0.0
    %5540 = vmatprep.subr.mxu0 0.0
    %5541 = vmatpush1.msra.mxu0 0.0
    %5542 = vmatprep.subr.mxu0 0.0
    %5543 = vmatpush1.msra.mxu0 0.0
    %5544 = vmatprep.subr.mxu0 0.0
    %5545 = vmatpush1.msra.mxu0 0.0
    %5546 = vmatprep.subr.mxu0 0.0
    %5547 = vmatpush1.msra.mxu0 0.0
    %5548 = vmatprep.subr.mxu0 0.0
    %5549 = vmatpush1.msra.mxu0 0.0
    %5550 = vmatprep.subr.mxu0 0.0
    %5551 = vmatpush1.msra.mxu0 0.0
    %5552 = vmatprep.subr.mxu0 0.0
    %5553 = vmatpush1.msra.mxu0 0.0
    %5554 = vmatprep.subr.mxu0 0.0
    %5555 = vmatpush1.msra.mxu0 0.0
    %5556 = vmatprep.subr.mxu0 0.0
    %5557 = vmatpush1.msra.mxu0 0.0
    %5558 = vmatprep.subr.mxu0 0.0
    %5559 = vmatpush1.msra.mxu0 0.0
    %5560 = vmatprep.subr.mxu0 0.0
    %v5561 = vand.u32 %v5225, 4294901760
    %v5562 = vsub.f32 %v5225, %v5561
    %v5563 = vand.u32 %v5562, 4294901760
    %5564 = vmatpush1.msra.mxu0 %v5563
    %5565 = vmatprep.subr.mxu0 0.0
    %5566 = vmatpush2.msra.mxu0 0.0
    %5567 = vmatprep.subr.mxu0 0.0
    %5568 = vmatpush2.msra.mxu0 0.0
    %5569 = vmatprep.subr.mxu0 0.0
    %5570 = vmatpush2.msra.mxu0 0.0
    %5571 = vmatprep.subr.mxu0 0.0
    %5572 = vmatpush2.msra.mxu0 0.0
    %5573 = vmatprep.subr.mxu0 0.0
    %5574 = vmatpush2.msra.mxu0 0.0
    %5575 = vmatprep.subr.mxu0 0.0
    %5576 = vmatpush2.msra.mxu0 0.0
    %5577 = vmatprep.subr.mxu0 0.0
    %5578 = vmatpush2.msra.mxu0 0.0
    %5579 = vmatprep.subr.mxu0 0.0
    %5580 = vmatpush2.msra.mxu0 0.0
    %5581 = vmatprep.subr.mxu0 0.0
    %5582 = vmatpush2.msra.mxu0 0.0
    %5583 = vmatprep.subr.mxu0 0.0
    %5584 = vmatpush2.msra.mxu0 0.0
    %5585 = vmatprep.subr.mxu0 0.0
    %5586 = vmatpush2.msra.mxu0 0.0
    %5587 = vmatprep.subr.mxu0 0.0
    %5588 = vmatpush2.msra.mxu0 0.0
    %5589 = vmatprep.subr.mxu0 0.0
    %5590 = vmatpush2.msra.mxu0 0.0
    %5591 = vmatprep.subr.mxu0 0.0
    %5592 = vmatpush2.msra.mxu0 0.0
    %5593 = vmatprep.subr.mxu0 0.0
    %5594 = vmatpush2.msra.mxu0 0.0
    %5595 = vmatprep.subr.mxu0 0.0
    %5596 = vmatpush2.msra.mxu0 0.0
    %5597 = vmatprep.mubr.f32.mxu0 0.0
    %v5598 = vand.u32 %v5228, 4294901760
    %5599 = vmatmul.mubr.f32.gmra.mxu0 %v5598
    %v5600 = vpop.f32.mrf.mxu0
    %v5601 = vadd.f32 %v5527, %v5600
    %v5602 = vpop.f32.mrf.mxu0
    %5603 = vdwg.mxu0
    %5604 = vmatprep.subr.mxu0 0.0
    %5605 = vmatpush1.msra.mxu0 0.0
    %5606 = vmatprep.subr.mxu0 0.0
    %5607 = vmatpush1.msra.mxu0 0.0
    %5608 = vmatprep.subr.mxu0 0.0
    %5609 = vmatpush1.msra.mxu0 0.0
    %5610 = vmatprep.subr.mxu0 0.0
    %5611 = vmatpush1.msra.mxu0 0.0
    %5612 = vmatprep.subr.mxu0 0.0
    %5613 = vmatpush1.msra.mxu0 0.0
    %5614 = vmatprep.subr.mxu0 0.0
    %5615 = vmatpush1.msra.mxu0 0.0
    %5616 = vmatprep.subr.mxu0 0.0
    %5617 = vmatpush1.msra.mxu0 0.0
    %5618 = vmatprep.subr.mxu0 0.0
    %5619 = vmatpush1.msra.mxu0 0.0
    %5620 = vmatprep.subr.mxu0 0.0
    %5621 = vmatpush1.msra.mxu0 0.0
    %5622 = vmatprep.subr.mxu0 0.0
    %5623 = vmatpush1.msra.mxu0 0.0
    %5624 = vmatprep.subr.mxu0 0.0
    %5625 = vmatpush1.msra.mxu0 0.0
    %5626 = vmatprep.subr.mxu0 0.0
    %5627 = vmatpush1.msra.mxu0 0.0
    %5628 = vmatprep.subr.mxu0 0.0
    %5629 = vmatpush1.msra.mxu0 0.0
    %5630 = vmatprep.subr.mxu0 0.0
    %5631 = vmatpush1.msra.mxu0 0.0
    %5632 = vmatprep.subr.mxu0 0.0
    %5633 = vmatpush1.msra.mxu0 0.0
    %5634 = vmatprep.subr.mxu0 0.0
    %v5635 = vand.u32 %v5225, 4294901760
    %5636 = vmatpush1.msra.mxu0 %v5635
    %5637 = vmatprep.subr.mxu0 0.0
    %5638 = vmatpush2.msra.mxu0 0.0
    %5639 = vmatprep.subr.mxu0 0.0
    %5640 = vmatpush2.msra.mxu0 0.0
    %5641 = vmatprep.subr.mxu0 0.0
    %5642 = vmatpush2.msra.mxu0 0.0
    %5643 = vmatprep.subr.mxu0 0.0
    %5644 = vmatpush2.msra.mxu0 0.0
    %5645 = vmatprep.subr.mxu0 0.0
    %5646 = vmatpush2.msra.mxu0 0.0
    %5647 = vmatprep.subr.mxu0 0.0
    %5648 = vmatpush2.msra.mxu0 0.0
    %5649 = vmatprep.subr.mxu0 0.0
    %5650 = vmatpush2.msra.mxu0 0.0
    %5651 = vmatprep.subr.mxu0 0.0
    %5652 = vmatpush2.msra.mxu0 0.0
    %5653 = vmatprep.subr.mxu0 0.0
    %5654 = vmatpush2.msra.mxu0 0.0
    %5655 = vmatprep.subr.mxu0 0.0
    %5656 = vmatpush2.msra.mxu0 0.0
    %5657 = vmatprep.subr.mxu0 0.0
    %5658 = vmatpush2.msra.mxu0 0.0
    %5659 = vmatprep.subr.mxu0 0.0
    %5660 = vmatpush2.msra.mxu0 0.0
    %5661 = vmatprep.subr.mxu0 0.0
    %5662 = vmatpush2.msra.mxu0 0.0
    %5663 = vmatprep.subr.mxu0 0.0
    %5664 = vmatpush2.msra.mxu0 0.0
    %5665 = vmatprep.subr.mxu0 0.0
    %5666 = vmatpush2.msra.mxu0 0.0
    %5667 = vmatprep.subr.mxu0 0.0
    %5668 = vmatpush2.msra.mxu0 0.0
    %5669 = vmatprep.mubr.f32.mxu0 0.0
    %v5670 = vand.u32 %v5228, 4294901760
    %5671 = vmatmul.mubr.f32.gmra.mxu0 %v5670
    %v5672 = vpop.f32.mrf.mxu0
    %v5673 = vadd.f32 %v5601, %v5672
    %v5674 = vpop.f32.mrf.mxu0
    %5675 = vdwg.mxu0
    %5676 = vrot.lane.b32.xlu0 %v591, 64
    %v5677 = vpop.permute.xlu0 %5676
    %v5680 = vsel %vm607, %v4311, 0
    %5682 = vmatprep.subr.mxu0 0.0
    %5683 = vmatpush1.msra.mxu0 0.0
    %5684 = vmatprep.subr.mxu0 0.0
    %5685 = vmatpush1.msra.mxu0 0.0
    %5686 = vmatprep.subr.mxu0 0.0
    %5687 = vmatpush1.msra.mxu0 0.0
    %5688 = vmatprep.subr.mxu0 0.0
    %5689 = vmatpush1.msra.mxu0 0.0
    %5690 = vmatprep.subr.mxu0 0.0
    %5691 = vmatpush1.msra.mxu0 0.0
    %5692 = vmatprep.subr.mxu0 0.0
    %5693 = vmatpush1.msra.mxu0 0.0
    %5694 = vmatprep.subr.mxu0 0.0
    %5695 = vmatpush1.msra.mxu0 0.0
    %5696 = vmatprep.subr.mxu0 0.0
    %5697 = vmatpush1.msra.mxu0 0.0
    %5698 = vmatprep.subr.mxu0 0.0
    %5699 = vmatpush1.msra.mxu0 0.0
    %5700 = vmatprep.subr.mxu0 0.0
    %5701 = vmatpush1.msra.mxu0 0.0
    %5702 = vmatprep.subr.mxu0 0.0
    %5703 = vmatpush1.msra.mxu0 0.0
    %5704 = vmatprep.subr.mxu0 0.0
    %5705 = vmatpush1.msra.mxu0 0.0
    %5706 = vmatprep.subr.mxu0 0.0
    %5707 = vmatpush1.msra.mxu0 0.0
    %5708 = vmatprep.subr.mxu0 0.0
    %5709 = vmatpush1.msra.mxu0 0.0
    %5710 = vmatprep.subr.mxu0 0.0
    %5711 = vmatpush1.msra.mxu0 0.0
    %5712 = vmatprep.subr.mxu0 0.0
    %v5713 = vand.u32 %v5677, 4294901760
    %5714 = vmatpush1.msra.mxu0 %v5713
    %5715 = vmatprep.subr.mxu0 0.0
    %5716 = vmatpush2.msra.mxu0 0.0
    %5717 = vmatprep.subr.mxu0 0.0
    %5718 = vmatpush2.msra.mxu0 0.0
    %5719 = vmatprep.subr.mxu0 0.0
    %5720 = vmatpush2.msra.mxu0 0.0
    %5721 = vmatprep.subr.mxu0 0.0
    %5722 = vmatpush2.msra.mxu0 0.0
    %5723 = vmatprep.subr.mxu0 0.0
    %5724 = vmatpush2.msra.mxu0 0.0
    %5725 = vmatprep.subr.mxu0 0.0
    %5726 = vmatpush2.msra.mxu0 0.0
    %5727 = vmatprep.subr.mxu0 0.0
    %5728 = vmatpush2.msra.mxu0 0.0
    %5729 = vmatprep.subr.mxu0 0.0
    %5730 = vmatpush2.msra.mxu0 0.0
    %5731 = vmatprep.subr.mxu0 0.0
    %5732 = vmatpush2.msra.mxu0 0.0
    %5733 = vmatprep.subr.mxu0 0.0
    %5734 = vmatpush2.msra.mxu0 0.0
    %5735 = vmatprep.subr.mxu0 0.0
    %5736 = vmatpush2.msra.mxu0 0.0
    %5737 = vmatprep.subr.mxu0 0.0
    %5738 = vmatpush2.msra.mxu0 0.0
    %5739 = vmatprep.subr.mxu0 0.0
    %5740 = vmatpush2.msra.mxu0 0.0
    %5741 = vmatprep.subr.mxu0 0.0
    %5742 = vmatpush2.msra.mxu0 0.0
    %5743 = vmatprep.subr.mxu0 0.0
    %5744 = vmatpush2.msra.mxu0 0.0
    %5745 = vmatprep.subr.mxu0 0.0
    %5746 = vmatpush2.msra.mxu0 0.0
    %5747 = vmatprep.mubr.f32.mxu0 0.0
    %v5748 = vand.u32 %v5680, 4294901760
    %v5749 = vsub.f32 %v5680, %v5748
    %v5750 = vand.u32 %v5749, 4294901760
    %v5751 = vsub.f32 %v5749, %v5750
    %v5752 = vand.u32 %v5751, 4294901760
    %5753 = vmatmul.mubr.f32.gmra.mxu0 %v5752
    %v5754 = vpop.f32.mrf.mxu0
    %v5755 = vadd.f32 0.0, %v5754
    %v5756 = vpop.f32.mrf.mxu0
    %5757 = vdwg.mxu0
    %5758 = vmatprep.subr.mxu0 0.0
    %5759 = vmatpush1.msra.mxu0 0.0
    %5760 = vmatprep.subr.mxu0 0.0
    %5761 = vmatpush1.msra.mxu0 0.0
    %5762 = vmatprep.subr.mxu0 0.0
    %5763 = vmatpush1.msra.mxu0 0.0
    %5764 = vmatprep.subr.mxu0 0.0
    %5765 = vmatpush1.msra.mxu0 0.0
    %5766 = vmatprep.subr.mxu0 0.0
    %5767 = vmatpush1.msra.mxu0 0.0
    %5768 = vmatprep.subr.mxu0 0.0
    %5769 = vmatpush1.msra.mxu0 0.0
    %5770 = vmatprep.subr.mxu0 0.0
    %5771 = vmatpush1.msra.mxu0 0.0
    %5772 = vmatprep.subr.mxu0 0.0
    %5773 = vmatpush1.msra.mxu0 0.0
    %5774 = vmatprep.subr.mxu0 0.0
    %5775 = vmatpush1.msra.mxu0 0.0
    %5776 = vmatprep.subr.mxu0 0.0
    %5777 = vmatpush1.msra.mxu0 0.0
    %5778 = vmatprep.subr.mxu0 0.0
    %5779 = vmatpush1.msra.mxu0 0.0
    %5780 = vmatprep.subr.mxu0 0.0
    %5781 = vmatpush1.msra.mxu0 0.0
    %5782 = vmatprep.subr.mxu0 0.0
    %5783 = vmatpush1.msra.mxu0 0.0
    %5784 = vmatprep.subr.mxu0 0.0
    %5785 = vmatpush1.msra.mxu0 0.0
    %5786 = vmatprep.subr.mxu0 0.0
    %5787 = vmatpush1.msra.mxu0 0.0
    %5788 = vmatprep.subr.mxu0 0.0
    %v5789 = vand.u32 %v5677, 4294901760
    %v5790 = vsub.f32 %v5677, %v5789
    %v5791 = vand.u32 %v5790, 4294901760
    %v5792 = vsub.f32 %v5790, %v5791
    %v5793 = vand.u32 %v5792, 4294901760
    %5794 = vmatpush1.msra.mxu0 %v5793
    %5795 = vmatprep.subr.mxu0 0.0
    %5796 = vmatpush2.msra.mxu0 0.0
    %5797 = vmatprep.subr.mxu0 0.0
    %5798 = vmatpush2.msra.mxu0 0.0
    %5799 = vmatprep.subr.mxu0 0.0
    %5800 = vmatpush2.msra.mxu0 0.0
    %5801 = vmatprep.subr.mxu0 0.0
    %5802 = vmatpush2.msra.mxu0 0.0
    %5803 = vmatprep.subr.mxu0 0.0
    %5804 = vmatpush2.msra.mxu0 0.0
    %5805 = vmatprep.subr.mxu0 0.0
    %5806 = vmatpush2.msra.mxu0 0.0
    %5807 = vmatprep.subr.mxu0 0.0
    %5808 = vmatpush2.msra.mxu0 0.0
    %5809 = vmatprep.subr.mxu0 0.0
    %5810 = vmatpush2.msra.mxu0 0.0
    %5811 = vmatprep.subr.mxu0 0.0
    %5812 = vmatpush2.msra.mxu0 0.0
    %5813 = vmatprep.subr.mxu0 0.0
    %5814 = vmatpush2.msra.mxu0 0.0
    %5815 = vmatprep.subr.mxu0 0.0
    %5816 = vmatpush2.msra.mxu0 0.0
    %5817 = vmatprep.subr.mxu0 0.0
    %5818 = vmatpush2.msra.mxu0 0.0
    %5819 = vmatprep.subr.mxu0 0.0
    %5820 = vmatpush2.msra.mxu0 0.0
    %5821 = vmatprep.subr.mxu0 0.0
    %5822 = vmatpush2.msra.mxu0 0.0
    %5823 = vmatprep.subr.mxu0 0.0
    %5824 = vmatpush2.msra.mxu0 0.0
    %5825 = vmatprep.subr.mxu0 0.0
    %5826 = vmatpush2.msra.mxu0 0.0
    %5827 = vmatprep.mubr.f32.mxu0 0.0
    %v5828 = vand.u32 %v5680, 4294901760
    %5829 = vmatmul.mubr.f32.gmra.mxu0 %v5828
    %v5830 = vpop.f32.mrf.mxu0
    %v5831 = vadd.f32 %v5755, %v5830
    %v5832 = vpop.f32.mrf.mxu0
    %5833 = vdwg.mxu0
    %5834 = vmatprep.subr.mxu0 0.0
    %5835 = vmatpush1.msra.mxu0 0.0
    %5836 = vmatprep.subr.mxu0 0.0
    %5837 = vmatpush1.msra.mxu0 0.0
    %5838 = vmatprep.subr.mxu0 0.0
    %5839 = vmatpush1.msra.mxu0 0.0
    %5840 = vmatprep.subr.mxu0 0.0
    %5841 = vmatpush1.msra.mxu0 0.0
    %5842 = vmatprep.subr.mxu0 0.0
    %5843 = vmatpush1.msra.mxu0 0.0
    %5844 = vmatprep.subr.mxu0 0.0
    %5845 = vmatpush1.msra.mxu0 0.0
    %5846 = vmatprep.subr.mxu0 0.0
    %5847 = vmatpush1.msra.mxu0 0.0
    %5848 = vmatprep.subr.mxu0 0.0
    %5849 = vmatpush1.msra.mxu0 0.0
    %5850 = vmatprep.subr.mxu0 0.0
    %5851 = vmatpush1.msra.mxu0 0.0
    %5852 = vmatprep.subr.mxu0 0.0
    %5853 = vmatpush1.msra.mxu0 0.0
    %5854 = vmatprep.subr.mxu0 0.0
    %5855 = vmatpush1.msra.mxu0 0.0
    %5856 = vmatprep.subr.mxu0 0.0
    %5857 = vmatpush1.msra.mxu0 0.0
    %5858 = vmatprep.subr.mxu0 0.0
    %5859 = vmatpush1.msra.mxu0 0.0
    %5860 = vmatprep.subr.mxu0 0.0
    %5861 = vmatpush1.msra.mxu0 0.0
    %5862 = vmatprep.subr.mxu0 0.0
    %5863 = vmatpush1.msra.mxu0 0.0
    %5864 = vmatprep.subr.mxu0 0.0
    %v5865 = vand.u32 %v5677, 4294901760
    %v5866 = vsub.f32 %v5677, %v5865
    %5867 = vmatpush1.msra.mxu0 %v5866
    %5868 = vmatprep.subr.mxu0 0.0
    %5869 = vmatpush2.msra.mxu0 0.0
    %5870 = vmatprep.subr.mxu0 0.0
    %5871 = vmatpush2.msra.mxu0 0.0
    %5872 = vmatprep.subr.mxu0 0.0
    %5873 = vmatpush2.msra.mxu0 0.0
    %5874 = vmatprep.subr.mxu0 0.0
    %5875 = vmatpush2.msra.mxu0 0.0
    %5876 = vmatprep.subr.mxu0 0.0
    %5877 = vmatpush2.msra.mxu0 0.0
    %5878 = vmatprep.subr.mxu0 0.0
    %5879 = vmatpush2.msra.mxu0 0.0
    %5880 = vmatprep.subr.mxu0 0.0
    %5881 = vmatpush2.msra.mxu0 0.0
    %5882 = vmatprep.subr.mxu0 0.0
    %5883 = vmatpush2.msra.mxu0 0.0
    %5884 = vmatprep.subr.mxu0 0.0
    %5885 = vmatpush2.msra.mxu0 0.0
    %5886 = vmatprep.subr.mxu0 0.0
    %5887 = vmatpush2.msra.mxu0 0.0
    %5888 = vmatprep.subr.mxu0 0.0
    %5889 = vmatpush2.msra.mxu0 0.0
    %5890 = vmatprep.subr.mxu0 0.0
    %5891 = vmatpush2.msra.mxu0 0.0
    %5892 = vmatprep.subr.mxu0 0.0
    %5893 = vmatpush2.msra.mxu0 0.0
    %5894 = vmatprep.subr.mxu0 0.0
    %5895 = vmatpush2.msra.mxu0 0.0
    %5896 = vmatprep.subr.mxu0 0.0
    %5897 = vmatpush2.msra.mxu0 0.0
    %5898 = vmatprep.subr.mxu0 0.0
    %5899 = vmatpush2.msra.mxu0 0.0
    %5900 = vmatprep.mubr.f32.mxu0 0.0
    %v5901 = vand.u32 %v5680, 4294901760
    %v5902 = vsub.f32 %v5680, %v5901
    %5903 = vmatmul.mubr.f32.gmra.mxu0 %v5902
    %v5904 = vpop.f32.mrf.mxu0
    %v5905 = vadd.f32 %v5831, %v5904
    %v5906 = vpop.f32.mrf.mxu0
    %5907 = vdwg.mxu0
    %5908 = vmatprep.subr.mxu0 0.0
    %5909 = vmatpush1.msra.mxu0 0.0
    %5910 = vmatprep.subr.mxu0 0.0
    %5911 = vmatpush1.msra.mxu0 0.0
    %5912 = vmatprep.subr.mxu0 0.0
    %5913 = vmatpush1.msra.mxu0 0.0
    %5914 = vmatprep.subr.mxu0 0.0
    %5915 = vmatpush1.msra.mxu0 0.0
    %5916 = vmatprep.subr.mxu0 0.0
    %5917 = vmatpush1.msra.mxu0 0.0
    %5918 = vmatprep.subr.mxu0 0.0
    %5919 = vmatpush1.msra.mxu0 0.0
    %5920 = vmatprep.subr.mxu0 0.0
    %5921 = vmatpush1.msra.mxu0 0.0
    %5922 = vmatprep.subr.mxu0 0.0
    %5923 = vmatpush1.msra.mxu0 0.0
    %5924 = vmatprep.subr.mxu0 0.0
    %5925 = vmatpush1.msra.mxu0 0.0
    %5926 = vmatprep.subr.mxu0 0.0
    %5927 = vmatpush1.msra.mxu0 0.0
    %5928 = vmatprep.subr.mxu0 0.0
    %5929 = vmatpush1.msra.mxu0 0.0
    %5930 = vmatprep.subr.mxu0 0.0
    %5931 = vmatpush1.msra.mxu0 0.0
    %5932 = vmatprep.subr.mxu0 0.0
    %5933 = vmatpush1.msra.mxu0 0.0
    %5934 = vmatprep.subr.mxu0 0.0
    %5935 = vmatpush1.msra.mxu0 0.0
    %5936 = vmatprep.subr.mxu0 0.0
    %5937 = vmatpush1.msra.mxu0 0.0
    %5938 = vmatprep.subr.mxu0 0.0
    %v5939 = vand.u32 %v5677, 4294901760
    %5940 = vmatpush1.msra.mxu0 %v5939
    %5941 = vmatprep.subr.mxu0 0.0
    %5942 = vmatpush2.msra.mxu0 0.0
    %5943 = vmatprep.subr.mxu0 0.0
    %5944 = vmatpush2.msra.mxu0 0.0
    %5945 = vmatprep.subr.mxu0 0.0
    %5946 = vmatpush2.msra.mxu0 0.0
    %5947 = vmatprep.subr.mxu0 0.0
    %5948 = vmatpush2.msra.mxu0 0.0
    %5949 = vmatprep.subr.mxu0 0.0
    %5950 = vmatpush2.msra.mxu0 0.0
    %5951 = vmatprep.subr.mxu0 0.0
    %5952 = vmatpush2.msra.mxu0 0.0
    %5953 = vmatprep.subr.mxu0 0.0
    %5954 = vmatpush2.msra.mxu0 0.0
    %5955 = vmatprep.subr.mxu0 0.0
    %5956 = vmatpush2.msra.mxu0 0.0
    %5957 = vmatprep.subr.mxu0 0.0
    %5958 = vmatpush2.msra.mxu0 0.0
    %5959 = vmatprep.subr.mxu0 0.0
    %5960 = vmatpush2.msra.mxu0 0.0
    %5961 = vmatprep.subr.mxu0 0.0
    %5962 = vmatpush2.msra.mxu0 0.0
    %5963 = vmatprep.subr.mxu0 0.0
    %5964 = vmatpush2.msra.mxu0 0.0
    %5965 = vmatprep.subr.mxu0 0.0
    %5966 = vmatpush2.msra.mxu0 0.0
    %5967 = vmatprep.subr.mxu0 0.0
    %5968 = vmatpush2.msra.mxu0 0.0
    %5969 = vmatprep.subr.mxu0 0.0
    %5970 = vmatpush2.msra.mxu0 0.0
    %5971 = vmatprep.subr.mxu0 0.0
    %5972 = vmatpush2.msra.mxu0 0.0
    %5973 = vmatprep.mubr.f32.mxu0 0.0
    %v5974 = vand.u32 %v5680, 4294901760
    %v5975 = vsub.f32 %v5680, %v5974
    %v5976 = vand.u32 %v5975, 4294901760
    %5977 = vmatmul.mubr.f32.gmra.mxu0 %v5976
    %v5978 = vpop.f32.mrf.mxu0
    %v5979 = vadd.f32 %v5905, %v5978
    %v5980 = vpop.f32.mrf.mxu0
    %5981 = vdwg.mxu0
    %5982 = vmatprep.subr.mxu0 0.0
    %5983 = vmatpush1.msra.mxu0 0.0
    %5984 = vmatprep.subr.mxu0 0.0
    %5985 = vmatpush1.msra.mxu0 0.0
    %5986 = vmatprep.subr.mxu0 0.0
    %5987 = vmatpush1.msra.mxu0 0.0
    %5988 = vmatprep.subr.mxu0 0.0
    %5989 = vmatpush1.msra.mxu0 0.0
    %5990 = vmatprep.subr.mxu0 0.0
    %5991 = vmatpush1.msra.mxu0 0.0
    %5992 = vmatprep.subr.mxu0 0.0
    %5993 = vmatpush1.msra.mxu0 0.0
    %5994 = vmatprep.subr.mxu0 0.0
    %5995 = vmatpush1.msra.mxu0 0.0
    %5996 = vmatprep.subr.mxu0 0.0
    %5997 = vmatpush1.msra.mxu0 0.0
    %5998 = vmatprep.subr.mxu0 0.0
    %5999 = vmatpush1.msra.mxu0 0.0
    %6000 = vmatprep.subr.mxu0 0.0
    %6001 = vmatpush1.msra.mxu0 0.0
    %6002 = vmatprep.subr.mxu0 0.0
    %6003 = vmatpush1.msra.mxu0 0.0
    %6004 = vmatprep.subr.mxu0 0.0
    %6005 = vmatpush1.msra.mxu0 0.0
    %6006 = vmatprep.subr.mxu0 0.0
    %6007 = vmatpush1.msra.mxu0 0.0
    %6008 = vmatprep.subr.mxu0 0.0
    %6009 = vmatpush1.msra.mxu0 0.0
    %6010 = vmatprep.subr.mxu0 0.0
    %6011 = vmatpush1.msra.mxu0 0.0
    %6012 = vmatprep.subr.mxu0 0.0
    %v6013 = vand.u32 %v5677, 4294901760
    %v6014 = vsub.f32 %v5677, %v6013
    %v6015 = vand.u32 %v6014, 4294901760
    %6016 = vmatpush1.msra.mxu0 %v6015
    %6017 = vmatprep.subr.mxu0 0.0
    %6018 = vmatpush2.msra.mxu0 0.0
    %6019 = vmatprep.subr.mxu0 0.0
    %6020 = vmatpush2.msra.mxu0 0.0
    %6021 = vmatprep.subr.mxu0 0.0
    %6022 = vmatpush2.msra.mxu0 0.0
    %6023 = vmatprep.subr.mxu0 0.0
    %6024 = vmatpush2.msra.mxu0 0.0
    %6025 = vmatprep.subr.mxu0 0.0
    %6026 = vmatpush2.msra.mxu0 0.0
    %6027 = vmatprep.subr.mxu0 0.0
    %6028 = vmatpush2.msra.mxu0 0.0
    %6029 = vmatprep.subr.mxu0 0.0
    %6030 = vmatpush2.msra.mxu0 0.0
    %6031 = vmatprep.subr.mxu0 0.0
    %6032 = vmatpush2.msra.mxu0 0.0
    %6033 = vmatprep.subr.mxu0 0.0
    %6034 = vmatpush2.msra.mxu0 0.0
    %6035 = vmatprep.subr.mxu0 0.0
    %6036 = vmatpush2.msra.mxu0 0.0
    %6037 = vmatprep.subr.mxu0 0.0
    %6038 = vmatpush2.msra.mxu0 0.0
    %6039 = vmatprep.subr.mxu0 0.0
    %6040 = vmatpush2.msra.mxu0 0.0
    %6041 = vmatprep.subr.mxu0 0.0
    %6042 = vmatpush2.msra.mxu0 0.0
    %6043 = vmatprep.subr.mxu0 0.0
    %6044 = vmatpush2.msra.mxu0 0.0
    %6045 = vmatprep.subr.mxu0 0.0
    %6046 = vmatpush2.msra.mxu0 0.0
    %6047 = vmatprep.subr.mxu0 0.0
    %6048 = vmatpush2.msra.mxu0 0.0
    %6049 = vmatprep.mubr.f32.mxu0 0.0
    %v6050 = vand.u32 %v5680, 4294901760
    %6051 = vmatmul.mubr.f32.gmra.mxu0 %v6050
    %v6052 = vpop.f32.mrf.mxu0
    %v6053 = vadd.f32 %v5979, %v6052
    %v6054 = vpop.f32.mrf.mxu0
    %6055 = vdwg.mxu0
    %6056 = vmatprep.subr.mxu0 0.0
    %6057 = vmatpush1.msra.mxu0 0.0
    %6058 = vmatprep.subr.mxu0 0.0
    %6059 = vmatpush1.msra.mxu0 0.0
    %6060 = vmatprep.subr.mxu0 0.0
    %6061 = vmatpush1.msra.mxu0 0.0
    %6062 = vmatprep.subr.mxu0 0.0
    %6063 = vmatpush1.msra.mxu0 0.0
    %6064 = vmatprep.subr.mxu0 0.0
    %6065 = vmatpush1.msra.mxu0 0.0
    %6066 = vmatprep.subr.mxu0 0.0
    %6067 = vmatpush1.msra.mxu0 0.0
    %6068 = vmatprep.subr.mxu0 0.0
    %6069 = vmatpush1.msra.mxu0 0.0
    %6070 = vmatprep.subr.mxu0 0.0
    %6071 = vmatpush1.msra.mxu0 0.0
    %6072 = vmatprep.subr.mxu0 0.0
    %6073 = vmatpush1.msra.mxu0 0.0
    %6074 = vmatprep.subr.mxu0 0.0
    %6075 = vmatpush1.msra.mxu0 0.0
    %6076 = vmatprep.subr.mxu0 0.0
    %6077 = vmatpush1.msra.mxu0 0.0
    %6078 = vmatprep.subr.mxu0 0.0
    %6079 = vmatpush1.msra.mxu0 0.0
    %6080 = vmatprep.subr.mxu0 0.0
    %6081 = vmatpush1.msra.mxu0 0.0
    %6082 = vmatprep.subr.mxu0 0.0
    %6083 = vmatpush1.msra.mxu0 0.0
    %6084 = vmatprep.subr.mxu0 0.0
    %6085 = vmatpush1.msra.mxu0 0.0
    %6086 = vmatprep.subr.mxu0 0.0
    %v6087 = vand.u32 %v5677, 4294901760
    %6088 = vmatpush1.msra.mxu0 %v6087
    %6089 = vmatprep.subr.mxu0 0.0
    %6090 = vmatpush2.msra.mxu0 0.0
    %6091 = vmatprep.subr.mxu0 0.0
    %6092 = vmatpush2.msra.mxu0 0.0
    %6093 = vmatprep.subr.mxu0 0.0
    %6094 = vmatpush2.msra.mxu0 0.0
    %6095 = vmatprep.subr.mxu0 0.0
    %6096 = vmatpush2.msra.mxu0 0.0
    %6097 = vmatprep.subr.mxu0 0.0
    %6098 = vmatpush2.msra.mxu0 0.0
    %6099 = vmatprep.subr.mxu0 0.0
    %6100 = vmatpush2.msra.mxu0 0.0
    %6101 = vmatprep.subr.mxu0 0.0
    %6102 = vmatpush2.msra.mxu0 0.0
    %6103 = vmatprep.subr.mxu0 0.0
    %6104 = vmatpush2.msra.mxu0 0.0
    %6105 = vmatprep.subr.mxu0 0.0
    %6106 = vmatpush2.msra.mxu0 0.0
    %6107 = vmatprep.subr.mxu0 0.0
    %6108 = vmatpush2.msra.mxu0 0.0
    %6109 = vmatprep.subr.mxu0 0.0
    %6110 = vmatpush2.msra.mxu0 0.0
    %6111 = vmatprep.subr.mxu0 0.0
    %6112 = vmatpush2.msra.mxu0 0.0
    %6113 = vmatprep.subr.mxu0 0.0
    %6114 = vmatpush2.msra.mxu0 0.0
    %6115 = vmatprep.subr.mxu0 0.0
    %6116 = vmatpush2.msra.mxu0 0.0
    %6117 = vmatprep.subr.mxu0 0.0
    %6118 = vmatpush2.msra.mxu0 0.0
    %6119 = vmatprep.subr.mxu0 0.0
    %6120 = vmatpush2.msra.mxu0 0.0
    %6121 = vmatprep.mubr.f32.mxu0 0.0
    %v6122 = vand.u32 %v5680, 4294901760
    %6123 = vmatmul.mubr.f32.gmra.mxu0 %v6122
    %v6124 = vpop.f32.mrf.mxu0
    %v6125 = vadd.f32 %v6053, %v6124
    %v6126 = vpop.f32.mrf.mxu0
    %6127 = vdwg.mxu0
    %6128 = vrot.lane.b32.xlu0 %v593, 64
    %v6129 = vpop.permute.xlu0 %6128
    %v6132 = vsel %vm607, %v4313, 0
    %6134 = vmatprep.subr.mxu0 0.0
    %6135 = vmatpush1.msra.mxu0 0.0
    %6136 = vmatprep.subr.mxu0 0.0
    %6137 = vmatpush1.msra.mxu0 0.0
    %6138 = vmatprep.subr.mxu0 0.0
    %6139 = vmatpush1.msra.mxu0 0.0
    %6140 = vmatprep.subr.mxu0 0.0
    %6141 = vmatpush1.msra.mxu0 0.0
    %6142 = vmatprep.subr.mxu0 0.0
    %6143 = vmatpush1.msra.mxu0 0.0
    %6144 = vmatprep.subr.mxu0 0.0
    %6145 = vmatpush1.msra.mxu0 0.0
    %6146 = vmatprep.subr.mxu0 0.0
    %6147 = vmatpush1.msra.mxu0 0.0
    %6148 = vmatprep.subr.mxu0 0.0
    %6149 = vmatpush1.msra.mxu0 0.0
    %6150 = vmatprep.subr.mxu0 0.0
    %6151 = vmatpush1.msra.mxu0 0.0
    %6152 = vmatprep.subr.mxu0 0.0
    %6153 = vmatpush1.msra.mxu0 0.0
    %6154 = vmatprep.subr.mxu0 0.0
    %6155 = vmatpush1.msra.mxu0 0.0
    %6156 = vmatprep.subr.mxu0 0.0
    %6157 = vmatpush1.msra.mxu0 0.0
    %6158 = vmatprep.subr.mxu0 0.0
    %6159 = vmatpush1.msra.mxu0 0.0
    %6160 = vmatprep.subr.mxu0 0.0
    %6161 = vmatpush1.msra.mxu0 0.0
    %6162 = vmatprep.subr.mxu0 0.0
    %6163 = vmatpush1.msra.mxu0 0.0
    %6164 = vmatprep.subr.mxu0 0.0
    %v6165 = vand.u32 %v6129, 4294901760
    %6166 = vmatpush1.msra.mxu0 %v6165
    %6167 = vmatprep.subr.mxu0 0.0
    %6168 = vmatpush2.msra.mxu0 0.0
    %6169 = vmatprep.subr.mxu0 0.0
    %6170 = vmatpush2.msra.mxu0 0.0
    %6171 = vmatprep.subr.mxu0 0.0
    %6172 = vmatpush2.msra.mxu0 0.0
    %6173 = vmatprep.subr.mxu0 0.0
    %6174 = vmatpush2.msra.mxu0 0.0
    %6175 = vmatprep.subr.mxu0 0.0
    %6176 = vmatpush2.msra.mxu0 0.0
    %6177 = vmatprep.subr.mxu0 0.0
    %6178 = vmatpush2.msra.mxu0 0.0
    %6179 = vmatprep.subr.mxu0 0.0
    %6180 = vmatpush2.msra.mxu0 0.0
    %6181 = vmatprep.subr.mxu0 0.0
    %6182 = vmatpush2.msra.mxu0 0.0
    %6183 = vmatprep.subr.mxu0 0.0
    %6184 = vmatpush2.msra.mxu0 0.0
    %6185 = vmatprep.subr.mxu0 0.0
    %6186 = vmatpush2.msra.mxu0 0.0
    %6187 = vmatprep.subr.mxu0 0.0
    %6188 = vmatpush2.msra.mxu0 0.0
    %6189 = vmatprep.subr.mxu0 0.0
    %6190 = vmatpush2.msra.mxu0 0.0
    %6191 = vmatprep.subr.mxu0 0.0
    %6192 = vmatpush2.msra.mxu0 0.0
    %6193 = vmatprep.subr.mxu0 0.0
    %6194 = vmatpush2.msra.mxu0 0.0
    %6195 = vmatprep.subr.mxu0 0.0
    %6196 = vmatpush2.msra.mxu0 0.0
    %6197 = vmatprep.subr.mxu0 0.0
    %6198 = vmatpush2.msra.mxu0 0.0
    %6199 = vmatprep.mubr.f32.mxu0 0.0
    %v6200 = vand.u32 %v6132, 4294901760
    %v6201 = vsub.f32 %v6132, %v6200
    %v6202 = vand.u32 %v6201, 4294901760
    %v6203 = vsub.f32 %v6201, %v6202
    %v6204 = vand.u32 %v6203, 4294901760
    %6205 = vmatmul.mubr.f32.gmra.mxu0 %v6204
    %v6206 = vpop.f32.mrf.mxu0
    %v6207 = vadd.f32 0.0, %v6206
    %v6208 = vpop.f32.mrf.mxu0
    %6209 = vdwg.mxu0
    %6210 = vmatprep.subr.mxu0 0.0
    %6211 = vmatpush1.msra.mxu0 0.0
    %6212 = vmatprep.subr.mxu0 0.0
    %6213 = vmatpush1.msra.mxu0 0.0
    %6214 = vmatprep.subr.mxu0 0.0
    %6215 = vmatpush1.msra.mxu0 0.0
    %6216 = vmatprep.subr.mxu0 0.0
    %6217 = vmatpush1.msra.mxu0 0.0
    %6218 = vmatprep.subr.mxu0 0.0
    %6219 = vmatpush1.msra.mxu0 0.0
    %6220 = vmatprep.subr.mxu0 0.0
    %6221 = vmatpush1.msra.mxu0 0.0
    %6222 = vmatprep.subr.mxu0 0.0
    %6223 = vmatpush1.msra.mxu0 0.0
    %6224 = vmatprep.subr.mxu0 0.0
    %6225 = vmatpush1.msra.mxu0 0.0
    %6226 = vmatprep.subr.mxu0 0.0
    %6227 = vmatpush1.msra.mxu0 0.0
    %6228 = vmatprep.subr.mxu0 0.0
    %6229 = vmatpush1.msra.mxu0 0.0
    %6230 = vmatprep.subr.mxu0 0.0
    %6231 = vmatpush1.msra.mxu0 0.0
    %6232 = vmatprep.subr.mxu0 0.0
    %6233 = vmatpush1.msra.mxu0 0.0
    %6234 = vmatprep.subr.mxu0 0.0
    %6235 = vmatpush1.msra.mxu0 0.0
    %6236 = vmatprep.subr.mxu0 0.0
    %6237 = vmatpush1.msra.mxu0 0.0
    %6238 = vmatprep.subr.mxu0 0.0
    %6239 = vmatpush1.msra.mxu0 0.0
    %6240 = vmatprep.subr.mxu0 0.0
    %v6241 = vand.u32 %v6129, 4294901760
    %v6242 = vsub.f32 %v6129, %v6241
    %v6243 = vand.u32 %v6242, 4294901760
    %v6244 = vsub.f32 %v6242, %v6243
    %v6245 = vand.u32 %v6244, 4294901760
    %6246 = vmatpush1.msra.mxu0 %v6245
    %6247 = vmatprep.subr.mxu0 0.0
    %6248 = vmatpush2.msra.mxu0 0.0
    %6249 = vmatprep.subr.mxu0 0.0
    %6250 = vmatpush2.msra.mxu0 0.0
    %6251 = vmatprep.subr.mxu0 0.0
    %6252 = vmatpush2.msra.mxu0 0.0
    %6253 = vmatprep.subr.mxu0 0.0
    %6254 = vmatpush2.msra.mxu0 0.0
    %6255 = vmatprep.subr.mxu0 0.0
    %6256 = vmatpush2.msra.mxu0 0.0
    %6257 = vmatprep.subr.mxu0 0.0
    %6258 = vmatpush2.msra.mxu0 0.0
    %6259 = vmatprep.subr.mxu0 0.0
    %6260 = vmatpush2.msra.mxu0 0.0
    %6261 = vmatprep.subr.mxu0 0.0
    %6262 = vmatpush2.msra.mxu0 0.0
    %6263 = vmatprep.subr.mxu0 0.0
    %6264 = vmatpush2.msra.mxu0 0.0
    %6265 = vmatprep.subr.mxu0 0.0
    %6266 = vmatpush2.msra.mxu0 0.0
    %6267 = vmatprep.subr.mxu0 0.0
    %6268 = vmatpush2.msra.mxu0 0.0
    %6269 = vmatprep.subr.mxu0 0.0
    %6270 = vmatpush2.msra.mxu0 0.0
    %6271 = vmatprep.subr.mxu0 0.0
    %6272 = vmatpush2.msra.mxu0 0.0
    %6273 = vmatprep.subr.mxu0 0.0
    %6274 = vmatpush2.msra.mxu0 0.0
    %6275 = vmatprep.subr.mxu0 0.0
    %6276 = vmatpush2.msra.mxu0 0.0
    %6277 = vmatprep.subr.mxu0 0.0
    %6278 = vmatpush2.msra.mxu0 0.0
    %6279 = vmatprep.mubr.f32.mxu0 0.0
    %v6280 = vand.u32 %v6132, 4294901760
    %6281 = vmatmul.mubr.f32.gmra.mxu0 %v6280
    %v6282 = vpop.f32.mrf.mxu0
    %v6283 = vadd.f32 %v6207, %v6282
    %v6284 = vpop.f32.mrf.mxu0
    %6285 = vdwg.mxu0
    %6286 = vmatprep.subr.mxu0 0.0
    %6287 = vmatpush1.msra.mxu0 0.0
    %6288 = vmatprep.subr.mxu0 0.0
    %6289 = vmatpush1.msra.mxu0 0.0
    %6290 = vmatprep.subr.mxu0 0.0
    %6291 = vmatpush1.msra.mxu0 0.0
    %6292 = vmatprep.subr.mxu0 0.0
    %6293 = vmatpush1.msra.mxu0 0.0
    %6294 = vmatprep.subr.mxu0 0.0
    %6295 = vmatpush1.msra.mxu0 0.0
    %6296 = vmatprep.subr.mxu0 0.0
    %6297 = vmatpush1.msra.mxu0 0.0
    %6298 = vmatprep.subr.mxu0 0.0
    %6299 = vmatpush1.msra.mxu0 0.0
    %6300 = vmatprep.subr.mxu0 0.0
    %6301 = vmatpush1.msra.mxu0 0.0
    %6302 = vmatprep.subr.mxu0 0.0
    %6303 = vmatpush1.msra.mxu0 0.0
    %6304 = vmatprep.subr.mxu0 0.0
    %6305 = vmatpush1.msra.mxu0 0.0
    %6306 = vmatprep.subr.mxu0 0.0
    %6307 = vmatpush1.msra.mxu0 0.0
    %6308 = vmatprep.subr.mxu0 0.0
    %6309 = vmatpush1.msra.mxu0 0.0
    %6310 = vmatprep.subr.mxu0 0.0
    %6311 = vmatpush1.msra.mxu0 0.0
    %6312 = vmatprep.subr.mxu0 0.0
    %6313 = vmatpush1.msra.mxu0 0.0
    %6314 = vmatprep.subr.mxu0 0.0
    %6315 = vmatpush1.msra.mxu0 0.0
    %6316 = vmatprep.subr.mxu0 0.0
    %v6317 = vand.u32 %v6129, 4294901760
    %v6318 = vsub.f32 %v6129, %v6317
    %6319 = vmatpush1.msra.mxu0 %v6318
    %6320 = vmatprep.subr.mxu0 0.0
    %6321 = vmatpush2.msra.mxu0 0.0
    %6322 = vmatprep.subr.mxu0 0.0
    %6323 = vmatpush2.msra.mxu0 0.0
    %6324 = vmatprep.subr.mxu0 0.0
    %6325 = vmatpush2.msra.mxu0 0.0
    %6326 = vmatprep.subr.mxu0 0.0
    %6327 = vmatpush2.msra.mxu0 0.0
    %6328 = vmatprep.subr.mxu0 0.0
    %6329 = vmatpush2.msra.mxu0 0.0
    %6330 = vmatprep.subr.mxu0 0.0
    %6331 = vmatpush2.msra.mxu0 0.0
    %6332 = vmatprep.subr.mxu0 0.0
    %6333 = vmatpush2.msra.mxu0 0.0
    %6334 = vmatprep.subr.mxu0 0.0
    %6335 = vmatpush2.msra.mxu0 0.0
    %6336 = vmatprep.subr.mxu0 0.0
    %6337 = vmatpush2.msra.mxu0 0.0
    %6338 = vmatprep.subr.mxu0 0.0
    %6339 = vmatpush2.msra.mxu0 0.0
    %6340 = vmatprep.subr.mxu0 0.0
    %6341 = vmatpush2.msra.mxu0 0.0
    %6342 = vmatprep.subr.mxu0 0.0
    %6343 = vmatpush2.msra.mxu0 0.0
    %6344 = vmatprep.subr.mxu0 0.0
    %6345 = vmatpush2.msra.mxu0 0.0
    %6346 = vmatprep.subr.mxu0 0.0
    %6347 = vmatpush2.msra.mxu0 0.0
    %6348 = vmatprep.subr.mxu0 0.0
    %6349 = vmatpush2.msra.mxu0 0.0
    %6350 = vmatprep.subr.mxu0 0.0
    %6351 = vmatpush2.msra.mxu0 0.0
    %6352 = vmatprep.mubr.f32.mxu0 0.0
    %v6353 = vand.u32 %v6132, 4294901760
    %v6354 = vsub.f32 %v6132, %v6353
    %6355 = vmatmul.mubr.f32.gmra.mxu0 %v6354
    %v6356 = vpop.f32.mrf.mxu0
    %v6357 = vadd.f32 %v6283, %v6356
    %v6358 = vpop.f32.mrf.mxu0
    %6359 = vdwg.mxu0
    %6360 = vmatprep.subr.mxu0 0.0
    %6361 = vmatpush1.msra.mxu0 0.0
    %6362 = vmatprep.subr.mxu0 0.0
    %6363 = vmatpush1.msra.mxu0 0.0
    %6364 = vmatprep.subr.mxu0 0.0
    %6365 = vmatpush1.msra.mxu0 0.0
    %6366 = vmatprep.subr.mxu0 0.0
    %6367 = vmatpush1.msra.mxu0 0.0
    %6368 = vmatprep.subr.mxu0 0.0
    %6369 = vmatpush1.msra.mxu0 0.0
    %6370 = vmatprep.subr.mxu0 0.0
    %6371 = vmatpush1.msra.mxu0 0.0
    %6372 = vmatprep.subr.mxu0 0.0
    %6373 = vmatpush1.msra.mxu0 0.0
    %6374 = vmatprep.subr.mxu0 0.0
    %6375 = vmatpush1.msra.mxu0 0.0
    %6376 = vmatprep.subr.mxu0 0.0
    %6377 = vmatpush1.msra.mxu0 0.0
    %6378 = vmatprep.subr.mxu0 0.0
    %6379 = vmatpush1.msra.mxu0 0.0
    %6380 = vmatprep.subr.mxu0 0.0
    %6381 = vmatpush1.msra.mxu0 0.0
    %6382 = vmatprep.subr.mxu0 0.0
    %6383 = vmatpush1.msra.mxu0 0.0
    %6384 = vmatprep.subr.mxu0 0.0
    %6385 = vmatpush1.msra.mxu0 0.0
    %6386 = vmatprep.subr.mxu0 0.0
    %6387 = vmatpush1.msra.mxu0 0.0
    %6388 = vmatprep.subr.mxu0 0.0
    %6389 = vmatpush1.msra.mxu0 0.0
    %6390 = vmatprep.subr.mxu0 0.0
    %v6391 = vand.u32 %v6129, 4294901760
    %6392 = vmatpush1.msra.mxu0 %v6391
    %6393 = vmatprep.subr.mxu0 0.0
    %6394 = vmatpush2.msra.mxu0 0.0
    %6395 = vmatprep.subr.mxu0 0.0
    %6396 = vmatpush2.msra.mxu0 0.0
    %6397 = vmatprep.subr.mxu0 0.0
    %6398 = vmatpush2.msra.mxu0 0.0
    %6399 = vmatprep.subr.mxu0 0.0
    %6400 = vmatpush2.msra.mxu0 0.0
    %6401 = vmatprep.subr.mxu0 0.0
    %6402 = vmatpush2.msra.mxu0 0.0
    %6403 = vmatprep.subr.mxu0 0.0
    %6404 = vmatpush2.msra.mxu0 0.0
    %6405 = vmatprep.subr.mxu0 0.0
    %6406 = vmatpush2.msra.mxu0 0.0
    %6407 = vmatprep.subr.mxu0 0.0
    %6408 = vmatpush2.msra.mxu0 0.0
    %6409 = vmatprep.subr.mxu0 0.0
    %6410 = vmatpush2.msra.mxu0 0.0
    %6411 = vmatprep.subr.mxu0 0.0
    %6412 = vmatpush2.msra.mxu0 0.0
    %6413 = vmatprep.subr.mxu0 0.0
    %6414 = vmatpush2.msra.mxu0 0.0
    %6415 = vmatprep.subr.mxu0 0.0
    %6416 = vmatpush2.msra.mxu0 0.0
    %6417 = vmatprep.subr.mxu0 0.0
    %6418 = vmatpush2.msra.mxu0 0.0
    %6419 = vmatprep.subr.mxu0 0.0
    %6420 = vmatpush2.msra.mxu0 0.0
    %6421 = vmatprep.subr.mxu0 0.0
    %6422 = vmatpush2.msra.mxu0 0.0
    %6423 = vmatprep.subr.mxu0 0.0
    %6424 = vmatpush2.msra.mxu0 0.0
    %6425 = vmatprep.mubr.f32.mxu0 0.0
    %v6426 = vand.u32 %v6132, 4294901760
    %v6427 = vsub.f32 %v6132, %v6426
    %v6428 = vand.u32 %v6427, 4294901760
    %6429 = vmatmul.mubr.f32.gmra.mxu0 %v6428
    %v6430 = vpop.f32.mrf.mxu0
    %v6431 = vadd.f32 %v6357, %v6430
    %v6432 = vpop.f32.mrf.mxu0
    %6433 = vdwg.mxu0
    %6434 = vmatprep.subr.mxu0 0.0
    %6435 = vmatpush1.msra.mxu0 0.0
    %6436 = vmatprep.subr.mxu0 0.0
    %6437 = vmatpush1.msra.mxu0 0.0
    %6438 = vmatprep.subr.mxu0 0.0
    %6439 = vmatpush1.msra.mxu0 0.0
    %6440 = vmatprep.subr.mxu0 0.0
    %6441 = vmatpush1.msra.mxu0 0.0
    %6442 = vmatprep.subr.mxu0 0.0
    %6443 = vmatpush1.msra.mxu0 0.0
    %6444 = vmatprep.subr.mxu0 0.0
    %6445 = vmatpush1.msra.mxu0 0.0
    %6446 = vmatprep.subr.mxu0 0.0
    %6447 = vmatpush1.msra.mxu0 0.0
    %6448 = vmatprep.subr.mxu0 0.0
    %6449 = vmatpush1.msra.mxu0 0.0
    %6450 = vmatprep.subr.mxu0 0.0
    %6451 = vmatpush1.msra.mxu0 0.0
    %6452 = vmatprep.subr.mxu0 0.0
    %6453 = vmatpush1.msra.mxu0 0.0
    %6454 = vmatprep.subr.mxu0 0.0
    %6455 = vmatpush1.msra.mxu0 0.0
    %6456 = vmatprep.subr.mxu0 0.0
    %6457 = vmatpush1.msra.mxu0 0.0
    %6458 = vmatprep.subr.mxu0 0.0
    %6459 = vmatpush1.msra.mxu0 0.0
    %6460 = vmatprep.subr.mxu0 0.0
    %6461 = vmatpush1.msra.mxu0 0.0
    %6462 = vmatprep.subr.mxu0 0.0
    %6463 = vmatpush1.msra.mxu0 0.0
    %6464 = vmatprep.subr.mxu0 0.0
    %v6465 = vand.u32 %v6129, 4294901760
    %v6466 = vsub.f32 %v6129, %v6465
    %v6467 = vand.u32 %v6466, 4294901760
    %6468 = vmatpush1.msra.mxu0 %v6467
    %6469 = vmatprep.subr.mxu0 0.0
    %6470 = vmatpush2.msra.mxu0 0.0
    %6471 = vmatprep.subr.mxu0 0.0
    %6472 = vmatpush2.msra.mxu0 0.0
    %6473 = vmatprep.subr.mxu0 0.0
    %6474 = vmatpush2.msra.mxu0 0.0
    %6475 = vmatprep.subr.mxu0 0.0
    %6476 = vmatpush2.msra.mxu0 0.0
    %6477 = vmatprep.subr.mxu0 0.0
    %6478 = vmatpush2.msra.mxu0 0.0
    %6479 = vmatprep.subr.mxu0 0.0
    %6480 = vmatpush2.msra.mxu0 0.0
    %6481 = vmatprep.subr.mxu0 0.0
    %6482 = vmatpush2.msra.mxu0 0.0
    %6483 = vmatprep.subr.mxu0 0.0
    %6484 = vmatpush2.msra.mxu0 0.0
    %6485 = vmatprep.subr.mxu0 0.0
    %6486 = vmatpush2.msra.mxu0 0.0
    %6487 = vmatprep.subr.mxu0 0.0
    %6488 = vmatpush2.msra.mxu0 0.0
    %6489 = vmatprep.subr.mxu0 0.0
    %6490 = vmatpush2.msra.mxu0 0.0
    %6491 = vmatprep.subr.mxu0 0.0
    %6492 = vmatpush2.msra.mxu0 0.0
    %6493 = vmatprep.subr.mxu0 0.0
    %6494 = vmatpush2.msra.mxu0 0.0
    %6495 = vmatprep.subr.mxu0 0.0
    %6496 = vmatpush2.msra.mxu0 0.0
    %6497 = vmatprep.subr.mxu0 0.0
    %6498 = vmatpush2.msra.mxu0 0.0
    %6499 = vmatprep.subr.mxu0 0.0
    %6500 = vmatpush2.msra.mxu0 0.0
    %6501 = vmatprep.mubr.f32.mxu0 0.0
    %v6502 = vand.u32 %v6132, 4294901760
    %6503 = vmatmul.mubr.f32.gmra.mxu0 %v6502
    %v6504 = vpop.f32.mrf.mxu0
    %v6505 = vadd.f32 %v6431, %v6504
    %v6506 = vpop.f32.mrf.mxu0
    %6507 = vdwg.mxu0
    %6508 = vmatprep.subr.mxu0 0.0
    %6509 = vmatpush1.msra.mxu0 0.0
    %6510 = vmatprep.subr.mxu0 0.0
    %6511 = vmatpush1.msra.mxu0 0.0
    %6512 = vmatprep.subr.mxu0 0.0
    %6513 = vmatpush1.msra.mxu0 0.0
    %6514 = vmatprep.subr.mxu0 0.0
    %6515 = vmatpush1.msra.mxu0 0.0
    %6516 = vmatprep.subr.mxu0 0.0
    %6517 = vmatpush1.msra.mxu0 0.0
    %6518 = vmatprep.subr.mxu0 0.0
    %6519 = vmatpush1.msra.mxu0 0.0
    %6520 = vmatprep.subr.mxu0 0.0
    %6521 = vmatpush1.msra.mxu0 0.0
    %6522 = vmatprep.subr.mxu0 0.0
    %6523 = vmatpush1.msra.mxu0 0.0
    %6524 = vmatprep.subr.mxu0 0.0
    %6525 = vmatpush1.msra.mxu0 0.0
    %6526 = vmatprep.subr.mxu0 0.0
    %6527 = vmatpush1.msra.mxu0 0.0
    %6528 = vmatprep.subr.mxu0 0.0
    %6529 = vmatpush1.msra.mxu0 0.0
    %6530 = vmatprep.subr.mxu0 0.0
    %6531 = vmatpush1.msra.mxu0 0.0
    %6532 = vmatprep.subr.mxu0 0.0
    %6533 = vmatpush1.msra.mxu0 0.0
    %6534 = vmatprep.subr.mxu0 0.0
    %6535 = vmatpush1.msra.mxu0 0.0
    %6536 = vmatprep.subr.mxu0 0.0
    %6537 = vmatpush1.msra.mxu0 0.0
    %6538 = vmatprep.subr.mxu0 0.0
    %v6539 = vand.u32 %v6129, 4294901760
    %6540 = vmatpush1.msra.mxu0 %v6539
    %6541 = vmatprep.subr.mxu0 0.0
    %6542 = vmatpush2.msra.mxu0 0.0
    %6543 = vmatprep.subr.mxu0 0.0
    %6544 = vmatpush2.msra.mxu0 0.0
    %6545 = vmatprep.subr.mxu0 0.0
    %6546 = vmatpush2.msra.mxu0 0.0
    %6547 = vmatprep.subr.mxu0 0.0
    %6548 = vmatpush2.msra.mxu0 0.0
    %6549 = vmatprep.subr.mxu0 0.0
    %6550 = vmatpush2.msra.mxu0 0.0
    %6551 = vmatprep.subr.mxu0 0.0
    %6552 = vmatpush2.msra.mxu0 0.0
    %6553 = vmatprep.subr.mxu0 0.0
    %6554 = vmatpush2.msra.mxu0 0.0
    %6555 = vmatprep.subr.mxu0 0.0
    %6556 = vmatpush2.msra.mxu0 0.0
    %6557 = vmatprep.subr.mxu0 0.0
    %6558 = vmatpush2.msra.mxu0 0.0
    %6559 = vmatprep.subr.mxu0 0.0
    %6560 = vmatpush2.msra.mxu0 0.0
    %6561 = vmatprep.subr.mxu0 0.0
    %6562 = vmatpush2.msra.mxu0 0.0
    %6563 = vmatprep.subr.mxu0 0.0
    %6564 = vmatpush2.msra.mxu0 0.0
    %6565 = vmatprep.subr.mxu0 0.0
    %6566 = vmatpush2.msra.mxu0 0.0
    %6567 = vmatprep.subr.mxu0 0.0
    %6568 = vmatpush2.msra.mxu0 0.0
    %6569 = vmatprep.subr.mxu0 0.0
    %6570 = vmatpush2.msra.mxu0 0.0
    %6571 = vmatprep.subr.mxu0 0.0
    %6572 = vmatpush2.msra.mxu0 0.0
    %6573 = vmatprep.mubr.f32.mxu0 0.0
    %v6574 = vand.u32 %v6132, 4294901760
    %6575 = vmatmul.mubr.f32.gmra.mxu0 %v6574
    %v6576 = vpop.f32.mrf.mxu0
    %v6577 = vadd.f32 %v6505, %v6576
    %v6578 = vpop.f32.mrf.mxu0
    %6579 = vdwg.mxu0
    %6580 = vrot.lane.b32.xlu0 %v595, 64
    %v6581 = vpop.permute.xlu0 %6580
    %v6584 = vsel %vm607, %v4315, 0
    %6586 = vmatprep.subr.mxu0 0.0
    %6587 = vmatpush1.msra.mxu0 0.0
    %6588 = vmatprep.subr.mxu0 0.0
    %6589 = vmatpush1.msra.mxu0 0.0
    %6590 = vmatprep.subr.mxu0 0.0
    %6591 = vmatpush1.msra.mxu0 0.0
    %6592 = vmatprep.subr.mxu0 0.0
    %6593 = vmatpush1.msra.mxu0 0.0
    %6594 = vmatprep.subr.mxu0 0.0
    %6595 = vmatpush1.msra.mxu0 0.0
    %6596 = vmatprep.subr.mxu0 0.0
    %6597 = vmatpush1.msra.mxu0 0.0
    %6598 = vmatprep.subr.mxu0 0.0
    %6599 = vmatpush1.msra.mxu0 0.0
    %6600 = vmatprep.subr.mxu0 0.0
    %6601 = vmatpush1.msra.mxu0 0.0
    %6602 = vmatprep.subr.mxu0 0.0
    %6603 = vmatpush1.msra.mxu0 0.0
    %6604 = vmatprep.subr.mxu0 0.0
    %6605 = vmatpush1.msra.mxu0 0.0
    %6606 = vmatprep.subr.mxu0 0.0
    %6607 = vmatpush1.msra.mxu0 0.0
    %6608 = vmatprep.subr.mxu0 0.0
    %6609 = vmatpush1.msra.mxu0 0.0
    %6610 = vmatprep.subr.mxu0 0.0
    %6611 = vmatpush1.msra.mxu0 0.0
    %6612 = vmatprep.subr.mxu0 0.0
    %6613 = vmatpush1.msra.mxu0 0.0
    %6614 = vmatprep.subr.mxu0 0.0
    %6615 = vmatpush1.msra.mxu0 0.0
    %6616 = vmatprep.subr.mxu0 0.0
    %v6617 = vand.u32 %v6581, 4294901760
    %6618 = vmatpush1.msra.mxu0 %v6617
    %6619 = vmatprep.subr.mxu0 0.0
    %6620 = vmatpush2.msra.mxu0 0.0
    %6621 = vmatprep.subr.mxu0 0.0
    %6622 = vmatpush2.msra.mxu0 0.0
    %6623 = vmatprep.subr.mxu0 0.0
    %6624 = vmatpush2.msra.mxu0 0.0
    %6625 = vmatprep.subr.mxu0 0.0
    %6626 = vmatpush2.msra.mxu0 0.0
    %6627 = vmatprep.subr.mxu0 0.0
    %6628 = vmatpush2.msra.mxu0 0.0
    %6629 = vmatprep.subr.mxu0 0.0
    %6630 = vmatpush2.msra.mxu0 0.0
    %6631 = vmatprep.subr.mxu0 0.0
    %6632 = vmatpush2.msra.mxu0 0.0
    %6633 = vmatprep.subr.mxu0 0.0
    %6634 = vmatpush2.msra.mxu0 0.0
    %6635 = vmatprep.subr.mxu0 0.0
    %6636 = vmatpush2.msra.mxu0 0.0
    %6637 = vmatprep.subr.mxu0 0.0
    %6638 = vmatpush2.msra.mxu0 0.0
    %6639 = vmatprep.subr.mxu0 0.0
    %6640 = vmatpush2.msra.mxu0 0.0
    %6641 = vmatprep.subr.mxu0 0.0
    %6642 = vmatpush2.msra.mxu0 0.0
    %6643 = vmatprep.subr.mxu0 0.0
    %6644 = vmatpush2.msra.mxu0 0.0
    %6645 = vmatprep.subr.mxu0 0.0
    %6646 = vmatpush2.msra.mxu0 0.0
    %6647 = vmatprep.subr.mxu0 0.0
    %6648 = vmatpush2.msra.mxu0 0.0
    %6649 = vmatprep.subr.mxu0 0.0
    %6650 = vmatpush2.msra.mxu0 0.0
    %6651 = vmatprep.mubr.f32.mxu0 0.0
    %v6652 = vand.u32 %v6584, 4294901760
    %v6653 = vsub.f32 %v6584, %v6652
    %v6654 = vand.u32 %v6653, 4294901760
    %v6655 = vsub.f32 %v6653, %v6654
    %v6656 = vand.u32 %v6655, 4294901760
    %6657 = vmatmul.mubr.f32.gmra.mxu0 %v6656
    %v6658 = vpop.f32.mrf.mxu0
    %v6659 = vadd.f32 0.0, %v6658
    %v6660 = vpop.f32.mrf.mxu0
    %6661 = vdwg.mxu0
    %6662 = vmatprep.subr.mxu0 0.0
    %6663 = vmatpush1.msra.mxu0 0.0
    %6664 = vmatprep.subr.mxu0 0.0
    %6665 = vmatpush1.msra.mxu0 0.0
    %6666 = vmatprep.subr.mxu0 0.0
    %6667 = vmatpush1.msra.mxu0 0.0
    %6668 = vmatprep.subr.mxu0 0.0
    %6669 = vmatpush1.msra.mxu0 0.0
    %6670 = vmatprep.subr.mxu0 0.0
    %6671 = vmatpush1.msra.mxu0 0.0
    %6672 = vmatprep.subr.mxu0 0.0
    %6673 = vmatpush1.msra.mxu0 0.0
    %6674 = vmatprep.subr.mxu0 0.0
    %6675 = vmatpush1.msra.mxu0 0.0
    %6676 = vmatprep.subr.mxu0 0.0
    %6677 = vmatpush1.msra.mxu0 0.0
    %6678 = vmatprep.subr.mxu0 0.0
    %6679 = vmatpush1.msra.mxu0 0.0
    %6680 = vmatprep.subr.mxu0 0.0
    %6681 = vmatpush1.msra.mxu0 0.0
    %6682 = vmatprep.subr.mxu0 0.0
    %6683 = vmatpush1.msra.mxu0 0.0
    %6684 = vmatprep.subr.mxu0 0.0
    %6685 = vmatpush1.msra.mxu0 0.0
    %6686 = vmatprep.subr.mxu0 0.0
    %6687 = vmatpush1.msra.mxu0 0.0
    %6688 = vmatprep.subr.mxu0 0.0
    %6689 = vmatpush1.msra.mxu0 0.0
    %6690 = vmatprep.subr.mxu0 0.0
    %6691 = vmatpush1.msra.mxu0 0.0
    %6692 = vmatprep.subr.mxu0 0.0
    %v6693 = vand.u32 %v6581, 4294901760
    %v6694 = vsub.f32 %v6581, %v6693
    %v6695 = vand.u32 %v6694, 4294901760
    %v6696 = vsub.f32 %v6694, %v6695
    %v6697 = vand.u32 %v6696, 4294901760
    %6698 = vmatpush1.msra.mxu0 %v6697
    %6699 = vmatprep.subr.mxu0 0.0
    %6700 = vmatpush2.msra.mxu0 0.0
    %6701 = vmatprep.subr.mxu0 0.0
    %6702 = vmatpush2.msra.mxu0 0.0
    %6703 = vmatprep.subr.mxu0 0.0
    %6704 = vmatpush2.msra.mxu0 0.0
    %6705 = vmatprep.subr.mxu0 0.0
    %6706 = vmatpush2.msra.mxu0 0.0
    %6707 = vmatprep.subr.mxu0 0.0
    %6708 = vmatpush2.msra.mxu0 0.0
    %6709 = vmatprep.subr.mxu0 0.0
    %6710 = vmatpush2.msra.mxu0 0.0
    %6711 = vmatprep.subr.mxu0 0.0
    %6712 = vmatpush2.msra.mxu0 0.0
    %6713 = vmatprep.subr.mxu0 0.0
    %6714 = vmatpush2.msra.mxu0 0.0
    %6715 = vmatprep.subr.mxu0 0.0
    %6716 = vmatpush2.msra.mxu0 0.0
    %6717 = vmatprep.subr.mxu0 0.0
    %6718 = vmatpush2.msra.mxu0 0.0
    %6719 = vmatprep.subr.mxu0 0.0
    %6720 = vmatpush2.msra.mxu0 0.0
    %6721 = vmatprep.subr.mxu0 0.0
    %6722 = vmatpush2.msra.mxu0 0.0
    %6723 = vmatprep.subr.mxu0 0.0
    %6724 = vmatpush2.msra.mxu0 0.0
    %6725 = vmatprep.subr.mxu0 0.0
    %6726 = vmatpush2.msra.mxu0 0.0
    %6727 = vmatprep.subr.mxu0 0.0
    %6728 = vmatpush2.msra.mxu0 0.0
    %6729 = vmatprep.subr.mxu0 0.0
    %6730 = vmatpush2.msra.mxu0 0.0
    %6731 = vmatprep.mubr.f32.mxu0 0.0
    %v6732 = vand.u32 %v6584, 4294901760
    %6733 = vmatmul.mubr.f32.gmra.mxu0 %v6732
    %v6734 = vpop.f32.mrf.mxu0
    %v6735 = vadd.f32 %v6659, %v6734
    %v6736 = vpop.f32.mrf.mxu0
    %6737 = vdwg.mxu0
    %6738 = vmatprep.subr.mxu0 0.0
    %6739 = vmatpush1.msra.mxu0 0.0
    %6740 = vmatprep.subr.mxu0 0.0
    %6741 = vmatpush1.msra.mxu0 0.0
    %6742 = vmatprep.subr.mxu0 0.0
    %6743 = vmatpush1.msra.mxu0 0.0
    %6744 = vmatprep.subr.mxu0 0.0
    %6745 = vmatpush1.msra.mxu0 0.0
    %6746 = vmatprep.subr.mxu0 0.0
    %6747 = vmatpush1.msra.mxu0 0.0
    %6748 = vmatprep.subr.mxu0 0.0
    %6749 = vmatpush1.msra.mxu0 0.0
    %6750 = vmatprep.subr.mxu0 0.0
    %6751 = vmatpush1.msra.mxu0 0.0
    %6752 = vmatprep.subr.mxu0 0.0
    %6753 = vmatpush1.msra.mxu0 0.0
    %6754 = vmatprep.subr.mxu0 0.0
    %6755 = vmatpush1.msra.mxu0 0.0
    %6756 = vmatprep.subr.mxu0 0.0
    %6757 = vmatpush1.msra.mxu0 0.0
    %6758 = vmatprep.subr.mxu0 0.0
    %6759 = vmatpush1.msra.mxu0 0.0
    %6760 = vmatprep.subr.mxu0 0.0
    %6761 = vmatpush1.msra.mxu0 0.0
    %6762 = vmatprep.subr.mxu0 0.0
    %6763 = vmatpush1.msra.mxu0 0.0
    %6764 = vmatprep.subr.mxu0 0.0
    %6765 = vmatpush1.msra.mxu0 0.0
    %6766 = vmatprep.subr.mxu0 0.0
    %6767 = vmatpush1.msra.mxu0 0.0
    %6768 = vmatprep.subr.mxu0 0.0
    %v6769 = vand.u32 %v6581, 4294901760
    %v6770 = vsub.f32 %v6581, %v6769
    %6771 = vmatpush1.msra.mxu0 %v6770
    %6772 = vmatprep.subr.mxu0 0.0
    %6773 = vmatpush2.msra.mxu0 0.0
    %6774 = vmatprep.subr.mxu0 0.0
    %6775 = vmatpush2.msra.mxu0 0.0
    %6776 = vmatprep.subr.mxu0 0.0
    %6777 = vmatpush2.msra.mxu0 0.0
    %6778 = vmatprep.subr.mxu0 0.0
    %6779 = vmatpush2.msra.mxu0 0.0
    %6780 = vmatprep.subr.mxu0 0.0
    %6781 = vmatpush2.msra.mxu0 0.0
    %6782 = vmatprep.subr.mxu0 0.0
    %6783 = vmatpush2.msra.mxu0 0.0
    %6784 = vmatprep.subr.mxu0 0.0
    %6785 = vmatpush2.msra.mxu0 0.0
    %6786 = vmatprep.subr.mxu0 0.0
    %6787 = vmatpush2.msra.mxu0 0.0
    %6788 = vmatprep.subr.mxu0 0.0
    %6789 = vmatpush2.msra.mxu0 0.0
    %6790 = vmatprep.subr.mxu0 0.0
    %6791 = vmatpush2.msra.mxu0 0.0
    %6792 = vmatprep.subr.mxu0 0.0
    %6793 = vmatpush2.msra.mxu0 0.0
    %6794 = vmatprep.subr.mxu0 0.0
    %6795 = vmatpush2.msra.mxu0 0.0
    %6796 = vmatprep.subr.mxu0 0.0
    %6797 = vmatpush2.msra.mxu0 0.0
    %6798 = vmatprep.subr.mxu0 0.0
    %6799 = vmatpush2.msra.mxu0 0.0
    %6800 = vmatprep.subr.mxu0 0.0
    %6801 = vmatpush2.msra.mxu0 0.0
    %6802 = vmatprep.subr.mxu0 0.0
    %6803 = vmatpush2.msra.mxu0 0.0
    %6804 = vmatprep.mubr.f32.mxu0 0.0
    %v6805 = vand.u32 %v6584, 4294901760
    %v6806 = vsub.f32 %v6584, %v6805
    %6807 = vmatmul.mubr.f32.gmra.mxu0 %v6806
    %v6808 = vpop.f32.mrf.mxu0
    %v6809 = vadd.f32 %v6735, %v6808
    %v6810 = vpop.f32.mrf.mxu0
    %6811 = vdwg.mxu0
    %6812 = vmatprep.subr.mxu0 0.0
    %6813 = vmatpush1.msra.mxu0 0.0
    %6814 = vmatprep.subr.mxu0 0.0
    %6815 = vmatpush1.msra.mxu0 0.0
    %6816 = vmatprep.subr.mxu0 0.0
    %6817 = vmatpush1.msra.mxu0 0.0
    %6818 = vmatprep.subr.mxu0 0.0
    %6819 = vmatpush1.msra.mxu0 0.0
    %6820 = vmatprep.subr.mxu0 0.0
    %6821 = vmatpush1.msra.mxu0 0.0
    %6822 = vmatprep.subr.mxu0 0.0
    %6823 = vmatpush1.msra.mxu0 0.0
    %6824 = vmatprep.subr.mxu0 0.0
    %6825 = vmatpush1.msra.mxu0 0.0
    %6826 = vmatprep.subr.mxu0 0.0
    %6827 = vmatpush1.msra.mxu0 0.0
    %6828 = vmatprep.subr.mxu0 0.0
    %6829 = vmatpush1.msra.mxu0 0.0
    %6830 = vmatprep.subr.mxu0 0.0
    %6831 = vmatpush1.msra.mxu0 0.0
    %6832 = vmatprep.subr.mxu0 0.0
    %6833 = vmatpush1.msra.mxu0 0.0
    %6834 = vmatprep.subr.mxu0 0.0
    %6835 = vmatpush1.msra.mxu0 0.0
    %6836 = vmatprep.subr.mxu0 0.0
    %6837 = vmatpush1.msra.mxu0 0.0
    %6838 = vmatprep.subr.mxu0 0.0
    %6839 = vmatpush1.msra.mxu0 0.0
    %6840 = vmatprep.subr.mxu0 0.0
    %6841 = vmatpush1.msra.mxu0 0.0
    %6842 = vmatprep.subr.mxu0 0.0
    %v6843 = vand.u32 %v6581, 4294901760
    %6844 = vmatpush1.msra.mxu0 %v6843
    %6845 = vmatprep.subr.mxu0 0.0
    %6846 = vmatpush2.msra.mxu0 0.0
    %6847 = vmatprep.subr.mxu0 0.0
    %6848 = vmatpush2.msra.mxu0 0.0
    %6849 = vmatprep.subr.mxu0 0.0
    %6850 = vmatpush2.msra.mxu0 0.0
    %6851 = vmatprep.subr.mxu0 0.0
    %6852 = vmatpush2.msra.mxu0 0.0
    %6853 = vmatprep.subr.mxu0 0.0
    %6854 = vmatpush2.msra.mxu0 0.0
    %6855 = vmatprep.subr.mxu0 0.0
    %6856 = vmatpush2.msra.mxu0 0.0
    %6857 = vmatprep.subr.mxu0 0.0
    %6858 = vmatpush2.msra.mxu0 0.0
    %6859 = vmatprep.subr.mxu0 0.0
    %6860 = vmatpush2.msra.mxu0 0.0
    %6861 = vmatprep.subr.mxu0 0.0
    %6862 = vmatpush2.msra.mxu0 0.0
    %6863 = vmatprep.subr.mxu0 0.0
    %6864 = vmatpush2.msra.mxu0 0.0
    %6865 = vmatprep.subr.mxu0 0.0
    %6866 = vmatpush2.msra.mxu0 0.0
    %6867 = vmatprep.subr.mxu0 0.0
    %6868 = vmatpush2.msra.mxu0 0.0
    %6869 = vmatprep.subr.mxu0 0.0
    %6870 = vmatpush2.msra.mxu0 0.0
    %6871 = vmatprep.subr.mxu0 0.0
    %6872 = vmatpush2.msra.mxu0 0.0
    %6873 = vmatprep.subr.mxu0 0.0
    %6874 = vmatpush2.msra.mxu0 0.0
    %6875 = vmatprep.subr.mxu0 0.0
    %6876 = vmatpush2.msra.mxu0 0.0
    %6877 = vmatprep.mubr.f32.mxu0 0.0
    %v6878 = vand.u32 %v6584, 4294901760
    %v6879 = vsub.f32 %v6584, %v6878
    %v6880 = vand.u32 %v6879, 4294901760
    %6881 = vmatmul.mubr.f32.gmra.mxu0 %v6880
    %v6882 = vpop.f32.mrf.mxu0
    %v6883 = vadd.f32 %v6809, %v6882
    %v6884 = vpop.f32.mrf.mxu0
    %6885 = vdwg.mxu0
    %6886 = vmatprep.subr.mxu0 0.0
    %6887 = vmatpush1.msra.mxu0 0.0
    %6888 = vmatprep.subr.mxu0 0.0
    %6889 = vmatpush1.msra.mxu0 0.0
    %6890 = vmatprep.subr.mxu0 0.0
    %6891 = vmatpush1.msra.mxu0 0.0
    %6892 = vmatprep.subr.mxu0 0.0
    %6893 = vmatpush1.msra.mxu0 0.0
    %6894 = vmatprep.subr.mxu0 0.0
    %6895 = vmatpush1.msra.mxu0 0.0
    %6896 = vmatprep.subr.mxu0 0.0
    %6897 = vmatpush1.msra.mxu0 0.0
    %6898 = vmatprep.subr.mxu0 0.0
    %6899 = vmatpush1.msra.mxu0 0.0
    %6900 = vmatprep.subr.mxu0 0.0
    %6901 = vmatpush1.msra.mxu0 0.0
    %6902 = vmatprep.subr.mxu0 0.0
    %6903 = vmatpush1.msra.mxu0 0.0
    %6904 = vmatprep.subr.mxu0 0.0
    %6905 = vmatpush1.msra.mxu0 0.0
    %6906 = vmatprep.subr.mxu0 0.0
    %6907 = vmatpush1.msra.mxu0 0.0
    %6908 = vmatprep.subr.mxu0 0.0
    %6909 = vmatpush1.msra.mxu0 0.0
    %6910 = vmatprep.subr.mxu0 0.0
    %6911 = vmatpush1.msra.mxu0 0.0
    %6912 = vmatprep.subr.mxu0 0.0
    %6913 = vmatpush1.msra.mxu0 0.0
    %6914 = vmatprep.subr.mxu0 0.0
    %6915 = vmatpush1.msra.mxu0 0.0
    %6916 = vmatprep.subr.mxu0 0.0
    %v6917 = vand.u32 %v6581, 4294901760
    %v6918 = vsub.f32 %v6581, %v6917
    %v6919 = vand.u32 %v6918, 4294901760
    %6920 = vmatpush1.msra.mxu0 %v6919
    %6921 = vmatprep.subr.mxu0 0.0
    %6922 = vmatpush2.msra.mxu0 0.0
    %6923 = vmatprep.subr.mxu0 0.0
    %6924 = vmatpush2.msra.mxu0 0.0
    %6925 = vmatprep.subr.mxu0 0.0
    %6926 = vmatpush2.msra.mxu0 0.0
    %6927 = vmatprep.subr.mxu0 0.0
    %6928 = vmatpush2.msra.mxu0 0.0
    %6929 = vmatprep.subr.mxu0 0.0
    %6930 = vmatpush2.msra.mxu0 0.0
    %6931 = vmatprep.subr.mxu0 0.0
    %6932 = vmatpush2.msra.mxu0 0.0
    %6933 = vmatprep.subr.mxu0 0.0
    %6934 = vmatpush2.msra.mxu0 0.0
    %6935 = vmatprep.subr.mxu0 0.0
    %6936 = vmatpush2.msra.mxu0 0.0
    %6937 = vmatprep.subr.mxu0 0.0
    %6938 = vmatpush2.msra.mxu0 0.0
    %6939 = vmatprep.subr.mxu0 0.0
    %6940 = vmatpush2.msra.mxu0 0.0
    %6941 = vmatprep.subr.mxu0 0.0
    %6942 = vmatpush2.msra.mxu0 0.0
    %6943 = vmatprep.subr.mxu0 0.0
    %6944 = vmatpush2.msra.mxu0 0.0
    %6945 = vmatprep.subr.mxu0 0.0
    %6946 = vmatpush2.msra.mxu0 0.0
    %6947 = vmatprep.subr.mxu0 0.0
    %6948 = vmatpush2.msra.mxu0 0.0
    %6949 = vmatprep.subr.mxu0 0.0
    %6950 = vmatpush2.msra.mxu0 0.0
    %6951 = vmatprep.subr.mxu0 0.0
    %6952 = vmatpush2.msra.mxu0 0.0
    %6953 = vmatprep.mubr.f32.mxu0 0.0
    %v6954 = vand.u32 %v6584, 4294901760
    %6955 = vmatmul.mubr.f32.gmra.mxu0 %v6954
    %v6956 = vpop.f32.mrf.mxu0
    %v6957 = vadd.f32 %v6883, %v6956
    %v6958 = vpop.f32.mrf.mxu0
    %6959 = vdwg.mxu0
    %6960 = vmatprep.subr.mxu0 0.0
    %6961 = vmatpush1.msra.mxu0 0.0
    %6962 = vmatprep.subr.mxu0 0.0
    %6963 = vmatpush1.msra.mxu0 0.0
    %6964 = vmatprep.subr.mxu0 0.0
    %6965 = vmatpush1.msra.mxu0 0.0
    %6966 = vmatprep.subr.mxu0 0.0
    %6967 = vmatpush1.msra.mxu0 0.0
    %6968 = vmatprep.subr.mxu0 0.0
    %6969 = vmatpush1.msra.mxu0 0.0
    %6970 = vmatprep.subr.mxu0 0.0
    %6971 = vmatpush1.msra.mxu0 0.0
    %6972 = vmatprep.subr.mxu0 0.0
    %6973 = vmatpush1.msra.mxu0 0.0
    %6974 = vmatprep.subr.mxu0 0.0
    %6975 = vmatpush1.msra.mxu0 0.0
    %6976 = vmatprep.subr.mxu0 0.0
    %6977 = vmatpush1.msra.mxu0 0.0
    %6978 = vmatprep.subr.mxu0 0.0
    %6979 = vmatpush1.msra.mxu0 0.0
    %6980 = vmatprep.subr.mxu0 0.0
    %6981 = vmatpush1.msra.mxu0 0.0
    %6982 = vmatprep.subr.mxu0 0.0
    %6983 = vmatpush1.msra.mxu0 0.0
    %6984 = vmatprep.subr.mxu0 0.0
    %6985 = vmatpush1.msra.mxu0 0.0
    %6986 = vmatprep.subr.mxu0 0.0
    %6987 = vmatpush1.msra.mxu0 0.0
    %6988 = vmatprep.subr.mxu0 0.0
    %6989 = vmatpush1.msra.mxu0 0.0
    %6990 = vmatprep.subr.mxu0 0.0
    %v6991 = vand.u32 %v6581, 4294901760
    %6992 = vmatpush1.msra.mxu0 %v6991
    %6993 = vmatprep.subr.mxu0 0.0
    %6994 = vmatpush2.msra.mxu0 0.0
    %6995 = vmatprep.subr.mxu0 0.0
    %6996 = vmatpush2.msra.mxu0 0.0
    %6997 = vmatprep.subr.mxu0 0.0
    %6998 = vmatpush2.msra.mxu0 0.0
    %6999 = vmatprep.subr.mxu0 0.0
    %7000 = vmatpush2.msra.mxu0 0.0
    %7001 = vmatprep.subr.mxu0 0.0
    %7002 = vmatpush2.msra.mxu0 0.0
    %7003 = vmatprep.subr.mxu0 0.0
    %7004 = vmatpush2.msra.mxu0 0.0
    %7005 = vmatprep.subr.mxu0 0.0
    %7006 = vmatpush2.msra.mxu0 0.0
    %7007 = vmatprep.subr.mxu0 0.0
    %7008 = vmatpush2.msra.mxu0 0.0
    %7009 = vmatprep.subr.mxu0 0.0
    %7010 = vmatpush2.msra.mxu0 0.0
    %7011 = vmatprep.subr.mxu0 0.0
    %7012 = vmatpush2.msra.mxu0 0.0
    %7013 = vmatprep.subr.mxu0 0.0
    %7014 = vmatpush2.msra.mxu0 0.0
    %7015 = vmatprep.subr.mxu0 0.0
    %7016 = vmatpush2.msra.mxu0 0.0
    %7017 = vmatprep.subr.mxu0 0.0
    %7018 = vmatpush2.msra.mxu0 0.0
    %7019 = vmatprep.subr.mxu0 0.0
    %7020 = vmatpush2.msra.mxu0 0.0
    %7021 = vmatprep.subr.mxu0 0.0
    %7022 = vmatpush2.msra.mxu0 0.0
    %7023 = vmatprep.subr.mxu0 0.0
    %7024 = vmatpush2.msra.mxu0 0.0
    %7025 = vmatprep.mubr.f32.mxu0 0.0
    %v7026 = vand.u32 %v6584, 4294901760
    %7027 = vmatmul.mubr.f32.gmra.mxu0 %v7026
    %v7028 = vpop.f32.mrf.mxu0
    %v7029 = vadd.f32 %v6957, %v7028
    %v7030 = vpop.f32.mrf.mxu0
    %7031 = vdwg.mxu0
    %7032 = vrot.lane.b32.xlu0 %v597, 64
    %v7033 = vpop.permute.xlu0 %7032
    %v7036 = vsel %vm607, %v4317, 0
    %7038 = vmatprep.subr.mxu0 0.0
    %7039 = vmatpush1.msra.mxu0 0.0
    %7040 = vmatprep.subr.mxu0 0.0
    %7041 = vmatpush1.msra.mxu0 0.0
    %7042 = vmatprep.subr.mxu0 0.0
    %7043 = vmatpush1.msra.mxu0 0.0
    %7044 = vmatprep.subr.mxu0 0.0
    %7045 = vmatpush1.msra.mxu0 0.0
    %7046 = vmatprep.subr.mxu0 0.0
    %7047 = vmatpush1.msra.mxu0 0.0
    %7048 = vmatprep.subr.mxu0 0.0
    %7049 = vmatpush1.msra.mxu0 0.0
    %7050 = vmatprep.subr.mxu0 0.0
    %7051 = vmatpush1.msra.mxu0 0.0
    %7052 = vmatprep.subr.mxu0 0.0
    %7053 = vmatpush1.msra.mxu0 0.0
    %7054 = vmatprep.subr.mxu0 0.0
    %7055 = vmatpush1.msra.mxu0 0.0
    %7056 = vmatprep.subr.mxu0 0.0
    %7057 = vmatpush1.msra.mxu0 0.0
    %7058 = vmatprep.subr.mxu0 0.0
    %7059 = vmatpush1.msra.mxu0 0.0
    %7060 = vmatprep.subr.mxu0 0.0
    %7061 = vmatpush1.msra.mxu0 0.0
    %7062 = vmatprep.subr.mxu0 0.0
    %7063 = vmatpush1.msra.mxu0 0.0
    %7064 = vmatprep.subr.mxu0 0.0
    %7065 = vmatpush1.msra.mxu0 0.0
    %7066 = vmatprep.subr.mxu0 0.0
    %7067 = vmatpush1.msra.mxu0 0.0
    %7068 = vmatprep.subr.mxu0 0.0
    %v7069 = vand.u32 %v7033, 4294901760
    %7070 = vmatpush1.msra.mxu0 %v7069
    %7071 = vmatprep.subr.mxu0 0.0
    %7072 = vmatpush2.msra.mxu0 0.0
    %7073 = vmatprep.subr.mxu0 0.0
    %7074 = vmatpush2.msra.mxu0 0.0
    %7075 = vmatprep.subr.mxu0 0.0
    %7076 = vmatpush2.msra.mxu0 0.0
    %7077 = vmatprep.subr.mxu0 0.0
    %7078 = vmatpush2.msra.mxu0 0.0
    %7079 = vmatprep.subr.mxu0 0.0
    %7080 = vmatpush2.msra.mxu0 0.0
    %7081 = vmatprep.subr.mxu0 0.0
    %7082 = vmatpush2.msra.mxu0 0.0
    %7083 = vmatprep.subr.mxu0 0.0
    %7084 = vmatpush2.msra.mxu0 0.0
    %7085 = vmatprep.subr.mxu0 0.0
    %7086 = vmatpush2.msra.mxu0 0.0
    %7087 = vmatprep.subr.mxu0 0.0
    %7088 = vmatpush2.msra.mxu0 0.0
    %7089 = vmatprep.subr.mxu0 0.0
    %7090 = vmatpush2.msra.mxu0 0.0
    %7091 = vmatprep.subr.mxu0 0.0
    %7092 = vmatpush2.msra.mxu0 0.0
    %7093 = vmatprep.subr.mxu0 0.0
    %7094 = vmatpush2.msra.mxu0 0.0
    %7095 = vmatprep.subr.mxu0 0.0
    %7096 = vmatpush2.msra.mxu0 0.0
    %7097 = vmatprep.subr.mxu0 0.0
    %7098 = vmatpush2.msra.mxu0 0.0
    %7099 = vmatprep.subr.mxu0 0.0
    %7100 = vmatpush2.msra.mxu0 0.0
    %7101 = vmatprep.subr.mxu0 0.0
    %7102 = vmatpush2.msra.mxu0 0.0
    %7103 = vmatprep.mubr.f32.mxu0 0.0
    %v7104 = vand.u32 %v7036, 4294901760
    %v7105 = vsub.f32 %v7036, %v7104
    %v7106 = vand.u32 %v7105, 4294901760
    %v7107 = vsub.f32 %v7105, %v7106
    %v7108 = vand.u32 %v7107, 4294901760
    %7109 = vmatmul.mubr.f32.gmra.mxu0 %v7108
    %v7110 = vpop.f32.mrf.mxu0
    %v7111 = vadd.f32 0.0, %v7110
    %v7112 = vpop.f32.mrf.mxu0
    %7113 = vdwg.mxu0
    %7114 = vmatprep.subr.mxu0 0.0
    %7115 = vmatpush1.msra.mxu0 0.0
    %7116 = vmatprep.subr.mxu0 0.0
    %7117 = vmatpush1.msra.mxu0 0.0
    %7118 = vmatprep.subr.mxu0 0.0
    %7119 = vmatpush1.msra.mxu0 0.0
    %7120 = vmatprep.subr.mxu0 0.0
    %7121 = vmatpush1.msra.mxu0 0.0
    %7122 = vmatprep.subr.mxu0 0.0
    %7123 = vmatpush1.msra.mxu0 0.0
    %7124 = vmatprep.subr.mxu0 0.0
    %7125 = vmatpush1.msra.mxu0 0.0
    %7126 = vmatprep.subr.mxu0 0.0
    %7127 = vmatpush1.msra.mxu0 0.0
    %7128 = vmatprep.subr.mxu0 0.0
    %7129 = vmatpush1.msra.mxu0 0.0
    %7130 = vmatprep.subr.mxu0 0.0
    %7131 = vmatpush1.msra.mxu0 0.0
    %7132 = vmatprep.subr.mxu0 0.0
    %7133 = vmatpush1.msra.mxu0 0.0
    %7134 = vmatprep.subr.mxu0 0.0
    %7135 = vmatpush1.msra.mxu0 0.0
    %7136 = vmatprep.subr.mxu0 0.0
    %7137 = vmatpush1.msra.mxu0 0.0
    %7138 = vmatprep.subr.mxu0 0.0
    %7139 = vmatpush1.msra.mxu0 0.0
    %7140 = vmatprep.subr.mxu0 0.0
    %7141 = vmatpush1.msra.mxu0 0.0
    %7142 = vmatprep.subr.mxu0 0.0
    %7143 = vmatpush1.msra.mxu0 0.0
    %7144 = vmatprep.subr.mxu0 0.0
    %v7145 = vand.u32 %v7033, 4294901760
    %v7146 = vsub.f32 %v7033, %v7145
    %v7147 = vand.u32 %v7146, 4294901760
    %v7148 = vsub.f32 %v7146, %v7147
    %v7149 = vand.u32 %v7148, 4294901760
    %7150 = vmatpush1.msra.mxu0 %v7149
    %7151 = vmatprep.subr.mxu0 0.0
    %7152 = vmatpush2.msra.mxu0 0.0
    %7153 = vmatprep.subr.mxu0 0.0
    %7154 = vmatpush2.msra.mxu0 0.0
    %7155 = vmatprep.subr.mxu0 0.0
    %7156 = vmatpush2.msra.mxu0 0.0
    %7157 = vmatprep.subr.mxu0 0.0
    %7158 = vmatpush2.msra.mxu0 0.0
    %7159 = vmatprep.subr.mxu0 0.0
    %7160 = vmatpush2.msra.mxu0 0.0
    %7161 = vmatprep.subr.mxu0 0.0
    %7162 = vmatpush2.msra.mxu0 0.0
    %7163 = vmatprep.subr.mxu0 0.0
    %7164 = vmatpush2.msra.mxu0 0.0
    %7165 = vmatprep.subr.mxu0 0.0
    %7166 = vmatpush2.msra.mxu0 0.0
    %7167 = vmatprep.subr.mxu0 0.0
    %7168 = vmatpush2.msra.mxu0 0.0
    %7169 = vmatprep.subr.mxu0 0.0
    %7170 = vmatpush2.msra.mxu0 0.0
    %7171 = vmatprep.subr.mxu0 0.0
    %7172 = vmatpush2.msra.mxu0 0.0
    %7173 = vmatprep.subr.mxu0 0.0
    %7174 = vmatpush2.msra.mxu0 0.0
    %7175 = vmatprep.subr.mxu0 0.0
    %7176 = vmatpush2.msra.mxu0 0.0
    %7177 = vmatprep.subr.mxu0 0.0
    %7178 = vmatpush2.msra.mxu0 0.0
    %7179 = vmatprep.subr.mxu0 0.0
    %7180 = vmatpush2.msra.mxu0 0.0
    %7181 = vmatprep.subr.mxu0 0.0
    %7182 = vmatpush2.msra.mxu0 0.0
    %7183 = vmatprep.mubr.f32.mxu0 0.0
    %v7184 = vand.u32 %v7036, 4294901760
    %7185 = vmatmul.mubr.f32.gmra.mxu0 %v7184
    %v7186 = vpop.f32.mrf.mxu0
    %v7187 = vadd.f32 %v7111, %v7186
    %v7188 = vpop.f32.mrf.mxu0
    %7189 = vdwg.mxu0
    %7190 = vmatprep.subr.mxu0 0.0
    %7191 = vmatpush1.msra.mxu0 0.0
    %7192 = vmatprep.subr.mxu0 0.0
    %7193 = vmatpush1.msra.mxu0 0.0
    %7194 = vmatprep.subr.mxu0 0.0
    %7195 = vmatpush1.msra.mxu0 0.0
    %7196 = vmatprep.subr.mxu0 0.0
    %7197 = vmatpush1.msra.mxu0 0.0
    %7198 = vmatprep.subr.mxu0 0.0
    %7199 = vmatpush1.msra.mxu0 0.0
    %7200 = vmatprep.subr.mxu0 0.0
    %7201 = vmatpush1.msra.mxu0 0.0
    %7202 = vmatprep.subr.mxu0 0.0
    %7203 = vmatpush1.msra.mxu0 0.0
    %7204 = vmatprep.subr.mxu0 0.0
    %7205 = vmatpush1.msra.mxu0 0.0
    %7206 = vmatprep.subr.mxu0 0.0
    %7207 = vmatpush1.msra.mxu0 0.0
    %7208 = vmatprep.subr.mxu0 0.0
    %7209 = vmatpush1.msra.mxu0 0.0
    %7210 = vmatprep.subr.mxu0 0.0
    %7211 = vmatpush1.msra.mxu0 0.0
    %7212 = vmatprep.subr.mxu0 0.0
    %7213 = vmatpush1.msra.mxu0 0.0
    %7214 = vmatprep.subr.mxu0 0.0
    %7215 = vmatpush1.msra.mxu0 0.0
    %7216 = vmatprep.subr.mxu0 0.0
    %7217 = vmatpush1.msra.mxu0 0.0
    %7218 = vmatprep.subr.mxu0 0.0
    %7219 = vmatpush1.msra.mxu0 0.0
    %7220 = vmatprep.subr.mxu0 0.0
    %v7221 = vand.u32 %v7033, 4294901760
    %v7222 = vsub.f32 %v7033, %v7221
    %7223 = vmatpush1.msra.mxu0 %v7222
    %7224 = vmatprep.subr.mxu0 0.0
    %7225 = vmatpush2.msra.mxu0 0.0
    %7226 = vmatprep.subr.mxu0 0.0
    %7227 = vmatpush2.msra.mxu0 0.0
    %7228 = vmatprep.subr.mxu0 0.0
    %7229 = vmatpush2.msra.mxu0 0.0
    %7230 = vmatprep.subr.mxu0 0.0
    %7231 = vmatpush2.msra.mxu0 0.0
    %7232 = vmatprep.subr.mxu0 0.0
    %7233 = vmatpush2.msra.mxu0 0.0
    %7234 = vmatprep.subr.mxu0 0.0
    %7235 = vmatpush2.msra.mxu0 0.0
    %7236 = vmatprep.subr.mxu0 0.0
    %7237 = vmatpush2.msra.mxu0 0.0
    %7238 = vmatprep.subr.mxu0 0.0
    %7239 = vmatpush2.msra.mxu0 0.0
    %7240 = vmatprep.subr.mxu0 0.0
    %7241 = vmatpush2.msra.mxu0 0.0
    %7242 = vmatprep.subr.mxu0 0.0
    %7243 = vmatpush2.msra.mxu0 0.0
    %7244 = vmatprep.subr.mxu0 0.0
    %7245 = vmatpush2.msra.mxu0 0.0
    %7246 = vmatprep.subr.mxu0 0.0
    %7247 = vmatpush2.msra.mxu0 0.0
    %7248 = vmatprep.subr.mxu0 0.0
    %7249 = vmatpush2.msra.mxu0 0.0
    %7250 = vmatprep.subr.mxu0 0.0
    %7251 = vmatpush2.msra.mxu0 0.0
    %7252 = vmatprep.subr.mxu0 0.0
    %7253 = vmatpush2.msra.mxu0 0.0
    %7254 = vmatprep.subr.mxu0 0.0
    %7255 = vmatpush2.msra.mxu0 0.0
    %7256 = vmatprep.mubr.f32.mxu0 0.0
    %v7257 = vand.u32 %v7036, 4294901760
    %v7258 = vsub.f32 %v7036, %v7257
    %7259 = vmatmul.mubr.f32.gmra.mxu0 %v7258
    %v7260 = vpop.f32.mrf.mxu0
    %v7261 = vadd.f32 %v7187, %v7260
    %v7262 = vpop.f32.mrf.mxu0
    %7263 = vdwg.mxu0
    %7264 = vmatprep.subr.mxu0 0.0
    %7265 = vmatpush1.msra.mxu0 0.0
    %7266 = vmatprep.subr.mxu0 0.0
    %7267 = vmatpush1.msra.mxu0 0.0
    %7268 = vmatprep.subr.mxu0 0.0
    %7269 = vmatpush1.msra.mxu0 0.0
    %7270 = vmatprep.subr.mxu0 0.0
    %7271 = vmatpush1.msra.mxu0 0.0
    %7272 = vmatprep.subr.mxu0 0.0
    %7273 = vmatpush1.msra.mxu0 0.0
    %7274 = vmatprep.subr.mxu0 0.0
    %7275 = vmatpush1.msra.mxu0 0.0
    %7276 = vmatprep.subr.mxu0 0.0
    %7277 = vmatpush1.msra.mxu0 0.0
    %7278 = vmatprep.subr.mxu0 0.0
    %7279 = vmatpush1.msra.mxu0 0.0
    %7280 = vmatprep.subr.mxu0 0.0
    %7281 = vmatpush1.msra.mxu0 0.0
    %7282 = vmatprep.subr.mxu0 0.0
    %7283 = vmatpush1.msra.mxu0 0.0
    %7284 = vmatprep.subr.mxu0 0.0
    %7285 = vmatpush1.msra.mxu0 0.0
    %7286 = vmatprep.subr.mxu0 0.0
    %7287 = vmatpush1.msra.mxu0 0.0
    %7288 = vmatprep.subr.mxu0 0.0
    %7289 = vmatpush1.msra.mxu0 0.0
    %7290 = vmatprep.subr.mxu0 0.0
    %7291 = vmatpush1.msra.mxu0 0.0
    %7292 = vmatprep.subr.mxu0 0.0
    %7293 = vmatpush1.msra.mxu0 0.0
    %7294 = vmatprep.subr.mxu0 0.0
    %v7295 = vand.u32 %v7033, 4294901760
    %7296 = vmatpush1.msra.mxu0 %v7295
    %7297 = vmatprep.subr.mxu0 0.0
    %7298 = vmatpush2.msra.mxu0 0.0
    %7299 = vmatprep.subr.mxu0 0.0
    %7300 = vmatpush2.msra.mxu0 0.0
    %7301 = vmatprep.subr.mxu0 0.0
    %7302 = vmatpush2.msra.mxu0 0.0
    %7303 = vmatprep.subr.mxu0 0.0
    %7304 = vmatpush2.msra.mxu0 0.0
    %7305 = vmatprep.subr.mxu0 0.0
    %7306 = vmatpush2.msra.mxu0 0.0
    %7307 = vmatprep.subr.mxu0 0.0
    %7308 = vmatpush2.msra.mxu0 0.0
    %7309 = vmatprep.subr.mxu0 0.0
    %7310 = vmatpush2.msra.mxu0 0.0
    %7311 = vmatprep.subr.mxu0 0.0
    %7312 = vmatpush2.msra.mxu0 0.0
    %7313 = vmatprep.subr.mxu0 0.0
    %7314 = vmatpush2.msra.mxu0 0.0
    %7315 = vmatprep.subr.mxu0 0.0
    %7316 = vmatpush2.msra.mxu0 0.0
    %7317 = vmatprep.subr.mxu0 0.0
    %7318 = vmatpush2.msra.mxu0 0.0
    %7319 = vmatprep.subr.mxu0 0.0
    %7320 = vmatpush2.msra.mxu0 0.0
    %7321 = vmatprep.subr.mxu0 0.0
    %7322 = vmatpush2.msra.mxu0 0.0
    %7323 = vmatprep.subr.mxu0 0.0
    %7324 = vmatpush2.msra.mxu0 0.0
    %7325 = vmatprep.subr.mxu0 0.0
    %7326 = vmatpush2.msra.mxu0 0.0
    %7327 = vmatprep.subr.mxu0 0.0
    %7328 = vmatpush2.msra.mxu0 0.0
    %7329 = vmatprep.mubr.f32.mxu0 0.0
    %v7330 = vand.u32 %v7036, 4294901760
    %v7331 = vsub.f32 %v7036, %v7330
    %v7332 = vand.u32 %v7331, 4294901760
    %7333 = vmatmul.mubr.f32.gmra.mxu0 %v7332
    %v7334 = vpop.f32.mrf.mxu0
    %v7335 = vadd.f32 %v7261, %v7334
    %v7336 = vpop.f32.mrf.mxu0
    %7337 = vdwg.mxu0
    %7338 = vmatprep.subr.mxu0 0.0
    %7339 = vmatpush1.msra.mxu0 0.0
    %7340 = vmatprep.subr.mxu0 0.0
    %7341 = vmatpush1.msra.mxu0 0.0
    %7342 = vmatprep.subr.mxu0 0.0
    %7343 = vmatpush1.msra.mxu0 0.0
    %7344 = vmatprep.subr.mxu0 0.0
    %7345 = vmatpush1.msra.mxu0 0.0
    %7346 = vmatprep.subr.mxu0 0.0
    %7347 = vmatpush1.msra.mxu0 0.0
    %7348 = vmatprep.subr.mxu0 0.0
    %7349 = vmatpush1.msra.mxu0 0.0
    %7350 = vmatprep.subr.mxu0 0.0
    %7351 = vmatpush1.msra.mxu0 0.0
    %7352 = vmatprep.subr.mxu0 0.0
    %7353 = vmatpush1.msra.mxu0 0.0
    %7354 = vmatprep.subr.mxu0 0.0
    %7355 = vmatpush1.msra.mxu0 0.0
    %7356 = vmatprep.subr.mxu0 0.0
    %7357 = vmatpush1.msra.mxu0 0.0
    %7358 = vmatprep.subr.mxu0 0.0
    %7359 = vmatpush1.msra.mxu0 0.0
    %7360 = vmatprep.subr.mxu0 0.0
    %7361 = vmatpush1.msra.mxu0 0.0
    %7362 = vmatprep.subr.mxu0 0.0
    %7363 = vmatpush1.msra.mxu0 0.0
    %7364 = vmatprep.subr.mxu0 0.0
    %7365 = vmatpush1.msra.mxu0 0.0
    %7366 = vmatprep.subr.mxu0 0.0
    %7367 = vmatpush1.msra.mxu0 0.0
    %7368 = vmatprep.subr.mxu0 0.0
    %v7369 = vand.u32 %v7033, 4294901760
    %v7370 = vsub.f32 %v7033, %v7369
    %v7371 = vand.u32 %v7370, 4294901760
    %7372 = vmatpush1.msra.mxu0 %v7371
    %7373 = vmatprep.subr.mxu0 0.0
    %7374 = vmatpush2.msra.mxu0 0.0
    %7375 = vmatprep.subr.mxu0 0.0
    %7376 = vmatpush2.msra.mxu0 0.0
    %7377 = vmatprep.subr.mxu0 0.0
    %7378 = vmatpush2.msra.mxu0 0.0
    %7379 = vmatprep.subr.mxu0 0.0
    %7380 = vmatpush2.msra.mxu0 0.0
    %7381 = vmatprep.subr.mxu0 0.0
    %7382 = vmatpush2.msra.mxu0 0.0
    %7383 = vmatprep.subr.mxu0 0.0
    %7384 = vmatpush2.msra.mxu0 0.0
    %7385 = vmatprep.subr.mxu0 0.0
    %7386 = vmatpush2.msra.mxu0 0.0
    %7387 = vmatprep.subr.mxu0 0.0
    %7388 = vmatpush2.msra.mxu0 0.0
    %7389 = vmatprep.subr.mxu0 0.0
    %7390 = vmatpush2.msra.mxu0 0.0
    %7391 = vmatprep.subr.mxu0 0.0
    %7392 = vmatpush2.msra.mxu0 0.0
    %7393 = vmatprep.subr.mxu0 0.0
    %7394 = vmatpush2.msra.mxu0 0.0
    %7395 = vmatprep.subr.mxu0 0.0
    %7396 = vmatpush2.msra.mxu0 0.0
    %7397 = vmatprep.subr.mxu0 0.0
    %7398 = vmatpush2.msra.mxu0 0.0
    %7399 = vmatprep.subr.mxu0 0.0
    %7400 = vmatpush2.msra.mxu0 0.0
    %7401 = vmatprep.subr.mxu0 0.0
    %7402 = vmatpush2.msra.mxu0 0.0
    %7403 = vmatprep.subr.mxu0 0.0
    %7404 = vmatpush2.msra.mxu0 0.0
    %7405 = vmatprep.mubr.f32.mxu0 0.0
    %v7406 = vand.u32 %v7036, 4294901760
    %7407 = vmatmul.mubr.f32.gmra.mxu0 %v7406
    %v7408 = vpop.f32.mrf.mxu0
    %v7409 = vadd.f32 %v7335, %v7408
    %v7410 = vpop.f32.mrf.mxu0
    %7411 = vdwg.mxu0
    %7412 = vmatprep.subr.mxu0 0.0
    %7413 = vmatpush1.msra.mxu0 0.0
    %7414 = vmatprep.subr.mxu0 0.0
    %7415 = vmatpush1.msra.mxu0 0.0
    %7416 = vmatprep.subr.mxu0 0.0
    %7417 = vmatpush1.msra.mxu0 0.0
    %7418 = vmatprep.subr.mxu0 0.0
    %7419 = vmatpush1.msra.mxu0 0.0
    %7420 = vmatprep.subr.mxu0 0.0
    %7421 = vmatpush1.msra.mxu0 0.0
    %7422 = vmatprep.subr.mxu0 0.0
    %7423 = vmatpush1.msra.mxu0 0.0
    %7424 = vmatprep.subr.mxu0 0.0
    %7425 = vmatpush1.msra.mxu0 0.0
    %7426 = vmatprep.subr.mxu0 0.0
    %7427 = vmatpush1.msra.mxu0 0.0
    %7428 = vmatprep.subr.mxu0 0.0
    %7429 = vmatpush1.msra.mxu0 0.0
    %7430 = vmatprep.subr.mxu0 0.0
    %7431 = vmatpush1.msra.mxu0 0.0
    %7432 = vmatprep.subr.mxu0 0.0
    %7433 = vmatpush1.msra.mxu0 0.0
    %7434 = vmatprep.subr.mxu0 0.0
    %7435 = vmatpush1.msra.mxu0 0.0
    %7436 = vmatprep.subr.mxu0 0.0
    %7437 = vmatpush1.msra.mxu0 0.0
    %7438 = vmatprep.subr.mxu0 0.0
    %7439 = vmatpush1.msra.mxu0 0.0
    %7440 = vmatprep.subr.mxu0 0.0
    %7441 = vmatpush1.msra.mxu0 0.0
    %7442 = vmatprep.subr.mxu0 0.0
    %v7443 = vand.u32 %v7033, 4294901760
    %7444 = vmatpush1.msra.mxu0 %v7443
    %7445 = vmatprep.subr.mxu0 0.0
    %7446 = vmatpush2.msra.mxu0 0.0
    %7447 = vmatprep.subr.mxu0 0.0
    %7448 = vmatpush2.msra.mxu0 0.0
    %7449 = vmatprep.subr.mxu0 0.0
    %7450 = vmatpush2.msra.mxu0 0.0
    %7451 = vmatprep.subr.mxu0 0.0
    %7452 = vmatpush2.msra.mxu0 0.0
    %7453 = vmatprep.subr.mxu0 0.0
    %7454 = vmatpush2.msra.mxu0 0.0
    %7455 = vmatprep.subr.mxu0 0.0
    %7456 = vmatpush2.msra.mxu0 0.0
    %7457 = vmatprep.subr.mxu0 0.0
    %7458 = vmatpush2.msra.mxu0 0.0
    %7459 = vmatprep.subr.mxu0 0.0
    %7460 = vmatpush2.msra.mxu0 0.0
    %7461 = vmatprep.subr.mxu0 0.0
    %7462 = vmatpush2.msra.mxu0 0.0
    %7463 = vmatprep.subr.mxu0 0.0
    %7464 = vmatpush2.msra.mxu0 0.0
    %7465 = vmatprep.subr.mxu0 0.0
    %7466 = vmatpush2.msra.mxu0 0.0
    %7467 = vmatprep.subr.mxu0 0.0
    %7468 = vmatpush2.msra.mxu0 0.0
    %7469 = vmatprep.subr.mxu0 0.0
    %7470 = vmatpush2.msra.mxu0 0.0
    %7471 = vmatprep.subr.mxu0 0.0
    %7472 = vmatpush2.msra.mxu0 0.0
    %7473 = vmatprep.subr.mxu0 0.0
    %7474 = vmatpush2.msra.mxu0 0.0
    %7475 = vmatprep.subr.mxu0 0.0
    %7476 = vmatpush2.msra.mxu0 0.0
    %7477 = vmatprep.mubr.f32.mxu0 0.0
    %v7478 = vand.u32 %v7036, 4294901760
    %7479 = vmatmul.mubr.f32.gmra.mxu0 %v7478
    %v7480 = vpop.f32.mrf.mxu0
    %v7481 = vadd.f32 %v7409, %v7480
    %v7482 = vpop.f32.mrf.mxu0
    %7483 = vdwg.mxu0
    %7484 = vrot.lane.b32.xlu0 %v599, 64
    %v7485 = vpop.permute.xlu0 %7484
    %v7488 = vsel %vm607, %v4319, 0
    %7490 = vmatprep.subr.mxu0 0.0
    %7491 = vmatpush1.msra.mxu0 0.0
    %7492 = vmatprep.subr.mxu0 0.0
    %7493 = vmatpush1.msra.mxu0 0.0
    %7494 = vmatprep.subr.mxu0 0.0
    %7495 = vmatpush1.msra.mxu0 0.0
    %7496 = vmatprep.subr.mxu0 0.0
    %7497 = vmatpush1.msra.mxu0 0.0
    %7498 = vmatprep.subr.mxu0 0.0
    %7499 = vmatpush1.msra.mxu0 0.0
    %7500 = vmatprep.subr.mxu0 0.0
    %7501 = vmatpush1.msra.mxu0 0.0
    %7502 = vmatprep.subr.mxu0 0.0
    %7503 = vmatpush1.msra.mxu0 0.0
    %7504 = vmatprep.subr.mxu0 0.0
    %7505 = vmatpush1.msra.mxu0 0.0
    %7506 = vmatprep.subr.mxu0 0.0
    %7507 = vmatpush1.msra.mxu0 0.0
    %7508 = vmatprep.subr.mxu0 0.0
    %7509 = vmatpush1.msra.mxu0 0.0
    %7510 = vmatprep.subr.mxu0 0.0
    %7511 = vmatpush1.msra.mxu0 0.0
    %7512 = vmatprep.subr.mxu0 0.0
    %7513 = vmatpush1.msra.mxu0 0.0
    %7514 = vmatprep.subr.mxu0 0.0
    %7515 = vmatpush1.msra.mxu0 0.0
    %7516 = vmatprep.subr.mxu0 0.0
    %7517 = vmatpush1.msra.mxu0 0.0
    %7518 = vmatprep.subr.mxu0 0.0
    %7519 = vmatpush1.msra.mxu0 0.0
    %7520 = vmatprep.subr.mxu0 0.0
    %v7521 = vand.u32 %v7485, 4294901760
    %7522 = vmatpush1.msra.mxu0 %v7521
    %7523 = vmatprep.subr.mxu0 0.0
    %7524 = vmatpush2.msra.mxu0 0.0
    %7525 = vmatprep.subr.mxu0 0.0
    %7526 = vmatpush2.msra.mxu0 0.0
    %7527 = vmatprep.subr.mxu0 0.0
    %7528 = vmatpush2.msra.mxu0 0.0
    %7529 = vmatprep.subr.mxu0 0.0
    %7530 = vmatpush2.msra.mxu0 0.0
    %7531 = vmatprep.subr.mxu0 0.0
    %7532 = vmatpush2.msra.mxu0 0.0
    %7533 = vmatprep.subr.mxu0 0.0
    %7534 = vmatpush2.msra.mxu0 0.0
    %7535 = vmatprep.subr.mxu0 0.0
    %7536 = vmatpush2.msra.mxu0 0.0
    %7537 = vmatprep.subr.mxu0 0.0
    %7538 = vmatpush2.msra.mxu0 0.0
    %7539 = vmatprep.subr.mxu0 0.0
    %7540 = vmatpush2.msra.mxu0 0.0
    %7541 = vmatprep.subr.mxu0 0.0
    %7542 = vmatpush2.msra.mxu0 0.0
    %7543 = vmatprep.subr.mxu0 0.0
    %7544 = vmatpush2.msra.mxu0 0.0
    %7545 = vmatprep.subr.mxu0 0.0
    %7546 = vmatpush2.msra.mxu0 0.0
    %7547 = vmatprep.subr.mxu0 0.0
    %7548 = vmatpush2.msra.mxu0 0.0
    %7549 = vmatprep.subr.mxu0 0.0
    %7550 = vmatpush2.msra.mxu0 0.0
    %7551 = vmatprep.subr.mxu0 0.0
    %7552 = vmatpush2.msra.mxu0 0.0
    %7553 = vmatprep.subr.mxu0 0.0
    %7554 = vmatpush2.msra.mxu0 0.0
    %7555 = vmatprep.mubr.f32.mxu0 0.0
    %v7556 = vand.u32 %v7488, 4294901760
    %v7557 = vsub.f32 %v7488, %v7556
    %v7558 = vand.u32 %v7557, 4294901760
    %v7559 = vsub.f32 %v7557, %v7558
    %v7560 = vand.u32 %v7559, 4294901760
    %7561 = vmatmul.mubr.f32.gmra.mxu0 %v7560
    %v7562 = vpop.f32.mrf.mxu0
    %v7563 = vadd.f32 0.0, %v7562
    %v7564 = vpop.f32.mrf.mxu0
    %7565 = vdwg.mxu0
    %7566 = vmatprep.subr.mxu0 0.0
    %7567 = vmatpush1.msra.mxu0 0.0
    %7568 = vmatprep.subr.mxu0 0.0
    %7569 = vmatpush1.msra.mxu0 0.0
    %7570 = vmatprep.subr.mxu0 0.0
    %7571 = vmatpush1.msra.mxu0 0.0
    %7572 = vmatprep.subr.mxu0 0.0
    %7573 = vmatpush1.msra.mxu0 0.0
    %7574 = vmatprep.subr.mxu0 0.0
    %7575 = vmatpush1.msra.mxu0 0.0
    %7576 = vmatprep.subr.mxu0 0.0
    %7577 = vmatpush1.msra.mxu0 0.0
    %7578 = vmatprep.subr.mxu0 0.0
    %7579 = vmatpush1.msra.mxu0 0.0
    %7580 = vmatprep.subr.mxu0 0.0
    %7581 = vmatpush1.msra.mxu0 0.0
    %7582 = vmatprep.subr.mxu0 0.0
    %7583 = vmatpush1.msra.mxu0 0.0
    %7584 = vmatprep.subr.mxu0 0.0
    %7585 = vmatpush1.msra.mxu0 0.0
    %7586 = vmatprep.subr.mxu0 0.0
    %7587 = vmatpush1.msra.mxu0 0.0
    %7588 = vmatprep.subr.mxu0 0.0
    %7589 = vmatpush1.msra.mxu0 0.0
    %7590 = vmatprep.subr.mxu0 0.0
    %7591 = vmatpush1.msra.mxu0 0.0
    %7592 = vmatprep.subr.mxu0 0.0
    %7593 = vmatpush1.msra.mxu0 0.0
    %7594 = vmatprep.subr.mxu0 0.0
    %7595 = vmatpush1.msra.mxu0 0.0
    %7596 = vmatprep.subr.mxu0 0.0
    %v7597 = vand.u32 %v7485, 4294901760
    %v7598 = vsub.f32 %v7485, %v7597
    %v7599 = vand.u32 %v7598, 4294901760
    %v7600 = vsub.f32 %v7598, %v7599
    %v7601 = vand.u32 %v7600, 4294901760
    %7602 = vmatpush1.msra.mxu0 %v7601
    %7603 = vmatprep.subr.mxu0 0.0
    %7604 = vmatpush2.msra.mxu0 0.0
    %7605 = vmatprep.subr.mxu0 0.0
    %7606 = vmatpush2.msra.mxu0 0.0
    %7607 = vmatprep.subr.mxu0 0.0
    %7608 = vmatpush2.msra.mxu0 0.0
    %7609 = vmatprep.subr.mxu0 0.0
    %7610 = vmatpush2.msra.mxu0 0.0
    %7611 = vmatprep.subr.mxu0 0.0
    %7612 = vmatpush2.msra.mxu0 0.0
    %7613 = vmatprep.subr.mxu0 0.0
    %7614 = vmatpush2.msra.mxu0 0.0
    %7615 = vmatprep.subr.mxu0 0.0
    %7616 = vmatpush2.msra.mxu0 0.0
    %7617 = vmatprep.subr.mxu0 0.0
    %7618 = vmatpush2.msra.mxu0 0.0
    %7619 = vmatprep.subr.mxu0 0.0
    %7620 = vmatpush2.msra.mxu0 0.0
    %7621 = vmatprep.subr.mxu0 0.0
    %7622 = vmatpush2.msra.mxu0 0.0
    %7623 = vmatprep.subr.mxu0 0.0
    %7624 = vmatpush2.msra.mxu0 0.0
    %7625 = vmatprep.subr.mxu0 0.0
    %7626 = vmatpush2.msra.mxu0 0.0
    %7627 = vmatprep.subr.mxu0 0.0
    %7628 = vmatpush2.msra.mxu0 0.0
    %7629 = vmatprep.subr.mxu0 0.0
    %7630 = vmatpush2.msra.mxu0 0.0
    %7631 = vmatprep.subr.mxu0 0.0
    %7632 = vmatpush2.msra.mxu0 0.0
    %7633 = vmatprep.subr.mxu0 0.0
    %7634 = vmatpush2.msra.mxu0 0.0
    %7635 = vmatprep.mubr.f32.mxu0 0.0
    %v7636 = vand.u32 %v7488, 4294901760
    %7637 = vmatmul.mubr.f32.gmra.mxu0 %v7636
    %v7638 = vpop.f32.mrf.mxu0
    %v7639 = vadd.f32 %v7563, %v7638
    %v7640 = vpop.f32.mrf.mxu0
    %7641 = vdwg.mxu0
    %7642 = vmatprep.subr.mxu0 0.0
    %7643 = vmatpush1.msra.mxu0 0.0
    %7644 = vmatprep.subr.mxu0 0.0
    %7645 = vmatpush1.msra.mxu0 0.0
    %7646 = vmatprep.subr.mxu0 0.0
    %7647 = vmatpush1.msra.mxu0 0.0
    %7648 = vmatprep.subr.mxu0 0.0
    %7649 = vmatpush1.msra.mxu0 0.0
    %7650 = vmatprep.subr.mxu0 0.0
    %7651 = vmatpush1.msra.mxu0 0.0
    %7652 = vmatprep.subr.mxu0 0.0
    %7653 = vmatpush1.msra.mxu0 0.0
    %7654 = vmatprep.subr.mxu0 0.0
    %7655 = vmatpush1.msra.mxu0 0.0
    %7656 = vmatprep.subr.mxu0 0.0
    %7657 = vmatpush1.msra.mxu0 0.0
    %7658 = vmatprep.subr.mxu0 0.0
    %7659 = vmatpush1.msra.mxu0 0.0
    %7660 = vmatprep.subr.mxu0 0.0
    %7661 = vmatpush1.msra.mxu0 0.0
    %7662 = vmatprep.subr.mxu0 0.0
    %7663 = vmatpush1.msra.mxu0 0.0
    %7664 = vmatprep.subr.mxu0 0.0
    %7665 = vmatpush1.msra.mxu0 0.0
    %7666 = vmatprep.subr.mxu0 0.0
    %7667 = vmatpush1.msra.mxu0 0.0
    %7668 = vmatprep.subr.mxu0 0.0
    %7669 = vmatpush1.msra.mxu0 0.0
    %7670 = vmatprep.subr.mxu0 0.0
    %7671 = vmatpush1.msra.mxu0 0.0
    %7672 = vmatprep.subr.mxu0 0.0
    %v7673 = vand.u32 %v7485, 4294901760
    %v7674 = vsub.f32 %v7485, %v7673
    %7675 = vmatpush1.msra.mxu0 %v7674
    %7676 = vmatprep.subr.mxu0 0.0
    %7677 = vmatpush2.msra.mxu0 0.0
    %7678 = vmatprep.subr.mxu0 0.0
    %7679 = vmatpush2.msra.mxu0 0.0
    %7680 = vmatprep.subr.mxu0 0.0
    %7681 = vmatpush2.msra.mxu0 0.0
    %7682 = vmatprep.subr.mxu0 0.0
    %7683 = vmatpush2.msra.mxu0 0.0
    %7684 = vmatprep.subr.mxu0 0.0
    %7685 = vmatpush2.msra.mxu0 0.0
    %7686 = vmatprep.subr.mxu0 0.0
    %7687 = vmatpush2.msra.mxu0 0.0
    %7688 = vmatprep.subr.mxu0 0.0
    %7689 = vmatpush2.msra.mxu0 0.0
    %7690 = vmatprep.subr.mxu0 0.0
    %7691 = vmatpush2.msra.mxu0 0.0
    %7692 = vmatprep.subr.mxu0 0.0
    %7693 = vmatpush2.msra.mxu0 0.0
    %7694 = vmatprep.subr.mxu0 0.0
    %7695 = vmatpush2.msra.mxu0 0.0
    %7696 = vmatprep.subr.mxu0 0.0
    %7697 = vmatpush2.msra.mxu0 0.0
    %7698 = vmatprep.subr.mxu0 0.0
    %7699 = vmatpush2.msra.mxu0 0.0
    %7700 = vmatprep.subr.mxu0 0.0
    %7701 = vmatpush2.msra.mxu0 0.0
    %7702 = vmatprep.subr.mxu0 0.0
    %7703 = vmatpush2.msra.mxu0 0.0
    %7704 = vmatprep.subr.mxu0 0.0
    %7705 = vmatpush2.msra.mxu0 0.0
    %7706 = vmatprep.subr.mxu0 0.0
    %7707 = vmatpush2.msra.mxu0 0.0
    %7708 = vmatprep.mubr.f32.mxu0 0.0
    %v7709 = vand.u32 %v7488, 4294901760
    %v7710 = vsub.f32 %v7488, %v7709
    %7711 = vmatmul.mubr.f32.gmra.mxu0 %v7710
    %v7712 = vpop.f32.mrf.mxu0
    %v7713 = vadd.f32 %v7639, %v7712
    %v7714 = vpop.f32.mrf.mxu0
    %7715 = vdwg.mxu0
    %7716 = vmatprep.subr.mxu0 0.0
    %7717 = vmatpush1.msra.mxu0 0.0
    %7718 = vmatprep.subr.mxu0 0.0
    %7719 = vmatpush1.msra.mxu0 0.0
    %7720 = vmatprep.subr.mxu0 0.0
    %7721 = vmatpush1.msra.mxu0 0.0
    %7722 = vmatprep.subr.mxu0 0.0
    %7723 = vmatpush1.msra.mxu0 0.0
    %7724 = vmatprep.subr.mxu0 0.0
    %7725 = vmatpush1.msra.mxu0 0.0
    %7726 = vmatprep.subr.mxu0 0.0
    %7727 = vmatpush1.msra.mxu0 0.0
    %7728 = vmatprep.subr.mxu0 0.0
    %7729 = vmatpush1.msra.mxu0 0.0
    %7730 = vmatprep.subr.mxu0 0.0
    %7731 = vmatpush1.msra.mxu0 0.0
    %7732 = vmatprep.subr.mxu0 0.0
    %7733 = vmatpush1.msra.mxu0 0.0
    %7734 = vmatprep.subr.mxu0 0.0
    %7735 = vmatpush1.msra.mxu0 0.0
    %7736 = vmatprep.subr.mxu0 0.0
    %7737 = vmatpush1.msra.mxu0 0.0
    %7738 = vmatprep.subr.mxu0 0.0
    %7739 = vmatpush1.msra.mxu0 0.0
    %7740 = vmatprep.subr.mxu0 0.0
    %7741 = vmatpush1.msra.mxu0 0.0
    %7742 = vmatprep.subr.mxu0 0.0
    %7743 = vmatpush1.msra.mxu0 0.0
    %7744 = vmatprep.subr.mxu0 0.0
    %7745 = vmatpush1.msra.mxu0 0.0
    %7746 = vmatprep.subr.mxu0 0.0
    %v7747 = vand.u32 %v7485, 4294901760
    %7748 = vmatpush1.msra.mxu0 %v7747
    %7749 = vmatprep.subr.mxu0 0.0
    %7750 = vmatpush2.msra.mxu0 0.0
    %7751 = vmatprep.subr.mxu0 0.0
    %7752 = vmatpush2.msra.mxu0 0.0
    %7753 = vmatprep.subr.mxu0 0.0
    %7754 = vmatpush2.msra.mxu0 0.0
    %7755 = vmatprep.subr.mxu0 0.0
    %7756 = vmatpush2.msra.mxu0 0.0
    %7757 = vmatprep.subr.mxu0 0.0
    %7758 = vmatpush2.msra.mxu0 0.0
    %7759 = vmatprep.subr.mxu0 0.0
    %7760 = vmatpush2.msra.mxu0 0.0
    %7761 = vmatprep.subr.mxu0 0.0
    %7762 = vmatpush2.msra.mxu0 0.0
    %7763 = vmatprep.subr.mxu0 0.0
    %7764 = vmatpush2.msra.mxu0 0.0
    %7765 = vmatprep.subr.mxu0 0.0
    %7766 = vmatpush2.msra.mxu0 0.0
    %7767 = vmatprep.subr.mxu0 0.0
    %7768 = vmatpush2.msra.mxu0 0.0
    %7769 = vmatprep.subr.mxu0 0.0
    %7770 = vmatpush2.msra.mxu0 0.0
    %7771 = vmatprep.subr.mxu0 0.0
    %7772 = vmatpush2.msra.mxu0 0.0
    %7773 = vmatprep.subr.mxu0 0.0
    %7774 = vmatpush2.msra.mxu0 0.0
    %7775 = vmatprep.subr.mxu0 0.0
    %7776 = vmatpush2.msra.mxu0 0.0
    %7777 = vmatprep.subr.mxu0 0.0
    %7778 = vmatpush2.msra.mxu0 0.0
    %7779 = vmatprep.subr.mxu0 0.0
    %7780 = vmatpush2.msra.mxu0 0.0
    %7781 = vmatprep.mubr.f32.mxu0 0.0
    %v7782 = vand.u32 %v7488, 4294901760
    %v7783 = vsub.f32 %v7488, %v7782
    %v7784 = vand.u32 %v7783, 4294901760
    %7785 = vmatmul.mubr.f32.gmra.mxu0 %v7784
    %v7786 = vpop.f32.mrf.mxu0
    %v7787 = vadd.f32 %v7713, %v7786
    %v7788 = vpop.f32.mrf.mxu0
    %7789 = vdwg.mxu0
    %7790 = vmatprep.subr.mxu0 0.0
    %7791 = vmatpush1.msra.mxu0 0.0
    %7792 = vmatprep.subr.mxu0 0.0
    %7793 = vmatpush1.msra.mxu0 0.0
    %7794 = vmatprep.subr.mxu0 0.0
    %7795 = vmatpush1.msra.mxu0 0.0
    %7796 = vmatprep.subr.mxu0 0.0
    %7797 = vmatpush1.msra.mxu0 0.0
    %7798 = vmatprep.subr.mxu0 0.0
    %7799 = vmatpush1.msra.mxu0 0.0
    %7800 = vmatprep.subr.mxu0 0.0
    %7801 = vmatpush1.msra.mxu0 0.0
    %7802 = vmatprep.subr.mxu0 0.0
    %7803 = vmatpush1.msra.mxu0 0.0
    %7804 = vmatprep.subr.mxu0 0.0
    %7805 = vmatpush1.msra.mxu0 0.0
    %7806 = vmatprep.subr.mxu0 0.0
    %7807 = vmatpush1.msra.mxu0 0.0
    %7808 = vmatprep.subr.mxu0 0.0
    %7809 = vmatpush1.msra.mxu0 0.0
    %7810 = vmatprep.subr.mxu0 0.0
    %7811 = vmatpush1.msra.mxu0 0.0
    %7812 = vmatprep.subr.mxu0 0.0
    %7813 = vmatpush1.msra.mxu0 0.0
    %7814 = vmatprep.subr.mxu0 0.0
    %7815 = vmatpush1.msra.mxu0 0.0
    %7816 = vmatprep.subr.mxu0 0.0
    %7817 = vmatpush1.msra.mxu0 0.0
    %7818 = vmatprep.subr.mxu0 0.0
    %7819 = vmatpush1.msra.mxu0 0.0
    %7820 = vmatprep.subr.mxu0 0.0
    %v7821 = vand.u32 %v7485, 4294901760
    %v7822 = vsub.f32 %v7485, %v7821
    %v7823 = vand.u32 %v7822, 4294901760
    %7824 = vmatpush1.msra.mxu0 %v7823
    %7825 = vmatprep.subr.mxu0 0.0
    %7826 = vmatpush2.msra.mxu0 0.0
    %7827 = vmatprep.subr.mxu0 0.0
    %7828 = vmatpush2.msra.mxu0 0.0
    %7829 = vmatprep.subr.mxu0 0.0
    %7830 = vmatpush2.msra.mxu0 0.0
    %7831 = vmatprep.subr.mxu0 0.0
    %7832 = vmatpush2.msra.mxu0 0.0
    %7833 = vmatprep.subr.mxu0 0.0
    %7834 = vmatpush2.msra.mxu0 0.0
    %7835 = vmatprep.subr.mxu0 0.0
    %7836 = vmatpush2.msra.mxu0 0.0
    %7837 = vmatprep.subr.mxu0 0.0
    %7838 = vmatpush2.msra.mxu0 0.0
    %7839 = vmatprep.subr.mxu0 0.0
    %7840 = vmatpush2.msra.mxu0 0.0
    %7841 = vmatprep.subr.mxu0 0.0
    %7842 = vmatpush2.msra.mxu0 0.0
    %7843 = vmatprep.subr.mxu0 0.0
    %7844 = vmatpush2.msra.mxu0 0.0
    %7845 = vmatprep.subr.mxu0 0.0
    %7846 = vmatpush2.msra.mxu0 0.0
    %7847 = vmatprep.subr.mxu0 0.0
    %7848 = vmatpush2.msra.mxu0 0.0
    %7849 = vmatprep.subr.mxu0 0.0
    %7850 = vmatpush2.msra.mxu0 0.0
    %7851 = vmatprep.subr.mxu0 0.0
    %7852 = vmatpush2.msra.mxu0 0.0
    %7853 = vmatprep.subr.mxu0 0.0
    %7854 = vmatpush2.msra.mxu0 0.0
    %7855 = vmatprep.subr.mxu0 0.0
    %7856 = vmatpush2.msra.mxu0 0.0
    %7857 = vmatprep.mubr.f32.mxu0 0.0
    %v7858 = vand.u32 %v7488, 4294901760
    %7859 = vmatmul.mubr.f32.gmra.mxu0 %v7858
    %v7860 = vpop.f32.mrf.mxu0
    %v7861 = vadd.f32 %v7787, %v7860
    %v7862 = vpop.f32.mrf.mxu0
    %7863 = vdwg.mxu0
    %7864 = vmatprep.subr.mxu0 0.0
    %7865 = vmatpush1.msra.mxu0 0.0
    %7866 = vmatprep.subr.mxu0 0.0
    %7867 = vmatpush1.msra.mxu0 0.0
    %7868 = vmatprep.subr.mxu0 0.0
    %7869 = vmatpush1.msra.mxu0 0.0
    %7870 = vmatprep.subr.mxu0 0.0
    %7871 = vmatpush1.msra.mxu0 0.0
    %7872 = vmatprep.subr.mxu0 0.0
    %7873 = vmatpush1.msra.mxu0 0.0
    %7874 = vmatprep.subr.mxu0 0.0
    %7875 = vmatpush1.msra.mxu0 0.0
    %7876 = vmatprep.subr.mxu0 0.0
    %7877 = vmatpush1.msra.mxu0 0.0
    %7878 = vmatprep.subr.mxu0 0.0
    %7879 = vmatpush1.msra.mxu0 0.0
    %7880 = vmatprep.subr.mxu0 0.0
    %7881 = vmatpush1.msra.mxu0 0.0
    %7882 = vmatprep.subr.mxu0 0.0
    %7883 = vmatpush1.msra.mxu0 0.0
    %7884 = vmatprep.subr.mxu0 0.0
    %7885 = vmatpush1.msra.mxu0 0.0
    %7886 = vmatprep.subr.mxu0 0.0
    %7887 = vmatpush1.msra.mxu0 0.0
    %7888 = vmatprep.subr.mxu0 0.0
    %7889 = vmatpush1.msra.mxu0 0.0
    %7890 = vmatprep.subr.mxu0 0.0
    %7891 = vmatpush1.msra.mxu0 0.0
    %7892 = vmatprep.subr.mxu0 0.0
    %7893 = vmatpush1.msra.mxu0 0.0
    %7894 = vmatprep.subr.mxu0 0.0
    %v7895 = vand.u32 %v7485, 4294901760
    %7896 = vmatpush1.msra.mxu0 %v7895
    %7897 = vmatprep.subr.mxu0 0.0
    %7898 = vmatpush2.msra.mxu0 0.0
    %7899 = vmatprep.subr.mxu0 0.0
    %7900 = vmatpush2.msra.mxu0 0.0
    %7901 = vmatprep.subr.mxu0 0.0
    %7902 = vmatpush2.msra.mxu0 0.0
    %7903 = vmatprep.subr.mxu0 0.0
    %7904 = vmatpush2.msra.mxu0 0.0
    %7905 = vmatprep.subr.mxu0 0.0
    %7906 = vmatpush2.msra.mxu0 0.0
    %7907 = vmatprep.subr.mxu0 0.0
    %7908 = vmatpush2.msra.mxu0 0.0
    %7909 = vmatprep.subr.mxu0 0.0
    %7910 = vmatpush2.msra.mxu0 0.0
    %7911 = vmatprep.subr.mxu0 0.0
    %7912 = vmatpush2.msra.mxu0 0.0
    %7913 = vmatprep.subr.mxu0 0.0
    %7914 = vmatpush2.msra.mxu0 0.0
    %7915 = vmatprep.subr.mxu0 0.0
    %7916 = vmatpush2.msra.mxu0 0.0
    %7917 = vmatprep.subr.mxu0 0.0
    %7918 = vmatpush2.msra.mxu0 0.0
    %7919 = vmatprep.subr.mxu0 0.0
    %7920 = vmatpush2.msra.mxu0 0.0
    %7921 = vmatprep.subr.mxu0 0.0
    %7922 = vmatpush2.msra.mxu0 0.0
    %7923 = vmatprep.subr.mxu0 0.0
    %7924 = vmatpush2.msra.mxu0 0.0
    %7925 = vmatprep.subr.mxu0 0.0
    %7926 = vmatpush2.msra.mxu0 0.0
    %7927 = vmatprep.subr.mxu0 0.0
    %7928 = vmatpush2.msra.mxu0 0.0
    %7929 = vmatprep.mubr.f32.mxu0 0.0
    %v7930 = vand.u32 %v7488, 4294901760
    %7931 = vmatmul.mubr.f32.gmra.mxu0 %v7930
    %v7932 = vpop.f32.mrf.mxu0
    %v7933 = vadd.f32 %v7861, %v7932
    %v7934 = vpop.f32.mrf.mxu0
    %7935 = vdwg.mxu0
    %7937 = vrot.lane.b32.xlu0 %v42, 32
    %v7938 = vpop.permute.xlu0 %7937
    %v7941 = vsel %vm607, %v4769, 0
    %v7944 = vsel %vm607, %v5221, 0
    %7946 = vmatprep.subr.mxu0 0.0
    %7947 = vmatpush1.msra.mxu0 0.0
    %7948 = vmatprep.subr.mxu0 0.0
    %7949 = vmatpush1.msra.mxu0 0.0
    %7950 = vmatprep.subr.mxu0 0.0
    %7951 = vmatpush1.msra.mxu0 0.0
    %7952 = vmatprep.subr.mxu0 0.0
    %7953 = vmatpush1.msra.mxu0 0.0
    %7954 = vmatprep.subr.mxu0 0.0
    %7955 = vmatpush1.msra.mxu0 0.0
    %7956 = vmatprep.subr.mxu0 0.0
    %7957 = vmatpush1.msra.mxu0 0.0
    %7958 = vmatprep.subr.mxu0 0.0
    %7959 = vmatpush1.msra.mxu0 0.0
    %7960 = vmatprep.subr.mxu0 0.0
    %7961 = vmatpush1.msra.mxu0 0.0
    %7962 = vmatprep.subr.mxu0 0.0
    %7963 = vmatpush1.msra.mxu0 0.0
    %7964 = vmatprep.subr.mxu0 0.0
    %7965 = vmatpush1.msra.mxu0 0.0
    %7966 = vmatprep.subr.mxu0 0.0
    %7967 = vmatpush1.msra.mxu0 0.0
    %7968 = vmatprep.subr.mxu0 0.0
    %7969 = vmatpush1.msra.mxu0 0.0
    %7970 = vmatprep.subr.mxu0 0.0
    %7971 = vmatpush1.msra.mxu0 0.0
    %7972 = vmatprep.subr.mxu0 0.0
    %7973 = vmatpush1.msra.mxu0 0.0
    %7974 = vmatprep.subr.mxu0 0.0
    %7975 = vmatpush1.msra.mxu0 0.0
    %7976 = vmatprep.subr.mxu0 0.0
    %v7977 = vand.u32 %v7938, 4294901760
    %7978 = vmatpush1.msra.mxu0 %v7977
    %7979 = vmatprep.subr.mxu0 0.0
    %7980 = vmatpush2.msra.mxu0 0.0
    %7981 = vmatprep.subr.mxu0 0.0
    %7982 = vmatpush2.msra.mxu0 0.0
    %7983 = vmatprep.subr.mxu0 0.0
    %7984 = vmatpush2.msra.mxu0 0.0
    %7985 = vmatprep.subr.mxu0 0.0
    %7986 = vmatpush2.msra.mxu0 0.0
    %7987 = vmatprep.subr.mxu0 0.0
    %7988 = vmatpush2.msra.mxu0 0.0
    %7989 = vmatprep.subr.mxu0 0.0
    %7990 = vmatpush2.msra.mxu0 0.0
    %7991 = vmatprep.subr.mxu0 0.0
    %7992 = vmatpush2.msra.mxu0 0.0
    %7993 = vmatprep.subr.mxu0 0.0
    %7994 = vmatpush2.msra.mxu0 0.0
    %7995 = vmatprep.subr.mxu0 0.0
    %7996 = vmatpush2.msra.mxu0 0.0
    %7997 = vmatprep.subr.mxu0 0.0
    %7998 = vmatpush2.msra.mxu0 0.0
    %7999 = vmatprep.subr.mxu0 0.0
    %8000 = vmatpush2.msra.mxu0 0.0
    %8001 = vmatprep.subr.mxu0 0.0
    %8002 = vmatpush2.msra.mxu0 0.0
    %8003 = vmatprep.subr.mxu0 0.0
    %8004 = vmatpush2.msra.mxu0 0.0
    %8005 = vmatprep.subr.mxu0 0.0
    %8006 = vmatpush2.msra.mxu0 0.0
    %8007 = vmatprep.subr.mxu0 0.0
    %8008 = vmatpush2.msra.mxu0 0.0
    %8009 = vmatprep.subr.mxu0 0.0
    %8010 = vmatpush2.msra.mxu0 0.0
    %8011 = vmatprep.mubr.f32.mxu0 0.0
    %v8012 = vand.u32 %v7941, 4294901760
    %v8013 = vsub.f32 %v7941, %v8012
    %v8014 = vand.u32 %v8013, 4294901760
    %v8015 = vsub.f32 %v8013, %v8014
    %v8016 = vand.u32 %v8015, 4294901760
    %8017 = vmatmul.mubr.f32.gmra.mxu0 %v8016
    %v8018 = vpop.f32.mrf.mxu0
    %v8019 = vadd.f32 0.0, %v8018
    %v8020 = vpop.f32.mrf.mxu0
    %8021 = vmatprep.mubr.f32.mxu0 0.0
    %v8022 = vand.u32 %v7944, 4294901760
    %v8023 = vsub.f32 %v7944, %v8022
    %v8024 = vand.u32 %v8023, 4294901760
    %v8025 = vsub.f32 %v8023, %v8024
    %v8026 = vand.u32 %v8025, 4294901760
    %8027 = vmatmul.mubr.f32.gmra.mxu0 %v8026
    %v8028 = vpop.f32.mrf.mxu0
    %v8029 = vadd.f32 0.0, %v8028
    %v8030 = vpop.f32.mrf.mxu0
    %8031 = vdwg.mxu0
    %8032 = vmatprep.subr.mxu0 0.0
    %8033 = vmatpush1.msra.mxu0 0.0
    %8034 = vmatprep.subr.mxu0 0.0
    %8035 = vmatpush1.msra.mxu0 0.0
    %8036 = vmatprep.subr.mxu0 0.0
    %8037 = vmatpush1.msra.mxu0 0.0
    %8038 = vmatprep.subr.mxu0 0.0
    %8039 = vmatpush1.msra.mxu0 0.0
    %8040 = vmatprep.subr.mxu0 0.0
    %8041 = vmatpush1.msra.mxu0 0.0
    %8042 = vmatprep.subr.mxu0 0.0
    %8043 = vmatpush1.msra.mxu0 0.0
    %8044 = vmatprep.subr.mxu0 0.0
    %8045 = vmatpush1.msra.mxu0 0.0
    %8046 = vmatprep.subr.mxu0 0.0
    %8047 = vmatpush1.msra.mxu0 0.0
    %8048 = vmatprep.subr.mxu0 0.0
    %8049 = vmatpush1.msra.mxu0 0.0
    %8050 = vmatprep.subr.mxu0 0.0
    %8051 = vmatpush1.msra.mxu0 0.0
    %8052 = vmatprep.subr.mxu0 0.0
    %8053 = vmatpush1.msra.mxu0 0.0
    %8054 = vmatprep.subr.mxu0 0.0
    %8055 = vmatpush1.msra.mxu0 0.0
    %8056 = vmatprep.subr.mxu0 0.0
    %8057 = vmatpush1.msra.mxu0 0.0
    %8058 = vmatprep.subr.mxu0 0.0
    %8059 = vmatpush1.msra.mxu0 0.0
    %8060 = vmatprep.subr.mxu0 0.0
    %8061 = vmatpush1.msra.mxu0 0.0
    %8062 = vmatprep.subr.mxu0 0.0
    %v8063 = vand.u32 %v7938, 4294901760
    %v8064 = vsub.f32 %v7938, %v8063
    %v8065 = vand.u32 %v8064, 4294901760
    %v8066 = vsub.f32 %v8064, %v8065
    %v8067 = vand.u32 %v8066, 4294901760
    %8068 = vmatpush1.msra.mxu0 %v8067
    %8069 = vmatprep.subr.mxu0 0.0
    %8070 = vmatpush2.msra.mxu0 0.0
    %8071 = vmatprep.subr.mxu0 0.0
    %8072 = vmatpush2.msra.mxu0 0.0
    %8073 = vmatprep.subr.mxu0 0.0
    %8074 = vmatpush2.msra.mxu0 0.0
    %8075 = vmatprep.subr.mxu0 0.0
    %8076 = vmatpush2.msra.mxu0 0.0
    %8077 = vmatprep.subr.mxu0 0.0
    %8078 = vmatpush2.msra.mxu0 0.0
    %8079 = vmatprep.subr.mxu0 0.0
    %8080 = vmatpush2.msra.mxu0 0.0
    %8081 = vmatprep.subr.mxu0 0.0
    %8082 = vmatpush2.msra.mxu0 0.0
    %8083 = vmatprep.subr.mxu0 0.0
    %8084 = vmatpush2.msra.mxu0 0.0
    %8085 = vmatprep.subr.mxu0 0.0
    %8086 = vmatpush2.msra.mxu0 0.0
    %8087 = vmatprep.subr.mxu0 0.0
    %8088 = vmatpush2.msra.mxu0 0.0
    %8089 = vmatprep.subr.mxu0 0.0
    %8090 = vmatpush2.msra.mxu0 0.0
    %8091 = vmatprep.subr.mxu0 0.0
    %8092 = vmatpush2.msra.mxu0 0.0
    %8093 = vmatprep.subr.mxu0 0.0
    %8094 = vmatpush2.msra.mxu0 0.0
    %8095 = vmatprep.subr.mxu0 0.0
    %8096 = vmatpush2.msra.mxu0 0.0
    %8097 = vmatprep.subr.mxu0 0.0
    %8098 = vmatpush2.msra.mxu0 0.0
    %8099 = vmatprep.subr.mxu0 0.0
    %8100 = vmatpush2.msra.mxu0 0.0
    %8101 = vmatprep.mubr.f32.mxu0 0.0
    %v8102 = vand.u32 %v7941, 4294901760
    %8103 = vmatmul.mubr.f32.gmra.mxu0 %v8102
    %v8104 = vpop.f32.mrf.mxu0
    %v8105 = vadd.f32 %v8019, %v8104
    %v8106 = vpop.f32.mrf.mxu0
    %8107 = vmatprep.mubr.f32.mxu0 0.0
    %v8108 = vand.u32 %v7944, 4294901760
    %8109 = vmatmul.mubr.f32.gmra.mxu0 %v8108
    %v8110 = vpop.f32.mrf.mxu0
    %v8111 = vadd.f32 %v8029, %v8110
    %v8112 = vpop.f32.mrf.mxu0
    %8113 = vdwg.mxu0
    %8114 = vmatprep.subr.mxu0 0.0
    %8115 = vmatpush1.msra.mxu0 0.0
    %8116 = vmatprep.subr.mxu0 0.0
    %8117 = vmatpush1.msra.mxu0 0.0
    %8118 = vmatprep.subr.mxu0 0.0
    %8119 = vmatpush1.msra.mxu0 0.0
    %8120 = vmatprep.subr.mxu0 0.0
    %8121 = vmatpush1.msra.mxu0 0.0
    %8122 = vmatprep.subr.mxu0 0.0
    %8123 = vmatpush1.msra.mxu0 0.0
    %8124 = vmatprep.subr.mxu0 0.0
    %8125 = vmatpush1.msra.mxu0 0.0
    %8126 = vmatprep.subr.mxu0 0.0
    %8127 = vmatpush1.msra.mxu0 0.0
    %8128 = vmatprep.subr.mxu0 0.0
    %8129 = vmatpush1.msra.mxu0 0.0
    %8130 = vmatprep.subr.mxu0 0.0
    %8131 = vmatpush1.msra.mxu0 0.0
    %8132 = vmatprep.subr.mxu0 0.0
    %8133 = vmatpush1.msra.mxu0 0.0
    %8134 = vmatprep.subr.mxu0 0.0
    %8135 = vmatpush1.msra.mxu0 0.0
    %8136 = vmatprep.subr.mxu0 0.0
    %8137 = vmatpush1.msra.mxu0 0.0
    %8138 = vmatprep.subr.mxu0 0.0
    %8139 = vmatpush1.msra.mxu0 0.0
    %8140 = vmatprep.subr.mxu0 0.0
    %8141 = vmatpush1.msra.mxu0 0.0
    %8142 = vmatprep.subr.mxu0 0.0
    %8143 = vmatpush1.msra.mxu0 0.0
    %8144 = vmatprep.subr.mxu0 0.0
    %v8145 = vand.u32 %v7938, 4294901760
    %v8146 = vsub.f32 %v7938, %v8145
    %8147 = vmatpush1.msra.mxu0 %v8146
    %8148 = vmatprep.subr.mxu0 0.0
    %8149 = vmatpush2.msra.mxu0 0.0
    %8150 = vmatprep.subr.mxu0 0.0
    %8151 = vmatpush2.msra.mxu0 0.0
    %8152 = vmatprep.subr.mxu0 0.0
    %8153 = vmatpush2.msra.mxu0 0.0
    %8154 = vmatprep.subr.mxu0 0.0
    %8155 = vmatpush2.msra.mxu0 0.0
    %8156 = vmatprep.subr.mxu0 0.0
    %8157 = vmatpush2.msra.mxu0 0.0
    %8158 = vmatprep.subr.mxu0 0.0
    %8159 = vmatpush2.msra.mxu0 0.0
    %8160 = vmatprep.subr.mxu0 0.0
    %8161 = vmatpush2.msra.mxu0 0.0
    %8162 = vmatprep.subr.mxu0 0.0
    %8163 = vmatpush2.msra.mxu0 0.0
    %8164 = vmatprep.subr.mxu0 0.0
    %8165 = vmatpush2.msra.mxu0 0.0
    %8166 = vmatprep.subr.mxu0 0.0
    %8167 = vmatpush2.msra.mxu0 0.0
    %8168 = vmatprep.subr.mxu0 0.0
    %8169 = vmatpush2.msra.mxu0 0.0
    %8170 = vmatprep.subr.mxu0 0.0
    %8171 = vmatpush2.msra.mxu0 0.0
    %8172 = vmatprep.subr.mxu0 0.0
    %8173 = vmatpush2.msra.mxu0 0.0
    %8174 = vmatprep.subr.mxu0 0.0
    %8175 = vmatpush2.msra.mxu0 0.0
    %8176 = vmatprep.subr.mxu0 0.0
    %8177 = vmatpush2.msra.mxu0 0.0
    %8178 = vmatprep.subr.mxu0 0.0
    %8179 = vmatpush2.msra.mxu0 0.0
    %8180 = vmatprep.mubr.f32.mxu0 0.0
    %v8181 = vand.u32 %v7941, 4294901760
    %v8182 = vsub.f32 %v7941, %v8181
    %8183 = vmatmul.mubr.f32.gmra.mxu0 %v8182
    %v8184 = vpop.f32.mrf.mxu0
    %v8185 = vadd.f32 %v8105, %v8184
    %v8186 = vpop.f32.mrf.mxu0
    %8187 = vmatprep.mubr.f32.mxu0 0.0
    %v8188 = vand.u32 %v7944, 4294901760
    %v8189 = vsub.f32 %v7944, %v8188
    %8190 = vmatmul.mubr.f32.gmra.mxu0 %v8189
    %v8191 = vpop.f32.mrf.mxu0
    %v8192 = vadd.f32 %v8111, %v8191
    %v8193 = vpop.f32.mrf.mxu0
    %8194 = vdwg.mxu0
    %8195 = vmatprep.subr.mxu0 0.0
    %8196 = vmatpush1.msra.mxu0 0.0
    %8197 = vmatprep.subr.mxu0 0.0
    %8198 = vmatpush1.msra.mxu0 0.0
    %8199 = vmatprep.subr.mxu0 0.0
    %8200 = vmatpush1.msra.mxu0 0.0
    %8201 = vmatprep.subr.mxu0 0.0
    %8202 = vmatpush1.msra.mxu0 0.0
    %8203 = vmatprep.subr.mxu0 0.0
    %8204 = vmatpush1.msra.mxu0 0.0
    %8205 = vmatprep.subr.mxu0 0.0
    %8206 = vmatpush1.msra.mxu0 0.0
    %8207 = vmatprep.subr.mxu0 0.0
    %8208 = vmatpush1.msra.mxu0 0.0
    %8209 = vmatprep.subr.mxu0 0.0
    %8210 = vmatpush1.msra.mxu0 0.0
    %8211 = vmatprep.subr.mxu0 0.0
    %8212 = vmatpush1.msra.mxu0 0.0
    %8213 = vmatprep.subr.mxu0 0.0
    %8214 = vmatpush1.msra.mxu0 0.0
    %8215 = vmatprep.subr.mxu0 0.0
    %8216 = vmatpush1.msra.mxu0 0.0
    %8217 = vmatprep.subr.mxu0 0.0
    %8218 = vmatpush1.msra.mxu0 0.0
    %8219 = vmatprep.subr.mxu0 0.0
    %8220 = vmatpush1.msra.mxu0 0.0
    %8221 = vmatprep.subr.mxu0 0.0
    %8222 = vmatpush1.msra.mxu0 0.0
    %8223 = vmatprep.subr.mxu0 0.0
    %8224 = vmatpush1.msra.mxu0 0.0
    %8225 = vmatprep.subr.mxu0 0.0
    %v8226 = vand.u32 %v7938, 4294901760
    %8227 = vmatpush1.msra.mxu0 %v8226
    %8228 = vmatprep.subr.mxu0 0.0
    %8229 = vmatpush2.msra.mxu0 0.0
    %8230 = vmatprep.subr.mxu0 0.0
    %8231 = vmatpush2.msra.mxu0 0.0
    %8232 = vmatprep.subr.mxu0 0.0
    %8233 = vmatpush2.msra.mxu0 0.0
    %8234 = vmatprep.subr.mxu0 0.0
    %8235 = vmatpush2.msra.mxu0 0.0
    %8236 = vmatprep.subr.mxu0 0.0
    %8237 = vmatpush2.msra.mxu0 0.0
    %8238 = vmatprep.subr.mxu0 0.0
    %8239 = vmatpush2.msra.mxu0 0.0
    %8240 = vmatprep.subr.mxu0 0.0
    %8241 = vmatpush2.msra.mxu0 0.0
    %8242 = vmatprep.subr.mxu0 0.0
    %8243 = vmatpush2.msra.mxu0 0.0
    %8244 = vmatprep.subr.mxu0 0.0
    %8245 = vmatpush2.msra.mxu0 0.0
    %8246 = vmatprep.subr.mxu0 0.0
    %8247 = vmatpush2.msra.mxu0 0.0
    %8248 = vmatprep.subr.mxu0 0.0
    %8249 = vmatpush2.msra.mxu0 0.0
    %8250 = vmatprep.subr.mxu0 0.0
    %8251 = vmatpush2.msra.mxu0 0.0
    %8252 = vmatprep.subr.mxu0 0.0
    %8253 = vmatpush2.msra.mxu0 0.0
    %8254 = vmatprep.subr.mxu0 0.0
    %8255 = vmatpush2.msra.mxu0 0.0
    %8256 = vmatprep.subr.mxu0 0.0
    %8257 = vmatpush2.msra.mxu0 0.0
    %8258 = vmatprep.subr.mxu0 0.0
    %8259 = vmatpush2.msra.mxu0 0.0
    %8260 = vmatprep.mubr.f32.mxu0 0.0
    %v8261 = vand.u32 %v7941, 4294901760
    %v8262 = vsub.f32 %v7941, %v8261
    %v8263 = vand.u32 %v8262, 4294901760
    %8264 = vmatmul.mubr.f32.gmra.mxu0 %v8263
    %v8265 = vpop.f32.mrf.mxu0
    %v8266 = vadd.f32 %v8185, %v8265
    %v8267 = vpop.f32.mrf.mxu0
    %8268 = vmatprep.mubr.f32.mxu0 0.0
    %v8269 = vand.u32 %v7944, 4294901760
    %v8270 = vsub.f32 %v7944, %v8269
    %v8271 = vand.u32 %v8270, 4294901760
    %8272 = vmatmul.mubr.f32.gmra.mxu0 %v8271
    %v8273 = vpop.f32.mrf.mxu0
    %v8274 = vadd.f32 %v8192, %v8273
    %v8275 = vpop.f32.mrf.mxu0
    %8276 = vdwg.mxu0
    %8277 = vmatprep.subr.mxu0 0.0
    %8278 = vmatpush1.msra.mxu0 0.0
    %8279 = vmatprep.subr.mxu0 0.0
    %8280 = vmatpush1.msra.mxu0 0.0
    %8281 = vmatprep.subr.mxu0 0.0
    %8282 = vmatpush1.msra.mxu0 0.0
    %8283 = vmatprep.subr.mxu0 0.0
    %8284 = vmatpush1.msra.mxu0 0.0
    %8285 = vmatprep.subr.mxu0 0.0
    %8286 = vmatpush1.msra.mxu0 0.0
    %8287 = vmatprep.subr.mxu0 0.0
    %8288 = vmatpush1.msra.mxu0 0.0
    %8289 = vmatprep.subr.mxu0 0.0
    %8290 = vmatpush1.msra.mxu0 0.0
    %8291 = vmatprep.subr.mxu0 0.0
    %8292 = vmatpush1.msra.mxu0 0.0
    %8293 = vmatprep.subr.mxu0 0.0
    %8294 = vmatpush1.msra.mxu0 0.0
    %8295 = vmatprep.subr.mxu0 0.0
    %8296 = vmatpush1.msra.mxu0 0.0
    %8297 = vmatprep.subr.mxu0 0.0
    %8298 = vmatpush1.msra.mxu0 0.0
    %8299 = vmatprep.subr.mxu0 0.0
    %8300 = vmatpush1.msra.mxu0 0.0
    %8301 = vmatprep.subr.mxu0 0.0
    %8302 = vmatpush1.msra.mxu0 0.0
    %8303 = vmatprep.subr.mxu0 0.0
    %8304 = vmatpush1.msra.mxu0 0.0
    %8305 = vmatprep.subr.mxu0 0.0
    %8306 = vmatpush1.msra.mxu0 0.0
    %8307 = vmatprep.subr.mxu0 0.0
    %v8308 = vand.u32 %v7938, 4294901760
    %v8309 = vsub.f32 %v7938, %v8308
    %v8310 = vand.u32 %v8309, 4294901760
    %8311 = vmatpush1.msra.mxu0 %v8310
    %8312 = vmatprep.subr.mxu0 0.0
    %8313 = vmatpush2.msra.mxu0 0.0
    %8314 = vmatprep.subr.mxu0 0.0
    %8315 = vmatpush2.msra.mxu0 0.0
    %8316 = vmatprep.subr.mxu0 0.0
    %8317 = vmatpush2.msra.mxu0 0.0
    %8318 = vmatprep.subr.mxu0 0.0
    %8319 = vmatpush2.msra.mxu0 0.0
    %8320 = vmatprep.subr.mxu0 0.0
    %8321 = vmatpush2.msra.mxu0 0.0
    %8322 = vmatprep.subr.mxu0 0.0
    %8323 = vmatpush2.msra.mxu0 0.0
    %8324 = vmatprep.subr.mxu0 0.0
    %8325 = vmatpush2.msra.mxu0 0.0
    %8326 = vmatprep.subr.mxu0 0.0
    %8327 = vmatpush2.msra.mxu0 0.0
    %8328 = vmatprep.subr.mxu0 0.0
    %8329 = vmatpush2.msra.mxu0 0.0
    %8330 = vmatprep.subr.mxu0 0.0
    %8331 = vmatpush2.msra.mxu0 0.0
    %8332 = vmatprep.subr.mxu0 0.0
    %8333 = vmatpush2.msra.mxu0 0.0
    %8334 = vmatprep.subr.mxu0 0.0
    %8335 = vmatpush2.msra.mxu0 0.0
    %8336 = vmatprep.subr.mxu0 0.0
    %8337 = vmatpush2.msra.mxu0 0.0
    %8338 = vmatprep.subr.mxu0 0.0
    %8339 = vmatpush2.msra.mxu0 0.0
    %8340 = vmatprep.subr.mxu0 0.0
    %8341 = vmatpush2.msra.mxu0 0.0
    %8342 = vmatprep.subr.mxu0 0.0
    %8343 = vmatpush2.msra.mxu0 0.0
    %8344 = vmatprep.mubr.f32.mxu0 0.0
    %v8345 = vand.u32 %v7941, 4294901760
    %8346 = vmatmul.mubr.f32.gmra.mxu0 %v8345
    %v8347 = vpop.f32.mrf.mxu0
    %v8348 = vadd.f32 %v8266, %v8347
    %v8349 = vpop.f32.mrf.mxu0
    %8350 = vmatprep.mubr.f32.mxu0 0.0
    %v8351 = vand.u32 %v7944, 4294901760
    %8352 = vmatmul.mubr.f32.gmra.mxu0 %v8351
    %v8353 = vpop.f32.mrf.mxu0
    %v8354 = vadd.f32 %v8274, %v8353
    %v8355 = vpop.f32.mrf.mxu0
    %8356 = vdwg.mxu0
    %8357 = vmatprep.subr.mxu0 0.0
    %8358 = vmatpush1.msra.mxu0 0.0
    %8359 = vmatprep.subr.mxu0 0.0
    %8360 = vmatpush1.msra.mxu0 0.0
    %8361 = vmatprep.subr.mxu0 0.0
    %8362 = vmatpush1.msra.mxu0 0.0
    %8363 = vmatprep.subr.mxu0 0.0
    %8364 = vmatpush1.msra.mxu0 0.0
    %8365 = vmatprep.subr.mxu0 0.0
    %8366 = vmatpush1.msra.mxu0 0.0
    %8367 = vmatprep.subr.mxu0 0.0
    %8368 = vmatpush1.msra.mxu0 0.0
    %8369 = vmatprep.subr.mxu0 0.0
    %8370 = vmatpush1.msra.mxu0 0.0
    %8371 = vmatprep.subr.mxu0 0.0
    %8372 = vmatpush1.msra.mxu0 0.0
    %8373 = vmatprep.subr.mxu0 0.0
    %8374 = vmatpush1.msra.mxu0 0.0
    %8375 = vmatprep.subr.mxu0 0.0
    %8376 = vmatpush1.msra.mxu0 0.0
    %8377 = vmatprep.subr.mxu0 0.0
    %8378 = vmatpush1.msra.mxu0 0.0
    %8379 = vmatprep.subr.mxu0 0.0
    %8380 = vmatpush1.msra.mxu0 0.0
    %8381 = vmatprep.subr.mxu0 0.0
    %8382 = vmatpush1.msra.mxu0 0.0
    %8383 = vmatprep.subr.mxu0 0.0
    %8384 = vmatpush1.msra.mxu0 0.0
    %8385 = vmatprep.subr.mxu0 0.0
    %8386 = vmatpush1.msra.mxu0 0.0
    %8387 = vmatprep.subr.mxu0 0.0
    %v8388 = vand.u32 %v7938, 4294901760
    %8389 = vmatpush1.msra.mxu0 %v8388
    %8390 = vmatprep.subr.mxu0 0.0
    %8391 = vmatpush2.msra.mxu0 0.0
    %8392 = vmatprep.subr.mxu0 0.0
    %8393 = vmatpush2.msra.mxu0 0.0
    %8394 = vmatprep.subr.mxu0 0.0
    %8395 = vmatpush2.msra.mxu0 0.0
    %8396 = vmatprep.subr.mxu0 0.0
    %8397 = vmatpush2.msra.mxu0 0.0
    %8398 = vmatprep.subr.mxu0 0.0
    %8399 = vmatpush2.msra.mxu0 0.0
    %8400 = vmatprep.subr.mxu0 0.0
    %8401 = vmatpush2.msra.mxu0 0.0
    %8402 = vmatprep.subr.mxu0 0.0
    %8403 = vmatpush2.msra.mxu0 0.0
    %8404 = vmatprep.subr.mxu0 0.0
    %8405 = vmatpush2.msra.mxu0 0.0
    %8406 = vmatprep.subr.mxu0 0.0
    %8407 = vmatpush2.msra.mxu0 0.0
    %8408 = vmatprep.subr.mxu0 0.0
    %8409 = vmatpush2.msra.mxu0 0.0
    %8410 = vmatprep.subr.mxu0 0.0
    %8411 = vmatpush2.msra.mxu0 0.0
    %8412 = vmatprep.subr.mxu0 0.0
    %8413 = vmatpush2.msra.mxu0 0.0
    %8414 = vmatprep.subr.mxu0 0.0
    %8415 = vmatpush2.msra.mxu0 0.0
    %8416 = vmatprep.subr.mxu0 0.0
    %8417 = vmatpush2.msra.mxu0 0.0
    %8418 = vmatprep.subr.mxu0 0.0
    %8419 = vmatpush2.msra.mxu0 0.0
    %8420 = vmatprep.subr.mxu0 0.0
    %8421 = vmatpush2.msra.mxu0 0.0
    %8422 = vmatprep.mubr.f32.mxu0 0.0
    %v8423 = vand.u32 %v7941, 4294901760
    %8424 = vmatmul.mubr.f32.gmra.mxu0 %v8423
    %v8425 = vpop.f32.mrf.mxu0
    %v8426 = vadd.f32 %v8348, %v8425
    %v8427 = vpop.f32.mrf.mxu0
    %8428 = vmatprep.mubr.f32.mxu0 0.0
    %v8429 = vand.u32 %v7944, 4294901760
    %8430 = vmatmul.mubr.f32.gmra.mxu0 %v8429
    %v8431 = vpop.f32.mrf.mxu0
    %v8432 = vadd.f32 %v8354, %v8431
    %v8433 = vpop.f32.mrf.mxu0
    %8434 = vdwg.mxu0
    %8437 = vrot.lane.b32.xlu0 %v8426, 96
    %v8438 = vpop.permute.xlu0 %8437
    %8439 = vrot.lane.b32.xlu0 %v8432, 96
    %v8440 = vpop.permute.xlu0 %8439
    %v8443 = vadd.f32 %v50, %v8438
    %v8444 = vadd.f32 %v50, %v8440
    %8446 = vrot.lane.b32.xlu0 %v43, 32
    %v8447 = vpop.permute.xlu0 %8446
    %v8450 = vsel %vm607, %v5673, 0
    %v8453 = vsel %vm607, %v6125, 0
    %8455 = vmatprep.subr.mxu0 0.0
    %8456 = vmatpush1.msra.mxu0 0.0
    %8457 = vmatprep.subr.mxu0 0.0
    %8458 = vmatpush1.msra.mxu0 0.0
    %8459 = vmatprep.subr.mxu0 0.0
    %8460 = vmatpush1.msra.mxu0 0.0
    %8461 = vmatprep.subr.mxu0 0.0
    %8462 = vmatpush1.msra.mxu0 0.0
    %8463 = vmatprep.subr.mxu0 0.0
    %8464 = vmatpush1.msra.mxu0 0.0
    %8465 = vmatprep.subr.mxu0 0.0
    %8466 = vmatpush1.msra.mxu0 0.0
    %8467 = vmatprep.subr.mxu0 0.0
    %8468 = vmatpush1.msra.mxu0 0.0
    %8469 = vmatprep.subr.mxu0 0.0
    %8470 = vmatpush1.msra.mxu0 0.0
    %8471 = vmatprep.subr.mxu0 0.0
    %8472 = vmatpush1.msra.mxu0 0.0
    %8473 = vmatprep.subr.mxu0 0.0
    %8474 = vmatpush1.msra.mxu0 0.0
    %8475 = vmatprep.subr.mxu0 0.0
    %8476 = vmatpush1.msra.mxu0 0.0
    %8477 = vmatprep.subr.mxu0 0.0
    %8478 = vmatpush1.msra.mxu0 0.0
    %8479 = vmatprep.subr.mxu0 0.0
    %8480 = vmatpush1.msra.mxu0 0.0
    %8481 = vmatprep.subr.mxu0 0.0
    %8482 = vmatpush1.msra.mxu0 0.0
    %8483 = vmatprep.subr.mxu0 0.0
    %8484 = vmatpush1.msra.mxu0 0.0
    %8485 = vmatprep.subr.mxu0 0.0
    %v8486 = vand.u32 %v8447, 4294901760
    %8487 = vmatpush1.msra.mxu0 %v8486
    %8488 = vmatprep.subr.mxu0 0.0
    %8489 = vmatpush2.msra.mxu0 0.0
    %8490 = vmatprep.subr.mxu0 0.0
    %8491 = vmatpush2.msra.mxu0 0.0
    %8492 = vmatprep.subr.mxu0 0.0
    %8493 = vmatpush2.msra.mxu0 0.0
    %8494 = vmatprep.subr.mxu0 0.0
    %8495 = vmatpush2.msra.mxu0 0.0
    %8496 = vmatprep.subr.mxu0 0.0
    %8497 = vmatpush2.msra.mxu0 0.0
    %8498 = vmatprep.subr.mxu0 0.0
    %8499 = vmatpush2.msra.mxu0 0.0
    %8500 = vmatprep.subr.mxu0 0.0
    %8501 = vmatpush2.msra.mxu0 0.0
    %8502 = vmatprep.subr.mxu0 0.0
    %8503 = vmatpush2.msra.mxu0 0.0
    %8504 = vmatprep.subr.mxu0 0.0
    %8505 = vmatpush2.msra.mxu0 0.0
    %8506 = vmatprep.subr.mxu0 0.0
    %8507 = vmatpush2.msra.mxu0 0.0
    %8508 = vmatprep.subr.mxu0 0.0
    %8509 = vmatpush2.msra.mxu0 0.0
    %8510 = vmatprep.subr.mxu0 0.0
    %8511 = vmatpush2.msra.mxu0 0.0
    %8512 = vmatprep.subr.mxu0 0.0
    %8513 = vmatpush2.msra.mxu0 0.0
    %8514 = vmatprep.subr.mxu0 0.0
    %8515 = vmatpush2.msra.mxu0 0.0
    %8516 = vmatprep.subr.mxu0 0.0
    %8517 = vmatpush2.msra.mxu0 0.0
    %8518 = vmatprep.subr.mxu0 0.0
    %8519 = vmatpush2.msra.mxu0 0.0
    %8520 = vmatprep.mubr.f32.mxu0 0.0
    %v8521 = vand.u32 %v8450, 4294901760
    %v8522 = vsub.f32 %v8450, %v8521
    %v8523 = vand.u32 %v8522, 4294901760
    %v8524 = vsub.f32 %v8522, %v8523
    %v8525 = vand.u32 %v8524, 4294901760
    %8526 = vmatmul.mubr.f32.gmra.mxu0 %v8525
    %v8527 = vpop.f32.mrf.mxu0
    %v8528 = vadd.f32 0.0, %v8527
    %v8529 = vpop.f32.mrf.mxu0
    %8530 = vmatprep.mubr.f32.mxu0 0.0
    %v8531 = vand.u32 %v8453, 4294901760
    %v8532 = vsub.f32 %v8453, %v8531
    %v8533 = vand.u32 %v8532, 4294901760
    %v8534 = vsub.f32 %v8532, %v8533
    %v8535 = vand.u32 %v8534, 4294901760
    %8536 = vmatmul.mubr.f32.gmra.mxu0 %v8535
    %v8537 = vpop.f32.mrf.mxu0
    %v8538 = vadd.f32 0.0, %v8537
    %v8539 = vpop.f32.mrf.mxu0
    %8540 = vdwg.mxu0
    %8541 = vmatprep.subr.mxu0 0.0
    %8542 = vmatpush1.msra.mxu0 0.0
    %8543 = vmatprep.subr.mxu0 0.0
    %8544 = vmatpush1.msra.mxu0 0.0
    %8545 = vmatprep.subr.mxu0 0.0
    %8546 = vmatpush1.msra.mxu0 0.0
    %8547 = vmatprep.subr.mxu0 0.0
    %8548 = vmatpush1.msra.mxu0 0.0
    %8549 = vmatprep.subr.mxu0 0.0
    %8550 = vmatpush1.msra.mxu0 0.0
    %8551 = vmatprep.subr.mxu0 0.0
    %8552 = vmatpush1.msra.mxu0 0.0
    %8553 = vmatprep.subr.mxu0 0.0
    %8554 = vmatpush1.msra.mxu0 0.0
    %8555 = vmatprep.subr.mxu0 0.0
    %8556 = vmatpush1.msra.mxu0 0.0
    %8557 = vmatprep.subr.mxu0 0.0
    %8558 = vmatpush1.msra.mxu0 0.0
    %8559 = vmatprep.subr.mxu0 0.0
    %8560 = vmatpush1.msra.mxu0 0.0
    %8561 = vmatprep.subr.mxu0 0.0
    %8562 = vmatpush1.msra.mxu0 0.0
    %8563 = vmatprep.subr.mxu0 0.0
    %8564 = vmatpush1.msra.mxu0 0.0
    %8565 = vmatprep.subr.mxu0 0.0
    %8566 = vmatpush1.msra.mxu0 0.0
    %8567 = vmatprep.subr.mxu0 0.0
    %8568 = vmatpush1.msra.mxu0 0.0
    %8569 = vmatprep.subr.mxu0 0.0
    %8570 = vmatpush1.msra.mxu0 0.0
    %8571 = vmatprep.subr.mxu0 0.0
    %v8572 = vand.u32 %v8447, 4294901760
    %v8573 = vsub.f32 %v8447, %v8572
    %v8574 = vand.u32 %v8573, 4294901760
    %v8575 = vsub.f32 %v8573, %v8574
    %v8576 = vand.u32 %v8575, 4294901760
    %8577 = vmatpush1.msra.mxu0 %v8576
    %8578 = vmatprep.subr.mxu0 0.0
    %8579 = vmatpush2.msra.mxu0 0.0
    %8580 = vmatprep.subr.mxu0 0.0
    %8581 = vmatpush2.msra.mxu0 0.0
    %8582 = vmatprep.subr.mxu0 0.0
    %8583 = vmatpush2.msra.mxu0 0.0
    %8584 = vmatprep.subr.mxu0 0.0
    %8585 = vmatpush2.msra.mxu0 0.0
    %8586 = vmatprep.subr.mxu0 0.0
    %8587 = vmatpush2.msra.mxu0 0.0
    %8588 = vmatprep.subr.mxu0 0.0
    %8589 = vmatpush2.msra.mxu0 0.0
    %8590 = vmatprep.subr.mxu0 0.0
    %8591 = vmatpush2.msra.mxu0 0.0
    %8592 = vmatprep.subr.mxu0 0.0
    %8593 = vmatpush2.msra.mxu0 0.0
    %8594 = vmatprep.subr.mxu0 0.0
    %8595 = vmatpush2.msra.mxu0 0.0
    %8596 = vmatprep.subr.mxu0 0.0
    %8597 = vmatpush2.msra.mxu0 0.0
    %8598 = vmatprep.subr.mxu0 0.0
    %8599 = vmatpush2.msra.mxu0 0.0
    %8600 = vmatprep.subr.mxu0 0.0
    %8601 = vmatpush2.msra.mxu0 0.0
    %8602 = vmatprep.subr.mxu0 0.0
    %8603 = vmatpush2.msra.mxu0 0.0
    %8604 = vmatprep.subr.mxu0 0.0
    %8605 = vmatpush2.msra.mxu0 0.0
    %8606 = vmatprep.subr.mxu0 0.0
    %8607 = vmatpush2.msra.mxu0 0.0
    %8608 = vmatprep.subr.mxu0 0.0
    %8609 = vmatpush2.msra.mxu0 0.0
    %8610 = vmatprep.mubr.f32.mxu0 0.0
    %v8611 = vand.u32 %v8450, 4294901760
    %8612 = vmatmul.mubr.f32.gmra.mxu0 %v8611
    %v8613 = vpop.f32.mrf.mxu0
    %v8614 = vadd.f32 %v8528, %v8613
    %v8615 = vpop.f32.mrf.mxu0
    %8616 = vmatprep.mubr.f32.mxu0 0.0
    %v8617 = vand.u32 %v8453, 4294901760
    %8618 = vmatmul.mubr.f32.gmra.mxu0 %v8617
    %v8619 = vpop.f32.mrf.mxu0
    %v8620 = vadd.f32 %v8538, %v8619
    %v8621 = vpop.f32.mrf.mxu0
    %8622 = vdwg.mxu0
    %8623 = vmatprep.subr.mxu0 0.0
    %8624 = vmatpush1.msra.mxu0 0.0
    %8625 = vmatprep.subr.mxu0 0.0
    %8626 = vmatpush1.msra.mxu0 0.0
    %8627 = vmatprep.subr.mxu0 0.0
    %8628 = vmatpush1.msra.mxu0 0.0
    %8629 = vmatprep.subr.mxu0 0.0
    %8630 = vmatpush1.msra.mxu0 0.0
    %8631 = vmatprep.subr.mxu0 0.0
    %8632 = vmatpush1.msra.mxu0 0.0
    %8633 = vmatprep.subr.mxu0 0.0
    %8634 = vmatpush1.msra.mxu0 0.0
    %8635 = vmatprep.subr.mxu0 0.0
    %8636 = vmatpush1.msra.mxu0 0.0
    %8637 = vmatprep.subr.mxu0 0.0
    %8638 = vmatpush1.msra.mxu0 0.0
    %8639 = vmatprep.subr.mxu0 0.0
    %8640 = vmatpush1.msra.mxu0 0.0
    %8641 = vmatprep.subr.mxu0 0.0
    %8642 = vmatpush1.msra.mxu0 0.0
    %8643 = vmatprep.subr.mxu0 0.0
    %8644 = vmatpush1.msra.mxu0 0.0
    %8645 = vmatprep.subr.mxu0 0.0
    %8646 = vmatpush1.msra.mxu0 0.0
    %8647 = vmatprep.subr.mxu0 0.0
    %8648 = vmatpush1.msra.mxu0 0.0
    %8649 = vmatprep.subr.mxu0 0.0
    %8650 = vmatpush1.msra.mxu0 0.0
    %8651 = vmatprep.subr.mxu0 0.0
    %8652 = vmatpush1.msra.mxu0 0.0
    %8653 = vmatprep.subr.mxu0 0.0
    %v8654 = vand.u32 %v8447, 4294901760
    %v8655 = vsub.f32 %v8447, %v8654
    %8656 = vmatpush1.msra.mxu0 %v8655
    %8657 = vmatprep.subr.mxu0 0.0
    %8658 = vmatpush2.msra.mxu0 0.0
    %8659 = vmatprep.subr.mxu0 0.0
    %8660 = vmatpush2.msra.mxu0 0.0
    %8661 = vmatprep.subr.mxu0 0.0
    %8662 = vmatpush2.msra.mxu0 0.0
    %8663 = vmatprep.subr.mxu0 0.0
    %8664 = vmatpush2.msra.mxu0 0.0
    %8665 = vmatprep.subr.mxu0 0.0
    %8666 = vmatpush2.msra.mxu0 0.0
    %8667 = vmatprep.subr.mxu0 0.0
    %8668 = vmatpush2.msra.mxu0 0.0
    %8669 = vmatprep.subr.mxu0 0.0
    %8670 = vmatpush2.msra.mxu0 0.0
    %8671 = vmatprep.subr.mxu0 0.0
    %8672 = vmatpush2.msra.mxu0 0.0
    %8673 = vmatprep.subr.mxu0 0.0
    %8674 = vmatpush2.msra.mxu0 0.0
    %8675 = vmatprep.subr.mxu0 0.0
    %8676 = vmatpush2.msra.mxu0 0.0
    %8677 = vmatprep.subr.mxu0 0.0
    %8678 = vmatpush2.msra.mxu0 0.0
    %8679 = vmatprep.subr.mxu0 0.0
    %8680 = vmatpush2.msra.mxu0 0.0
    %8681 = vmatprep.subr.mxu0 0.0
    %8682 = vmatpush2.msra.mxu0 0.0
    %8683 = vmatprep.subr.mxu0 0.0
    %8684 = vmatpush2.msra.mxu0 0.0
    %8685 = vmatprep.subr.mxu0 0.0
    %8686 = vmatpush2.msra.mxu0 0.0
    %8687 = vmatprep.subr.mxu0 0.0
    %8688 = vmatpush2.msra.mxu0 0.0
    %8689 = vmatprep.mubr.f32.mxu0 0.0
    %v8690 = vand.u32 %v8450, 4294901760
    %v8691 = vsub.f32 %v8450, %v8690
    %8692 = vmatmul.mubr.f32.gmra.mxu0 %v8691
    %v8693 = vpop.f32.mrf.mxu0
    %v8694 = vadd.f32 %v8614, %v8693
    %v8695 = vpop.f32.mrf.mxu0
    %8696 = vmatprep.mubr.f32.mxu0 0.0
    %v8697 = vand.u32 %v8453, 4294901760
    %v8698 = vsub.f32 %v8453, %v8697
    %8699 = vmatmul.mubr.f32.gmra.mxu0 %v8698
    %v8700 = vpop.f32.mrf.mxu0
    %v8701 = vadd.f32 %v8620, %v8700
    %v8702 = vpop.f32.mrf.mxu0
    %8703 = vdwg.mxu0
    %8704 = vmatprep.subr.mxu0 0.0
    %8705 = vmatpush1.msra.mxu0 0.0
    %8706 = vmatprep.subr.mxu0 0.0
    %8707 = vmatpush1.msra.mxu0 0.0
    %8708 = vmatprep.subr.mxu0 0.0
    %8709 = vmatpush1.msra.mxu0 0.0
    %8710 = vmatprep.subr.mxu0 0.0
    %8711 = vmatpush1.msra.mxu0 0.0
    %8712 = vmatprep.subr.mxu0 0.0
    %8713 = vmatpush1.msra.mxu0 0.0
    %8714 = vmatprep.subr.mxu0 0.0
    %8715 = vmatpush1.msra.mxu0 0.0
    %8716 = vmatprep.subr.mxu0 0.0
    %8717 = vmatpush1.msra.mxu0 0.0
    %8718 = vmatprep.subr.mxu0 0.0
    %8719 = vmatpush1.msra.mxu0 0.0
    %8720 = vmatprep.subr.mxu0 0.0
    %8721 = vmatpush1.msra.mxu0 0.0
    %8722 = vmatprep.subr.mxu0 0.0
    %8723 = vmatpush1.msra.mxu0 0.0
    %8724 = vmatprep.subr.mxu0 0.0
    %8725 = vmatpush1.msra.mxu0 0.0
    %8726 = vmatprep.subr.mxu0 0.0
    %8727 = vmatpush1.msra.mxu0 0.0
    %8728 = vmatprep.subr.mxu0 0.0
    %8729 = vmatpush1.msra.mxu0 0.0
    %8730 = vmatprep.subr.mxu0 0.0
    %8731 = vmatpush1.msra.mxu0 0.0
    %8732 = vmatprep.subr.mxu0 0.0
    %8733 = vmatpush1.msra.mxu0 0.0
    %8734 = vmatprep.subr.mxu0 0.0
    %v8735 = vand.u32 %v8447, 4294901760
    %8736 = vmatpush1.msra.mxu0 %v8735
    %8737 = vmatprep.subr.mxu0 0.0
    %8738 = vmatpush2.msra.mxu0 0.0
    %8739 = vmatprep.subr.mxu0 0.0
    %8740 = vmatpush2.msra.mxu0 0.0
    %8741 = vmatprep.subr.mxu0 0.0
    %8742 = vmatpush2.msra.mxu0 0.0
    %8743 = vmatprep.subr.mxu0 0.0
    %8744 = vmatpush2.msra.mxu0 0.0
    %8745 = vmatprep.subr.mxu0 0.0
    %8746 = vmatpush2.msra.mxu0 0.0
    %8747 = vmatprep.subr.mxu0 0.0
    %8748 = vmatpush2.msra.mxu0 0.0
    %8749 = vmatprep.subr.mxu0 0.0
    %8750 = vmatpush2.msra.mxu0 0.0
    %8751 = vmatprep.subr.mxu0 0.0
    %8752 = vmatpush2.msra.mxu0 0.0
    %8753 = vmatprep.subr.mxu0 0.0
    %8754 = vmatpush2.msra.mxu0 0.0
    %8755 = vmatprep.subr.mxu0 0.0
    %8756 = vmatpush2.msra.mxu0 0.0
    %8757 = vmatprep.subr.mxu0 0.0
    %8758 = vmatpush2.msra.mxu0 0.0
    %8759 = vmatprep.subr.mxu0 0.0
    %8760 = vmatpush2.msra.mxu0 0.0
    %8761 = vmatprep.subr.mxu0 0.0
    %8762 = vmatpush2.msra.mxu0 0.0
    %8763 = vmatprep.subr.mxu0 0.0
    %8764 = vmatpush2.msra.mxu0 0.0
    %8765 = vmatprep.subr.mxu0 0.0
    %8766 = vmatpush2.msra.mxu0 0.0
    %8767 = vmatprep.subr.mxu0 0.0
    %8768 = vmatpush2.msra.mxu0 0.0
    %8769 = vmatprep.mubr.f32.mxu0 0.0
    %v8770 = vand.u32 %v8450, 4294901760
    %v8771 = vsub.f32 %v8450, %v8770
    %v8772 = vand.u32 %v8771, 4294901760
    %8773 = vmatmul.mubr.f32.gmra.mxu0 %v8772
    %v8774 = vpop.f32.mrf.mxu0
    %v8775 = vadd.f32 %v8694, %v8774
    %v8776 = vpop.f32.mrf.mxu0
    %8777 = vmatprep.mubr.f32.mxu0 0.0
    %v8778 = vand.u32 %v8453, 4294901760
    %v8779 = vsub.f32 %v8453, %v8778
    %v8780 = vand.u32 %v8779, 4294901760
    %8781 = vmatmul.mubr.f32.gmra.mxu0 %v8780
    %v8782 = vpop.f32.mrf.mxu0
    %v8783 = vadd.f32 %v8701, %v8782
    %v8784 = vpop.f32.mrf.mxu0
    %8785 = vdwg.mxu0
    %8786 = vmatprep.subr.mxu0 0.0
    %8787 = vmatpush1.msra.mxu0 0.0
    %8788 = vmatprep.subr.mxu0 0.0
    %8789 = vmatpush1.msra.mxu0 0.0
    %8790 = vmatprep.subr.mxu0 0.0
    %8791 = vmatpush1.msra.mxu0 0.0
    %8792 = vmatprep.subr.mxu0 0.0
    %8793 = vmatpush1.msra.mxu0 0.0
    %8794 = vmatprep.subr.mxu0 0.0
    %8795 = vmatpush1.msra.mxu0 0.0
    %8796 = vmatprep.subr.mxu0 0.0
    %8797 = vmatpush1.msra.mxu0 0.0
    %8798 = vmatprep.subr.mxu0 0.0
    %8799 = vmatpush1.msra.mxu0 0.0
    %8800 = vmatprep.subr.mxu0 0.0
    %8801 = vmatpush1.msra.mxu0 0.0
    %8802 = vmatprep.subr.mxu0 0.0
    %8803 = vmatpush1.msra.mxu0 0.0
    %8804 = vmatprep.subr.mxu0 0.0
    %8805 = vmatpush1.msra.mxu0 0.0
    %8806 = vmatprep.subr.mxu0 0.0
    %8807 = vmatpush1.msra.mxu0 0.0
    %8808 = vmatprep.subr.mxu0 0.0
    %8809 = vmatpush1.msra.mxu0 0.0
    %8810 = vmatprep.subr.mxu0 0.0
    %8811 = vmatpush1.msra.mxu0 0.0
    %8812 = vmatprep.subr.mxu0 0.0
    %8813 = vmatpush1.msra.mxu0 0.0
    %8814 = vmatprep.subr.mxu0 0.0
    %8815 = vmatpush1.msra.mxu0 0.0
    %8816 = vmatprep.subr.mxu0 0.0
    %v8817 = vand.u32 %v8447, 4294901760
    %v8818 = vsub.f32 %v8447, %v8817
    %v8819 = vand.u32 %v8818, 4294901760
    %8820 = vmatpush1.msra.mxu0 %v8819
    %8821 = vmatprep.subr.mxu0 0.0
    %8822 = vmatpush2.msra.mxu0 0.0
    %8823 = vmatprep.subr.mxu0 0.0
    %8824 = vmatpush2.msra.mxu0 0.0
    %8825 = vmatprep.subr.mxu0 0.0
    %8826 = vmatpush2.msra.mxu0 0.0
    %8827 = vmatprep.subr.mxu0 0.0
    %8828 = vmatpush2.msra.mxu0 0.0
    %8829 = vmatprep.subr.mxu0 0.0
    %8830 = vmatpush2.msra.mxu0 0.0
    %8831 = vmatprep.subr.mxu0 0.0
    %8832 = vmatpush2.msra.mxu0 0.0
    %8833 = vmatprep.subr.mxu0 0.0
    %8834 = vmatpush2.msra.mxu0 0.0
    %8835 = vmatprep.subr.mxu0 0.0
    %8836 = vmatpush2.msra.mxu0 0.0
    %8837 = vmatprep.subr.mxu0 0.0
    %8838 = vmatpush2.msra.mxu0 0.0
    %8839 = vmatprep.subr.mxu0 0.0
    %8840 = vmatpush2.msra.mxu0 0.0
    %8841 = vmatprep.subr.mxu0 0.0
    %8842 = vmatpush2.msra.mxu0 0.0
    %8843 = vmatprep.subr.mxu0 0.0
    %8844 = vmatpush2.msra.mxu0 0.0
    %8845 = vmatprep.subr.mxu0 0.0
    %8846 = vmatpush2.msra.mxu0 0.0
    %8847 = vmatprep.subr.mxu0 0.0
    %8848 = vmatpush2.msra.mxu0 0.0
    %8849 = vmatprep.subr.mxu0 0.0
    %8850 = vmatpush2.msra.mxu0 0.0
    %8851 = vmatprep.subr.mxu0 0.0
    %8852 = vmatpush2.msra.mxu0 0.0
    %8853 = vmatprep.mubr.f32.mxu0 0.0
    %v8854 = vand.u32 %v8450, 4294901760
    %8855 = vmatmul.mubr.f32.gmra.mxu0 %v8854
    %v8856 = vpop.f32.mrf.mxu0
    %v8857 = vadd.f32 %v8775, %v8856
    %v8858 = vpop.f32.mrf.mxu0
    %8859 = vmatprep.mubr.f32.mxu0 0.0
    %v8860 = vand.u32 %v8453, 4294901760
    %8861 = vmatmul.mubr.f32.gmra.mxu0 %v8860
    %v8862 = vpop.f32.mrf.mxu0
    %v8863 = vadd.f32 %v8783, %v8862
    %v8864 = vpop.f32.mrf.mxu0
    %8865 = vdwg.mxu0
    %8866 = vmatprep.subr.mxu0 0.0
    %8867 = vmatpush1.msra.mxu0 0.0
    %8868 = vmatprep.subr.mxu0 0.0
    %8869 = vmatpush1.msra.mxu0 0.0
    %8870 = vmatprep.subr.mxu0 0.0
    %8871 = vmatpush1.msra.mxu0 0.0
    %8872 = vmatprep.subr.mxu0 0.0
    %8873 = vmatpush1.msra.mxu0 0.0
    %8874 = vmatprep.subr.mxu0 0.0
    %8875 = vmatpush1.msra.mxu0 0.0
    %8876 = vmatprep.subr.mxu0 0.0
    %8877 = vmatpush1.msra.mxu0 0.0
    %8878 = vmatprep.subr.mxu0 0.0
    %8879 = vmatpush1.msra.mxu0 0.0
    %8880 = vmatprep.subr.mxu0 0.0
    %8881 = vmatpush1.msra.mxu0 0.0
    %8882 = vmatprep.subr.mxu0 0.0
    %8883 = vmatpush1.msra.mxu0 0.0
    %8884 = vmatprep.subr.mxu0 0.0
    %8885 = vmatpush1.msra.mxu0 0.0
    %8886 = vmatprep.subr.mxu0 0.0
    %8887 = vmatpush1.msra.mxu0 0.0
    %8888 = vmatprep.subr.mxu0 0.0
    %8889 = vmatpush1.msra.mxu0 0.0
    %8890 = vmatprep.subr.mxu0 0.0
    %8891 = vmatpush1.msra.mxu0 0.0
    %8892 = vmatprep.subr.mxu0 0.0
    %8893 = vmatpush1.msra.mxu0 0.0
    %8894 = vmatprep.subr.mxu0 0.0
    %8895 = vmatpush1.msra.mxu0 0.0
    %8896 = vmatprep.subr.mxu0 0.0
    %v8897 = vand.u32 %v8447, 4294901760
    %8898 = vmatpush1.msra.mxu0 %v8897
    %8899 = vmatprep.subr.mxu0 0.0
    %8900 = vmatpush2.msra.mxu0 0.0
    %8901 = vmatprep.subr.mxu0 0.0
    %8902 = vmatpush2.msra.mxu0 0.0
    %8903 = vmatprep.subr.mxu0 0.0
    %8904 = vmatpush2.msra.mxu0 0.0
    %8905 = vmatprep.subr.mxu0 0.0
    %8906 = vmatpush2.msra.mxu0 0.0
    %8907 = vmatprep.subr.mxu0 0.0
    %8908 = vmatpush2.msra.mxu0 0.0
    %8909 = vmatprep.subr.mxu0 0.0
    %8910 = vmatpush2.msra.mxu0 0.0
    %8911 = vmatprep.subr.mxu0 0.0
    %8912 = vmatpush2.msra.mxu0 0.0
    %8913 = vmatprep.subr.mxu0 0.0
    %8914 = vmatpush2.msra.mxu0 0.0
    %8915 = vmatprep.subr.mxu0 0.0
    %8916 = vmatpush2.msra.mxu0 0.0
    %8917 = vmatprep.subr.mxu0 0.0
    %8918 = vmatpush2.msra.mxu0 0.0
    %8919 = vmatprep.subr.mxu0 0.0
    %8920 = vmatpush2.msra.mxu0 0.0
    %8921 = vmatprep.subr.mxu0 0.0
    %8922 = vmatpush2.msra.mxu0 0.0
    %8923 = vmatprep.subr.mxu0 0.0
    %8924 = vmatpush2.msra.mxu0 0.0
    %8925 = vmatprep.subr.mxu0 0.0
    %8926 = vmatpush2.msra.mxu0 0.0
    %8927 = vmatprep.subr.mxu0 0.0
    %8928 = vmatpush2.msra.mxu0 0.0
    %8929 = vmatprep.subr.mxu0 0.0
    %8930 = vmatpush2.msra.mxu0 0.0
    %8931 = vmatprep.mubr.f32.mxu0 0.0
    %v8932 = vand.u32 %v8450, 4294901760
    %8933 = vmatmul.mubr.f32.gmra.mxu0 %v8932
    %v8934 = vpop.f32.mrf.mxu0
    %v8935 = vadd.f32 %v8857, %v8934
    %v8936 = vpop.f32.mrf.mxu0
    %8937 = vmatprep.mubr.f32.mxu0 0.0
    %v8938 = vand.u32 %v8453, 4294901760
    %8939 = vmatmul.mubr.f32.gmra.mxu0 %v8938
    %v8940 = vpop.f32.mrf.mxu0
    %v8941 = vadd.f32 %v8863, %v8940
    %v8942 = vpop.f32.mrf.mxu0
    %8943 = vdwg.mxu0
    %8946 = vrot.lane.b32.xlu0 %v8935, 96
    %v8947 = vpop.permute.xlu0 %8946
    %8948 = vrot.lane.b32.xlu0 %v8941, 96
    %v8949 = vpop.permute.xlu0 %8948
    %v8952 = vadd.f32 %v8443, %v8947
    %v8953 = vadd.f32 %v8444, %v8949
    %8955 = vrot.lane.b32.xlu0 %v44, 32
    %v8956 = vpop.permute.xlu0 %8955
    %v8959 = vsel %vm607, %v6577, 0
    %v8962 = vsel %vm607, %v7029, 0
    %8964 = vmatprep.subr.mxu0 0.0
    %8965 = vmatpush1.msra.mxu0 0.0
    %8966 = vmatprep.subr.mxu0 0.0
    %8967 = vmatpush1.msra.mxu0 0.0
    %8968 = vmatprep.subr.mxu0 0.0
    %8969 = vmatpush1.msra.mxu0 0.0
    %8970 = vmatprep.subr.mxu0 0.0
    %8971 = vmatpush1.msra.mxu0 0.0
    %8972 = vmatprep.subr.mxu0 0.0
    %8973 = vmatpush1.msra.mxu0 0.0
    %8974 = vmatprep.subr.mxu0 0.0
    %8975 = vmatpush1.msra.mxu0 0.0
    %8976 = vmatprep.subr.mxu0 0.0
    %8977 = vmatpush1.msra.mxu0 0.0
    %8978 = vmatprep.subr.mxu0 0.0
    %8979 = vmatpush1.msra.mxu0 0.0
    %8980 = vmatprep.subr.mxu0 0.0
    %8981 = vmatpush1.msra.mxu0 0.0
    %8982 = vmatprep.subr.mxu0 0.0
    %8983 = vmatpush1.msra.mxu0 0.0
    %8984 = vmatprep.subr.mxu0 0.0
    %8985 = vmatpush1.msra.mxu0 0.0
    %8986 = vmatprep.subr.mxu0 0.0
    %8987 = vmatpush1.msra.mxu0 0.0
    %8988 = vmatprep.subr.mxu0 0.0
    %8989 = vmatpush1.msra.mxu0 0.0
    %8990 = vmatprep.subr.mxu0 0.0
    %8991 = vmatpush1.msra.mxu0 0.0
    %8992 = vmatprep.subr.mxu0 0.0
    %8993 = vmatpush1.msra.mxu0 0.0
    %8994 = vmatprep.subr.mxu0 0.0
    %v8995 = vand.u32 %v8956, 4294901760
    %8996 = vmatpush1.msra.mxu0 %v8995
    %8997 = vmatprep.subr.mxu0 0.0
    %8998 = vmatpush2.msra.mxu0 0.0
    %8999 = vmatprep.subr.mxu0 0.0
    %9000 = vmatpush2.msra.mxu0 0.0
    %9001 = vmatprep.subr.mxu0 0.0
    %9002 = vmatpush2.msra.mxu0 0.0
    %9003 = vmatprep.subr.mxu0 0.0
    %9004 = vmatpush2.msra.mxu0 0.0
    %9005 = vmatprep.subr.mxu0 0.0
    %9006 = vmatpush2.msra.mxu0 0.0
    %9007 = vmatprep.subr.mxu0 0.0
    %9008 = vmatpush2.msra.mxu0 0.0
    %9009 = vmatprep.subr.mxu0 0.0
    %9010 = vmatpush2.msra.mxu0 0.0
    %9011 = vmatprep.subr.mxu0 0.0
    %9012 = vmatpush2.msra.mxu0 0.0
    %9013 = vmatprep.subr.mxu0 0.0
    %9014 = vmatpush2.msra.mxu0 0.0
    %9015 = vmatprep.subr.mxu0 0.0
    %9016 = vmatpush2.msra.mxu0 0.0
    %9017 = vmatprep.subr.mxu0 0.0
    %9018 = vmatpush2.msra.mxu0 0.0
    %9019 = vmatprep.subr.mxu0 0.0
    %9020 = vmatpush2.msra.mxu0 0.0
    %9021 = vmatprep.subr.mxu0 0.0
    %9022 = vmatpush2.msra.mxu0 0.0
    %9023 = vmatprep.subr.mxu0 0.0
    %9024 = vmatpush2.msra.mxu0 0.0
    %9025 = vmatprep.subr.mxu0 0.0
    %9026 = vmatpush2.msra.mxu0 0.0
    %9027 = vmatprep.subr.mxu0 0.0
    %9028 = vmatpush2.msra.mxu0 0.0
    %9029 = vmatprep.mubr.f32.mxu0 0.0
    %v9030 = vand.u32 %v8959, 4294901760
    %v9031 = vsub.f32 %v8959, %v9030
    %v9032 = vand.u32 %v9031, 4294901760
    %v9033 = vsub.f32 %v9031, %v9032
    %v9034 = vand.u32 %v9033, 4294901760
    %9035 = vmatmul.mubr.f32.gmra.mxu0 %v9034
    %v9036 = vpop.f32.mrf.mxu0
    %v9037 = vadd.f32 0.0, %v9036
    %v9038 = vpop.f32.mrf.mxu0
    %9039 = vmatprep.mubr.f32.mxu0 0.0
    %v9040 = vand.u32 %v8962, 4294901760
    %v9041 = vsub.f32 %v8962, %v9040
    %v9042 = vand.u32 %v9041, 4294901760
    %v9043 = vsub.f32 %v9041, %v9042
    %v9044 = vand.u32 %v9043, 4294901760
    %9045 = vmatmul.mubr.f32.gmra.mxu0 %v9044
    %v9046 = vpop.f32.mrf.mxu0
    %v9047 = vadd.f32 0.0, %v9046
    %v9048 = vpop.f32.mrf.mxu0
    %9049 = vdwg.mxu0
    %9050 = vmatprep.subr.mxu0 0.0
    %9051 = vmatpush1.msra.mxu0 0.0
    %9052 = vmatprep.subr.mxu0 0.0
    %9053 = vmatpush1.msra.mxu0 0.0
    %9054 = vmatprep.subr.mxu0 0.0
    %9055 = vmatpush1.msra.mxu0 0.0
    %9056 = vmatprep.subr.mxu0 0.0
    %9057 = vmatpush1.msra.mxu0 0.0
    %9058 = vmatprep.subr.mxu0 0.0
    %9059 = vmatpush1.msra.mxu0 0.0
    %9060 = vmatprep.subr.mxu0 0.0
    %9061 = vmatpush1.msra.mxu0 0.0
    %9062 = vmatprep.subr.mxu0 0.0
    %9063 = vmatpush1.msra.mxu0 0.0
    %9064 = vmatprep.subr.mxu0 0.0
    %9065 = vmatpush1.msra.mxu0 0.0
    %9066 = vmatprep.subr.mxu0 0.0
    %9067 = vmatpush1.msra.mxu0 0.0
    %9068 = vmatprep.subr.mxu0 0.0
    %9069 = vmatpush1.msra.mxu0 0.0
    %9070 = vmatprep.subr.mxu0 0.0
    %9071 = vmatpush1.msra.mxu0 0.0
    %9072 = vmatprep.subr.mxu0 0.0
    %9073 = vmatpush1.msra.mxu0 0.0
    %9074 = vmatprep.subr.mxu0 0.0
    %9075 = vmatpush1.msra.mxu0 0.0
    %9076 = vmatprep.subr.mxu0 0.0
    %9077 = vmatpush1.msra.mxu0 0.0
    %9078 = vmatprep.subr.mxu0 0.0
    %9079 = vmatpush1.msra.mxu0 0.0
    %9080 = vmatprep.subr.mxu0 0.0
    %v9081 = vand.u32 %v8956, 4294901760
    %v9082 = vsub.f32 %v8956, %v9081
    %v9083 = vand.u32 %v9082, 4294901760
    %v9084 = vsub.f32 %v9082, %v9083
    %v9085 = vand.u32 %v9084, 4294901760
    %9086 = vmatpush1.msra.mxu0 %v9085
    %9087 = vmatprep.subr.mxu0 0.0
    %9088 = vmatpush2.msra.mxu0 0.0
    %9089 = vmatprep.subr.mxu0 0.0
    %9090 = vmatpush2.msra.mxu0 0.0
    %9091 = vmatprep.subr.mxu0 0.0
    %9092 = vmatpush2.msra.mxu0 0.0
    %9093 = vmatprep.subr.mxu0 0.0
    %9094 = vmatpush2.msra.mxu0 0.0
    %9095 = vmatprep.subr.mxu0 0.0
    %9096 = vmatpush2.msra.mxu0 0.0
    %9097 = vmatprep.subr.mxu0 0.0
    %9098 = vmatpush2.msra.mxu0 0.0
    %9099 = vmatprep.subr.mxu0 0.0
    %9100 = vmatpush2.msra.mxu0 0.0
    %9101 = vmatprep.subr.mxu0 0.0
    %9102 = vmatpush2.msra.mxu0 0.0
    %9103 = vmatprep.subr.mxu0 0.0
    %9104 = vmatpush2.msra.mxu0 0.0
    %9105 = vmatprep.subr.mxu0 0.0
    %9106 = vmatpush2.msra.mxu0 0.0
    %9107 = vmatprep.subr.mxu0 0.0
    %9108 = vmatpush2.msra.mxu0 0.0
    %9109 = vmatprep.subr.mxu0 0.0
    %9110 = vmatpush2.msra.mxu0 0.0
    %9111 = vmatprep.subr.mxu0 0.0
    %9112 = vmatpush2.msra.mxu0 0.0
    %9113 = vmatprep.subr.mxu0 0.0
    %9114 = vmatpush2.msra.mxu0 0.0
    %9115 = vmatprep.subr.mxu0 0.0
    %9116 = vmatpush2.msra.mxu0 0.0
    %9117 = vmatprep.subr.mxu0 0.0
    %9118 = vmatpush2.msra.mxu0 0.0
    %9119 = vmatprep.mubr.f32.mxu0 0.0
    %v9120 = vand.u32 %v8959, 4294901760
    %9121 = vmatmul.mubr.f32.gmra.mxu0 %v9120
    %v9122 = vpop.f32.mrf.mxu0
    %v9123 = vadd.f32 %v9037, %v9122
    %v9124 = vpop.f32.mrf.mxu0
    %9125 = vmatprep.mubr.f32.mxu0 0.0
    %v9126 = vand.u32 %v8962, 4294901760
    %9127 = vmatmul.mubr.f32.gmra.mxu0 %v9126
    %v9128 = vpop.f32.mrf.mxu0
    %v9129 = vadd.f32 %v9047, %v9128
    %v9130 = vpop.f32.mrf.mxu0
    %9131 = vdwg.mxu0
    %9132 = vmatprep.subr.mxu0 0.0
    %9133 = vmatpush1.msra.mxu0 0.0
    %9134 = vmatprep.subr.mxu0 0.0
    %9135 = vmatpush1.msra.mxu0 0.0
    %9136 = vmatprep.subr.mxu0 0.0
    %9137 = vmatpush1.msra.mxu0 0.0
    %9138 = vmatprep.subr.mxu0 0.0
    %9139 = vmatpush1.msra.mxu0 0.0
    %9140 = vmatprep.subr.mxu0 0.0
    %9141 = vmatpush1.msra.mxu0 0.0
    %9142 = vmatprep.subr.mxu0 0.0
    %9143 = vmatpush1.msra.mxu0 0.0
    %9144 = vmatprep.subr.mxu0 0.0
    %9145 = vmatpush1.msra.mxu0 0.0
    %9146 = vmatprep.subr.mxu0 0.0
    %9147 = vmatpush1.msra.mxu0 0.0
    %9148 = vmatprep.subr.mxu0 0.0
    %9149 = vmatpush1.msra.mxu0 0.0
    %9150 = vmatprep.subr.mxu0 0.0
    %9151 = vmatpush1.msra.mxu0 0.0
    %9152 = vmatprep.subr.mxu0 0.0
    %9153 = vmatpush1.msra.mxu0 0.0
    %9154 = vmatprep.subr.mxu0 0.0
    %9155 = vmatpush1.msra.mxu0 0.0
    %9156 = vmatprep.subr.mxu0 0.0
    %9157 = vmatpush1.msra.mxu0 0.0
    %9158 = vmatprep.subr.mxu0 0.0
    %9159 = vmatpush1.msra.mxu0 0.0
    %9160 = vmatprep.subr.mxu0 0.0
    %9161 = vmatpush1.msra.mxu0 0.0
    %9162 = vmatprep.subr.mxu0 0.0
    %v9163 = vand.u32 %v8956, 4294901760
    %v9164 = vsub.f32 %v8956, %v9163
    %9165 = vmatpush1.msra.mxu0 %v9164
    %9166 = vmatprep.subr.mxu0 0.0
    %9167 = vmatpush2.msra.mxu0 0.0
    %9168 = vmatprep.subr.mxu0 0.0
    %9169 = vmatpush2.msra.mxu0 0.0
    %9170 = vmatprep.subr.mxu0 0.0
    %9171 = vmatpush2.msra.mxu0 0.0
    %9172 = vmatprep.subr.mxu0 0.0
    %9173 = vmatpush2.msra.mxu0 0.0
    %9174 = vmatprep.subr.mxu0 0.0
    %9175 = vmatpush2.msra.mxu0 0.0
    %9176 = vmatprep.subr.mxu0 0.0
    %9177 = vmatpush2.msra.mxu0 0.0
    %9178 = vmatprep.subr.mxu0 0.0
    %9179 = vmatpush2.msra.mxu0 0.0
    %9180 = vmatprep.subr.mxu0 0.0
    %9181 = vmatpush2.msra.mxu0 0.0
    %9182 = vmatprep.subr.mxu0 0.0
    %9183 = vmatpush2.msra.mxu0 0.0
    %9184 = vmatprep.subr.mxu0 0.0
    %9185 = vmatpush2.msra.mxu0 0.0
    %9186 = vmatprep.subr.mxu0 0.0
    %9187 = vmatpush2.msra.mxu0 0.0
    %9188 = vmatprep.subr.mxu0 0.0
    %9189 = vmatpush2.msra.mxu0 0.0
    %9190 = vmatprep.subr.mxu0 0.0
    %9191 = vmatpush2.msra.mxu0 0.0
    %9192 = vmatprep.subr.mxu0 0.0
    %9193 = vmatpush2.msra.mxu0 0.0
    %9194 = vmatprep.subr.mxu0 0.0
    %9195 = vmatpush2.msra.mxu0 0.0
    %9196 = vmatprep.subr.mxu0 0.0
    %9197 = vmatpush2.msra.mxu0 0.0
    %9198 = vmatprep.mubr.f32.mxu0 0.0
    %v9199 = vand.u32 %v8959, 4294901760
    %v9200 = vsub.f32 %v8959, %v9199
    %9201 = vmatmul.mubr.f32.gmra.mxu0 %v9200
    %v9202 = vpop.f32.mrf.mxu0
    %v9203 = vadd.f32 %v9123, %v9202
    %v9204 = vpop.f32.mrf.mxu0
    %9205 = vmatprep.mubr.f32.mxu0 0.0
    %v9206 = vand.u32 %v8962, 4294901760
    %v9207 = vsub.f32 %v8962, %v9206
    %9208 = vmatmul.mubr.f32.gmra.mxu0 %v9207
    %v9209 = vpop.f32.mrf.mxu0
    %v9210 = vadd.f32 %v9129, %v9209
    %v9211 = vpop.f32.mrf.mxu0
    %9212 = vdwg.mxu0
    %9213 = vmatprep.subr.mxu0 0.0
    %9214 = vmatpush1.msra.mxu0 0.0
    %9215 = vmatprep.subr.mxu0 0.0
    %9216 = vmatpush1.msra.mxu0 0.0
    %9217 = vmatprep.subr.mxu0 0.0
    %9218 = vmatpush1.msra.mxu0 0.0
    %9219 = vmatprep.subr.mxu0 0.0
    %9220 = vmatpush1.msra.mxu0 0.0
    %9221 = vmatprep.subr.mxu0 0.0
    %9222 = vmatpush1.msra.mxu0 0.0
    %9223 = vmatprep.subr.mxu0 0.0
    %9224 = vmatpush1.msra.mxu0 0.0
    %9225 = vmatprep.subr.mxu0 0.0
    %9226 = vmatpush1.msra.mxu0 0.0
    %9227 = vmatprep.subr.mxu0 0.0
    %9228 = vmatpush1.msra.mxu0 0.0
    %9229 = vmatprep.subr.mxu0 0.0
    %9230 = vmatpush1.msra.mxu0 0.0
    %9231 = vmatprep.subr.mxu0 0.0
    %9232 = vmatpush1.msra.mxu0 0.0
    %9233 = vmatprep.subr.mxu0 0.0
    %9234 = vmatpush1.msra.mxu0 0.0
    %9235 = vmatprep.subr.mxu0 0.0
    %9236 = vmatpush1.msra.mxu0 0.0
    %9237 = vmatprep.subr.mxu0 0.0
    %9238 = vmatpush1.msra.mxu0 0.0
    %9239 = vmatprep.subr.mxu0 0.0
    %9240 = vmatpush1.msra.mxu0 0.0
    %9241 = vmatprep.subr.mxu0 0.0
    %9242 = vmatpush1.msra.mxu0 0.0
    %9243 = vmatprep.subr.mxu0 0.0
    %v9244 = vand.u32 %v8956, 4294901760
    %9245 = vmatpush1.msra.mxu0 %v9244
    %9246 = vmatprep.subr.mxu0 0.0
    %9247 = vmatpush2.msra.mxu0 0.0
    %9248 = vmatprep.subr.mxu0 0.0
    %9249 = vmatpush2.msra.mxu0 0.0
    %9250 = vmatprep.subr.mxu0 0.0
    %9251 = vmatpush2.msra.mxu0 0.0
    %9252 = vmatprep.subr.mxu0 0.0
    %9253 = vmatpush2.msra.mxu0 0.0
    %9254 = vmatprep.subr.mxu0 0.0
    %9255 = vmatpush2.msra.mxu0 0.0
    %9256 = vmatprep.subr.mxu0 0.0
    %9257 = vmatpush2.msra.mxu0 0.0
    %9258 = vmatprep.subr.mxu0 0.0
    %9259 = vmatpush2.msra.mxu0 0.0
    %9260 = vmatprep.subr.mxu0 0.0
    %9261 = vmatpush2.msra.mxu0 0.0
    %9262 = vmatprep.subr.mxu0 0.0
    %9263 = vmatpush2.msra.mxu0 0.0
    %9264 = vmatprep.subr.mxu0 0.0
    %9265 = vmatpush2.msra.mxu0 0.0
    %9266 = vmatprep.subr.mxu0 0.0
    %9267 = vmatpush2.msra.mxu0 0.0
    %9268 = vmatprep.subr.mxu0 0.0
    %9269 = vmatpush2.msra.mxu0 0.0
    %9270 = vmatprep.subr.mxu0 0.0
    %9271 = vmatpush2.msra.mxu0 0.0
    %9272 = vmatprep.subr.mxu0 0.0
    %9273 = vmatpush2.msra.mxu0 0.0
    %9274 = vmatprep.subr.mxu0 0.0
    %9275 = vmatpush2.msra.mxu0 0.0
    %9276 = vmatprep.subr.mxu0 0.0
    %9277 = vmatpush2.msra.mxu0 0.0
    %9278 = vmatprep.mubr.f32.mxu0 0.0
    %v9279 = vand.u32 %v8959, 4294901760
    %v9280 = vsub.f32 %v8959, %v9279
    %v9281 = vand.u32 %v9280, 4294901760
    %9282 = vmatmul.mubr.f32.gmra.mxu0 %v9281
    %v9283 = vpop.f32.mrf.mxu0
    %v9284 = vadd.f32 %v9203, %v9283
    %v9285 = vpop.f32.mrf.mxu0
    %9286 = vmatprep.mubr.f32.mxu0 0.0
    %v9287 = vand.u32 %v8962, 4294901760
    %v9288 = vsub.f32 %v8962, %v9287
    %v9289 = vand.u32 %v9288, 4294901760
    %9290 = vmatmul.mubr.f32.gmra.mxu0 %v9289
    %v9291 = vpop.f32.mrf.mxu0
    %v9292 = vadd.f32 %v9210, %v9291
    %v9293 = vpop.f32.mrf.mxu0
    %9294 = vdwg.mxu0
    %9295 = vmatprep.subr.mxu0 0.0
    %9296 = vmatpush1.msra.mxu0 0.0
    %9297 = vmatprep.subr.mxu0 0.0
    %9298 = vmatpush1.msra.mxu0 0.0
    %9299 = vmatprep.subr.mxu0 0.0
    %9300 = vmatpush1.msra.mxu0 0.0
    %9301 = vmatprep.subr.mxu0 0.0
    %9302 = vmatpush1.msra.mxu0 0.0
    %9303 = vmatprep.subr.mxu0 0.0
    %9304 = vmatpush1.msra.mxu0 0.0
    %9305 = vmatprep.subr.mxu0 0.0
    %9306 = vmatpush1.msra.mxu0 0.0
    %9307 = vmatprep.subr.mxu0 0.0
    %9308 = vmatpush1.msra.mxu0 0.0
    %9309 = vmatprep.subr.mxu0 0.0
    %9310 = vmatpush1.msra.mxu0 0.0
    %9311 = vmatprep.subr.mxu0 0.0
    %9312 = vmatpush1.msra.mxu0 0.0
    %9313 = vmatprep.subr.mxu0 0.0
    %9314 = vmatpush1.msra.mxu0 0.0
    %9315 = vmatprep.subr.mxu0 0.0
    %9316 = vmatpush1.msra.mxu0 0.0
    %9317 = vmatprep.subr.mxu0 0.0
    %9318 = vmatpush1.msra.mxu0 0.0
    %9319 = vmatprep.subr.mxu0 0.0
    %9320 = vmatpush1.msra.mxu0 0.0
    %9321 = vmatprep.subr.mxu0 0.0
    %9322 = vmatpush1.msra.mxu0 0.0
    %9323 = vmatprep.subr.mxu0 0.0
    %9324 = vmatpush1.msra.mxu0 0.0
    %9325 = vmatprep.subr.mxu0 0.0
    %v9326 = vand.u32 %v8956, 4294901760
    %v9327 = vsub.f32 %v8956, %v9326
    %v9328 = vand.u32 %v9327, 4294901760
    %9329 = vmatpush1.msra.mxu0 %v9328
    %9330 = vmatprep.subr.mxu0 0.0
    %9331 = vmatpush2.msra.mxu0 0.0
    %9332 = vmatprep.subr.mxu0 0.0
    %9333 = vmatpush2.msra.mxu0 0.0
    %9334 = vmatprep.subr.mxu0 0.0
    %9335 = vmatpush2.msra.mxu0 0.0
    %9336 = vmatprep.subr.mxu0 0.0
    %9337 = vmatpush2.msra.mxu0 0.0
    %9338 = vmatprep.subr.mxu0 0.0
    %9339 = vmatpush2.msra.mxu0 0.0
    %9340 = vmatprep.subr.mxu0 0.0
    %9341 = vmatpush2.msra.mxu0 0.0
    %9342 = vmatprep.subr.mxu0 0.0
    %9343 = vmatpush2.msra.mxu0 0.0
    %9344 = vmatprep.subr.mxu0 0.0
    %9345 = vmatpush2.msra.mxu0 0.0
    %9346 = vmatprep.subr.mxu0 0.0
    %9347 = vmatpush2.msra.mxu0 0.0
    %9348 = vmatprep.subr.mxu0 0.0
    %9349 = vmatpush2.msra.mxu0 0.0
    %9350 = vmatprep.subr.mxu0 0.0
    %9351 = vmatpush2.msra.mxu0 0.0
    %9352 = vmatprep.subr.mxu0 0.0
    %9353 = vmatpush2.msra.mxu0 0.0
    %9354 = vmatprep.subr.mxu0 0.0
    %9355 = vmatpush2.msra.mxu0 0.0
    %9356 = vmatprep.subr.mxu0 0.0
    %9357 = vmatpush2.msra.mxu0 0.0
    %9358 = vmatprep.subr.mxu0 0.0
    %9359 = vmatpush2.msra.mxu0 0.0
    %9360 = vmatprep.subr.mxu0 0.0
    %9361 = vmatpush2.msra.mxu0 0.0
    %9362 = vmatprep.mubr.f32.mxu0 0.0
    %v9363 = vand.u32 %v8959, 4294901760
    %9364 = vmatmul.mubr.f32.gmra.mxu0 %v9363
    %v9365 = vpop.f32.mrf.mxu0
    %v9366 = vadd.f32 %v9284, %v9365
    %v9367 = vpop.f32.mrf.mxu0
    %9368 = vmatprep.mubr.f32.mxu0 0.0
    %v9369 = vand.u32 %v8962, 4294901760
    %9370 = vmatmul.mubr.f32.gmra.mxu0 %v9369
    %v9371 = vpop.f32.mrf.mxu0
    %v9372 = vadd.f32 %v9292, %v9371
    %v9373 = vpop.f32.mrf.mxu0
    %9374 = vdwg.mxu0
    %9375 = vmatprep.subr.mxu0 0.0
    %9376 = vmatpush1.msra.mxu0 0.0
    %9377 = vmatprep.subr.mxu0 0.0
    %9378 = vmatpush1.msra.mxu0 0.0
    %9379 = vmatprep.subr.mxu0 0.0
    %9380 = vmatpush1.msra.mxu0 0.0
    %9381 = vmatprep.subr.mxu0 0.0
    %9382 = vmatpush1.msra.mxu0 0.0
    %9383 = vmatprep.subr.mxu0 0.0
    %9384 = vmatpush1.msra.mxu0 0.0
    %9385 = vmatprep.subr.mxu0 0.0
    %9386 = vmatpush1.msra.mxu0 0.0
    %9387 = vmatprep.subr.mxu0 0.0
    %9388 = vmatpush1.msra.mxu0 0.0
    %9389 = vmatprep.subr.mxu0 0.0
    %9390 = vmatpush1.msra.mxu0 0.0
    %9391 = vmatprep.subr.mxu0 0.0
    %9392 = vmatpush1.msra.mxu0 0.0
    %9393 = vmatprep.subr.mxu0 0.0
    %9394 = vmatpush1.msra.mxu0 0.0
    %9395 = vmatprep.subr.mxu0 0.0
    %9396 = vmatpush1.msra.mxu0 0.0
    %9397 = vmatprep.subr.mxu0 0.0
    %9398 = vmatpush1.msra.mxu0 0.0
    %9399 = vmatprep.subr.mxu0 0.0
    %9400 = vmatpush1.msra.mxu0 0.0
    %9401 = vmatprep.subr.mxu0 0.0
    %9402 = vmatpush1.msra.mxu0 0.0
    %9403 = vmatprep.subr.mxu0 0.0
    %9404 = vmatpush1.msra.mxu0 0.0
    %9405 = vmatprep.subr.mxu0 0.0
    %v9406 = vand.u32 %v8956, 4294901760
    %9407 = vmatpush1.msra.mxu0 %v9406
    %9408 = vmatprep.subr.mxu0 0.0
    %9409 = vmatpush2.msra.mxu0 0.0
    %9410 = vmatprep.subr.mxu0 0.0
    %9411 = vmatpush2.msra.mxu0 0.0
    %9412 = vmatprep.subr.mxu0 0.0
    %9413 = vmatpush2.msra.mxu0 0.0
    %9414 = vmatprep.subr.mxu0 0.0
    %9415 = vmatpush2.msra.mxu0 0.0
    %9416 = vmatprep.subr.mxu0 0.0
    %9417 = vmatpush2.msra.mxu0 0.0
    %9418 = vmatprep.subr.mxu0 0.0
    %9419 = vmatpush2.msra.mxu0 0.0
    %9420 = vmatprep.subr.mxu0 0.0
    %9421 = vmatpush2.msra.mxu0 0.0
    %9422 = vmatprep.subr.mxu0 0.0
    %9423 = vmatpush2.msra.mxu0 0.0
    %9424 = vmatprep.subr.mxu0 0.0
    %9425 = vmatpush2.msra.mxu0 0.0
    %9426 = vmatprep.subr.mxu0 0.0
    %9427 = vmatpush2.msra.mxu0 0.0
    %9428 = vmatprep.subr.mxu0 0.0
    %9429 = vmatpush2.msra.mxu0 0.0
    %9430 = vmatprep.subr.mxu0 0.0
    %9431 = vmatpush2.msra.mxu0 0.0
    %9432 = vmatprep.subr.mxu0 0.0
    %9433 = vmatpush2.msra.mxu0 0.0
    %9434 = vmatprep.subr.mxu0 0.0
    %9435 = vmatpush2.msra.mxu0 0.0
    %9436 = vmatprep.subr.mxu0 0.0
    %9437 = vmatpush2.msra.mxu0 0.0
    %9438 = vmatprep.subr.mxu0 0.0
    %9439 = vmatpush2.msra.mxu0 0.0
    %9440 = vmatprep.mubr.f32.mxu0 0.0
    %v9441 = vand.u32 %v8959, 4294901760
    %9442 = vmatmul.mubr.f32.gmra.mxu0 %v9441
    %v9443 = vpop.f32.mrf.mxu0
    %v9444 = vadd.f32 %v9366, %v9443
    %v9445 = vpop.f32.mrf.mxu0
    %9446 = vmatprep.mubr.f32.mxu0 0.0
    %v9447 = vand.u32 %v8962, 4294901760
    %9448 = vmatmul.mubr.f32.gmra.mxu0 %v9447
    %v9449 = vpop.f32.mrf.mxu0
    %v9450 = vadd.f32 %v9372, %v9449
    %v9451 = vpop.f32.mrf.mxu0
    %9452 = vdwg.mxu0
    %9455 = vrot.lane.b32.xlu0 %v9444, 96
    %v9456 = vpop.permute.xlu0 %9455
    %9457 = vrot.lane.b32.xlu0 %v9450, 96
    %v9458 = vpop.permute.xlu0 %9457
    %v9461 = vadd.f32 %v8952, %v9456
    %v9462 = vadd.f32 %v8953, %v9458
    %9464 = vrot.lane.b32.xlu0 %v45, 32
    %v9465 = vpop.permute.xlu0 %9464
    %v9468 = vsel %vm607, %v7481, 0
    %v9471 = vsel %vm607, %v7933, 0
    %9473 = vmatprep.subr.mxu0 0.0
    %9474 = vmatpush1.msra.mxu0 0.0
    %9475 = vmatprep.subr.mxu0 0.0
    %9476 = vmatpush1.msra.mxu0 0.0
    %9477 = vmatprep.subr.mxu0 0.0
    %9478 = vmatpush1.msra.mxu0 0.0
    %9479 = vmatprep.subr.mxu0 0.0
    %9480 = vmatpush1.msra.mxu0 0.0
    %9481 = vmatprep.subr.mxu0 0.0
    %9482 = vmatpush1.msra.mxu0 0.0
    %9483 = vmatprep.subr.mxu0 0.0
    %9484 = vmatpush1.msra.mxu0 0.0
    %9485 = vmatprep.subr.mxu0 0.0
    %9486 = vmatpush1.msra.mxu0 0.0
    %9487 = vmatprep.subr.mxu0 0.0
    %9488 = vmatpush1.msra.mxu0 0.0
    %9489 = vmatprep.subr.mxu0 0.0
    %9490 = vmatpush1.msra.mxu0 0.0
    %9491 = vmatprep.subr.mxu0 0.0
    %9492 = vmatpush1.msra.mxu0 0.0
    %9493 = vmatprep.subr.mxu0 0.0
    %9494 = vmatpush1.msra.mxu0 0.0
    %9495 = vmatprep.subr.mxu0 0.0
    %9496 = vmatpush1.msra.mxu0 0.0
    %9497 = vmatprep.subr.mxu0 0.0
    %9498 = vmatpush1.msra.mxu0 0.0
    %9499 = vmatprep.subr.mxu0 0.0
    %9500 = vmatpush1.msra.mxu0 0.0
    %9501 = vmatprep.subr.mxu0 0.0
    %9502 = vmatpush1.msra.mxu0 0.0
    %9503 = vmatprep.subr.mxu0 0.0
    %v9504 = vand.u32 %v9465, 4294901760
    %9505 = vmatpush1.msra.mxu0 %v9504
    %9506 = vmatprep.subr.mxu0 0.0
    %9507 = vmatpush2.msra.mxu0 0.0
    %9508 = vmatprep.subr.mxu0 0.0
    %9509 = vmatpush2.msra.mxu0 0.0
    %9510 = vmatprep.subr.mxu0 0.0
    %9511 = vmatpush2.msra.mxu0 0.0
    %9512 = vmatprep.subr.mxu0 0.0
    %9513 = vmatpush2.msra.mxu0 0.0
    %9514 = vmatprep.subr.mxu0 0.0
    %9515 = vmatpush2.msra.mxu0 0.0
    %9516 = vmatprep.subr.mxu0 0.0
    %9517 = vmatpush2.msra.mxu0 0.0
    %9518 = vmatprep.subr.mxu0 0.0
    %9519 = vmatpush2.msra.mxu0 0.0
    %9520 = vmatprep.subr.mxu0 0.0
    %9521 = vmatpush2.msra.mxu0 0.0
    %9522 = vmatprep.subr.mxu0 0.0
    %9523 = vmatpush2.msra.mxu0 0.0
    %9524 = vmatprep.subr.mxu0 0.0
    %9525 = vmatpush2.msra.mxu0 0.0
    %9526 = vmatprep.subr.mxu0 0.0
    %9527 = vmatpush2.msra.mxu0 0.0
    %9528 = vmatprep.subr.mxu0 0.0
    %9529 = vmatpush2.msra.mxu0 0.0
    %9530 = vmatprep.subr.mxu0 0.0
    %9531 = vmatpush2.msra.mxu0 0.0
    %9532 = vmatprep.subr.mxu0 0.0
    %9533 = vmatpush2.msra.mxu0 0.0
    %9534 = vmatprep.subr.mxu0 0.0
    %9535 = vmatpush2.msra.mxu0 0.0
    %9536 = vmatprep.subr.mxu0 0.0
    %9537 = vmatpush2.msra.mxu0 0.0
    %9538 = vmatprep.mubr.f32.mxu0 0.0
    %v9539 = vand.u32 %v9468, 4294901760
    %v9540 = vsub.f32 %v9468, %v9539
    %v9541 = vand.u32 %v9540, 4294901760
    %v9542 = vsub.f32 %v9540, %v9541
    %v9543 = vand.u32 %v9542, 4294901760
    %9544 = vmatmul.mubr.f32.gmra.mxu0 %v9543
    %v9545 = vpop.f32.mrf.mxu0
    %v9546 = vadd.f32 0.0, %v9545
    %v9547 = vpop.f32.mrf.mxu0
    %9548 = vmatprep.mubr.f32.mxu0 0.0
    %v9549 = vand.u32 %v9471, 4294901760
    %v9550 = vsub.f32 %v9471, %v9549
    %v9551 = vand.u32 %v9550, 4294901760
    %v9552 = vsub.f32 %v9550, %v9551
    %v9553 = vand.u32 %v9552, 4294901760
    %9554 = vmatmul.mubr.f32.gmra.mxu0 %v9553
    %v9555 = vpop.f32.mrf.mxu0
    %v9556 = vadd.f32 0.0, %v9555
    %v9557 = vpop.f32.mrf.mxu0
    %9558 = vdwg.mxu0
    %9559 = vmatprep.subr.mxu0 0.0
    %9560 = vmatpush1.msra.mxu0 0.0
    %9561 = vmatprep.subr.mxu0 0.0
    %9562 = vmatpush1.msra.mxu0 0.0
    %9563 = vmatprep.subr.mxu0 0.0
    %9564 = vmatpush1.msra.mxu0 0.0
    %9565 = vmatprep.subr.mxu0 0.0
    %9566 = vmatpush1.msra.mxu0 0.0
    %9567 = vmatprep.subr.mxu0 0.0
    %9568 = vmatpush1.msra.mxu0 0.0
    %9569 = vmatprep.subr.mxu0 0.0
    %9570 = vmatpush1.msra.mxu0 0.0
    %9571 = vmatprep.subr.mxu0 0.0
    %9572 = vmatpush1.msra.mxu0 0.0
    %9573 = vmatprep.subr.mxu0 0.0
    %9574 = vmatpush1.msra.mxu0 0.0
    %9575 = vmatprep.subr.mxu0 0.0
    %9576 = vmatpush1.msra.mxu0 0.0
    %9577 = vmatprep.subr.mxu0 0.0
    %9578 = vmatpush1.msra.mxu0 0.0
    %9579 = vmatprep.subr.mxu0 0.0
    %9580 = vmatpush1.msra.mxu0 0.0
    %9581 = vmatprep.subr.mxu0 0.0
    %9582 = vmatpush1.msra.mxu0 0.0
    %9583 = vmatprep.subr.mxu0 0.0
    %9584 = vmatpush1.msra.mxu0 0.0
    %9585 = vmatprep.subr.mxu0 0.0
    %9586 = vmatpush1.msra.mxu0 0.0
    %9587 = vmatprep.subr.mxu0 0.0
    %9588 = vmatpush1.msra.mxu0 0.0
    %9589 = vmatprep.subr.mxu0 0.0
    %v9590 = vand.u32 %v9465, 4294901760
    %v9591 = vsub.f32 %v9465, %v9590
    %v9592 = vand.u32 %v9591, 4294901760
    %v9593 = vsub.f32 %v9591, %v9592
    %v9594 = vand.u32 %v9593, 4294901760
    %9595 = vmatpush1.msra.mxu0 %v9594
    %9596 = vmatprep.subr.mxu0 0.0
    %9597 = vmatpush2.msra.mxu0 0.0
    %9598 = vmatprep.subr.mxu0 0.0
    %9599 = vmatpush2.msra.mxu0 0.0
    %9600 = vmatprep.subr.mxu0 0.0
    %9601 = vmatpush2.msra.mxu0 0.0
    %9602 = vmatprep.subr.mxu0 0.0
    %9603 = vmatpush2.msra.mxu0 0.0
    %9604 = vmatprep.subr.mxu0 0.0
    %9605 = vmatpush2.msra.mxu0 0.0
    %9606 = vmatprep.subr.mxu0 0.0
    %9607 = vmatpush2.msra.mxu0 0.0
    %9608 = vmatprep.subr.mxu0 0.0
    %9609 = vmatpush2.msra.mxu0 0.0
    %9610 = vmatprep.subr.mxu0 0.0
    %9611 = vmatpush2.msra.mxu0 0.0
    %9612 = vmatprep.subr.mxu0 0.0
    %9613 = vmatpush2.msra.mxu0 0.0
    %9614 = vmatprep.subr.mxu0 0.0
    %9615 = vmatpush2.msra.mxu0 0.0
    %9616 = vmatprep.subr.mxu0 0.0
    %9617 = vmatpush2.msra.mxu0 0.0
    %9618 = vmatprep.subr.mxu0 0.0
    %9619 = vmatpush2.msra.mxu0 0.0
    %9620 = vmatprep.subr.mxu0 0.0
    %9621 = vmatpush2.msra.mxu0 0.0
    %9622 = vmatprep.subr.mxu0 0.0
    %9623 = vmatpush2.msra.mxu0 0.0
    %9624 = vmatprep.subr.mxu0 0.0
    %9625 = vmatpush2.msra.mxu0 0.0
    %9626 = vmatprep.subr.mxu0 0.0
    %9627 = vmatpush2.msra.mxu0 0.0
    %9628 = vmatprep.mubr.f32.mxu0 0.0
    %v9629 = vand.u32 %v9468, 4294901760
    %9630 = vmatmul.mubr.f32.gmra.mxu0 %v9629
    %v9631 = vpop.f32.mrf.mxu0
    %v9632 = vadd.f32 %v9546, %v9631
    %v9633 = vpop.f32.mrf.mxu0
    %9634 = vmatprep.mubr.f32.mxu0 0.0
    %v9635 = vand.u32 %v9471, 4294901760
    %9636 = vmatmul.mubr.f32.gmra.mxu0 %v9635
    %v9637 = vpop.f32.mrf.mxu0
    %v9638 = vadd.f32 %v9556, %v9637
    %v9639 = vpop.f32.mrf.mxu0
    %9640 = vdwg.mxu0
    %9641 = vmatprep.subr.mxu0 0.0
    %9642 = vmatpush1.msra.mxu0 0.0
    %9643 = vmatprep.subr.mxu0 0.0
    %9644 = vmatpush1.msra.mxu0 0.0
    %9645 = vmatprep.subr.mxu0 0.0
    %9646 = vmatpush1.msra.mxu0 0.0
    %9647 = vmatprep.subr.mxu0 0.0
    %9648 = vmatpush1.msra.mxu0 0.0
    %9649 = vmatprep.subr.mxu0 0.0
    %9650 = vmatpush1.msra.mxu0 0.0
    %9651 = vmatprep.subr.mxu0 0.0
    %9652 = vmatpush1.msra.mxu0 0.0
    %9653 = vmatprep.subr.mxu0 0.0
    %9654 = vmatpush1.msra.mxu0 0.0
    %9655 = vmatprep.subr.mxu0 0.0
    %9656 = vmatpush1.msra.mxu0 0.0
    %9657 = vmatprep.subr.mxu0 0.0
    %9658 = vmatpush1.msra.mxu0 0.0
    %9659 = vmatprep.subr.mxu0 0.0
    %9660 = vmatpush1.msra.mxu0 0.0
    %9661 = vmatprep.subr.mxu0 0.0
    %9662 = vmatpush1.msra.mxu0 0.0
    %9663 = vmatprep.subr.mxu0 0.0
    %9664 = vmatpush1.msra.mxu0 0.0
    %9665 = vmatprep.subr.mxu0 0.0
    %9666 = vmatpush1.msra.mxu0 0.0
    %9667 = vmatprep.subr.mxu0 0.0
    %9668 = vmatpush1.msra.mxu0 0.0
    %9669 = vmatprep.subr.mxu0 0.0
    %9670 = vmatpush1.msra.mxu0 0.0
    %9671 = vmatprep.subr.mxu0 0.0
    %v9672 = vand.u32 %v9465, 4294901760
    %v9673 = vsub.f32 %v9465, %v9672
    %9674 = vmatpush1.msra.mxu0 %v9673
    %9675 = vmatprep.subr.mxu0 0.0
    %9676 = vmatpush2.msra.mxu0 0.0
    %9677 = vmatprep.subr.mxu0 0.0
    %9678 = vmatpush2.msra.mxu0 0.0
    %9679 = vmatprep.subr.mxu0 0.0
    %9680 = vmatpush2.msra.mxu0 0.0
    %9681 = vmatprep.subr.mxu0 0.0
    %9682 = vmatpush2.msra.mxu0 0.0
    %9683 = vmatprep.subr.mxu0 0.0
    %9684 = vmatpush2.msra.mxu0 0.0
    %9685 = vmatprep.subr.mxu0 0.0
    %9686 = vmatpush2.msra.mxu0 0.0
    %9687 = vmatprep.subr.mxu0 0.0
    %9688 = vmatpush2.msra.mxu0 0.0
    %9689 = vmatprep.subr.mxu0 0.0
    %9690 = vmatpush2.msra.mxu0 0.0
    %9691 = vmatprep.subr.mxu0 0.0
    %9692 = vmatpush2.msra.mxu0 0.0
    %9693 = vmatprep.subr.mxu0 0.0
    %9694 = vmatpush2.msra.mxu0 0.0
    %9695 = vmatprep.subr.mxu0 0.0
    %9696 = vmatpush2.msra.mxu0 0.0
    %9697 = vmatprep.subr.mxu0 0.0
    %9698 = vmatpush2.msra.mxu0 0.0
    %9699 = vmatprep.subr.mxu0 0.0
    %9700 = vmatpush2.msra.mxu0 0.0
    %9701 = vmatprep.subr.mxu0 0.0
    %9702 = vmatpush2.msra.mxu0 0.0
    %9703 = vmatprep.subr.mxu0 0.0
    %9704 = vmatpush2.msra.mxu0 0.0
    %9705 = vmatprep.subr.mxu0 0.0
    %9706 = vmatpush2.msra.mxu0 0.0
    %9707 = vmatprep.mubr.f32.mxu0 0.0
    %v9708 = vand.u32 %v9468, 4294901760
    %v9709 = vsub.f32 %v9468, %v9708
    %9710 = vmatmul.mubr.f32.gmra.mxu0 %v9709
    %v9711 = vpop.f32.mrf.mxu0
    %v9712 = vadd.f32 %v9632, %v9711
    %v9713 = vpop.f32.mrf.mxu0
    %9714 = vmatprep.mubr.f32.mxu0 0.0
    %v9715 = vand.u32 %v9471, 4294901760
    %v9716 = vsub.f32 %v9471, %v9715
    %9717 = vmatmul.mubr.f32.gmra.mxu0 %v9716
    %v9718 = vpop.f32.mrf.mxu0
    %v9719 = vadd.f32 %v9638, %v9718
    %v9720 = vpop.f32.mrf.mxu0
    %9721 = vdwg.mxu0
    %9722 = vmatprep.subr.mxu0 0.0
    %9723 = vmatpush1.msra.mxu0 0.0
    %9724 = vmatprep.subr.mxu0 0.0
    %9725 = vmatpush1.msra.mxu0 0.0
    %9726 = vmatprep.subr.mxu0 0.0
    %9727 = vmatpush1.msra.mxu0 0.0
    %9728 = vmatprep.subr.mxu0 0.0
    %9729 = vmatpush1.msra.mxu0 0.0
    %9730 = vmatprep.subr.mxu0 0.0
    %9731 = vmatpush1.msra.mxu0 0.0
    %9732 = vmatprep.subr.mxu0 0.0
    %9733 = vmatpush1.msra.mxu0 0.0
    %9734 = vmatprep.subr.mxu0 0.0
    %9735 = vmatpush1.msra.mxu0 0.0
    %9736 = vmatprep.subr.mxu0 0.0
    %9737 = vmatpush1.msra.mxu0 0.0
    %9738 = vmatprep.subr.mxu0 0.0
    %9739 = vmatpush1.msra.mxu0 0.0
    %9740 = vmatprep.subr.mxu0 0.0
    %9741 = vmatpush1.msra.mxu0 0.0
    %9742 = vmatprep.subr.mxu0 0.0
    %9743 = vmatpush1.msra.mxu0 0.0
    %9744 = vmatprep.subr.mxu0 0.0
    %9745 = vmatpush1.msra.mxu0 0.0
    %9746 = vmatprep.subr.mxu0 0.0
    %9747 = vmatpush1.msra.mxu0 0.0
    %9748 = vmatprep.subr.mxu0 0.0
    %9749 = vmatpush1.msra.mxu0 0.0
    %9750 = vmatprep.subr.mxu0 0.0
    %9751 = vmatpush1.msra.mxu0 0.0
    %9752 = vmatprep.subr.mxu0 0.0
    %v9753 = vand.u32 %v9465, 4294901760
    %9754 = vmatpush1.msra.mxu0 %v9753
    %9755 = vmatprep.subr.mxu0 0.0
    %9756 = vmatpush2.msra.mxu0 0.0
    %9757 = vmatprep.subr.mxu0 0.0
    %9758 = vmatpush2.msra.mxu0 0.0
    %9759 = vmatprep.subr.mxu0 0.0
    %9760 = vmatpush2.msra.mxu0 0.0
    %9761 = vmatprep.subr.mxu0 0.0
    %9762 = vmatpush2.msra.mxu0 0.0
    %9763 = vmatprep.subr.mxu0 0.0
    %9764 = vmatpush2.msra.mxu0 0.0
    %9765 = vmatprep.subr.mxu0 0.0
    %9766 = vmatpush2.msra.mxu0 0.0
    %9767 = vmatprep.subr.mxu0 0.0
    %9768 = vmatpush2.msra.mxu0 0.0
    %9769 = vmatprep.subr.mxu0 0.0
    %9770 = vmatpush2.msra.mxu0 0.0
    %9771 = vmatprep.subr.mxu0 0.0
    %9772 = vmatpush2.msra.mxu0 0.0
    %9773 = vmatprep.subr.mxu0 0.0
    %9774 = vmatpush2.msra.mxu0 0.0
    %9775 = vmatprep.subr.mxu0 0.0
    %9776 = vmatpush2.msra.mxu0 0.0
    %9777 = vmatprep.subr.mxu0 0.0
    %9778 = vmatpush2.msra.mxu0 0.0
    %9779 = vmatprep.subr.mxu0 0.0
    %9780 = vmatpush2.msra.mxu0 0.0
    %9781 = vmatprep.subr.mxu0 0.0
    %9782 = vmatpush2.msra.mxu0 0.0
    %9783 = vmatprep.subr.mxu0 0.0
    %9784 = vmatpush2.msra.mxu0 0.0
    %9785 = vmatprep.subr.mxu0 0.0
    %9786 = vmatpush2.msra.mxu0 0.0
    %9787 = vmatprep.mubr.f32.mxu0 0.0
    %v9788 = vand.u32 %v9468, 4294901760
    %v9789 = vsub.f32 %v9468, %v9788
    %v9790 = vand.u32 %v9789, 4294901760
    %9791 = vmatmul.mubr.f32.gmra.mxu0 %v9790
    %v9792 = vpop.f32.mrf.mxu0
    %v9793 = vadd.f32 %v9712, %v9792
    %v9794 = vpop.f32.mrf.mxu0
    %9795 = vmatprep.mubr.f32.mxu0 0.0
    %v9796 = vand.u32 %v9471, 4294901760
    %v9797 = vsub.f32 %v9471, %v9796
    %v9798 = vand.u32 %v9797, 4294901760
    %9799 = vmatmul.mubr.f32.gmra.mxu0 %v9798
    %v9800 = vpop.f32.mrf.mxu0
    %v9801 = vadd.f32 %v9719, %v9800
    %v9802 = vpop.f32.mrf.mxu0
    %9803 = vdwg.mxu0
    %9804 = vmatprep.subr.mxu0 0.0
    %9805 = vmatpush1.msra.mxu0 0.0
    %9806 = vmatprep.subr.mxu0 0.0
    %9807 = vmatpush1.msra.mxu0 0.0
    %9808 = vmatprep.subr.mxu0 0.0
    %9809 = vmatpush1.msra.mxu0 0.0
    %9810 = vmatprep.subr.mxu0 0.0
    %9811 = vmatpush1.msra.mxu0 0.0
    %9812 = vmatprep.subr.mxu0 0.0
    %9813 = vmatpush1.msra.mxu0 0.0
    %9814 = vmatprep.subr.mxu0 0.0
    %9815 = vmatpush1.msra.mxu0 0.0
    %9816 = vmatprep.subr.mxu0 0.0
    %9817 = vmatpush1.msra.mxu0 0.0
    %9818 = vmatprep.subr.mxu0 0.0
    %9819 = vmatpush1.msra.mxu0 0.0
    %9820 = vmatprep.subr.mxu0 0.0
    %9821 = vmatpush1.msra.mxu0 0.0
    %9822 = vmatprep.subr.mxu0 0.0
    %9823 = vmatpush1.msra.mxu0 0.0
    %9824 = vmatprep.subr.mxu0 0.0
    %9825 = vmatpush1.msra.mxu0 0.0
    %9826 = vmatprep.subr.mxu0 0.0
    %9827 = vmatpush1.msra.mxu0 0.0
    %9828 = vmatprep.subr.mxu0 0.0
    %9829 = vmatpush1.msra.mxu0 0.0
    %9830 = vmatprep.subr.mxu0 0.0
    %9831 = vmatpush1.msra.mxu0 0.0
    %9832 = vmatprep.subr.mxu0 0.0
    %9833 = vmatpush1.msra.mxu0 0.0
    %9834 = vmatprep.subr.mxu0 0.0
    %v9835 = vand.u32 %v9465, 4294901760
    %v9836 = vsub.f32 %v9465, %v9835
    %v9837 = vand.u32 %v9836, 4294901760
    %9838 = vmatpush1.msra.mxu0 %v9837
    %9839 = vmatprep.subr.mxu0 0.0
    %9840 = vmatpush2.msra.mxu0 0.0
    %9841 = vmatprep.subr.mxu0 0.0
    %9842 = vmatpush2.msra.mxu0 0.0
    %9843 = vmatprep.subr.mxu0 0.0
    %9844 = vmatpush2.msra.mxu0 0.0
    %9845 = vmatprep.subr.mxu0 0.0
    %9846 = vmatpush2.msra.mxu0 0.0
    %9847 = vmatprep.subr.mxu0 0.0
    %9848 = vmatpush2.msra.mxu0 0.0
    %9849 = vmatprep.subr.mxu0 0.0
    %9850 = vmatpush2.msra.mxu0 0.0
    %9851 = vmatprep.subr.mxu0 0.0
    %9852 = vmatpush2.msra.mxu0 0.0
    %9853 = vmatprep.subr.mxu0 0.0
    %9854 = vmatpush2.msra.mxu0 0.0
    %9855 = vmatprep.subr.mxu0 0.0
    %9856 = vmatpush2.msra.mxu0 0.0
    %9857 = vmatprep.subr.mxu0 0.0
    %9858 = vmatpush2.msra.mxu0 0.0
    %9859 = vmatprep.subr.mxu0 0.0
    %9860 = vmatpush2.msra.mxu0 0.0
    %9861 = vmatprep.subr.mxu0 0.0
    %9862 = vmatpush2.msra.mxu0 0.0
    %9863 = vmatprep.subr.mxu0 0.0
    %9864 = vmatpush2.msra.mxu0 0.0
    %9865 = vmatprep.subr.mxu0 0.0
    %9866 = vmatpush2.msra.mxu0 0.0
    %9867 = vmatprep.subr.mxu0 0.0
    %9868 = vmatpush2.msra.mxu0 0.0
    %9869 = vmatprep.subr.mxu0 0.0
    %9870 = vmatpush2.msra.mxu0 0.0
    %9871 = vmatprep.mubr.f32.mxu0 0.0
    %v9872 = vand.u32 %v9468, 4294901760
    %9873 = vmatmul.mubr.f32.gmra.mxu0 %v9872
    %v9874 = vpop.f32.mrf.mxu0
    %v9875 = vadd.f32 %v9793, %v9874
    %v9876 = vpop.f32.mrf.mxu0
    %9877 = vmatprep.mubr.f32.mxu0 0.0
    %v9878 = vand.u32 %v9471, 4294901760
    %9879 = vmatmul.mubr.f32.gmra.mxu0 %v9878
    %v9880 = vpop.f32.mrf.mxu0
    %v9881 = vadd.f32 %v9801, %v9880
    %v9882 = vpop.f32.mrf.mxu0
    %9883 = vdwg.mxu0
    %9884 = vmatprep.subr.mxu0 0.0
    %9885 = vmatpush1.msra.mxu0 0.0
    %9886 = vmatprep.subr.mxu0 0.0
    %9887 = vmatpush1.msra.mxu0 0.0
    %9888 = vmatprep.subr.mxu0 0.0
    %9889 = vmatpush1.msra.mxu0 0.0
    %9890 = vmatprep.subr.mxu0 0.0
    %9891 = vmatpush1.msra.mxu0 0.0
    %9892 = vmatprep.subr.mxu0 0.0
    %9893 = vmatpush1.msra.mxu0 0.0
    %9894 = vmatprep.subr.mxu0 0.0
    %9895 = vmatpush1.msra.mxu0 0.0
    %9896 = vmatprep.subr.mxu0 0.0
    %9897 = vmatpush1.msra.mxu0 0.0
    %9898 = vmatprep.subr.mxu0 0.0
    %9899 = vmatpush1.msra.mxu0 0.0
    %9900 = vmatprep.subr.mxu0 0.0
    %9901 = vmatpush1.msra.mxu0 0.0
    %9902 = vmatprep.subr.mxu0 0.0
    %9903 = vmatpush1.msra.mxu0 0.0
    %9904 = vmatprep.subr.mxu0 0.0
    %9905 = vmatpush1.msra.mxu0 0.0
    %9906 = vmatprep.subr.mxu0 0.0
    %9907 = vmatpush1.msra.mxu0 0.0
    %9908 = vmatprep.subr.mxu0 0.0
    %9909 = vmatpush1.msra.mxu0 0.0
    %9910 = vmatprep.subr.mxu0 0.0
    %9911 = vmatpush1.msra.mxu0 0.0
    %9912 = vmatprep.subr.mxu0 0.0
    %9913 = vmatpush1.msra.mxu0 0.0
    %9914 = vmatprep.subr.mxu0 0.0
    %v9915 = vand.u32 %v9465, 4294901760
    %9916 = vmatpush1.msra.mxu0 %v9915
    %9917 = vmatprep.subr.mxu0 0.0
    %9918 = vmatpush2.msra.mxu0 0.0
    %9919 = vmatprep.subr.mxu0 0.0
    %9920 = vmatpush2.msra.mxu0 0.0
    %9921 = vmatprep.subr.mxu0 0.0
    %9922 = vmatpush2.msra.mxu0 0.0
    %9923 = vmatprep.subr.mxu0 0.0
    %9924 = vmatpush2.msra.mxu0 0.0
    %9925 = vmatprep.subr.mxu0 0.0
    %9926 = vmatpush2.msra.mxu0 0.0
    %9927 = vmatprep.subr.mxu0 0.0
    %9928 = vmatpush2.msra.mxu0 0.0
    %9929 = vmatprep.subr.mxu0 0.0
    %9930 = vmatpush2.msra.mxu0 0.0
    %9931 = vmatprep.subr.mxu0 0.0
    %9932 = vmatpush2.msra.mxu0 0.0
    %9933 = vmatprep.subr.mxu0 0.0
    %9934 = vmatpush2.msra.mxu0 0.0
    %9935 = vmatprep.subr.mxu0 0.0
    %9936 = vmatpush2.msra.mxu0 0.0
    %9937 = vmatprep.subr.mxu0 0.0
    %9938 = vmatpush2.msra.mxu0 0.0
    %9939 = vmatprep.subr.mxu0 0.0
    %9940 = vmatpush2.msra.mxu0 0.0
    %9941 = vmatprep.subr.mxu0 0.0
    %9942 = vmatpush2.msra.mxu0 0.0
    %9943 = vmatprep.subr.mxu0 0.0
    %9944 = vmatpush2.msra.mxu0 0.0
    %9945 = vmatprep.subr.mxu0 0.0
    %9946 = vmatpush2.msra.mxu0 0.0
    %9947 = vmatprep.subr.mxu0 0.0
    %9948 = vmatpush2.msra.mxu0 0.0
    %9949 = vmatprep.mubr.f32.mxu0 0.0
    %v9950 = vand.u32 %v9468, 4294901760
    %9951 = vmatmul.mubr.f32.gmra.mxu0 %v9950
    %v9952 = vpop.f32.mrf.mxu0
    %v9953 = vadd.f32 %v9875, %v9952
    %v9954 = vpop.f32.mrf.mxu0
    %9955 = vmatprep.mubr.f32.mxu0 0.0
    %v9956 = vand.u32 %v9471, 4294901760
    %9957 = vmatmul.mubr.f32.gmra.mxu0 %v9956
    %v9958 = vpop.f32.mrf.mxu0
    %v9959 = vadd.f32 %v9881, %v9958
    %v9960 = vpop.f32.mrf.mxu0
    %9961 = vdwg.mxu0
    %9964 = vrot.lane.b32.xlu0 %v9953, 96
    %v9965 = vpop.permute.xlu0 %9964
    %9966 = vrot.lane.b32.xlu0 %v9959, 96
    %v9967 = vpop.permute.xlu0 %9966
    %v9970 = vadd.f32 %v9461, %v9965
    %v9971 = vadd.f32 %v9462, %v9967
    %9974 = vrot.lane.b32.xlu0 %v9970, 32
    %v9975 = vpop.permute.xlu0 %9974
    %9976 = vrot.lane.b32.xlu0 %v9971, 32
    %v9977 = vpop.permute.xlu0 %9976
    %9980 = vst.msk [vmem:[#allocation7] sm:$0xff] %vm51, %v9975
    %9981 = vst.msk [vmem:[#allocation7 + $0x8] sm:$0xff] %vm51, %v9977
    // Predicated region
    $region18: #{tpu_custom_call.1} parent=1 // pred_check
      _
    $region19: #{tpu_custom_call.1} parent=1 // pred_check_branch
      %9983 = sbr.rel (0) target = $region21
    $region20: #{tpu_custom_call.1} parent=1 // pred_region
      %s9985 = ssub.s32 256, 256
      %9986 = vsyncadd [#allocation4], %s9985
      %s9987 = sshll.u32 [#allocation7], 4
      %s9988 = int_to_ptr.vmem [resolvable:$true] %s9987
      %9993 = dma.vmem_to_hbm [thread:$0]  %s9988, 256, %s2, [#allocation4], 128, 128, 8
    $region21: #{tpu_custom_call.1} parent=1 // pred_fallthru
      _
    // Predicated region
    $region22: #{tpu_custom_call.1} parent=1 // pred_check
      _
    $region23: #{tpu_custom_call.1} parent=1 // pred_check_branch
      %9995 = sbr.rel (0) target = $region25
    $region24: #{tpu_custom_call.1} parent=1 // pred_region
      %9996 = dma.done [#allocation4], 256
    $region25: #{tpu_custom_call.1} parent=1 // pred_fallthru
      _
    %9997 = vsyncpa [#allocation3], 1
    %9998 = vsyncpa [#allocation6], 1
    %9999 = vsyncpa [#allocation4], 1

</llo_original>
